<compile_context>
chip_gen: v5e
topology: v5e:2x2
jax: 0.10.0
libtpu: 0.0.40
codegen_flags: <defaults>
</compile_context>

<pallas_src>
import functools

import jax
import jax.numpy as jnp
from jax import lax
from jax.experimental import pallas as pl
from jax.experimental.pallas import tpu as pltpu


def _round_up(v, m):
    return (v + m - 1) // m * m


def _lstm_fc_kernel(x_ref, wih0_ref, whh0_ref, b0_ref,
                    w1cat_ref, b1_ref, fcw_ref, fcb_ref,
                    out_ref, gx_ref, h01_ref, *, seq_len, batch):
    T = seq_len
    Bb = batch
    Hp = whh0_ref.shape[0]

    # ---- hoisted layer-0 input projection: one (T*Bb, D) @ (D, 4Hp) bf16 matmul ----
    gx_ref[...] = (jnp.dot(x_ref[...], wih0_ref[...],
                           preferred_element_type=jnp.float32) + b0_ref[...])

    # Persistent layer-1 operand buffer [h0_t | h1_{t-1}] (bf16, fed straight to MXU).
    h01_ref[...] = jnp.zeros_like(h01_ref)

    # Hoist the bias broadcast out of the time loop (JAX doesn't CSE broadcast_in_dim).
    b1 = jnp.broadcast_to(b1_ref[...], (Bb, 4 * Hp))

    def step(gx_t, h0, c0, h1, c1):
        # ---- layer 0: only the recurrent matmul per step (bf16 operands, f32 acc) ----
        pre0 = gx_t + jnp.dot(h0.astype(jnp.bfloat16), whh0_ref[...],
                              preferred_element_type=jnp.float32)
        sig0 = jax.nn.sigmoid(pre0[:, :2 * Hp])          # fused i|f sigmoid (one EUP call)
        i0, f0 = sig0[:, :Hp], sig0[:, Hp:]
        g0 = jnp.tanh(pre0[:, 2 * Hp:3 * Hp])
        o0 = jax.nn.sigmoid(pre0[:, 3 * Hp:])
        c0 = f0 * c0 + i0 * g0
        h0 = o0 * jnp.tanh(c0)

        # ---- layer 1: fused [h0_t | h1_{t-1}] @ [wih1; whh1] from the scratch ref ----
        h01_ref[:, :Hp] = h0.astype(jnp.bfloat16)
        pre1 = jnp.dot(h01_ref[...], w1cat_ref[...],
                       preferred_element_type=jnp.float32) + b1
        sig1 = jax.nn.sigmoid(pre1[:, :2 * Hp])
        i1, f1 = sig1[:, :Hp], sig1[:, Hp:]
        g1 = jnp.tanh(pre1[:, 2 * Hp:3 * Hp])
        o1 = jax.nn.sigmoid(pre1[:, 3 * Hp:])
        c1 = f1 * c1 + i1 * g1
        h1 = o1 * jnp.tanh(c1)
        h01_ref[:, Hp:] = h1.astype(jnp.bfloat16)
        return h0, c0, h1, c1

    zeros = jnp.zeros((Bb, Hp), jnp.float32)
    h0, c0, h1, c1 = zeros, zeros, zeros, zeros

    if T <= 16:
        # Small static T: full unroll; h/c stay in vregs.
        for t in range(T):
            h0, c0, h1, c1 = step(gx_ref[t * Bb:(t + 1) * Bb, :], h0, c0, h1, c1)
    else:
        # Larger T: bounded unroll keeps code size / live ranges under control.
        def body(t, carry):
            row = pl.multiple_of(t * Bb, 8)
            return step(gx_ref[pl.ds(row, Bb), :], *carry)
        h0, c0, h1, c1 = lax.fori_loop(0, T, body, (h0, c0, h1, c1), unroll=2)

    # fc(h_n[-1]) as VPU multiply + cross-lane reduce (avoids an N=1 MXU matmul).
    out_ref[...] = (jnp.sum(h1 * fcw_ref[...], axis=-1, keepdims=True)
                    + fcb_ref[...])


def _pad_gates(w, H, Hp, k_pad=None):
    """(K, 4H) -> (k_pad, 4Hp): zero-pad each PyTorch gate block [i|f|g|o] from H to Hp
    columns, and optionally zero-pad rows (K -> k_pad)."""
    K = w.shape[0]
    if k_pad is None:
        k_pad = K
    w4 = w.reshape(K, 4, H)
    w4 = jnp.pad(w4, ((0, k_pad - K), (0, 0), (0, Hp - H)))
    return w4.reshape(k_pad, 4 * Hp)


def lstm_model_forward(x, params):
    """x: (B, T, D) float32 -> (B, 1) float32."""
    B, T, D = x.shape
    H = params["whh0"].shape[0]
    Hp = _round_up(H, 128)   # lane-aligned hidden size
    Bp = _round_up(B, 8)     # sublane-aligned batch

    # Batch-block grid: split across the two v7x TensorCores when each half keeps
    # >= 8 sublanes; single block otherwise (no-op on v5e/v6e anyway).
    nb = 2 if (Bp >= 16 and Bp % 16 == 0) else 1
    Bb = Bp // nb

    # time-major, batch-padded, batch-blocked, flattened per block to (T*Bb, D) so the
    # hoisted input projection is one matmul and per-step reads are sublane-aligned.
    x_tm = jnp.transpose(x, (1, 0, 2))                      # (T, B, D)
    x_tm = jnp.pad(x_tm, ((0, 0), (0, Bp - B), (0, 0)))     # (T, Bp, D)
    x_blk = (x_tm.reshape(T, nb, Bb, D)
             .transpose(1, 0, 2, 3)
             .reshape(nb, T * Bb, D)
             .astype(jnp.bfloat16))                         # (nb, T*Bb, D) bf16

    # bf16 MXU operands; biases / fc stay f32 (gate math is f32).
    wih0 = _pad_gates(params["wih0"], H, Hp).astype(jnp.bfloat16)            # (D,  4Hp)
    whh0 = _pad_gates(params["whh0"], H, Hp, k_pad=Hp).astype(jnp.bfloat16)  # (Hp, 4Hp)
    b0 = _pad_gates(params["b0"], H, Hp)                                     # (1,  4Hp)
    wih1 = _pad_gates(params["wih1"], H, Hp, k_pad=Hp)                       # (Hp, 4Hp)
    whh1 = _pad_gates(params["whh1"], H, Hp, k_pad=Hp)                       # (Hp, 4Hp)
    w1cat = jnp.concatenate([wih1, whh1], axis=0).astype(jnp.bfloat16)       # (2Hp, 4Hp)
    b1 = _pad_gates(params["b1"], H, Hp)                                     # (1,  4Hp)
    fcw = jnp.pad(params["fcw"].T, ((0, 0), (0, Hp - H)))                    # (1,  Hp)
    fcb = params["fcb"]                                                      # (1,  1)

    kernel = functools.partial(_lstm_fc_kernel, seq_len=T, batch=Bb)
    out_p = pl.pallas_call(
        kernel,
        out_shape=jax.ShapeDtypeStruct((Bp, 1), jnp.float32),
        grid_spec=pltpu.PrefetchScalarGridSpec(
            num_scalar_prefetch=0,
            grid=(nb,),
            in_specs=[
                pl.BlockSpec((None, T * Bb, D), lambda b: (b, 0, 0)),   # x block
                pl.BlockSpec((D, 4 * Hp), lambda b: (0, 0)),            # wih0
                pl.BlockSpec((Hp, 4 * Hp), lambda b: (0, 0)),           # whh0
                pl.BlockSpec((1, 4 * Hp), lambda b: (0, 0)),            # b0
                pl.BlockSpec((2 * Hp, 4 * Hp), lambda b: (0, 0)),       # [wih1; whh1]
                pl.BlockSpec((1, 4 * Hp), lambda b: (0, 0)),            # b1
                pl.BlockSpec((1, Hp), lambda b: (0, 0)),                # fcw
                pl.BlockSpec((1, 1), lambda b: (0, 0)),                 # fcb
            ],
            out_specs=pl.BlockSpec((Bb, 1), lambda b: (b, 0)),
            scratch_shapes=[
                pltpu.VMEM((T * Bb, 4 * Hp), jnp.float32),    # hoisted input projection
                pltpu.VMEM((Bb, 2 * Hp), jnp.bfloat16),       # [h0_t | h1_{t-1}] buffer
            ]),
        compiler_params=pltpu.CompilerParams(
            dimension_semantics=("parallel",),                # megacore split on v7x
            vmem_limit_bytes=48 * 1024 * 1024),               # fits v7x 64MiB w/ headroom
    )(x_blk, wih0, whh0, b0, w1cat, b1, fcw, fcb)
    return out_p[:B]


def init_params(key, input_size, hidden_size):
    """Deterministic synthetic params, PyTorch-style uniform(-1/sqrt(H), 1/sqrt(H))."""
    H = hidden_size
    k = 1.0 / jnp.sqrt(jnp.float32(H))
    keys = jax.random.split(key, 8)

    def u(kk, shape):
        return jax.random.uniform(kk, shape, jnp.float32, -k, k)

    return {
        # layer 0: input_size -> H
        "wih0": u(keys[0], (input_size, 4 * H)),
        "whh0": u(keys[1], (H, 4 * H)),
        "b0":   u(keys[2], (1, 4 * H)),          # b_ih + b_hh folded into one bias
        # layer 1: H -> H
        "wih1": u(keys[3], (H, 4 * H)),
        "whh1": u(keys[4], (H, 4 * H)),
        "b1":   u(keys[5], (1, 4 * H)),
        # fc: H -> 1
        "fcw":  u(keys[6], (H, 1)),
        "fcb":  u(keys[7], (1, 1)),
    }


def lstm_model_ref(x, params):
    """Pure-JAX f32 reference of the same forward pass."""
    B, T, D = x.shape
    H = params["whh0"].shape[0]

    def layer(inp, wih, whh, b):
        h = jnp.zeros((B, H), jnp.float32)
        c = jnp.zeros((B, H), jnp.float32)
        hs = []
        for t in range(T):
            gates = inp[:, t, :] @ wih + h @ whh + b
            i = jax.nn.sigmoid(gates[:, 0:H])
            f = jax.nn.sigmoid(gates[:, H:2 * H])
            g = jnp.tanh(gates[:, 2 * H:3 * H])
            o = jax.nn.sigmoid(gates[:, 3 * H:4 * H])
            c = f * c + i * g
            h = o * jnp.tanh(c)
            hs.append(h)
        return jnp.stack(hs, axis=1), h

    h0_seq, _ = layer(x, params["wih0"], params["whh0"], params["b0"])
    _, h1 = layer(h0_seq, params["wih1"], params["whh1"], params["b1"])
    return h1 @ params["fcw"] + params["fcb"]


if __name__ == "__main__":
    B, T, D, H = 2, 8, 16, 32   # batch, seq_len, input_size, hidden_size (num_layers=2)
    key = jax.random.PRNGKey(0)
    kx, kp = jax.random.split(key)
    x = jax.random.normal(kx, (B, T, D), jnp.float32)
    params = init_params(kp, D, H)

    out = lstm_model_forward(x, params)
    out = jax.block_until_ready(out)

    ref = lstm_model_ref(x, params)
    assert out.shape == (B, 1), out.shape
    # Tolerance widened vs the pure-f32 reference because MXU operands are bf16
    # (f32 accumulation); gate math stays f32.
    assert jnp.allclose(out, ref, rtol=3e-2, atol=3e-2), (out, ref)

    print("KERNEL_OK")
</pallas_src>

<mosaic_0001>
module attributes {stable_mosaic.version = 11 : i64} {
  func.func @_lstm_fc_kernel(%arg0: i32, %arg1: memref<1x64x16xbf16, #tpu.memory_space<vmem>>, %arg2: memref<16x512xbf16, #tpu.memory_space<vmem>>, %arg3: memref<128x512xbf16, #tpu.memory_space<vmem>>, %arg4: memref<1x512xf32, #tpu.memory_space<vmem>>, %arg5: memref<256x512xbf16, #tpu.memory_space<vmem>>, %arg6: memref<1x512xf32, #tpu.memory_space<vmem>>, %arg7: memref<1x128xf32, #tpu.memory_space<vmem>>, %arg8: memref<1x1xf32, #tpu.memory_space<vmem>>, %arg9: memref<8x1xf32, #tpu.memory_space<vmem>>, %arg10: memref<64x512xf32, #tpu.memory_space<vmem>>, %arg11: memref<8x256xbf16, #tpu.memory_space<vmem>>) attributes {dimension_semantics = [#tpu.dimension_semantics<parallel>], iteration_bounds = array<i64: 1>, scalar_prefetch = 0 : i64, scratch_operands = 2 : i64, tpu.core_type = #tpu.core_type<tc>, window_params = [{transform_indices = @transform_0, window_bounds = array<i64: 1, 64, 16>}, {pipeline_mode = #tpu.pipeline_mode<synchronous>, transform_indices = @transform_1, window_bounds = array<i64: 16, 512>}, {pipeline_mode = #tpu.pipeline_mode<synchronous>, transform_indices = @transform_2, window_bounds = array<i64: 128, 512>}, {pipeline_mode = #tpu.pipeline_mode<synchronous>, transform_indices = @transform_3, window_bounds = array<i64: 1, 512>}, {pipeline_mode = #tpu.pipeline_mode<synchronous>, transform_indices = @transform_4, window_bounds = array<i64: 256, 512>}, {pipeline_mode = #tpu.pipeline_mode<synchronous>, transform_indices = @transform_5, window_bounds = array<i64: 1, 512>}, {pipeline_mode = #tpu.pipeline_mode<synchronous>, transform_indices = @transform_6, window_bounds = array<i64: 1, 128>}, {pipeline_mode = #tpu.pipeline_mode<synchronous>, transform_indices = @transform_7, window_bounds = array<i64: 1, 1>}, {transform_indices = @transform_8, window_bounds = array<i64: 8, 1>}]} {
    %c0 = arith.constant 0 : index
    %c0_0 = arith.constant 0 : index
    %c0_1 = arith.constant 0 : index
    %0 = vector.load %arg1[%c0, %c0_0, %c0_1] : memref<1x64x16xbf16, #tpu.memory_space<vmem>>, vector<1x64x16xbf16>
    %1 = vector.shape_cast %0 : vector<1x64x16xbf16> to vector<64x16xbf16>
    %c0_2 = arith.constant 0 : index
    %c0_3 = arith.constant 0 : index
    %2 = vector.load %arg2[%c0_2, %c0_3] : memref<16x512xbf16, #tpu.memory_space<vmem>>, vector<16x512xbf16>
    %cst = arith.constant dense<0.000000e+00> : vector<64x512xf32>
    %3 = tpu.matmul %1, %2, %cst {dimension_numbers = #tpu.dot_dimension_numbers<[1], [0], [0], [1], [0, 0, 1, 1], [], []>} : vector<64x16xbf16>, vector<16x512xbf16>, vector<64x512xf32> -> vector<64x512xf32>
    %c0_4 = arith.constant 0 : index
    %c0_5 = arith.constant 0 : index
    %4 = vector.load %arg4[%c0_4, %c0_5] : memref<1x512xf32, #tpu.memory_space<vmem>>, vector<1x512xf32>
    %5 = vector.broadcast %4 : vector<1x512xf32> to vector<64x512xf32>
    %6 = arith.addf %3, %5 : vector<64x512xf32>
    %c0_6 = arith.constant 0 : index
    %c0_7 = arith.constant 0 : index
    %7 = vector.load %arg10[%c0_6, %c0_7] : memref<64x512xf32, #tpu.memory_space<vmem>>, vector<64x512xf32>
    tpu.vector_store %arg10[%c0_6, %c0_7], %6 {strides = array<i32>} : memref<64x512xf32, #tpu.memory_space<vmem>>, vector<64x512xf32>,
    %cst_8 = arith.constant 0.000000e+00 : bf16
    %8 = vector.broadcast %cst_8 : bf16 to vector<8x256xbf16>
    %c0_9 = arith.constant 0 : index
    %c0_10 = arith.constant 0 : index
    %9 = vector.load %arg11[%c0_9, %c0_10] : memref<8x256xbf16, #tpu.memory_space<vmem>>, vector<8x256xbf16>
    tpu.vector_store %arg11[%c0_9, %c0_10], %8 {strides = array<i32>} : memref<8x256xbf16, #tpu.memory_space<vmem>>, vector<8x256xbf16>,
    %c0_11 = arith.constant 0 : index
    %c0_12 = arith.constant 0 : index
    %10 = vector.load %arg6[%c0_11, %c0_12] : memref<1x512xf32, #tpu.memory_space<vmem>>, vector<1x512xf32>
    %11 = vector.shape_cast %10 : vector<1x512xf32> to vector<1x512xf32>
    %12 = vector.broadcast %11 : vector<1x512xf32> to vector<8x512xf32>
    %cst_13 = arith.constant 0.000000e+00 : f32
    %13 = vector.broadcast %cst_13 : f32 to vector<8x128xf32>
    %c0_14 = arith.constant 0 : index
    %c0_15 = arith.constant 0 : index
    %14 = vector.load %arg10[%c0_14, %c0_15] : memref<64x512xf32, #tpu.memory_space<vmem>>, vector<8x512xf32>
    %15 = arith.truncf %13 : vector<8x128xf32> to vector<8x128xbf16>
    %c0_16 = arith.constant 0 : index
    %c0_17 = arith.constant 0 : index
    %16 = vector.load %arg3[%c0_16, %c0_17] : memref<128x512xbf16, #tpu.memory_space<vmem>>, vector<128x512xbf16>
    %cst_18 = arith.constant dense<0.000000e+00> : vector<8x512xf32>
    %17 = tpu.matmul %15, %16, %cst_18 {dimension_numbers = #tpu.dot_dimension_numbers<[1], [0], [0], [1], [0, 0, 1, 1], [], []>} : vector<8x128xbf16>, vector<128x512xbf16>, vector<8x512xf32> -> vector<8x512xf32>
    %18 = arith.addf %14, %17 : vector<8x512xf32>
    %19 = vector.extract_strided_slice %18 {offsets = [0, 0], sizes = [8, 256], strides = [1, 1]} : vector<8x512xf32> to vector<8x256xf32>
    %20 = arith.negf %19 : vector<8x256xf32>
    %21 = math.exp %20 : vector<8x256xf32>
    %cst_19 = arith.constant 1.000000e+00 : f32
    %22 = vector.broadcast %cst_19 : f32 to vector<8x256xf32>
    %23 = arith.addf %22, %21 : vector<8x256xf32>
    %24 = arith.divf %22, %23 : vector<8x256xf32>
    %25 = vector.extract_strided_slice %24 {offsets = [0, 0], sizes = [8, 128], strides = [1, 1]} : vector<8x256xf32> to vector<8x128xf32>
    %26 = vector.extract_strided_slice %24 {offsets = [0, 128], sizes = [8, 128], strides = [1, 1]} : vector<8x256xf32> to vector<8x128xf32>
    %27 = vector.extract_strided_slice %18 {offsets = [0, 256], sizes = [8, 128], strides = [1, 1]} : vector<8x512xf32> to vector<8x128xf32>
    %28 = math.tanh %27 : vector<8x128xf32>
    %29 = vector.extract_strided_slice %18 {offsets = [0, 384], sizes = [8, 128], strides = [1, 1]} : vector<8x512xf32> to vector<8x128xf32>
    %30 = arith.negf %29 : vector<8x128xf32>
    %31 = math.exp %30 : vector<8x128xf32>
    %cst_20 = arith.constant 1.000000e+00 : f32
    %32 = vector.broadcast %cst_20 : f32 to vector<8x128xf32>
    %33 = arith.addf %32, %31 : vector<8x128xf32>
    %34 = arith.divf %32, %33 : vector<8x128xf32>
    %35 = arith.mulf %26, %13 : vector<8x128xf32>
    %36 = arith.mulf %25, %28 : vector<8x128xf32>
    %37 = arith.addf %35, %36 : vector<8x128xf32>
    %38 = math.tanh %37 : vector<8x128xf32>
    %39 = arith.mulf %34, %38 : vector<8x128xf32>
    %40 = arith.truncf %39 : vector<8x128xf32> to vector<8x128xbf16>
    %c0_21 = arith.constant 0 : index
    %c0_22 = arith.constant 0 : index
    %41 = vector.load %arg11[%c0_21, %c0_22] : memref<8x256xbf16, #tpu.memory_space<vmem>>, vector<8x128xbf16>
    tpu.vector_store %arg11[%c0_21, %c0_22], %40 {strides = array<i32>} : memref<8x256xbf16, #tpu.memory_space<vmem>>, vector<8x128xbf16>,
    %c0_23 = arith.constant 0 : index
    %c0_24 = arith.constant 0 : index
    %42 = vector.load %arg11[%c0_23, %c0_24] : memref<8x256xbf16, #tpu.memory_space<vmem>>, vector<8x256xbf16>
    %c0_25 = arith.constant 0 : index
    %c0_26 = arith.constant 0 : index
    %43 = vector.load %arg5[%c0_25, %c0_26] : memref<256x512xbf16, #tpu.memory_space<vmem>>, vector<256x512xbf16>
    %cst_27 = arith.constant dense<0.000000e+00> : vector<8x512xf32>
    %44 = tpu.matmul %42, %43, %cst_27 {dimension_numbers = #tpu.dot_dimension_numbers<[1], [0], [0], [1], [0, 0, 1, 1], [], []>} : vector<8x256xbf16>, vector<256x512xbf16>, vector<8x512xf32> -> vector<8x512xf32>
    %45 = arith.addf %44, %12 : vector<8x512xf32>
    %46 = vector.extract_strided_slice %45 {offsets = [0, 0], sizes = [8, 256], strides = [1, 1]} : vector<8x512xf32> to vector<8x256xf32>
    %47 = arith.negf %46 : vector<8x256xf32>
    %48 = math.exp %47 : vector<8x256xf32>
    %cst_28 = arith.constant 1.000000e+00 : f32
    %49 = vector.broadcast %cst_28 : f32 to vector<8x256xf32>
    %50 = arith.addf %49, %48 : vector<8x256xf32>
    %51 = arith.divf %49, %50 : vector<8x256xf32>
    %52 = vector.extract_strided_slice %51 {offsets = [0, 0], sizes = [8, 128], strides = [1, 1]} : vector<8x256xf32> to vector<8x128xf32>
    %53 = vector.extract_strided_slice %51 {offsets = [0, 128], sizes = [8, 128], strides = [1, 1]} : vector<8x256xf32> to vector<8x128xf32>
    %54 = vector.extract_strided_slice %45 {offsets = [0, 256], sizes = [8, 128], strides = [1, 1]} : vector<8x512xf32> to vector<8x128xf32>
    %55 = math.tanh %54 : vector<8x128xf32>
    %56 = vector.extract_strided_slice %45 {offsets = [0, 384], sizes = [8, 128], strides = [1, 1]} : vector<8x512xf32> to vector<8x128xf32>
    %57 = arith.negf %56 : vector<8x128xf32>
    %58 = math.exp %57 : vector<8x128xf32>
    %cst_29 = arith.constant 1.000000e+00 : f32
    %59 = vector.broadcast %cst_29 : f32 to vector<8x128xf32>
    %60 = arith.addf %59, %58 : vector<8x128xf32>
    %61 = arith.divf %59, %60 : vector<8x128xf32>
    %62 = arith.mulf %53, %13 : vector<8x128xf32>
    %63 = arith.mulf %52, %55 : vector<8x128xf32>
    %64 = arith.addf %62, %63 : vector<8x128xf32>
    %65 = math.tanh %64 : vector<8x128xf32>
    %66 = arith.mulf %61, %65 : vector<8x128xf32>
    %67 = arith.truncf %66 : vector<8x128xf32> to vector<8x128xbf16>
    %c0_30 = arith.constant 0 : index
    %c128 = arith.constant 128 : index
    %68 = vector.load %arg11[%c0_30, %c128] : memref<8x256xbf16, #tpu.memory_space<vmem>>, vector<8x128xbf16>
    tpu.vector_store %arg11[%c0_30, %c128], %67 {strides = array<i32>} : memref<8x256xbf16, #tpu.memory_space<vmem>>, vector<8x128xbf16>,
    %c8 = arith.constant 8 : index
    %c0_31 = arith.constant 0 : index
    %69 = vector.load %arg10[%c8, %c0_31] : memref<64x512xf32, #tpu.memory_space<vmem>>, vector<8x512xf32>
    %70 = arith.truncf %39 : vector<8x128xf32> to vector<8x128xbf16>
    %c0_32 = arith.constant 0 : index
    %c0_33 = arith.constant 0 : index
    %71 = vector.load %arg3[%c0_32, %c0_33] : memref<128x512xbf16, #tpu.memory_space<vmem>>, vector<128x512xbf16>
    %cst_34 = arith.constant dense<0.000000e+00> : vector<8x512xf32>
    %72 = tpu.matmul %70, %71, %cst_34 {dimension_numbers = #tpu.dot_dimension_numbers<[1], [0], [0], [1], [0, 0, 1, 1], [], []>} : vector<8x128xbf16>, vector<128x512xbf16>, vector<8x512xf32> -> vector<8x512xf32>
    %73 = arith.addf %69, %72 : vector<8x512xf32>
    %74 = vector.extract_strided_slice %73 {offsets = [0, 0], sizes = [8, 256], strides = [1, 1]} : vector<8x512xf32> to vector<8x256xf32>
    %75 = arith.negf %74 : vector<8x256xf32>
    %76 = math.exp %75 : vector<8x256xf32>
    %cst_35 = arith.constant 1.000000e+00 : f32
    %77 = vector.broadcast %cst_35 : f32 to vector<8x256xf32>
    %78 = arith.addf %77, %76 : vector<8x256xf32>
    %79 = arith.divf %77, %78 : vector<8x256xf32>
    %80 = vector.extract_strided_slice %79 {offsets = [0, 0], sizes = [8, 128], strides = [1, 1]} : vector<8x256xf32> to vector<8x128xf32>
    %81 = vector.extract_strided_slice %79 {offsets = [0, 128], sizes = [8, 128], strides = [1, 1]} : vector<8x256xf32> to vector<8x128xf32>
    %82 = vector.extract_strided_slice %73 {offsets = [0, 256], sizes = [8, 128], strides = [1, 1]} : vector<8x512xf32> to vector<8x128xf32>
    %83 = math.tanh %82 : vector<8x128xf32>
    %84 = vector.extract_strided_slice %73 {offsets = [0, 384], sizes = [8, 128], strides = [1, 1]} : vector<8x512xf32> to vector<8x128xf32>
    %85 = arith.negf %84 : vector<8x128xf32>
    %86 = math.exp %85 : vector<8x128xf32>
    %cst_36 = arith.constant 1.000000e+00 : f32
    %87 = vector.broadcast %cst_36 : f32 to vector<8x128xf32>
    %88 = arith.addf %87, %86 : vector<8x128xf32>
    %89 = arith.divf %87, %88 : vector<8x128xf32>
    %90 = arith.mulf %81, %37 : vector<8x128xf32>
    %91 = arith.mulf %80, %83 : vector<8x128xf32>
    %92 = arith.addf %90, %91 : vector<8x128xf32>
    %93 = math.tanh %92 : vector<8x128xf32>
    %94 = arith.mulf %89, %93 : vector<8x128xf32>
    %95 = arith.truncf %94 : vector<8x128xf32> to vector<8x128xbf16>
    %c0_37 = arith.constant 0 : index
    %c0_38 = arith.constant 0 : index
    %96 = vector.load %arg11[%c0_37, %c0_38] : memref<8x256xbf16, #tpu.memory_space<vmem>>, vector<8x128xbf16>
    tpu.vector_store %arg11[%c0_37, %c0_38], %95 {strides = array<i32>} : memref<8x256xbf16, #tpu.memory_space<vmem>>, vector<8x128xbf16>,
    %c0_39 = arith.constant 0 : index
    %c0_40 = arith.constant 0 : index
    %97 = vector.load %arg11[%c0_39, %c0_40] : memref<8x256xbf16, #tpu.memory_space<vmem>>, vector<8x256xbf16>
    %c0_41 = arith.constant 0 : index
    %c0_42 = arith.constant 0 : index
    %98 = vector.load %arg5[%c0_41, %c0_42] : memref<256x512xbf16, #tpu.memory_space<vmem>>, vector<256x512xbf16>
    %cst_43 = arith.constant dense<0.000000e+00> : vector<8x512xf32>
    %99 = tpu.matmul %97, %98, %cst_43 {dimension_numbers = #tpu.dot_dimension_numbers<[1], [0], [0], [1], [0, 0, 1, 1], [], []>} : vector<8x256xbf16>, vector<256x512xbf16>, vector<8x512xf32> -> vector<8x512xf32>
    %100 = arith.addf %99, %12 : vector<8x512xf32>
    %101 = vector.extract_strided_slice %100 {offsets = [0, 0], sizes = [8, 256], strides = [1, 1]} : vector<8x512xf32> to vector<8x256xf32>
    %102 = arith.negf %101 : vector<8x256xf32>
    %103 = math.exp %102 : vector<8x256xf32>
    %cst_44 = arith.constant 1.000000e+00 : f32
    %104 = vector.broadcast %cst_44 : f32 to vector<8x256xf32>
    %105 = arith.addf %104, %103 : vector<8x256xf32>
    %106 = arith.divf %104, %105 : vector<8x256xf32>
    %107 = vector.extract_strided_slice %106 {offsets = [0, 0], sizes = [8, 128], strides = [1, 1]} : vector<8x256xf32> to vector<8x128xf32>
    %108 = vector.extract_strided_slice %106 {offsets = [0, 128], sizes = [8, 128], strides = [1, 1]} : vector<8x256xf32> to vector<8x128xf32>
    %109 = vector.extract_strided_slice %100 {offsets = [0, 256], sizes = [8, 128], strides = [1, 1]} : vector<8x512xf32> to vector<8x128xf32>
    %110 = math.tanh %109 : vector<8x128xf32>
    %111 = vector.extract_strided_slice %100 {offsets = [0, 384], sizes = [8, 128], strides = [1, 1]} : vector<8x512xf32> to vector<8x128xf32>
    %112 = arith.negf %111 : vector<8x128xf32>
    %113 = math.exp %112 : vector<8x128xf32>
    %cst_45 = arith.constant 1.000000e+00 : f32
    %114 = vector.broadcast %cst_45 : f32 to vector<8x128xf32>
    %115 = arith.addf %114, %113 : vector<8x128xf32>
    %116 = arith.divf %114, %115 : vector<8x128xf32>
    %117 = arith.mulf %108, %64 : vector<8x128xf32>
    %118 = arith.mulf %107, %110 : vector<8x128xf32>
    %119 = arith.addf %117, %118 : vector<8x128xf32>
    %120 = math.tanh %119 : vector<8x128xf32>
    %121 = arith.mulf %116, %120 : vector<8x128xf32>
    %122 = arith.truncf %121 : vector<8x128xf32> to vector<8x128xbf16>
    %c0_46 = arith.constant 0 : index
    %c128_47 = arith.constant 128 : index
    %123 = vector.load %arg11[%c0_46, %c128_47] : memref<8x256xbf16, #tpu.memory_space<vmem>>, vector<8x128xbf16>
    tpu.vector_store %arg11[%c0_46, %c128_47], %122 {strides = array<i32>} : memref<8x256xbf16, #tpu.memory_space<vmem>>, vector<8x128xbf16>,
    %c16 = arith.constant 16 : index
    %c0_48 = arith.constant 0 : index
    %124 = vector.load %arg10[%c16, %c0_48] : memref<64x512xf32, #tpu.memory_space<vmem>>, vector<8x512xf32>
    %125 = arith.truncf %94 : vector<8x128xf32> to vector<8x128xbf16>
    %c0_49 = arith.constant 0 : index
    %c0_50 = arith.constant 0 : index
    %126 = vector.load %arg3[%c0_49, %c0_50] : memref<128x512xbf16, #tpu.memory_space<vmem>>, vector<128x512xbf16>
    %cst_51 = arith.constant dense<0.000000e+00> : vector<8x512xf32>
    %127 = tpu.matmul %125, %126, %cst_51 {dimension_numbers = #tpu.dot_dimension_numbers<[1], [0], [0], [1], [0, 0, 1, 1], [], []>} : vector<8x128xbf16>, vector<128x512xbf16>, vector<8x512xf32> -> vector<8x512xf32>
    %128 = arith.addf %124, %127 : vector<8x512xf32>
    %129 = vector.extract_strided_slice %128 {offsets = [0, 0], sizes = [8, 256], strides = [1, 1]} : vector<8x512xf32> to vector<8x256xf32>
    %130 = arith.negf %129 : vector<8x256xf32>
    %131 = math.exp %130 : vector<8x256xf32>
    %cst_52 = arith.constant 1.000000e+00 : f32
    %132 = vector.broadcast %cst_52 : f32 to vector<8x256xf32>
    %133 = arith.addf %132, %131 : vector<8x256xf32>
    %134 = arith.divf %132, %133 : vector<8x256xf32>
    %135 = vector.extract_strided_slice %134 {offsets = [0, 0], sizes = [8, 128], strides = [1, 1]} : vector<8x256xf32> to vector<8x128xf32>
    %136 = vector.extract_strided_slice %134 {offsets = [0, 128], sizes = [8, 128], strides = [1, 1]} : vector<8x256xf32> to vector<8x128xf32>
    %137 = vector.extract_strided_slice %128 {offsets = [0, 256], sizes = [8, 128], strides = [1, 1]} : vector<8x512xf32> to vector<8x128xf32>
    %138 = math.tanh %137 : vector<8x128xf32>
    %139 = vector.extract_strided_slice %128 {offsets = [0, 384], sizes = [8, 128], strides = [1, 1]} : vector<8x512xf32> to vector<8x128xf32>
    %140 = arith.negf %139 : vector<8x128xf32>
    %141 = math.exp %140 : vector<8x128xf32>
    %cst_53 = arith.constant 1.000000e+00 : f32
    %142 = vector.broadcast %cst_53 : f32 to vector<8x128xf32>
    %143 = arith.addf %142, %141 : vector<8x128xf32>
    %144 = arith.divf %142, %143 : vector<8x128xf32>
    %145 = arith.mulf %136, %92 : vector<8x128xf32>
    %146 = arith.mulf %135, %138 : vector<8x128xf32>
    %147 = arith.addf %145, %146 : vector<8x128xf32>
    %148 = math.tanh %147 : vector<8x128xf32>
    %149 = arith.mulf %144, %148 : vector<8x128xf32>
    %150 = arith.truncf %149 : vector<8x128xf32> to vector<8x128xbf16>
    %c0_54 = arith.constant 0 : index
    %c0_55 = arith.constant 0 : index
    %151 = vector.load %arg11[%c0_54, %c0_55] : memref<8x256xbf16, #tpu.memory_space<vmem>>, vector<8x128xbf16>
    tpu.vector_store %arg11[%c0_54, %c0_55], %150 {strides = array<i32>} : memref<8x256xbf16, #tpu.memory_space<vmem>>, vector<8x128xbf16>,
    %c0_56 = arith.constant 0 : index
    %c0_57 = arith.constant 0 : index
    %152 = vector.load %arg11[%c0_56, %c0_57] : memref<8x256xbf16, #tpu.memory_space<vmem>>, vector<8x256xbf16>
    %c0_58 = arith.constant 0 : index
    %c0_59 = arith.constant 0 : index
    %153 = vector.load %arg5[%c0_58, %c0_59] : memref<256x512xbf16, #tpu.memory_space<vmem>>, vector<256x512xbf16>
    %cst_60 = arith.constant dense<0.000000e+00> : vector<8x512xf32>
    %154 = tpu.matmul %152, %153, %cst_60 {dimension_numbers = #tpu.dot_dimension_numbers<[1], [0], [0], [1], [0, 0, 1, 1], [], []>} : vector<8x256xbf16>, vector<256x512xbf16>, vector<8x512xf32> -> vector<8x512xf32>
    %155 = arith.addf %154, %12 : vector<8x512xf32>
    %156 = vector.extract_strided_slice %155 {offsets = [0, 0], sizes = [8, 256], strides = [1, 1]} : vector<8x512xf32> to vector<8x256xf32>
    %157 = arith.negf %156 : vector<8x256xf32>
    %158 = math.exp %157 : vector<8x256xf32>
    %cst_61 = arith.constant 1.000000e+00 : f32
    %159 = vector.broadcast %cst_61 : f32 to vector<8x256xf32>
    %160 = arith.addf %159, %158 : vector<8x256xf32>
    %161 = arith.divf %159, %160 : vector<8x256xf32>
    %162 = vector.extract_strided_slice %161 {offsets = [0, 0], sizes = [8, 128], strides = [1, 1]} : vector<8x256xf32> to vector<8x128xf32>
    %163 = vector.extract_strided_slice %161 {offsets = [0, 128], sizes = [8, 128], strides = [1, 1]} : vector<8x256xf32> to vector<8x128xf32>
    %164 = vector.extract_strided_slice %155 {offsets = [0, 256], sizes = [8, 128], strides = [1, 1]} : vector<8x512xf32> to vector<8x128xf32>
    %165 = math.tanh %164 : vector<8x128xf32>
    %166 = vector.extract_strided_slice %155 {offsets = [0, 384], sizes = [8, 128], strides = [1, 1]} : vector<8x512xf32> to vector<8x128xf32>
    %167 = arith.negf %166 : vector<8x128xf32>
    %168 = math.exp %167 : vector<8x128xf32>
    %cst_62 = arith.constant 1.000000e+00 : f32
    %169 = vector.broadcast %cst_62 : f32 to vector<8x128xf32>
    %170 = arith.addf %169, %168 : vector<8x128xf32>
    %171 = arith.divf %169, %170 : vector<8x128xf32>
    %172 = arith.mulf %163, %119 : vector<8x128xf32>
    %173 = arith.mulf %162, %165 : vector<8x128xf32>
    %174 = arith.addf %172, %173 : vector<8x128xf32>
    %175 = math.tanh %174 : vector<8x128xf32>
    %176 = arith.mulf %171, %175 : vector<8x128xf32>
    %177 = arith.truncf %176 : vector<8x128xf32> to vector<8x128xbf16>
    %c0_63 = arith.constant 0 : index
    %c128_64 = arith.constant 128 : index
    %178 = vector.load %arg11[%c0_63, %c128_64] : memref<8x256xbf16, #tpu.memory_space<vmem>>, vector<8x128xbf16>
    tpu.vector_store %arg11[%c0_63, %c128_64], %177 {strides = array<i32>} : memref<8x256xbf16, #tpu.memory_space<vmem>>, vector<8x128xbf16>,
    %c24 = arith.constant 24 : index
    %c0_65 = arith.constant 0 : index
    %179 = vector.load %arg10[%c24, %c0_65] : memref<64x512xf32, #tpu.memory_space<vmem>>, vector<8x512xf32>
    %180 = arith.truncf %149 : vector<8x128xf32> to vector<8x128xbf16>
    %c0_66 = arith.constant 0 : index
    %c0_67 = arith.constant 0 : index
    %181 = vector.load %arg3[%c0_66, %c0_67] : memref<128x512xbf16, #tpu.memory_space<vmem>>, vector<128x512xbf16>
    %cst_68 = arith.constant dense<0.000000e+00> : vector<8x512xf32>
    %182 = tpu.matmul %180, %181, %cst_68 {dimension_numbers = #tpu.dot_dimension_numbers<[1], [0], [0], [1], [0, 0, 1, 1], [], []>} : vector<8x128xbf16>, vector<128x512xbf16>, vector<8x512xf32> -> vector<8x512xf32>
    %183 = arith.addf %179, %182 : vector<8x512xf32>
    %184 = vector.extract_strided_slice %183 {offsets = [0, 0], sizes = [8, 256], strides = [1, 1]} : vector<8x512xf32> to vector<8x256xf32>
    %185 = arith.negf %184 : vector<8x256xf32>
    %186 = math.exp %185 : vector<8x256xf32>
    %cst_69 = arith.constant 1.000000e+00 : f32
    %187 = vector.broadcast %cst_69 : f32 to vector<8x256xf32>
    %188 = arith.addf %187, %186 : vector<8x256xf32>
    %189 = arith.divf %187, %188 : vector<8x256xf32>
    %190 = vector.extract_strided_slice %189 {offsets = [0, 0], sizes = [8, 128], strides = [1, 1]} : vector<8x256xf32> to vector<8x128xf32>
    %191 = vector.extract_strided_slice %189 {offsets = [0, 128], sizes = [8, 128], strides = [1, 1]} : vector<8x256xf32> to vector<8x128xf32>
    %192 = vector.extract_strided_slice %183 {offsets = [0, 256], sizes = [8, 128], strides = [1, 1]} : vector<8x512xf32> to vector<8x128xf32>
    %193 = math.tanh %192 : vector<8x128xf32>
    %194 = vector.extract_strided_slice %183 {offsets = [0, 384], sizes = [8, 128], strides = [1, 1]} : vector<8x512xf32> to vector<8x128xf32>
    %195 = arith.negf %194 : vector<8x128xf32>
    %196 = math.exp %195 : vector<8x128xf32>
    %cst_70 = arith.constant 1.000000e+00 : f32
    %197 = vector.broadcast %cst_70 : f32 to vector<8x128xf32>
    %198 = arith.addf %197, %196 : vector<8x128xf32>
    %199 = arith.divf %197, %198 : vector<8x128xf32>
    %200 = arith.mulf %191, %147 : vector<8x128xf32>
    %201 = arith.mulf %190, %193 : vector<8x128xf32>
    %202 = arith.addf %200, %201 : vector<8x128xf32>
    %203 = math.tanh %202 : vector<8x128xf32>
    %204 = arith.mulf %199, %203 : vector<8x128xf32>
    %205 = arith.truncf %204 : vector<8x128xf32> to vector<8x128xbf16>
    %c0_71 = arith.constant 0 : index
    %c0_72 = arith.constant 0 : index
    %206 = vector.load %arg11[%c0_71, %c0_72] : memref<8x256xbf16, #tpu.memory_space<vmem>>, vector<8x128xbf16>
    tpu.vector_store %arg11[%c0_71, %c0_72], %205 {strides = array<i32>} : memref<8x256xbf16, #tpu.memory_space<vmem>>, vector<8x128xbf16>,
    %c0_73 = arith.constant 0 : index
    %c0_74 = arith.constant 0 : index
    %207 = vector.load %arg11[%c0_73, %c0_74] : memref<8x256xbf16, #tpu.memory_space<vmem>>, vector<8x256xbf16>
    %c0_75 = arith.constant 0 : index
    %c0_76 = arith.constant 0 : index
    %208 = vector.load %arg5[%c0_75, %c0_76] : memref<256x512xbf16, #tpu.memory_space<vmem>>, vector<256x512xbf16>
    %cst_77 = arith.constant dense<0.000000e+00> : vector<8x512xf32>
    %209 = tpu.matmul %207, %208, %cst_77 {dimension_numbers = #tpu.dot_dimension_numbers<[1], [0], [0], [1], [0, 0, 1, 1], [], []>} : vector<8x256xbf16>, vector<256x512xbf16>, vector<8x512xf32> -> vector<8x512xf32>
    %210 = arith.addf %209, %12 : vector<8x512xf32>
    %211 = vector.extract_strided_slice %210 {offsets = [0, 0], sizes = [8, 256], strides = [1, 1]} : vector<8x512xf32> to vector<8x256xf32>
    %212 = arith.negf %211 : vector<8x256xf32>
    %213 = math.exp %212 : vector<8x256xf32>
    %cst_78 = arith.constant 1.000000e+00 : f32
    %214 = vector.broadcast %cst_78 : f32 to vector<8x256xf32>
    %215 = arith.addf %214, %213 : vector<8x256xf32>
    %216 = arith.divf %214, %215 : vector<8x256xf32>
    %217 = vector.extract_strided_slice %216 {offsets = [0, 0], sizes = [8, 128], strides = [1, 1]} : vector<8x256xf32> to vector<8x128xf32>
    %218 = vector.extract_strided_slice %216 {offsets = [0, 128], sizes = [8, 128], strides = [1, 1]} : vector<8x256xf32> to vector<8x128xf32>
    %219 = vector.extract_strided_slice %210 {offsets = [0, 256], sizes = [8, 128], strides = [1, 1]} : vector<8x512xf32> to vector<8x128xf32>
    %220 = math.tanh %219 : vector<8x128xf32>
    %221 = vector.extract_strided_slice %210 {offsets = [0, 384], sizes = [8, 128], strides = [1, 1]} : vector<8x512xf32> to vector<8x128xf32>
    %222 = arith.negf %221 : vector<8x128xf32>
    %223 = math.exp %222 : vector<8x128xf32>
    %cst_79 = arith.constant 1.000000e+00 : f32
    %224 = vector.broadcast %cst_79 : f32 to vector<8x128xf32>
    %225 = arith.addf %224, %223 : vector<8x128xf32>
    %226 = arith.divf %224, %225 : vector<8x128xf32>
    %227 = arith.mulf %218, %174 : vector<8x128xf32>
    %228 = arith.mulf %217, %220 : vector<8x128xf32>
    %229 = arith.addf %227, %228 : vector<8x128xf32>
    %230 = math.tanh %229 : vector<8x128xf32>
    %231 = arith.mulf %226, %230 : vector<8x128xf32>
    %232 = arith.truncf %231 : vector<8x128xf32> to vector<8x128xbf16>
    %c0_80 = arith.constant 0 : index
    %c128_81 = arith.constant 128 : index
    %233 = vector.load %arg11[%c0_80, %c128_81] : memref<8x256xbf16, #tpu.memory_space<vmem>>, vector<8x128xbf16>
    tpu.vector_store %arg11[%c0_80, %c128_81], %232 {strides = array<i32>} : memref<8x256xbf16, #tpu.memory_space<vmem>>, vector<8x128xbf16>,
    %c32 = arith.constant 32 : index
    %c0_82 = arith.constant 0 : index
    %234 = vector.load %arg10[%c32, %c0_82] : memref<64x512xf32, #tpu.memory_space<vmem>>, vector<8x512xf32>
    %235 = arith.truncf %204 : vector<8x128xf32> to vector<8x128xbf16>
    %c0_83 = arith.constant 0 : index
    %c0_84 = arith.constant 0 : index
    %236 = vector.load %arg3[%c0_83, %c0_84] : memref<128x512xbf16, #tpu.memory_space<vmem>>, vector<128x512xbf16>
    %cst_85 = arith.constant dense<0.000000e+00> : vector<8x512xf32>
    %237 = tpu.matmul %235, %236, %cst_85 {dimension_numbers = #tpu.dot_dimension_numbers<[1], [0], [0], [1], [0, 0, 1, 1], [], []>} : vector<8x128xbf16>, vector<128x512xbf16>, vector<8x512xf32> -> vector<8x512xf32>
    %238 = arith.addf %234, %237 : vector<8x512xf32>
    %239 = vector.extract_strided_slice %238 {offsets = [0, 0], sizes = [8, 256], strides = [1, 1]} : vector<8x512xf32> to vector<8x256xf32>
    %240 = arith.negf %239 : vector<8x256xf32>
    %241 = math.exp %240 : vector<8x256xf32>
    %cst_86 = arith.constant 1.000000e+00 : f32
    %242 = vector.broadcast %cst_86 : f32 to vector<8x256xf32>
    %243 = arith.addf %242, %241 : vector<8x256xf32>
    %244 = arith.divf %242, %243 : vector<8x256xf32>
    %245 = vector.extract_strided_slice %244 {offsets = [0, 0], sizes = [8, 128], strides = [1, 1]} : vector<8x256xf32> to vector<8x128xf32>
    %246 = vector.extract_strided_slice %244 {offsets = [0, 128], sizes = [8, 128], strides = [1, 1]} : vector<8x256xf32> to vector<8x128xf32>
    %247 = vector.extract_strided_slice %238 {offsets = [0, 256], sizes = [8, 128], strides = [1, 1]} : vector<8x512xf32> to vector<8x128xf32>
    %248 = math.tanh %247 : vector<8x128xf32>
    %249 = vector.extract_strided_slice %238 {offsets = [0, 384], sizes = [8, 128], strides = [1, 1]} : vector<8x512xf32> to vector<8x128xf32>
    %250 = arith.negf %249 : vector<8x128xf32>
    %251 = math.exp %250 : vector<8x128xf32>
    %cst_87 = arith.constant 1.000000e+00 : f32
    %252 = vector.broadcast %cst_87 : f32 to vector<8x128xf32>
    %253 = arith.addf %252, %251 : vector<8x128xf32>
    %254 = arith.divf %252, %253 : vector<8x128xf32>
    %255 = arith.mulf %246, %202 : vector<8x128xf32>
    %256 = arith.mulf %245, %248 : vector<8x128xf32>
    %257 = arith.addf %255, %256 : vector<8x128xf32>
    %258 = math.tanh %257 : vector<8x128xf32>
    %259 = arith.mulf %254, %258 : vector<8x128xf32>
    %260 = arith.truncf %259 : vector<8x128xf32> to vector<8x128xbf16>
    %c0_88 = arith.constant 0 : index
    %c0_89 = arith.constant 0 : index
    %261 = vector.load %arg11[%c0_88, %c0_89] : memref<8x256xbf16, #tpu.memory_space<vmem>>, vector<8x128xbf16>
    tpu.vector_store %arg11[%c0_88, %c0_89], %260 {strides = array<i32>} : memref<8x256xbf16, #tpu.memory_space<vmem>>, vector<8x128xbf16>,
    %c0_90 = arith.constant 0 : index
    %c0_91 = arith.constant 0 : index
    %262 = vector.load %arg11[%c0_90, %c0_91] : memref<8x256xbf16, #tpu.memory_space<vmem>>, vector<8x256xbf16>
    %c0_92 = arith.constant 0 : index
    %c0_93 = arith.constant 0 : index
    %263 = vector.load %arg5[%c0_92, %c0_93] : memref<256x512xbf16, #tpu.memory_space<vmem>>, vector<256x512xbf16>
    %cst_94 = arith.constant dense<0.000000e+00> : vector<8x512xf32>
    %264 = tpu.matmul %262, %263, %cst_94 {dimension_numbers = #tpu.dot_dimension_numbers<[1], [0], [0], [1], [0, 0, 1, 1], [], []>} : vector<8x256xbf16>, vector<256x512xbf16>, vector<8x512xf32> -> vector<8x512xf32>
    %265 = arith.addf %264, %12 : vector<8x512xf32>
    %266 = vector.extract_strided_slice %265 {offsets = [0, 0], sizes = [8, 256], strides = [1, 1]} : vector<8x512xf32> to vector<8x256xf32>
    %267 = arith.negf %266 : vector<8x256xf32>
    %268 = math.exp %267 : vector<8x256xf32>
    %cst_95 = arith.constant 1.000000e+00 : f32
    %269 = vector.broadcast %cst_95 : f32 to vector<8x256xf32>
    %270 = arith.addf %269, %268 : vector<8x256xf32>
    %271 = arith.divf %269, %270 : vector<8x256xf32>
    %272 = vector.extract_strided_slice %271 {offsets = [0, 0], sizes = [8, 128], strides = [1, 1]} : vector<8x256xf32> to vector<8x128xf32>
    %273 = vector.extract_strided_slice %271 {offsets = [0, 128], sizes = [8, 128], strides = [1, 1]} : vector<8x256xf32> to vector<8x128xf32>
    %274 = vector.extract_strided_slice %265 {offsets = [0, 256], sizes = [8, 128], strides = [1, 1]} : vector<8x512xf32> to vector<8x128xf32>
    %275 = math.tanh %274 : vector<8x128xf32>
    %276 = vector.extract_strided_slice %265 {offsets = [0, 384], sizes = [8, 128], strides = [1, 1]} : vector<8x512xf32> to vector<8x128xf32>
    %277 = arith.negf %276 : vector<8x128xf32>
    %278 = math.exp %277 : vector<8x128xf32>
    %cst_96 = arith.constant 1.000000e+00 : f32
    %279 = vector.broadcast %cst_96 : f32 to vector<8x128xf32>
    %280 = arith.addf %279, %278 : vector<8x128xf32>
    %281 = arith.divf %279, %280 : vector<8x128xf32>
    %282 = arith.mulf %273, %229 : vector<8x128xf32>
    %283 = arith.mulf %272, %275 : vector<8x128xf32>
    %284 = arith.addf %282, %283 : vector<8x128xf32>
    %285 = math.tanh %284 : vector<8x128xf32>
    %286 = arith.mulf %281, %285 : vector<8x128xf32>
    %287 = arith.truncf %286 : vector<8x128xf32> to vector<8x128xbf16>
    %c0_97 = arith.constant 0 : index
    %c128_98 = arith.constant 128 : index
    %288 = vector.load %arg11[%c0_97, %c128_98] : memref<8x256xbf16, #tpu.memory_space<vmem>>, vector<8x128xbf16>
    tpu.vector_store %arg11[%c0_97, %c128_98], %287 {strides = array<i32>} : memref<8x256xbf16, #tpu.memory_space<vmem>>, vector<8x128xbf16>,
    %c40 = arith.constant 40 : index
    %c0_99 = arith.constant 0 : index
    %289 = vector.load %arg10[%c40, %c0_99] : memref<64x512xf32, #tpu.memory_space<vmem>>, vector<8x512xf32>
    %290 = arith.truncf %259 : vector<8x128xf32> to vector<8x128xbf16>
    %c0_100 = arith.constant 0 : index
    %c0_101 = arith.constant 0 : index
    %291 = vector.load %arg3[%c0_100, %c0_101] : memref<128x512xbf16, #tpu.memory_space<vmem>>, vector<128x512xbf16>
    %cst_102 = arith.constant dense<0.000000e+00> : vector<8x512xf32>
    %292 = tpu.matmul %290, %291, %cst_102 {dimension_numbers = #tpu.dot_dimension_numbers<[1], [0], [0], [1], [0, 0, 1, 1], [], []>} : vector<8x128xbf16>, vector<128x512xbf16>, vector<8x512xf32> -> vector<8x512xf32>
    %293 = arith.addf %289, %292 : vector<8x512xf32>
    %294 = vector.extract_strided_slice %293 {offsets = [0, 0], sizes = [8, 256], strides = [1, 1]} : vector<8x512xf32> to vector<8x256xf32>
    %295 = arith.negf %294 : vector<8x256xf32>
    %296 = math.exp %295 : vector<8x256xf32>
    %cst_103 = arith.constant 1.000000e+00 : f32
    %297 = vector.broadcast %cst_103 : f32 to vector<8x256xf32>
    %298 = arith.addf %297, %296 : vector<8x256xf32>
    %299 = arith.divf %297, %298 : vector<8x256xf32>
    %300 = vector.extract_strided_slice %299 {offsets = [0, 0], sizes = [8, 128], strides = [1, 1]} : vector<8x256xf32> to vector<8x128xf32>
    %301 = vector.extract_strided_slice %299 {offsets = [0, 128], sizes = [8, 128], strides = [1, 1]} : vector<8x256xf32> to vector<8x128xf32>
    %302 = vector.extract_strided_slice %293 {offsets = [0, 256], sizes = [8, 128], strides = [1, 1]} : vector<8x512xf32> to vector<8x128xf32>
    %303 = math.tanh %302 : vector<8x128xf32>
    %304 = vector.extract_strided_slice %293 {offsets = [0, 384], sizes = [8, 128], strides = [1, 1]} : vector<8x512xf32> to vector<8x128xf32>
    %305 = arith.negf %304 : vector<8x128xf32>
    %306 = math.exp %305 : vector<8x128xf32>
    %cst_104 = arith.constant 1.000000e+00 : f32
    %307 = vector.broadcast %cst_104 : f32 to vector<8x128xf32>
    %308 = arith.addf %307, %306 : vector<8x128xf32>
    %309 = arith.divf %307, %308 : vector<8x128xf32>
    %310 = arith.mulf %301, %257 : vector<8x128xf32>
    %311 = arith.mulf %300, %303 : vector<8x128xf32>
    %312 = arith.addf %310, %311 : vector<8x128xf32>
    %313 = math.tanh %312 : vector<8x128xf32>
    %314 = arith.mulf %309, %313 : vector<8x128xf32>
    %315 = arith.truncf %314 : vector<8x128xf32> to vector<8x128xbf16>
    %c0_105 = arith.constant 0 : index
    %c0_106 = arith.constant 0 : index
    %316 = vector.load %arg11[%c0_105, %c0_106] : memref<8x256xbf16, #tpu.memory_space<vmem>>, vector<8x128xbf16>
    tpu.vector_store %arg11[%c0_105, %c0_106], %315 {strides = array<i32>} : memref<8x256xbf16, #tpu.memory_space<vmem>>, vector<8x128xbf16>,
    %c0_107 = arith.constant 0 : index
    %c0_108 = arith.constant 0 : index
    %317 = vector.load %arg11[%c0_107, %c0_108] : memref<8x256xbf16, #tpu.memory_space<vmem>>, vector<8x256xbf16>
    %c0_109 = arith.constant 0 : index
    %c0_110 = arith.constant 0 : index
    %318 = vector.load %arg5[%c0_109, %c0_110] : memref<256x512xbf16, #tpu.memory_space<vmem>>, vector<256x512xbf16>
    %cst_111 = arith.constant dense<0.000000e+00> : vector<8x512xf32>
    %319 = tpu.matmul %317, %318, %cst_111 {dimension_numbers = #tpu.dot_dimension_numbers<[1], [0], [0], [1], [0, 0, 1, 1], [], []>} : vector<8x256xbf16>, vector<256x512xbf16>, vector<8x512xf32> -> vector<8x512xf32>
    %320 = arith.addf %319, %12 : vector<8x512xf32>
    %321 = vector.extract_strided_slice %320 {offsets = [0, 0], sizes = [8, 256], strides = [1, 1]} : vector<8x512xf32> to vector<8x256xf32>
    %322 = arith.negf %321 : vector<8x256xf32>
    %323 = math.exp %322 : vector<8x256xf32>
    %cst_112 = arith.constant 1.000000e+00 : f32
    %324 = vector.broadcast %cst_112 : f32 to vector<8x256xf32>
    %325 = arith.addf %324, %323 : vector<8x256xf32>
    %326 = arith.divf %324, %325 : vector<8x256xf32>
    %327 = vector.extract_strided_slice %326 {offsets = [0, 0], sizes = [8, 128], strides = [1, 1]} : vector<8x256xf32> to vector<8x128xf32>
    %328 = vector.extract_strided_slice %326 {offsets = [0, 128], sizes = [8, 128], strides = [1, 1]} : vector<8x256xf32> to vector<8x128xf32>
    %329 = vector.extract_strided_slice %320 {offsets = [0, 256], sizes = [8, 128], strides = [1, 1]} : vector<8x512xf32> to vector<8x128xf32>
    %330 = math.tanh %329 : vector<8x128xf32>
    %331 = vector.extract_strided_slice %320 {offsets = [0, 384], sizes = [8, 128], strides = [1, 1]} : vector<8x512xf32> to vector<8x128xf32>
    %332 = arith.negf %331 : vector<8x128xf32>
    %333 = math.exp %332 : vector<8x128xf32>
    %cst_113 = arith.constant 1.000000e+00 : f32
    %334 = vector.broadcast %cst_113 : f32 to vector<8x128xf32>
    %335 = arith.addf %334, %333 : vector<8x128xf32>
    %336 = arith.divf %334, %335 : vector<8x128xf32>
    %337 = arith.mulf %328, %284 : vector<8x128xf32>
    %338 = arith.mulf %327, %330 : vector<8x128xf32>
    %339 = arith.addf %337, %338 : vector<8x128xf32>
    %340 = math.tanh %339 : vector<8x128xf32>
    %341 = arith.mulf %336, %340 : vector<8x128xf32>
    %342 = arith.truncf %341 : vector<8x128xf32> to vector<8x128xbf16>
    %c0_114 = arith.constant 0 : index
    %c128_115 = arith.constant 128 : index
    %343 = vector.load %arg11[%c0_114, %c128_115] : memref<8x256xbf16, #tpu.memory_space<vmem>>, vector<8x128xbf16>
    tpu.vector_store %arg11[%c0_114, %c128_115], %342 {strides = array<i32>} : memref<8x256xbf16, #tpu.memory_space<vmem>>, vector<8x128xbf16>,
    %c48 = arith.constant 48 : index
    %c0_116 = arith.constant 0 : index
    %344 = vector.load %arg10[%c48, %c0_116] : memref<64x512xf32, #tpu.memory_space<vmem>>, vector<8x512xf32>
    %345 = arith.truncf %314 : vector<8x128xf32> to vector<8x128xbf16>
    %c0_117 = arith.constant 0 : index
    %c0_118 = arith.constant 0 : index
    %346 = vector.load %arg3[%c0_117, %c0_118] : memref<128x512xbf16, #tpu.memory_space<vmem>>, vector<128x512xbf16>
    %cst_119 = arith.constant dense<0.000000e+00> : vector<8x512xf32>
    %347 = tpu.matmul %345, %346, %cst_119 {dimension_numbers = #tpu.dot_dimension_numbers<[1], [0], [0], [1], [0, 0, 1, 1], [], []>} : vector<8x128xbf16>, vector<128x512xbf16>, vector<8x512xf32> -> vector<8x512xf32>
    %348 = arith.addf %344, %347 : vector<8x512xf32>
    %349 = vector.extract_strided_slice %348 {offsets = [0, 0], sizes = [8, 256], strides = [1, 1]} : vector<8x512xf32> to vector<8x256xf32>
    %350 = arith.negf %349 : vector<8x256xf32>
    %351 = math.exp %350 : vector<8x256xf32>
    %cst_120 = arith.constant 1.000000e+00 : f32
    %352 = vector.broadcast %cst_120 : f32 to vector<8x256xf32>
    %353 = arith.addf %352, %351 : vector<8x256xf32>
    %354 = arith.divf %352, %353 : vector<8x256xf32>
    %355 = vector.extract_strided_slice %354 {offsets = [0, 0], sizes = [8, 128], strides = [1, 1]} : vector<8x256xf32> to vector<8x128xf32>
    %356 = vector.extract_strided_slice %354 {offsets = [0, 128], sizes = [8, 128], strides = [1, 1]} : vector<8x256xf32> to vector<8x128xf32>
    %357 = vector.extract_strided_slice %348 {offsets = [0, 256], sizes = [8, 128], strides = [1, 1]} : vector<8x512xf32> to vector<8x128xf32>
    %358 = math.tanh %357 : vector<8x128xf32>
    %359 = vector.extract_strided_slice %348 {offsets = [0, 384], sizes = [8, 128], strides = [1, 1]} : vector<8x512xf32> to vector<8x128xf32>
    %360 = arith.negf %359 : vector<8x128xf32>
    %361 = math.exp %360 : vector<8x128xf32>
    %cst_121 = arith.constant 1.000000e+00 : f32
    %362 = vector.broadcast %cst_121 : f32 to vector<8x128xf32>
    %363 = arith.addf %362, %361 : vector<8x128xf32>
    %364 = arith.divf %362, %363 : vector<8x128xf32>
    %365 = arith.mulf %356, %312 : vector<8x128xf32>
    %366 = arith.mulf %355, %358 : vector<8x128xf32>
    %367 = arith.addf %365, %366 : vector<8x128xf32>
    %368 = math.tanh %367 : vector<8x128xf32>
    %369 = arith.mulf %364, %368 : vector<8x128xf32>
    %370 = arith.truncf %369 : vector<8x128xf32> to vector<8x128xbf16>
    %c0_122 = arith.constant 0 : index
    %c0_123 = arith.constant 0 : index
    %371 = vector.load %arg11[%c0_122, %c0_123] : memref<8x256xbf16, #tpu.memory_space<vmem>>, vector<8x128xbf16>
    tpu.vector_store %arg11[%c0_122, %c0_123], %370 {strides = array<i32>} : memref<8x256xbf16, #tpu.memory_space<vmem>>, vector<8x128xbf16>,
    %c0_124 = arith.constant 0 : index
    %c0_125 = arith.constant 0 : index
    %372 = vector.load %arg11[%c0_124, %c0_125] : memref<8x256xbf16, #tpu.memory_space<vmem>>, vector<8x256xbf16>
    %c0_126 = arith.constant 0 : index
    %c0_127 = arith.constant 0 : index
    %373 = vector.load %arg5[%c0_126, %c0_127] : memref<256x512xbf16, #tpu.memory_space<vmem>>, vector<256x512xbf16>
    %cst_128 = arith.constant dense<0.000000e+00> : vector<8x512xf32>
    %374 = tpu.matmul %372, %373, %cst_128 {dimension_numbers = #tpu.dot_dimension_numbers<[1], [0], [0], [1], [0, 0, 1, 1], [], []>} : vector<8x256xbf16>, vector<256x512xbf16>, vector<8x512xf32> -> vector<8x512xf32>
    %375 = arith.addf %374, %12 : vector<8x512xf32>
    %376 = vector.extract_strided_slice %375 {offsets = [0, 0], sizes = [8, 256], strides = [1, 1]} : vector<8x512xf32> to vector<8x256xf32>
    %377 = arith.negf %376 : vector<8x256xf32>
    %378 = math.exp %377 : vector<8x256xf32>
    %cst_129 = arith.constant 1.000000e+00 : f32
    %379 = vector.broadcast %cst_129 : f32 to vector<8x256xf32>
    %380 = arith.addf %379, %378 : vector<8x256xf32>
    %381 = arith.divf %379, %380 : vector<8x256xf32>
    %382 = vector.extract_strided_slice %381 {offsets = [0, 0], sizes = [8, 128], strides = [1, 1]} : vector<8x256xf32> to vector<8x128xf32>
    %383 = vector.extract_strided_slice %381 {offsets = [0, 128], sizes = [8, 128], strides = [1, 1]} : vector<8x256xf32> to vector<8x128xf32>
    %384 = vector.extract_strided_slice %375 {offsets = [0, 256], sizes = [8, 128], strides = [1, 1]} : vector<8x512xf32> to vector<8x128xf32>
    %385 = math.tanh %384 : vector<8x128xf32>
    %386 = vector.extract_strided_slice %375 {offsets = [0, 384], sizes = [8, 128], strides = [1, 1]} : vector<8x512xf32> to vector<8x128xf32>
    %387 = arith.negf %386 : vector<8x128xf32>
    %388 = math.exp %387 : vector<8x128xf32>
    %cst_130 = arith.constant 1.000000e+00 : f32
    %389 = vector.broadcast %cst_130 : f32 to vector<8x128xf32>
    %390 = arith.addf %389, %388 : vector<8x128xf32>
    %391 = arith.divf %389, %390 : vector<8x128xf32>
    %392 = arith.mulf %383, %339 : vector<8x128xf32>
    %393 = arith.mulf %382, %385 : vector<8x128xf32>
    %394 = arith.addf %392, %393 : vector<8x128xf32>
    %395 = math.tanh %394 : vector<8x128xf32>
    %396 = arith.mulf %391, %395 : vector<8x128xf32>
    %397 = arith.truncf %396 : vector<8x128xf32> to vector<8x128xbf16>
    %c0_131 = arith.constant 0 : index
    %c128_132 = arith.constant 128 : index
    %398 = vector.load %arg11[%c0_131, %c128_132] : memref<8x256xbf16, #tpu.memory_space<vmem>>, vector<8x128xbf16>
    tpu.vector_store %arg11[%c0_131, %c128_132], %397 {strides = array<i32>} : memref<8x256xbf16, #tpu.memory_space<vmem>>, vector<8x128xbf16>,
    %c56 = arith.constant 56 : index
    %c0_133 = arith.constant 0 : index
    %399 = vector.load %arg10[%c56, %c0_133] : memref<64x512xf32, #tpu.memory_space<vmem>>, vector<8x512xf32>
    %400 = arith.truncf %369 : vector<8x128xf32> to vector<8x128xbf16>
    %c0_134 = arith.constant 0 : index
    %c0_135 = arith.constant 0 : index
    %401 = vector.load %arg3[%c0_134, %c0_135] : memref<128x512xbf16, #tpu.memory_space<vmem>>, vector<128x512xbf16>
    %cst_136 = arith.constant dense<0.000000e+00> : vector<8x512xf32>
    %402 = tpu.matmul %400, %401, %cst_136 {dimension_numbers = #tpu.dot_dimension_numbers<[1], [0], [0], [1], [0, 0, 1, 1], [], []>} : vector<8x128xbf16>, vector<128x512xbf16>, vector<8x512xf32> -> vector<8x512xf32>
    %403 = arith.addf %399, %402 : vector<8x512xf32>
    %404 = vector.extract_strided_slice %403 {offsets = [0, 0], sizes = [8, 256], strides = [1, 1]} : vector<8x512xf32> to vector<8x256xf32>
    %405 = arith.negf %404 : vector<8x256xf32>
    %406 = math.exp %405 : vector<8x256xf32>
    %cst_137 = arith.constant 1.000000e+00 : f32
    %407 = vector.broadcast %cst_137 : f32 to vector<8x256xf32>
    %408 = arith.addf %407, %406 : vector<8x256xf32>
    %409 = arith.divf %407, %408 : vector<8x256xf32>
    %410 = vector.extract_strided_slice %409 {offsets = [0, 0], sizes = [8, 128], strides = [1, 1]} : vector<8x256xf32> to vector<8x128xf32>
    %411 = vector.extract_strided_slice %409 {offsets = [0, 128], sizes = [8, 128], strides = [1, 1]} : vector<8x256xf32> to vector<8x128xf32>
    %412 = vector.extract_strided_slice %403 {offsets = [0, 256], sizes = [8, 128], strides = [1, 1]} : vector<8x512xf32> to vector<8x128xf32>
    %413 = math.tanh %412 : vector<8x128xf32>
    %414 = vector.extract_strided_slice %403 {offsets = [0, 384], sizes = [8, 128], strides = [1, 1]} : vector<8x512xf32> to vector<8x128xf32>
    %415 = arith.negf %414 : vector<8x128xf32>
    %416 = math.exp %415 : vector<8x128xf32>
    %cst_138 = arith.constant 1.000000e+00 : f32
    %417 = vector.broadcast %cst_138 : f32 to vector<8x128xf32>
    %418 = arith.addf %417, %416 : vector<8x128xf32>
    %419 = arith.divf %417, %418 : vector<8x128xf32>
    %420 = arith.mulf %411, %367 : vector<8x128xf32>
    %421 = arith.mulf %410, %413 : vector<8x128xf32>
    %422 = arith.addf %420, %421 : vector<8x128xf32>
    %423 = math.tanh %422 : vector<8x128xf32>
    %424 = arith.mulf %419, %423 : vector<8x128xf32>
    %425 = arith.truncf %424 : vector<8x128xf32> to vector<8x128xbf16>
    %c0_139 = arith.constant 0 : index
    %c0_140 = arith.constant 0 : index
    %426 = vector.load %arg11[%c0_139, %c0_140] : memref<8x256xbf16, #tpu.memory_space<vmem>>, vector<8x128xbf16>
    tpu.vector_store %arg11[%c0_139, %c0_140], %425 {strides = array<i32>} : memref<8x256xbf16, #tpu.memory_space<vmem>>, vector<8x128xbf16>,
    %c0_141 = arith.constant 0 : index
    %c0_142 = arith.constant 0 : index
    %427 = vector.load %arg11[%c0_141, %c0_142] : memref<8x256xbf16, #tpu.memory_space<vmem>>, vector<8x256xbf16>
    %c0_143 = arith.constant 0 : index
    %c0_144 = arith.constant 0 : index
    %428 = vector.load %arg5[%c0_143, %c0_144] : memref<256x512xbf16, #tpu.memory_space<vmem>>, vector<256x512xbf16>
    %cst_145 = arith.constant dense<0.000000e+00> : vector<8x512xf32>
    %429 = tpu.matmul %427, %428, %cst_145 {dimension_numbers = #tpu.dot_dimension_numbers<[1], [0], [0], [1], [0, 0, 1, 1], [], []>} : vector<8x256xbf16>, vector<256x512xbf16>, vector<8x512xf32> -> vector<8x512xf32>
    %430 = arith.addf %429, %12 : vector<8x512xf32>
    %431 = vector.extract_strided_slice %430 {offsets = [0, 0], sizes = [8, 256], strides = [1, 1]} : vector<8x512xf32> to vector<8x256xf32>
    %432 = arith.negf %431 : vector<8x256xf32>
    %433 = math.exp %432 : vector<8x256xf32>
    %cst_146 = arith.constant 1.000000e+00 : f32
    %434 = vector.broadcast %cst_146 : f32 to vector<8x256xf32>
    %435 = arith.addf %434, %433 : vector<8x256xf32>
    %436 = arith.divf %434, %435 : vector<8x256xf32>
    %437 = vector.extract_strided_slice %436 {offsets = [0, 0], sizes = [8, 128], strides = [1, 1]} : vector<8x256xf32> to vector<8x128xf32>
    %438 = vector.extract_strided_slice %436 {offsets = [0, 128], sizes = [8, 128], strides = [1, 1]} : vector<8x256xf32> to vector<8x128xf32>
    %439 = vector.extract_strided_slice %430 {offsets = [0, 256], sizes = [8, 128], strides = [1, 1]} : vector<8x512xf32> to vector<8x128xf32>
    %440 = math.tanh %439 : vector<8x128xf32>
    %441 = vector.extract_strided_slice %430 {offsets = [0, 384], sizes = [8, 128], strides = [1, 1]} : vector<8x512xf32> to vector<8x128xf32>
    %442 = arith.negf %441 : vector<8x128xf32>
    %443 = math.exp %442 : vector<8x128xf32>
    %cst_147 = arith.constant 1.000000e+00 : f32
    %444 = vector.broadcast %cst_147 : f32 to vector<8x128xf32>
    %445 = arith.addf %444, %443 : vector<8x128xf32>
    %446 = arith.divf %444, %445 : vector<8x128xf32>
    %447 = arith.mulf %438, %394 : vector<8x128xf32>
    %448 = arith.mulf %437, %440 : vector<8x128xf32>
    %449 = arith.addf %447, %448 : vector<8x128xf32>
    %450 = math.tanh %449 : vector<8x128xf32>
    %451 = arith.mulf %446, %450 : vector<8x128xf32>
    %452 = arith.truncf %451 : vector<8x128xf32> to vector<8x128xbf16>
    %c0_148 = arith.constant 0 : index
    %c128_149 = arith.constant 128 : index
    %453 = vector.load %arg11[%c0_148, %c128_149] : memref<8x256xbf16, #tpu.memory_space<vmem>>, vector<8x128xbf16>
    tpu.vector_store %arg11[%c0_148, %c128_149], %452 {strides = array<i32>} : memref<8x256xbf16, #tpu.memory_space<vmem>>, vector<8x128xbf16>,
    %c0_150 = arith.constant 0 : index
    %c0_151 = arith.constant 0 : index
    %454 = vector.load %arg7[%c0_150, %c0_151] : memref<1x128xf32, #tpu.memory_space<vmem>>, vector<1x128xf32>
    %455 = vector.broadcast %454 : vector<1x128xf32> to vector<8x128xf32>
    %456 = arith.mulf %451, %455 : vector<8x128xf32>
    %cst_152 = arith.constant dense<0.000000e+00> : vector<8xf32>
    %457 = vector.multi_reduction <add>, %456, %cst_152 [1] : vector<8x128xf32> to vector<8xf32>
    %458 = vector.shape_cast %457 : vector<8xf32> to vector<8x1xf32>
    %c0_153 = arith.constant 0 : index
    %c0_154 = arith.constant 0 : index
    %459 = vector.load %arg8[%c0_153, %c0_154] : memref<1x1xf32, #tpu.memory_space<vmem>>, vector<1x1xf32>
    %460 = vector.broadcast %459 : vector<1x1xf32> to vector<8x1xf32>
    %461 = arith.addf %458, %460 : vector<8x1xf32>
    %c0_155 = arith.constant 0 : index
    %c0_156 = arith.constant 0 : index
    %462 = vector.load %arg9[%c0_155, %c0_156] : memref<8x1xf32, #tpu.memory_space<vmem>>, vector<8x1xf32>
    tpu.vector_store %arg9[%c0_155, %c0_156], %461 {strides = array<i32>} : memref<8x1xf32, #tpu.memory_space<vmem>>, vector<8x1xf32>,
    return
  }
  func.func @transform_0(%arg0: i32) -> (i32, i32, i32) {
    %c0_i32 = arith.constant 0 : i32
    %c0_i32_0 = arith.constant 0 : i32
    %c0_i32_1 = arith.constant 0 : i32
    return %arg0, %c0_i32, %c0_i32_0 : i32, i32, i32
  }
  func.func @transform_1(%arg0: i32) -> (i32, i32) {
    %c0_i32 = arith.constant 0 : i32
    %c0_i32_0 = arith.constant 0 : i32
    %c0_i32_1 = arith.constant 0 : i32
    return %c0_i32, %c0_i32_0 : i32, i32
  }
  func.func @transform_2(%arg0: i32) -> (i32, i32) {
    %c0_i32 = arith.constant 0 : i32
    %c0_i32_0 = arith.constant 0 : i32
    %c0_i32_1 = arith.constant 0 : i32
    return %c0_i32, %c0_i32_0 : i32, i32
  }
  func.func @transform_3(%arg0: i32) -> (i32, i32) {
    %c0_i32 = arith.constant 0 : i32
    %c0_i32_0 = arith.constant 0 : i32
    %c0_i32_1 = arith.constant 0 : i32
    return %c0_i32, %c0_i32_0 : i32, i32
  }
  func.func @transform_4(%arg0: i32) -> (i32, i32) {
    %c0_i32 = arith.constant 0 : i32
    %c0_i32_0 = arith.constant 0 : i32
    %c0_i32_1 = arith.constant 0 : i32
    return %c0_i32, %c0_i32_0 : i32, i32
  }
  func.func @transform_5(%arg0: i32) -> (i32, i32) {
    %c0_i32 = arith.constant 0 : i32
    %c0_i32_0 = arith.constant 0 : i32
    %c0_i32_1 = arith.constant 0 : i32
    return %c0_i32, %c0_i32_0 : i32, i32
  }
  func.func @transform_6(%arg0: i32) -> (i32, i32) {
    %c0_i32 = arith.constant 0 : i32
    %c0_i32_0 = arith.constant 0 : i32
    %c0_i32_1 = arith.constant 0 : i32
    return %c0_i32, %c0_i32_0 : i32, i32
  }
  func.func @transform_7(%arg0: i32) -> (i32, i32) {
    %c0_i32 = arith.constant 0 : i32
    %c0_i32_0 = arith.constant 0 : i32
    %c0_i32_1 = arith.constant 0 : i32
    return %c0_i32, %c0_i32_0 : i32, i32
  }
  func.func @transform_8(%arg0: i32) -> (i32, i32) {
    %c0_i32 = arith.constant 0 : i32
    %c0_i32_0 = arith.constant 0 : i32
    return %arg0, %c0_i32 : i32, i32
  }
}

</mosaic_0001>

<llo_original>
// kernel: tpu_custom_call.1
$region0: #{tpu_custom_call.1}
  #allocation0 [shape = 'u32[]', space=smem, size = 0x4, offset = 0x4, fixed_abs, tag = 'smem constant byte address 0x4 - core index']
  #allocation1 [shape = 'u32[72,128]{1,0:T(1,128)}', space=vmem, size = 0x9000, scoped, tag = 'internal scratch']
  #allocation2 [shape = 'f32[64,512]{1,0:T(8,128)}', space=vmem, size = 0x20000, scoped, tag = 'scratch operand']
  #allocation3 [shape = 'bf16[8,256]{1,0:T(8,128)(2,1)}', space=vmem, size = 0x1000, scoped, tag = 'scratch operand']
  #allocation4 [shape = 'f32[1,1]{1,0:T(1,128)S(1)}', space=vmem, size = 0x200, scoped, tag = 'scoped memory for tpu_custom_call.1']
  %s0 = inlined_call_operand.vmem [shape: bf16[1,64,16], index: 0, kind: input, shape index: {}]
  %s1 = inlined_call_operand.vmem [shape: bf16[16,512], index: 1, kind: input, shape index: {}]
  %s2 = inlined_call_operand.hbm [shape: bf16[128,512], index: 2, kind: input, shape index: {}]
  %s3 = inlined_call_operand.vmem [shape: f32[1,512], index: 3, kind: input, shape index: {}]
  %s4 = inlined_call_operand.hbm [shape: bf16[256,512], index: 4, kind: input, shape index: {}]
  %s5 = inlined_call_operand.vmem [shape: f32[1,512], index: 5, kind: input, shape index: {}]
  %s6 = inlined_call_operand.vmem [shape: f32[1,128], index: 6, kind: input, shape index: {}]
  %s7 = inlined_call_operand.<no memory space> [shape: f32[1,1], index: 7, kind: input, shape index: {}]
  %s8 = inlined_call_operand.vmem [shape: f32[8,1], index: 8, kind: output, shape index: {}]
  %s9 = sld [smem:[#allocation0]]
  $region50: #{tpu_custom_call.1} parent=0
    _
  %s11 = ssub.s32 1, %s9
  %s12 = scalar_select 0, %s11, %s9
  %v13 = vstv %s7
  %14 = vst [vmem:[#allocation4] sm:$0x1] %v13
  $region1: #{tpu_custom_call.1} parent=0
    #allocation5 [shape = 'u8[131072]{0}', space=vmem, size = 0x20000, scoped, tag = 'input window, operand 2, single buffered']
    #allocation6 [shape = 's32[1]{0}', space=sflag, size = 0x4, scoped, tag = 'scoped memory for tpu_custom_call.1']
    #allocation7 [shape = 'u8[262144]{0}', space=vmem, size = 0x40000, scoped, tag = 'input window, operand 4, single buffered']
    #allocation8 [shape = 's32[1]{0}', space=sflag, size = 0x4, scoped, tag = 'scoped memory for tpu_custom_call.1']
    %15 = vsyncpa [#allocation6], 0
    %16 = vsyncpa [#allocation8], 0
    // Predicated region
    $region2: #{tpu_custom_call.1} parent=1 // pred_check
      _
    $region3: #{tpu_custom_call.1} parent=1 // pred_check_branch
      %18 = sbr.rel (0) target = $region5
    $region4: #{tpu_custom_call.1} parent=1 // pred_region
      _
    $region5: #{tpu_custom_call.1} parent=1 // pred_fallthru
      _
    // Predicated region
    $region6: #{tpu_custom_call.1} parent=1 // pred_check
      _
    $region7: #{tpu_custom_call.1} parent=1 // pred_check_branch
      %20 = sbr.rel (0) target = $region9
    $region8: #{tpu_custom_call.1} parent=1 // pred_region
      _
    $region9: #{tpu_custom_call.1} parent=1 // pred_fallthru
      _
    // Predicated region
    $region10: #{tpu_custom_call.1} parent=1 // pred_check
      _
    $region11: #{tpu_custom_call.1} parent=1 // pred_check_branch
      %22 = sbr.rel (0) target = $region13
    $region12: #{tpu_custom_call.1} parent=1 // pred_region
      %24 = vsyncadd [#allocation6], 0
      %s25 = sshll.u32 %s2, 4
      %s26 = int_to_ptr.hbm [resolvable:$true] %s25
      %s27 = sshll.u32 [#allocation5], 4
      %s28 = int_to_ptr.vmem [resolvable:$true] %s27
      %33 = dma.hbm_to_vmem [thread:$0]  %s26, 4096, %s28, [#allocation6], 256, 256, 16
    $region13: #{tpu_custom_call.1} parent=1 // pred_fallthru
      _
    // Predicated region
    $region14: #{tpu_custom_call.1} parent=1 // pred_check
      _
    $region15: #{tpu_custom_call.1} parent=1 // pred_check_branch
      %35 = sbr.rel (0) target = $region17
    $region16: #{tpu_custom_call.1} parent=1 // pred_region
      _
    $region17: #{tpu_custom_call.1} parent=1 // pred_fallthru
      _
    // Predicated region
    $region18: #{tpu_custom_call.1} parent=1 // pred_check
      _
    $region19: #{tpu_custom_call.1} parent=1 // pred_check_branch
      %37 = sbr.rel (0) target = $region21
    $region20: #{tpu_custom_call.1} parent=1 // pred_region
      %39 = vsyncadd [#allocation8], 0
      %s40 = sshll.u32 %s4, 4
      %s41 = int_to_ptr.hbm [resolvable:$true] %s40
      %s42 = sshll.u32 [#allocation7], 4
      %s43 = int_to_ptr.vmem [resolvable:$true] %s42
      %48 = dma.hbm_to_vmem [thread:$0]  %s41, 8192, %s43, [#allocation8], 256, 256, 16
    $region21: #{tpu_custom_call.1} parent=1 // pred_fallthru
      _
    // Predicated region
    $region22: #{tpu_custom_call.1} parent=1 // pred_check
      _
    $region23: #{tpu_custom_call.1} parent=1 // pred_check_branch
      %50 = sbr.rel (0) target = $region25
    $region24: #{tpu_custom_call.1} parent=1 // pred_region
      _
    $region25: #{tpu_custom_call.1} parent=1 // pred_fallthru
      _
    // Predicated region
    $region26: #{tpu_custom_call.1} parent=1 // pred_check
      _
    $region27: #{tpu_custom_call.1} parent=1 // pred_check_branch
      %52 = sbr.rel (0) target = $region29
    $region28: #{tpu_custom_call.1} parent=1 // pred_region
      _
    $region29: #{tpu_custom_call.1} parent=1 // pred_fallthru
      _
    // Predicated region
    $region30: #{tpu_custom_call.1} parent=1 // pred_check
      _
    $region31: #{tpu_custom_call.1} parent=1 // pred_check_branch
      %54 = sbr.rel (0) target = $region33
    $region32: #{tpu_custom_call.1} parent=1 // pred_region
      _
    $region33: #{tpu_custom_call.1} parent=1 // pred_fallthru
      _
    // Predicated region
    $region34: #{tpu_custom_call.1} parent=1 // pred_check
      _
    $region35: #{tpu_custom_call.1} parent=1 // pred_check_branch
      %56 = sbr.rel (0) target = $region37
    $region36: #{tpu_custom_call.1} parent=1 // pred_region
      %58 = dma.done [#allocation6], 4096
    $region37: #{tpu_custom_call.1} parent=1 // pred_fallthru
      _
    // Predicated region
    $region38: #{tpu_custom_call.1} parent=1 // pred_check
      _
    $region39: #{tpu_custom_call.1} parent=1 // pred_check_branch
      %60 = sbr.rel (0) target = $region41
    $region40: #{tpu_custom_call.1} parent=1 // pred_region
      %62 = dma.done [#allocation8], 8192
    $region41: #{tpu_custom_call.1} parent=1 // pred_fallthru
      _
    %v64 = vld [vmem:[%s0] sm:$0xf]
    %v65 = vld [vmem:[%s0 + $0x4] sm:$0xf]
    %v66 = vld [vmem:[%s0 + $0x8] sm:$0xf]
    %v67 = vld [vmem:[%s0 + $0xc] sm:$0xf]
    %v68 = vld [vmem:[%s0 + $0x10] sm:$0xf]
    %v69 = vld [vmem:[%s0 + $0x14] sm:$0xf]
    %v70 = vld [vmem:[%s0 + $0x18] sm:$0xf]
    %v71 = vld [vmem:[%s0 + $0x1c] sm:$0xf]
    %v72 = vld [vmem:[%s1] sm:$0xff]
    %v73 = vld [vmem:[%s1 + $0x8] sm:$0xff]
    %v74 = vld [vmem:[%s1 + $0x10] sm:$0xff]
    %v75 = vld [vmem:[%s1 + $0x18] sm:$0xff]
    %v76 = vld [vmem:[%s3] sm:$0xf]
    %v78 = vperm.slane %v76, 0
    %v79 = vperm.slane %v76, 1
    %v80 = vperm.slane %v76, 2
    %v81 = vperm.slane %v76, 3
    %v94 = vunpack.c.l.b16 %v64
    %v95 = vunpack.c.l.b16 %v65
    %v96 = vunpack.c.l.b16 %v66
    %v97 = vunpack.c.l.b16 %v67
    %v98 = vunpack.c.l.b16 %v68
    %v99 = vunpack.c.l.b16 %v69
    %v100 = vunpack.c.l.b16 %v70
    %v101 = vunpack.c.l.b16 %v71
    %v102 = vpack.c.b16 %v95, %v94
    %v103 = vpack.c.b16 %v97, %v96
    %v104 = vpack.c.b16 %v99, %v98
    %v105 = vpack.c.b16 %v101, %v100
    %v110 = vunpack.c.l.b16 %v72
    %v111 = vunpack.c.h.b16 %v72
    %v112 = vunpack.c.l.b16 %v73
    %v113 = vunpack.c.h.b16 %v73
    %v114 = vunpack.c.l.b16 %v74
    %v115 = vunpack.c.h.b16 %v74
    %v116 = vunpack.c.l.b16 %v75
    %v117 = vunpack.c.h.b16 %v75
    %v118 = vpack.c.b16 %v114, %v110
    %v119 = vpack.c.b16 %v115, %v111
    %v120 = vpack.c.b16 %v116, %v112
    %v121 = vpack.c.b16 %v117, %v113
    %vm126 = vcmask 130048
    %v128 = vsel %vm126, %v102, 0
    %v131 = vsel %vm126, %v103, 0
    %v134 = vsel %vm126, %v104, 0
    %v137 = vsel %vm126, %v105, 0
    %139 = vmatpush.bf16.msra.mxu0 0
    %140 = vmatpush.bf16.msra.mxu0 0
    %141 = vmatpush.bf16.msra.mxu0 0
    %142 = vmatpush.bf16.msra.mxu0 0
    %143 = vmatpush.bf16.msra.mxu0 0
    %144 = vmatpush.bf16.msra.mxu0 0
    %145 = vmatpush.bf16.msra.mxu0 0
    %146 = vmatpush.bf16.msra.mxu0 %v118
    %147 = vmatmul.bf16.gmra.mxu0 %v128
    %v148 = vpop.f32.mrf.mxu0
    %v149 = vadd.f32 %v78, %v148
    %v150 = vpop.f32.mrf.mxu0
    %v151 = vadd.f32 %v78, %v150
    %152 = vmatmul.bf16.gmra.mxu0 %v131
    %v153 = vpop.f32.mrf.mxu0
    %v154 = vadd.f32 %v78, %v153
    %v155 = vpop.f32.mrf.mxu0
    %v156 = vadd.f32 %v78, %v155
    %157 = vmatmul.bf16.gmra.mxu0 %v134
    %v158 = vpop.f32.mrf.mxu0
    %v159 = vadd.f32 %v78, %v158
    %v160 = vpop.f32.mrf.mxu0
    %v161 = vadd.f32 %v78, %v160
    %162 = vmatmul.bf16.gmra.mxu0 %v137
    %v163 = vpop.f32.mrf.mxu0
    %v164 = vadd.f32 %v78, %v163
    %v165 = vpop.f32.mrf.mxu0
    %v166 = vadd.f32 %v78, %v165
    %167 = vdwg.mxu0
    %168 = vmatpush.bf16.msra.mxu0 0
    %169 = vmatpush.bf16.msra.mxu0 0
    %170 = vmatpush.bf16.msra.mxu0 0
    %171 = vmatpush.bf16.msra.mxu0 0
    %172 = vmatpush.bf16.msra.mxu0 0
    %173 = vmatpush.bf16.msra.mxu0 0
    %174 = vmatpush.bf16.msra.mxu0 0
    %175 = vmatpush.bf16.msra.mxu0 %v119
    %176 = vmatmul.bf16.gmra.mxu0 %v128
    %v177 = vpop.f32.mrf.mxu0
    %v178 = vadd.f32 %v79, %v177
    %v179 = vpop.f32.mrf.mxu0
    %v180 = vadd.f32 %v79, %v179
    %181 = vmatmul.bf16.gmra.mxu0 %v131
    %v182 = vpop.f32.mrf.mxu0
    %v183 = vadd.f32 %v79, %v182
    %v184 = vpop.f32.mrf.mxu0
    %v185 = vadd.f32 %v79, %v184
    %186 = vmatmul.bf16.gmra.mxu0 %v134
    %v187 = vpop.f32.mrf.mxu0
    %v188 = vadd.f32 %v79, %v187
    %v189 = vpop.f32.mrf.mxu0
    %v190 = vadd.f32 %v79, %v189
    %191 = vmatmul.bf16.gmra.mxu0 %v137
    %v192 = vpop.f32.mrf.mxu0
    %v193 = vadd.f32 %v79, %v192
    %v194 = vpop.f32.mrf.mxu0
    %v195 = vadd.f32 %v79, %v194
    %196 = vdwg.mxu0
    %197 = vmatpush.bf16.msra.mxu0 0
    %198 = vmatpush.bf16.msra.mxu0 0
    %199 = vmatpush.bf16.msra.mxu0 0
    %200 = vmatpush.bf16.msra.mxu0 0
    %201 = vmatpush.bf16.msra.mxu0 0
    %202 = vmatpush.bf16.msra.mxu0 0
    %203 = vmatpush.bf16.msra.mxu0 0
    %204 = vmatpush.bf16.msra.mxu0 %v120
    %205 = vmatmul.bf16.gmra.mxu0 %v128
    %v206 = vpop.f32.mrf.mxu0
    %v207 = vadd.f32 %v80, %v206
    %v208 = vpop.f32.mrf.mxu0
    %v209 = vadd.f32 %v80, %v208
    %210 = vmatmul.bf16.gmra.mxu0 %v131
    %v211 = vpop.f32.mrf.mxu0
    %v212 = vadd.f32 %v80, %v211
    %v213 = vpop.f32.mrf.mxu0
    %v214 = vadd.f32 %v80, %v213
    %215 = vmatmul.bf16.gmra.mxu0 %v134
    %v216 = vpop.f32.mrf.mxu0
    %v217 = vadd.f32 %v80, %v216
    %v218 = vpop.f32.mrf.mxu0
    %v219 = vadd.f32 %v80, %v218
    %220 = vmatmul.bf16.gmra.mxu0 %v137
    %v221 = vpop.f32.mrf.mxu0
    %v222 = vadd.f32 %v80, %v221
    %v223 = vpop.f32.mrf.mxu0
    %v224 = vadd.f32 %v80, %v223
    %225 = vdwg.mxu0
    %226 = vmatpush.bf16.msra.mxu0 0
    %227 = vmatpush.bf16.msra.mxu0 0
    %228 = vmatpush.bf16.msra.mxu0 0
    %229 = vmatpush.bf16.msra.mxu0 0
    %230 = vmatpush.bf16.msra.mxu0 0
    %231 = vmatpush.bf16.msra.mxu0 0
    %232 = vmatpush.bf16.msra.mxu0 0
    %233 = vmatpush.bf16.msra.mxu0 %v121
    %234 = vmatmul.bf16.gmra.mxu0 %v128
    %v235 = vpop.f32.mrf.mxu0
    %v236 = vadd.f32 %v81, %v235
    %v237 = vpop.f32.mrf.mxu0
    %v238 = vadd.f32 %v81, %v237
    %239 = vmatmul.bf16.gmra.mxu0 %v131
    %v240 = vpop.f32.mrf.mxu0
    %v241 = vadd.f32 %v81, %v240
    %v242 = vpop.f32.mrf.mxu0
    %v243 = vadd.f32 %v81, %v242
    %244 = vmatmul.bf16.gmra.mxu0 %v134
    %v245 = vpop.f32.mrf.mxu0
    %v246 = vadd.f32 %v81, %v245
    %v247 = vpop.f32.mrf.mxu0
    %v248 = vadd.f32 %v81, %v247
    %249 = vmatmul.bf16.gmra.mxu0 %v137
    %v250 = vpop.f32.mrf.mxu0
    %v251 = vadd.f32 %v81, %v250
    %v252 = vpop.f32.mrf.mxu0
    %v253 = vadd.f32 %v81, %v252
    %254 = vdwg.mxu0
    %255 = vst [vmem:[#allocation2] sm:$0xff] %v149
    %256 = vst [vmem:[#allocation2 + $0x8] sm:$0xff] %v178
    %257 = vst [vmem:[#allocation2 + $0x10] sm:$0xff] %v207
    %258 = vst [vmem:[#allocation2 + $0x18] sm:$0xff] %v236
    %259 = vst [vmem:[#allocation2 + $0x20] sm:$0xff] %v151
    %260 = vst [vmem:[#allocation2 + $0x28] sm:$0xff] %v180
    %261 = vst [vmem:[#allocation2 + $0x30] sm:$0xff] %v209
    %262 = vst [vmem:[#allocation2 + $0x38] sm:$0xff] %v238
    %263 = vst [vmem:[#allocation2 + $0x40] sm:$0xff] %v154
    %264 = vst [vmem:[#allocation2 + $0x48] sm:$0xff] %v183
    %265 = vst [vmem:[#allocation2 + $0x50] sm:$0xff] %v212
    %266 = vst [vmem:[#allocation2 + $0x58] sm:$0xff] %v241
    %267 = vst [vmem:[#allocation2 + $0x60] sm:$0xff] %v156
    %268 = vst [vmem:[#allocation2 + $0x68] sm:$0xff] %v185
    %269 = vst [vmem:[#allocation2 + $0x70] sm:$0xff] %v214
    %270 = vst [vmem:[#allocation2 + $0x78] sm:$0xff] %v243
    %271 = vst [vmem:[#allocation2 + $0x80] sm:$0xff] %v159
    %272 = vst [vmem:[#allocation2 + $0x88] sm:$0xff] %v188
    %273 = vst [vmem:[#allocation2 + $0x90] sm:$0xff] %v217
    %274 = vst [vmem:[#allocation2 + $0x98] sm:$0xff] %v246
    %275 = vst [vmem:[#allocation2 + $0xa0] sm:$0xff] %v161
    %276 = vst [vmem:[#allocation2 + $0xa8] sm:$0xff] %v190
    %277 = vst [vmem:[#allocation2 + $0xb0] sm:$0xff] %v219
    %278 = vst [vmem:[#allocation2 + $0xb8] sm:$0xff] %v248
    %279 = vst [vmem:[#allocation2 + $0xc0] sm:$0xff] %v164
    %280 = vst [vmem:[#allocation2 + $0xc8] sm:$0xff] %v193
    %281 = vst [vmem:[#allocation2 + $0xd0] sm:$0xff] %v222
    %282 = vst [vmem:[#allocation2 + $0xd8] sm:$0xff] %v251
    %283 = vst [vmem:[#allocation2 + $0xe0] sm:$0xff] %v166
    %284 = vst [vmem:[#allocation2 + $0xe8] sm:$0xff] %v195
    %285 = vst [vmem:[#allocation2 + $0xf0] sm:$0xff] %v224
    %286 = vst [vmem:[#allocation2 + $0xf8] sm:$0xff] %v253
    %287 = vst [vmem:[#allocation3] sm:$0xff] 0
    %v288 = vld [vmem:[%s5] sm:$0xf]
    %v290 = vperm.slane %v288, 0
    %v291 = vperm.slane %v288, 1
    %v292 = vperm.slane %v288, 2
    %v293 = vperm.slane %v288, 3
    %v298 = vld [vmem:[#allocation2] sm:$0xff]
    %v299 = vld [vmem:[#allocation2 + $0x8] sm:$0xff]
    %v300 = vld [vmem:[#allocation2 + $0x10] sm:$0xff]
    %v301 = vld [vmem:[#allocation2 + $0x18] sm:$0xff]
    %v302 = vld [vmem:[#allocation5] sm:$0xff]
    %v303 = vld [vmem:[#allocation5 + $0x8] sm:$0xff]
    %v304 = vld [vmem:[#allocation5 + $0x10] sm:$0xff]
    %v305 = vld [vmem:[#allocation5 + $0x18] sm:$0xff]
    %v306 = vld [vmem:[#allocation5 + $0x20] sm:$0xff]
    %v307 = vld [vmem:[#allocation5 + $0x28] sm:$0xff]
    %v308 = vld [vmem:[#allocation5 + $0x30] sm:$0xff]
    %v309 = vld [vmem:[#allocation5 + $0x38] sm:$0xff]
    %v310 = vld [vmem:[#allocation5 + $0x40] sm:$0xff]
    %v311 = vld [vmem:[#allocation5 + $0x48] sm:$0xff]
    %v312 = vld [vmem:[#allocation5 + $0x50] sm:$0xff]
    %v313 = vld [vmem:[#allocation5 + $0x58] sm:$0xff]
    %v314 = vld [vmem:[#allocation5 + $0x60] sm:$0xff]
    %v315 = vld [vmem:[#allocation5 + $0x68] sm:$0xff]
    %v316 = vld [vmem:[#allocation5 + $0x70] sm:$0xff]
    %v317 = vld [vmem:[#allocation5 + $0x78] sm:$0xff]
    %v318 = vld [vmem:[#allocation5 + $0x80] sm:$0xff]
    %v319 = vld [vmem:[#allocation5 + $0x88] sm:$0xff]
    %v320 = vld [vmem:[#allocation5 + $0x90] sm:$0xff]
    %v321 = vld [vmem:[#allocation5 + $0x98] sm:$0xff]
    %v322 = vld [vmem:[#allocation5 + $0xa0] sm:$0xff]
    %v323 = vld [vmem:[#allocation5 + $0xa8] sm:$0xff]
    %v324 = vld [vmem:[#allocation5 + $0xb0] sm:$0xff]
    %v325 = vld [vmem:[#allocation5 + $0xb8] sm:$0xff]
    %v326 = vld [vmem:[#allocation5 + $0xc0] sm:$0xff]
    %v327 = vld [vmem:[#allocation5 + $0xc8] sm:$0xff]
    %v328 = vld [vmem:[#allocation5 + $0xd0] sm:$0xff]
    %v329 = vld [vmem:[#allocation5 + $0xd8] sm:$0xff]
    %v330 = vld [vmem:[#allocation5 + $0xe0] sm:$0xff]
    %v331 = vld [vmem:[#allocation5 + $0xe8] sm:$0xff]
    %v332 = vld [vmem:[#allocation5 + $0xf0] sm:$0xff]
    %v333 = vld [vmem:[#allocation5 + $0xf8] sm:$0xff]
    %v366 = vunpack.c.l.b16 %v302
    %v367 = vunpack.c.h.b16 %v302
    %v368 = vunpack.c.l.b16 %v303
    %v369 = vunpack.c.h.b16 %v303
    %v370 = vunpack.c.l.b16 %v304
    %v371 = vunpack.c.h.b16 %v304
    %v372 = vunpack.c.l.b16 %v305
    %v373 = vunpack.c.h.b16 %v305
    %v374 = vunpack.c.l.b16 %v306
    %v375 = vunpack.c.h.b16 %v306
    %v376 = vunpack.c.l.b16 %v307
    %v377 = vunpack.c.h.b16 %v307
    %v378 = vunpack.c.l.b16 %v308
    %v379 = vunpack.c.h.b16 %v308
    %v380 = vunpack.c.l.b16 %v309
    %v381 = vunpack.c.h.b16 %v309
    %v382 = vunpack.c.l.b16 %v310
    %v383 = vunpack.c.h.b16 %v310
    %v384 = vunpack.c.l.b16 %v311
    %v385 = vunpack.c.h.b16 %v311
    %v386 = vunpack.c.l.b16 %v312
    %v387 = vunpack.c.h.b16 %v312
    %v388 = vunpack.c.l.b16 %v313
    %v389 = vunpack.c.h.b16 %v313
    %v390 = vunpack.c.l.b16 %v314
    %v391 = vunpack.c.h.b16 %v314
    %v392 = vunpack.c.l.b16 %v315
    %v393 = vunpack.c.h.b16 %v315
    %v394 = vunpack.c.l.b16 %v316
    %v395 = vunpack.c.h.b16 %v316
    %v396 = vunpack.c.l.b16 %v317
    %v397 = vunpack.c.h.b16 %v317
    %v398 = vunpack.c.l.b16 %v318
    %v399 = vunpack.c.h.b16 %v318
    %v400 = vunpack.c.l.b16 %v319
    %v401 = vunpack.c.h.b16 %v319
    %v402 = vunpack.c.l.b16 %v320
    %v403 = vunpack.c.h.b16 %v320
    %v404 = vunpack.c.l.b16 %v321
    %v405 = vunpack.c.h.b16 %v321
    %v406 = vunpack.c.l.b16 %v322
    %v407 = vunpack.c.h.b16 %v322
    %v408 = vunpack.c.l.b16 %v323
    %v409 = vunpack.c.h.b16 %v323
    %v410 = vunpack.c.l.b16 %v324
    %v411 = vunpack.c.h.b16 %v324
    %v412 = vunpack.c.l.b16 %v325
    %v413 = vunpack.c.h.b16 %v325
    %v414 = vunpack.c.l.b16 %v326
    %v415 = vunpack.c.h.b16 %v326
    %v416 = vunpack.c.l.b16 %v327
    %v417 = vunpack.c.h.b16 %v327
    %v418 = vunpack.c.l.b16 %v328
    %v419 = vunpack.c.h.b16 %v328
    %v420 = vunpack.c.l.b16 %v329
    %v421 = vunpack.c.h.b16 %v329
    %v422 = vunpack.c.l.b16 %v330
    %v423 = vunpack.c.h.b16 %v330
    %v424 = vunpack.c.l.b16 %v331
    %v425 = vunpack.c.h.b16 %v331
    %v426 = vunpack.c.l.b16 %v332
    %v427 = vunpack.c.h.b16 %v332
    %v428 = vunpack.c.l.b16 %v333
    %v429 = vunpack.c.h.b16 %v333
    %v430 = vpack.c.b16 %v370, %v366
    %v431 = vpack.c.b16 %v371, %v367
    %v432 = vpack.c.b16 %v372, %v368
    %v433 = vpack.c.b16 %v373, %v369
    %v434 = vpack.c.b16 %v378, %v374
    %v435 = vpack.c.b16 %v379, %v375
    %v436 = vpack.c.b16 %v380, %v376
    %v437 = vpack.c.b16 %v381, %v377
    %v438 = vpack.c.b16 %v386, %v382
    %v439 = vpack.c.b16 %v387, %v383
    %v440 = vpack.c.b16 %v388, %v384
    %v441 = vpack.c.b16 %v389, %v385
    %v442 = vpack.c.b16 %v394, %v390
    %v443 = vpack.c.b16 %v395, %v391
    %v444 = vpack.c.b16 %v396, %v392
    %v445 = vpack.c.b16 %v397, %v393
    %v446 = vpack.c.b16 %v402, %v398
    %v447 = vpack.c.b16 %v403, %v399
    %v448 = vpack.c.b16 %v404, %v400
    %v449 = vpack.c.b16 %v405, %v401
    %v450 = vpack.c.b16 %v410, %v406
    %v451 = vpack.c.b16 %v411, %v407
    %v452 = vpack.c.b16 %v412, %v408
    %v453 = vpack.c.b16 %v413, %v409
    %v454 = vpack.c.b16 %v418, %v414
    %v455 = vpack.c.b16 %v419, %v415
    %v456 = vpack.c.b16 %v420, %v416
    %v457 = vpack.c.b16 %v421, %v417
    %v458 = vpack.c.b16 %v426, %v422
    %v459 = vpack.c.b16 %v427, %v423
    %v460 = vpack.c.b16 %v428, %v424
    %v461 = vpack.c.b16 %v429, %v425
    %494 = vmatpush.bf16.msra.mxu0 %v458
    %495 = vmatpush.bf16.msra.mxu0 %v454
    %496 = vmatpush.bf16.msra.mxu0 %v450
    %497 = vmatpush.bf16.msra.mxu0 %v446
    %498 = vmatpush.bf16.msra.mxu0 %v442
    %499 = vmatpush.bf16.msra.mxu0 %v438
    %500 = vmatpush.bf16.msra.mxu0 %v434
    %501 = vmatpush.bf16.msra.mxu0 %v430
    %502 = vmatmul.bf16.gmra.mxu0 0
    %v503 = vpop.f32.mrf.mxu0
    %v504 = vadd.f32 0.0, %v503
    %v505 = vpop.f32.mrf.mxu0
    %506 = vdwg.mxu0
    %507 = vmatpush.bf16.msra.mxu0 %v459
    %508 = vmatpush.bf16.msra.mxu0 %v455
    %509 = vmatpush.bf16.msra.mxu0 %v451
    %510 = vmatpush.bf16.msra.mxu0 %v447
    %511 = vmatpush.bf16.msra.mxu0 %v443
    %512 = vmatpush.bf16.msra.mxu0 %v439
    %513 = vmatpush.bf16.msra.mxu0 %v435
    %514 = vmatpush.bf16.msra.mxu0 %v431
    %515 = vmatmul.bf16.gmra.mxu0 0
    %v516 = vpop.f32.mrf.mxu0
    %v517 = vadd.f32 0.0, %v516
    %v518 = vpop.f32.mrf.mxu0
    %519 = vdwg.mxu0
    %520 = vmatpush.bf16.msra.mxu0 %v460
    %521 = vmatpush.bf16.msra.mxu0 %v456
    %522 = vmatpush.bf16.msra.mxu0 %v452
    %523 = vmatpush.bf16.msra.mxu0 %v448
    %524 = vmatpush.bf16.msra.mxu0 %v444
    %525 = vmatpush.bf16.msra.mxu0 %v440
    %526 = vmatpush.bf16.msra.mxu0 %v436
    %527 = vmatpush.bf16.msra.mxu0 %v432
    %528 = vmatmul.bf16.gmra.mxu0 0
    %v529 = vpop.f32.mrf.mxu0
    %v530 = vadd.f32 0.0, %v529
    %v531 = vpop.f32.mrf.mxu0
    %532 = vdwg.mxu0
    %533 = vmatpush.bf16.msra.mxu0 %v461
    %534 = vmatpush.bf16.msra.mxu0 %v457
    %535 = vmatpush.bf16.msra.mxu0 %v453
    %536 = vmatpush.bf16.msra.mxu0 %v449
    %537 = vmatpush.bf16.msra.mxu0 %v445
    %538 = vmatpush.bf16.msra.mxu0 %v441
    %539 = vmatpush.bf16.msra.mxu0 %v437
    %540 = vmatpush.bf16.msra.mxu0 %v433
    %541 = vmatmul.bf16.gmra.mxu0 0
    %v542 = vpop.f32.mrf.mxu0
    %v543 = vadd.f32 0.0, %v542
    %v544 = vpop.f32.mrf.mxu0
    %545 = vdwg.mxu0
    %v546 = vadd.f32 %v298, %v504
    %v547 = vadd.f32 %v299, %v517
    %v548 = vadd.f32 %v300, %v530
    %v549 = vadd.f32 %v301, %v543
    %v550 = vxor.u32 %v546, 2147483648
    %v551 = vxor.u32 %v547, 2147483648
    %v552 = vmul.f32 %v550, 1.442695
    %v553 = vpow.pop %v552
    %v554 = vmul.f32 %v551, 1.442695
    %v555 = vpow.pop %v554
    %v556 = vadd.f32 %v553, 1.0
    %v557 = vadd.f32 %v555, 1.0
    %v558 = vrcp.pop %v556
    %v559 = vmul.f32 %v556, %v558
    %v560 = vsub.f32 1.0, %v559
    %v561 = vmul.f32 %v558, %v560
    %v562 = vadd.f32 %v558, %v561
    %vm563 = vweird.f32 %v556
    %vm564 = vweird.f32 %v558
    %vm565 = vmor %vm563, %vm564
    %v566 = vsel %vm565, %v558, %v562
    %v567 = vand.u32 2147483647, %v556
    %vm568 = vcmp.eq.f32.partialorder %v567, 8.507059e+37
    %v569 = vand.u32 %v556, 2147483648
    %v570 = vor.u32 1.1754944e-38, %v569
    %v571 = vsel %vm568, %v570, %v566
    %v572 = vmul.f32 1.0, %v571
    %v573 = vrcp.pop %v557
    %v574 = vmul.f32 %v557, %v573
    %v575 = vsub.f32 1.0, %v574
    %v576 = vmul.f32 %v573, %v575
    %v577 = vadd.f32 %v573, %v576
    %vm578 = vweird.f32 %v557
    %vm579 = vweird.f32 %v573
    %vm580 = vmor %vm578, %vm579
    %v581 = vsel %vm580, %v573, %v577
    %v582 = vand.u32 2147483647, %v557
    %vm583 = vcmp.eq.f32.partialorder %v582, 8.507059e+37
    %v584 = vand.u32 %v557, 2147483648
    %v585 = vor.u32 1.1754944e-38, %v584
    %v586 = vsel %vm583, %v585, %v581
    %v587 = vmul.f32 1.0, %v586
    %v588 = vtanh.pop %v548
    %v589 = vxor.u32 %v549, 2147483648
    %v590 = vmul.f32 %v589, 1.442695
    %v591 = vpow.pop %v590
    %v592 = vadd.f32 %v591, 1.0
    %v593 = vrcp.pop %v592
    %v594 = vmul.f32 %v592, %v593
    %v595 = vsub.f32 1.0, %v594
    %v596 = vmul.f32 %v593, %v595
    %v597 = vadd.f32 %v593, %v596
    %vm598 = vweird.f32 %v592
    %vm599 = vweird.f32 %v593
    %vm600 = vmor %vm598, %vm599
    %v601 = vsel %vm600, %v593, %v597
    %v602 = vand.u32 2147483647, %v592
    %vm603 = vcmp.eq.f32.partialorder %v602, 8.507059e+37
    %v604 = vand.u32 %v592, 2147483648
    %v605 = vor.u32 1.1754944e-38, %v604
    %v606 = vsel %vm603, %v605, %v601
    %v607 = vmul.f32 1.0, %v606
    %v608 = vmul.f32 %v587, 0.0
    %v609 = vmul.f32 %v572, %v588
    %v610 = vadd.f32 %v608, %v609
    %v611 = vtanh.pop %v610
    %v612 = vmul.f32 %v607, %v611
    %v613 = vpack.c.bf16 %v612, %v612
    %614 = vst [vmem:[#allocation3] sm:$0xf] %v613
    %v615 = vld [vmem:[#allocation3] sm:$0xff]
    %v616 = vld [vmem:[#allocation7] sm:$0xff]
    %v617 = vld [vmem:[#allocation7 + $0x8] sm:$0xff]
    %v618 = vld [vmem:[#allocation7 + $0x10] sm:$0xff]
    %v619 = vld [vmem:[#allocation7 + $0x18] sm:$0xff]
    %v620 = vld [vmem:[#allocation7 + $0x20] sm:$0xff]
    %v621 = vld [vmem:[#allocation7 + $0x28] sm:$0xff]
    %v622 = vld [vmem:[#allocation7 + $0x30] sm:$0xff]
    %v623 = vld [vmem:[#allocation7 + $0x38] sm:$0xff]
    %v624 = vld [vmem:[#allocation7 + $0x40] sm:$0xff]
    %v625 = vld [vmem:[#allocation7 + $0x48] sm:$0xff]
    %v626 = vld [vmem:[#allocation7 + $0x50] sm:$0xff]
    %v627 = vld [vmem:[#allocation7 + $0x58] sm:$0xff]
    %v628 = vld [vmem:[#allocation7 + $0x60] sm:$0xff]
    %v629 = vld [vmem:[#allocation7 + $0x68] sm:$0xff]
    %v630 = vld [vmem:[#allocation7 + $0x70] sm:$0xff]
    %v631 = vld [vmem:[#allocation7 + $0x78] sm:$0xff]
    %v632 = vld [vmem:[#allocation7 + $0x80] sm:$0xff]
    %v633 = vld [vmem:[#allocation7 + $0x88] sm:$0xff]
    %v634 = vld [vmem:[#allocation7 + $0x90] sm:$0xff]
    %v635 = vld [vmem:[#allocation7 + $0x98] sm:$0xff]
    %v636 = vld [vmem:[#allocation7 + $0xa0] sm:$0xff]
    %v637 = vld [vmem:[#allocation7 + $0xa8] sm:$0xff]
    %v638 = vld [vmem:[#allocation7 + $0xb0] sm:$0xff]
    %v639 = vld [vmem:[#allocation7 + $0xb8] sm:$0xff]
    %v640 = vld [vmem:[#allocation7 + $0xc0] sm:$0xff]
    %v641 = vld [vmem:[#allocation7 + $0xc8] sm:$0xff]
    %v642 = vld [vmem:[#allocation7 + $0xd0] sm:$0xff]
    %v643 = vld [vmem:[#allocation7 + $0xd8] sm:$0xff]
    %v644 = vld [vmem:[#allocation7 + $0xe0] sm:$0xff]
    %v645 = vld [vmem:[#allocation7 + $0xe8] sm:$0xff]
    %v646 = vld [vmem:[#allocation7 + $0xf0] sm:$0xff]
    %v647 = vld [vmem:[#allocation7 + $0xf8] sm:$0xff]
    %v648 = vld [vmem:[#allocation7 + $0x100] sm:$0xff]
    %v649 = vld [vmem:[#allocation7 + $0x108] sm:$0xff]
    %v650 = vld [vmem:[#allocation7 + $0x110] sm:$0xff]
    %v651 = vld [vmem:[#allocation7 + $0x118] sm:$0xff]
    %v652 = vld [vmem:[#allocation7 + $0x120] sm:$0xff]
    %v653 = vld [vmem:[#allocation7 + $0x128] sm:$0xff]
    %v654 = vld [vmem:[#allocation7 + $0x130] sm:$0xff]
    %v655 = vld [vmem:[#allocation7 + $0x138] sm:$0xff]
    %v656 = vld [vmem:[#allocation7 + $0x140] sm:$0xff]
    %v657 = vld [vmem:[#allocation7 + $0x148] sm:$0xff]
    %v658 = vld [vmem:[#allocation7 + $0x150] sm:$0xff]
    %v659 = vld [vmem:[#allocation7 + $0x158] sm:$0xff]
    %v660 = vld [vmem:[#allocation7 + $0x160] sm:$0xff]
    %v661 = vld [vmem:[#allocation7 + $0x168] sm:$0xff]
    %v662 = vld [vmem:[#allocation7 + $0x170] sm:$0xff]
    %v663 = vld [vmem:[#allocation7 + $0x178] sm:$0xff]
    %v664 = vld [vmem:[#allocation7 + $0x180] sm:$0xff]
    %v665 = vld [vmem:[#allocation7 + $0x188] sm:$0xff]
    %v666 = vld [vmem:[#allocation7 + $0x190] sm:$0xff]
    %v667 = vld [vmem:[#allocation7 + $0x198] sm:$0xff]
    %v668 = vld [vmem:[#allocation7 + $0x1a0] sm:$0xff]
    %v669 = vld [vmem:[#allocation7 + $0x1a8] sm:$0xff]
    %v670 = vld [vmem:[#allocation7 + $0x1b0] sm:$0xff]
    %v671 = vld [vmem:[#allocation7 + $0x1b8] sm:$0xff]
    %v672 = vld [vmem:[#allocation7 + $0x1c0] sm:$0xff]
    %v673 = vld [vmem:[#allocation7 + $0x1c8] sm:$0xff]
    %v674 = vld [vmem:[#allocation7 + $0x1d0] sm:$0xff]
    %v675 = vld [vmem:[#allocation7 + $0x1d8] sm:$0xff]
    %v676 = vld [vmem:[#allocation7 + $0x1e0] sm:$0xff]
    %v677 = vld [vmem:[#allocation7 + $0x1e8] sm:$0xff]
    %v678 = vld [vmem:[#allocation7 + $0x1f0] sm:$0xff]
    %v679 = vld [vmem:[#allocation7 + $0x1f8] sm:$0xff]
    %v681 = vunpack.c.l.b16 %v615
    %v682 = vunpack.c.h.b16 %v615
    %v683 = vpack.c.b16 %v681, %v681
    %v684 = vpack.c.b16 %v682, %v682
    %v751 = vunpack.c.l.b16 %v616
    %v752 = vunpack.c.h.b16 %v616
    %v753 = vunpack.c.l.b16 %v617
    %v754 = vunpack.c.h.b16 %v617
    %v755 = vunpack.c.l.b16 %v618
    %v756 = vunpack.c.h.b16 %v618
    %v757 = vunpack.c.l.b16 %v619
    %v758 = vunpack.c.h.b16 %v619
    %v759 = vunpack.c.l.b16 %v620
    %v760 = vunpack.c.h.b16 %v620
    %v761 = vunpack.c.l.b16 %v621
    %v762 = vunpack.c.h.b16 %v621
    %v763 = vunpack.c.l.b16 %v622
    %v764 = vunpack.c.h.b16 %v622
    %v765 = vunpack.c.l.b16 %v623
    %v766 = vunpack.c.h.b16 %v623
    %v767 = vunpack.c.l.b16 %v624
    %v768 = vunpack.c.h.b16 %v624
    %v769 = vunpack.c.l.b16 %v625
    %v770 = vunpack.c.h.b16 %v625
    %v771 = vunpack.c.l.b16 %v626
    %v772 = vunpack.c.h.b16 %v626
    %v773 = vunpack.c.l.b16 %v627
    %v774 = vunpack.c.h.b16 %v627
    %v775 = vunpack.c.l.b16 %v628
    %v776 = vunpack.c.h.b16 %v628
    %v777 = vunpack.c.l.b16 %v629
    %v778 = vunpack.c.h.b16 %v629
    %v779 = vunpack.c.l.b16 %v630
    %v780 = vunpack.c.h.b16 %v630
    %v781 = vunpack.c.l.b16 %v631
    %v782 = vunpack.c.h.b16 %v631
    %v783 = vunpack.c.l.b16 %v632
    %v784 = vunpack.c.h.b16 %v632
    %v785 = vunpack.c.l.b16 %v633
    %v786 = vunpack.c.h.b16 %v633
    %v787 = vunpack.c.l.b16 %v634
    %v788 = vunpack.c.h.b16 %v634
    %v789 = vunpack.c.l.b16 %v635
    %v790 = vunpack.c.h.b16 %v635
    %v791 = vunpack.c.l.b16 %v636
    %v792 = vunpack.c.h.b16 %v636
    %v793 = vunpack.c.l.b16 %v637
    %v794 = vunpack.c.h.b16 %v637
    %v795 = vunpack.c.l.b16 %v638
    %v796 = vunpack.c.h.b16 %v638
    %v797 = vunpack.c.l.b16 %v639
    %v798 = vunpack.c.h.b16 %v639
    %v799 = vunpack.c.l.b16 %v640
    %v800 = vunpack.c.h.b16 %v640
    %v801 = vunpack.c.l.b16 %v641
    %v802 = vunpack.c.h.b16 %v641
    %v803 = vunpack.c.l.b16 %v642
    %v804 = vunpack.c.h.b16 %v642
    %v805 = vunpack.c.l.b16 %v643
    %v806 = vunpack.c.h.b16 %v643
    %v807 = vunpack.c.l.b16 %v644
    %v808 = vunpack.c.h.b16 %v644
    %v809 = vunpack.c.l.b16 %v645
    %v810 = vunpack.c.h.b16 %v645
    %v811 = vunpack.c.l.b16 %v646
    %v812 = vunpack.c.h.b16 %v646
    %v813 = vunpack.c.l.b16 %v647
    %v814 = vunpack.c.h.b16 %v647
    %v815 = vunpack.c.l.b16 %v648
    %v816 = vunpack.c.h.b16 %v648
    %v817 = vunpack.c.l.b16 %v649
    %v818 = vunpack.c.h.b16 %v649
    %v819 = vunpack.c.l.b16 %v650
    %v820 = vunpack.c.h.b16 %v650
    %v821 = vunpack.c.l.b16 %v651
    %v822 = vunpack.c.h.b16 %v651
    %v823 = vunpack.c.l.b16 %v652
    %v824 = vunpack.c.h.b16 %v652
    %v825 = vunpack.c.l.b16 %v653
    %v826 = vunpack.c.h.b16 %v653
    %v827 = vunpack.c.l.b16 %v654
    %v828 = vunpack.c.h.b16 %v654
    %v829 = vunpack.c.l.b16 %v655
    %v830 = vunpack.c.h.b16 %v655
    %v831 = vunpack.c.l.b16 %v656
    %v832 = vunpack.c.h.b16 %v656
    %v833 = vunpack.c.l.b16 %v657
    %v834 = vunpack.c.h.b16 %v657
    %v835 = vunpack.c.l.b16 %v658
    %v836 = vunpack.c.h.b16 %v658
    %v837 = vunpack.c.l.b16 %v659
    %v838 = vunpack.c.h.b16 %v659
    %v839 = vunpack.c.l.b16 %v660
    %v840 = vunpack.c.h.b16 %v660
    %v841 = vunpack.c.l.b16 %v661
    %v842 = vunpack.c.h.b16 %v661
    %v843 = vunpack.c.l.b16 %v662
    %v844 = vunpack.c.h.b16 %v662
    %v845 = vunpack.c.l.b16 %v663
    %v846 = vunpack.c.h.b16 %v663
    %v847 = vunpack.c.l.b16 %v664
    %v848 = vunpack.c.h.b16 %v664
    %v849 = vunpack.c.l.b16 %v665
    %v850 = vunpack.c.h.b16 %v665
    %v851 = vunpack.c.l.b16 %v666
    %v852 = vunpack.c.h.b16 %v666
    %v853 = vunpack.c.l.b16 %v667
    %v854 = vunpack.c.h.b16 %v667
    %v855 = vunpack.c.l.b16 %v668
    %v856 = vunpack.c.h.b16 %v668
    %v857 = vunpack.c.l.b16 %v669
    %v858 = vunpack.c.h.b16 %v669
    %v859 = vunpack.c.l.b16 %v670
    %v860 = vunpack.c.h.b16 %v670
    %v861 = vunpack.c.l.b16 %v671
    %v862 = vunpack.c.h.b16 %v671
    %v863 = vunpack.c.l.b16 %v672
    %v864 = vunpack.c.h.b16 %v672
    %v865 = vunpack.c.l.b16 %v673
    %v866 = vunpack.c.h.b16 %v673
    %v867 = vunpack.c.l.b16 %v674
    %v868 = vunpack.c.h.b16 %v674
    %v869 = vunpack.c.l.b16 %v675
    %v870 = vunpack.c.h.b16 %v675
    %v871 = vunpack.c.l.b16 %v676
    %v872 = vunpack.c.h.b16 %v676
    %v873 = vunpack.c.l.b16 %v677
    %v874 = vunpack.c.h.b16 %v677
    %v875 = vunpack.c.l.b16 %v678
    %v876 = vunpack.c.h.b16 %v678
    %v877 = vunpack.c.l.b16 %v679
    %v878 = vunpack.c.h.b16 %v679
    %v879 = vpack.c.b16 %v755, %v751
    %v880 = vpack.c.b16 %v756, %v752
    %v881 = vpack.c.b16 %v757, %v753
    %v882 = vpack.c.b16 %v758, %v754
    %v883 = vpack.c.b16 %v763, %v759
    %v884 = vpack.c.b16 %v764, %v760
    %v885 = vpack.c.b16 %v765, %v761
    %v886 = vpack.c.b16 %v766, %v762
    %v887 = vpack.c.b16 %v771, %v767
    %v888 = vpack.c.b16 %v772, %v768
    %v889 = vpack.c.b16 %v773, %v769
    %v890 = vpack.c.b16 %v774, %v770
    %v891 = vpack.c.b16 %v779, %v775
    %v892 = vpack.c.b16 %v780, %v776
    %v893 = vpack.c.b16 %v781, %v777
    %v894 = vpack.c.b16 %v782, %v778
    %v895 = vpack.c.b16 %v787, %v783
    %v896 = vpack.c.b16 %v788, %v784
    %v897 = vpack.c.b16 %v789, %v785
    %v898 = vpack.c.b16 %v790, %v786
    %v899 = vpack.c.b16 %v795, %v791
    %v900 = vpack.c.b16 %v796, %v792
    %v901 = vpack.c.b16 %v797, %v793
    %v902 = vpack.c.b16 %v798, %v794
    %v903 = vpack.c.b16 %v803, %v799
    %v904 = vpack.c.b16 %v804, %v800
    %v905 = vpack.c.b16 %v805, %v801
    %v906 = vpack.c.b16 %v806, %v802
    %v907 = vpack.c.b16 %v811, %v807
    %v908 = vpack.c.b16 %v812, %v808
    %v909 = vpack.c.b16 %v813, %v809
    %v910 = vpack.c.b16 %v814, %v810
    %v911 = vpack.c.b16 %v819, %v815
    %v912 = vpack.c.b16 %v820, %v816
    %v913 = vpack.c.b16 %v821, %v817
    %v914 = vpack.c.b16 %v822, %v818
    %v915 = vpack.c.b16 %v827, %v823
    %v916 = vpack.c.b16 %v828, %v824
    %v917 = vpack.c.b16 %v829, %v825
    %v918 = vpack.c.b16 %v830, %v826
    %v919 = vpack.c.b16 %v835, %v831
    %v920 = vpack.c.b16 %v836, %v832
    %v921 = vpack.c.b16 %v837, %v833
    %v922 = vpack.c.b16 %v838, %v834
    %v923 = vpack.c.b16 %v843, %v839
    %v924 = vpack.c.b16 %v844, %v840
    %v925 = vpack.c.b16 %v845, %v841
    %v926 = vpack.c.b16 %v846, %v842
    %v927 = vpack.c.b16 %v851, %v847
    %v928 = vpack.c.b16 %v852, %v848
    %v929 = vpack.c.b16 %v853, %v849
    %v930 = vpack.c.b16 %v854, %v850
    %v931 = vpack.c.b16 %v859, %v855
    %v932 = vpack.c.b16 %v860, %v856
    %v933 = vpack.c.b16 %v861, %v857
    %v934 = vpack.c.b16 %v862, %v858
    %v935 = vpack.c.b16 %v867, %v863
    %v936 = vpack.c.b16 %v868, %v864
    %v937 = vpack.c.b16 %v869, %v865
    %v938 = vpack.c.b16 %v870, %v866
    %v939 = vpack.c.b16 %v875, %v871
    %v940 = vpack.c.b16 %v876, %v872
    %v941 = vpack.c.b16 %v877, %v873
    %v942 = vpack.c.b16 %v878, %v874
    %1007 = vmatpush.bf16.msra.mxu0 %v907
    %1008 = vmatpush.bf16.msra.mxu0 %v903
    %1009 = vmatpush.bf16.msra.mxu0 %v899
    %1010 = vmatpush.bf16.msra.mxu0 %v895
    %1011 = vmatpush.bf16.msra.mxu0 %v891
    %1012 = vmatpush.bf16.msra.mxu0 %v887
    %1013 = vmatpush.bf16.msra.mxu0 %v883
    %1014 = vmatpush.bf16.msra.mxu0 %v879
    %1015 = vmatmul.bf16.gmra.mxu0 %v683
    %v1016 = vpop.f32.mrf.mxu0
    %v1017 = vadd.f32 %v290, %v1016
    %v1018 = vpop.f32.mrf.mxu0
    %1019 = vdwg.mxu0
    %1020 = vmatpush.bf16.msra.mxu0 %v939
    %1021 = vmatpush.bf16.msra.mxu0 %v935
    %1022 = vmatpush.bf16.msra.mxu0 %v931
    %1023 = vmatpush.bf16.msra.mxu0 %v927
    %1024 = vmatpush.bf16.msra.mxu0 %v923
    %1025 = vmatpush.bf16.msra.mxu0 %v919
    %1026 = vmatpush.bf16.msra.mxu0 %v915
    %1027 = vmatpush.bf16.msra.mxu0 %v911
    %1028 = vmatmul.bf16.gmra.mxu0 %v684
    %v1029 = vpop.f32.mrf.mxu0
    %v1030 = vadd.f32 %v1017, %v1029
    %v1031 = vpop.f32.mrf.mxu0
    %1032 = vdwg.mxu0
    %1033 = vmatpush.bf16.msra.mxu0 %v908
    %1034 = vmatpush.bf16.msra.mxu0 %v904
    %1035 = vmatpush.bf16.msra.mxu0 %v900
    %1036 = vmatpush.bf16.msra.mxu0 %v896
    %1037 = vmatpush.bf16.msra.mxu0 %v892
    %1038 = vmatpush.bf16.msra.mxu0 %v888
    %1039 = vmatpush.bf16.msra.mxu0 %v884
    %1040 = vmatpush.bf16.msra.mxu0 %v880
    %1041 = vmatmul.bf16.gmra.mxu0 %v683
    %v1042 = vpop.f32.mrf.mxu0
    %v1043 = vadd.f32 %v291, %v1042
    %v1044 = vpop.f32.mrf.mxu0
    %1045 = vdwg.mxu0
    %1046 = vmatpush.bf16.msra.mxu0 %v940
    %1047 = vmatpush.bf16.msra.mxu0 %v936
    %1048 = vmatpush.bf16.msra.mxu0 %v932
    %1049 = vmatpush.bf16.msra.mxu0 %v928
    %1050 = vmatpush.bf16.msra.mxu0 %v924
    %1051 = vmatpush.bf16.msra.mxu0 %v920
    %1052 = vmatpush.bf16.msra.mxu0 %v916
    %1053 = vmatpush.bf16.msra.mxu0 %v912
    %1054 = vmatmul.bf16.gmra.mxu0 %v684
    %v1055 = vpop.f32.mrf.mxu0
    %v1056 = vadd.f32 %v1043, %v1055
    %v1057 = vpop.f32.mrf.mxu0
    %1058 = vdwg.mxu0
    %1059 = vmatpush.bf16.msra.mxu0 %v909
    %1060 = vmatpush.bf16.msra.mxu0 %v905
    %1061 = vmatpush.bf16.msra.mxu0 %v901
    %1062 = vmatpush.bf16.msra.mxu0 %v897
    %1063 = vmatpush.bf16.msra.mxu0 %v893
    %1064 = vmatpush.bf16.msra.mxu0 %v889
    %1065 = vmatpush.bf16.msra.mxu0 %v885
    %1066 = vmatpush.bf16.msra.mxu0 %v881
    %1067 = vmatmul.bf16.gmra.mxu0 %v683
    %v1068 = vpop.f32.mrf.mxu0
    %v1069 = vadd.f32 %v292, %v1068
    %v1070 = vpop.f32.mrf.mxu0
    %1071 = vdwg.mxu0
    %1072 = vmatpush.bf16.msra.mxu0 %v941
    %1073 = vmatpush.bf16.msra.mxu0 %v937
    %1074 = vmatpush.bf16.msra.mxu0 %v933
    %1075 = vmatpush.bf16.msra.mxu0 %v929
    %1076 = vmatpush.bf16.msra.mxu0 %v925
    %1077 = vmatpush.bf16.msra.mxu0 %v921
    %1078 = vmatpush.bf16.msra.mxu0 %v917
    %1079 = vmatpush.bf16.msra.mxu0 %v913
    %1080 = vmatmul.bf16.gmra.mxu0 %v684
    %v1081 = vpop.f32.mrf.mxu0
    %v1082 = vadd.f32 %v1069, %v1081
    %v1083 = vpop.f32.mrf.mxu0
    %1084 = vdwg.mxu0
    %1085 = vmatpush.bf16.msra.mxu0 %v910
    %1086 = vmatpush.bf16.msra.mxu0 %v906
    %1087 = vmatpush.bf16.msra.mxu0 %v902
    %1088 = vmatpush.bf16.msra.mxu0 %v898
    %1089 = vmatpush.bf16.msra.mxu0 %v894
    %1090 = vmatpush.bf16.msra.mxu0 %v890
    %1091 = vmatpush.bf16.msra.mxu0 %v886
    %1092 = vmatpush.bf16.msra.mxu0 %v882
    %1093 = vmatmul.bf16.gmra.mxu0 %v683
    %v1094 = vpop.f32.mrf.mxu0
    %v1095 = vadd.f32 %v293, %v1094
    %v1096 = vpop.f32.mrf.mxu0
    %1097 = vdwg.mxu0
    %1098 = vmatpush.bf16.msra.mxu0 %v942
    %1099 = vmatpush.bf16.msra.mxu0 %v938
    %1100 = vmatpush.bf16.msra.mxu0 %v934
    %1101 = vmatpush.bf16.msra.mxu0 %v930
    %1102 = vmatpush.bf16.msra.mxu0 %v926
    %1103 = vmatpush.bf16.msra.mxu0 %v922
    %1104 = vmatpush.bf16.msra.mxu0 %v918
    %1105 = vmatpush.bf16.msra.mxu0 %v914
    %1106 = vmatmul.bf16.gmra.mxu0 %v684
    %v1107 = vpop.f32.mrf.mxu0
    %v1108 = vadd.f32 %v1095, %v1107
    %v1109 = vpop.f32.mrf.mxu0
    %1110 = vdwg.mxu0
    %v1111 = vxor.u32 %v1030, 2147483648
    %v1112 = vxor.u32 %v1056, 2147483648
    %v1113 = vmul.f32 %v1111, 1.442695
    %v1114 = vpow.pop %v1113
    %v1115 = vmul.f32 %v1112, 1.442695
    %v1116 = vpow.pop %v1115
    %v1117 = vadd.f32 %v1114, 1.0
    %v1118 = vadd.f32 %v1116, 1.0
    %v1119 = vrcp.pop %v1117
    %v1120 = vmul.f32 %v1117, %v1119
    %v1121 = vsub.f32 1.0, %v1120
    %v1122 = vmul.f32 %v1119, %v1121
    %v1123 = vadd.f32 %v1119, %v1122
    %vm1124 = vweird.f32 %v1117
    %vm1125 = vweird.f32 %v1119
    %vm1126 = vmor %vm1124, %vm1125
    %v1127 = vsel %vm1126, %v1119, %v1123
    %v1128 = vand.u32 2147483647, %v1117
    %vm1129 = vcmp.eq.f32.partialorder %v1128, 8.507059e+37
    %v1130 = vand.u32 %v1117, 2147483648
    %v1131 = vor.u32 1.1754944e-38, %v1130
    %v1132 = vsel %vm1129, %v1131, %v1127
    %v1133 = vmul.f32 1.0, %v1132
    %v1134 = vrcp.pop %v1118
    %v1135 = vmul.f32 %v1118, %v1134
    %v1136 = vsub.f32 1.0, %v1135
    %v1137 = vmul.f32 %v1134, %v1136
    %v1138 = vadd.f32 %v1134, %v1137
    %vm1139 = vweird.f32 %v1118
    %vm1140 = vweird.f32 %v1134
    %vm1141 = vmor %vm1139, %vm1140
    %v1142 = vsel %vm1141, %v1134, %v1138
    %v1143 = vand.u32 2147483647, %v1118
    %vm1144 = vcmp.eq.f32.partialorder %v1143, 8.507059e+37
    %v1145 = vand.u32 %v1118, 2147483648
    %v1146 = vor.u32 1.1754944e-38, %v1145
    %v1147 = vsel %vm1144, %v1146, %v1142
    %v1148 = vmul.f32 1.0, %v1147
    %v1149 = vtanh.pop %v1082
    %v1150 = vxor.u32 %v1108, 2147483648
    %v1151 = vmul.f32 %v1150, 1.442695
    %v1152 = vpow.pop %v1151
    %v1153 = vadd.f32 %v1152, 1.0
    %v1154 = vrcp.pop %v1153
    %v1155 = vmul.f32 %v1153, %v1154
    %v1156 = vsub.f32 1.0, %v1155
    %v1157 = vmul.f32 %v1154, %v1156
    %v1158 = vadd.f32 %v1154, %v1157
    %vm1159 = vweird.f32 %v1153
    %vm1160 = vweird.f32 %v1154
    %vm1161 = vmor %vm1159, %vm1160
    %v1162 = vsel %vm1161, %v1154, %v1158
    %v1163 = vand.u32 2147483647, %v1153
    %vm1164 = vcmp.eq.f32.partialorder %v1163, 8.507059e+37
    %v1165 = vand.u32 %v1153, 2147483648
    %v1166 = vor.u32 1.1754944e-38, %v1165
    %v1167 = vsel %vm1164, %v1166, %v1162
    %v1168 = vmul.f32 1.0, %v1167
    %v1169 = vmul.f32 %v1148, 0.0
    %v1170 = vmul.f32 %v1133, %v1149
    %v1171 = vadd.f32 %v1169, %v1170
    %v1172 = vtanh.pop %v1171
    %v1173 = vmul.f32 %v1168, %v1172
    %v1174 = vpack.c.bf16 %v1173, %v1173
    %1175 = vst [vmem:[#allocation3 + $0x4] sm:$0xf] %v1174
    %v1176 = vld [vmem:[#allocation2 + $0x20] sm:$0xff]
    %v1177 = vld [vmem:[#allocation2 + $0x28] sm:$0xff]
    %v1178 = vld [vmem:[#allocation2 + $0x30] sm:$0xff]
    %v1179 = vld [vmem:[#allocation2 + $0x38] sm:$0xff]
    %v1180 = vld [vmem:[#allocation5] sm:$0xff]
    %v1181 = vld [vmem:[#allocation5 + $0x8] sm:$0xff]
    %v1182 = vld [vmem:[#allocation5 + $0x10] sm:$0xff]
    %v1183 = vld [vmem:[#allocation5 + $0x18] sm:$0xff]
    %v1184 = vld [vmem:[#allocation5 + $0x20] sm:$0xff]
    %v1185 = vld [vmem:[#allocation5 + $0x28] sm:$0xff]
    %v1186 = vld [vmem:[#allocation5 + $0x30] sm:$0xff]
    %v1187 = vld [vmem:[#allocation5 + $0x38] sm:$0xff]
    %v1188 = vld [vmem:[#allocation5 + $0x40] sm:$0xff]
    %v1189 = vld [vmem:[#allocation5 + $0x48] sm:$0xff]
    %v1190 = vld [vmem:[#allocation5 + $0x50] sm:$0xff]
    %v1191 = vld [vmem:[#allocation5 + $0x58] sm:$0xff]
    %v1192 = vld [vmem:[#allocation5 + $0x60] sm:$0xff]
    %v1193 = vld [vmem:[#allocation5 + $0x68] sm:$0xff]
    %v1194 = vld [vmem:[#allocation5 + $0x70] sm:$0xff]
    %v1195 = vld [vmem:[#allocation5 + $0x78] sm:$0xff]
    %v1196 = vld [vmem:[#allocation5 + $0x80] sm:$0xff]
    %v1197 = vld [vmem:[#allocation5 + $0x88] sm:$0xff]
    %v1198 = vld [vmem:[#allocation5 + $0x90] sm:$0xff]
    %v1199 = vld [vmem:[#allocation5 + $0x98] sm:$0xff]
    %v1200 = vld [vmem:[#allocation5 + $0xa0] sm:$0xff]
    %v1201 = vld [vmem:[#allocation5 + $0xa8] sm:$0xff]
    %v1202 = vld [vmem:[#allocation5 + $0xb0] sm:$0xff]
    %v1203 = vld [vmem:[#allocation5 + $0xb8] sm:$0xff]
    %v1204 = vld [vmem:[#allocation5 + $0xc0] sm:$0xff]
    %v1205 = vld [vmem:[#allocation5 + $0xc8] sm:$0xff]
    %v1206 = vld [vmem:[#allocation5 + $0xd0] sm:$0xff]
    %v1207 = vld [vmem:[#allocation5 + $0xd8] sm:$0xff]
    %v1208 = vld [vmem:[#allocation5 + $0xe0] sm:$0xff]
    %v1209 = vld [vmem:[#allocation5 + $0xe8] sm:$0xff]
    %v1210 = vld [vmem:[#allocation5 + $0xf0] sm:$0xff]
    %v1211 = vld [vmem:[#allocation5 + $0xf8] sm:$0xff]
    %v1244 = vunpack.c.l.b16 %v1180
    %v1245 = vunpack.c.h.b16 %v1180
    %v1246 = vunpack.c.l.b16 %v1181
    %v1247 = vunpack.c.h.b16 %v1181
    %v1248 = vunpack.c.l.b16 %v1182
    %v1249 = vunpack.c.h.b16 %v1182
    %v1250 = vunpack.c.l.b16 %v1183
    %v1251 = vunpack.c.h.b16 %v1183
    %v1252 = vunpack.c.l.b16 %v1184
    %v1253 = vunpack.c.h.b16 %v1184
    %v1254 = vunpack.c.l.b16 %v1185
    %v1255 = vunpack.c.h.b16 %v1185
    %v1256 = vunpack.c.l.b16 %v1186
    %v1257 = vunpack.c.h.b16 %v1186
    %v1258 = vunpack.c.l.b16 %v1187
    %v1259 = vunpack.c.h.b16 %v1187
    %v1260 = vunpack.c.l.b16 %v1188
    %v1261 = vunpack.c.h.b16 %v1188
    %v1262 = vunpack.c.l.b16 %v1189
    %v1263 = vunpack.c.h.b16 %v1189
    %v1264 = vunpack.c.l.b16 %v1190
    %v1265 = vunpack.c.h.b16 %v1190
    %v1266 = vunpack.c.l.b16 %v1191
    %v1267 = vunpack.c.h.b16 %v1191
    %v1268 = vunpack.c.l.b16 %v1192
    %v1269 = vunpack.c.h.b16 %v1192
    %v1270 = vunpack.c.l.b16 %v1193
    %v1271 = vunpack.c.h.b16 %v1193
    %v1272 = vunpack.c.l.b16 %v1194
    %v1273 = vunpack.c.h.b16 %v1194
    %v1274 = vunpack.c.l.b16 %v1195
    %v1275 = vunpack.c.h.b16 %v1195
    %v1276 = vunpack.c.l.b16 %v1196
    %v1277 = vunpack.c.h.b16 %v1196
    %v1278 = vunpack.c.l.b16 %v1197
    %v1279 = vunpack.c.h.b16 %v1197
    %v1280 = vunpack.c.l.b16 %v1198
    %v1281 = vunpack.c.h.b16 %v1198
    %v1282 = vunpack.c.l.b16 %v1199
    %v1283 = vunpack.c.h.b16 %v1199
    %v1284 = vunpack.c.l.b16 %v1200
    %v1285 = vunpack.c.h.b16 %v1200
    %v1286 = vunpack.c.l.b16 %v1201
    %v1287 = vunpack.c.h.b16 %v1201
    %v1288 = vunpack.c.l.b16 %v1202
    %v1289 = vunpack.c.h.b16 %v1202
    %v1290 = vunpack.c.l.b16 %v1203
    %v1291 = vunpack.c.h.b16 %v1203
    %v1292 = vunpack.c.l.b16 %v1204
    %v1293 = vunpack.c.h.b16 %v1204
    %v1294 = vunpack.c.l.b16 %v1205
    %v1295 = vunpack.c.h.b16 %v1205
    %v1296 = vunpack.c.l.b16 %v1206
    %v1297 = vunpack.c.h.b16 %v1206
    %v1298 = vunpack.c.l.b16 %v1207
    %v1299 = vunpack.c.h.b16 %v1207
    %v1300 = vunpack.c.l.b16 %v1208
    %v1301 = vunpack.c.h.b16 %v1208
    %v1302 = vunpack.c.l.b16 %v1209
    %v1303 = vunpack.c.h.b16 %v1209
    %v1304 = vunpack.c.l.b16 %v1210
    %v1305 = vunpack.c.h.b16 %v1210
    %v1306 = vunpack.c.l.b16 %v1211
    %v1307 = vunpack.c.h.b16 %v1211
    %v1308 = vpack.c.b16 %v1248, %v1244
    %v1309 = vpack.c.b16 %v1249, %v1245
    %v1310 = vpack.c.b16 %v1250, %v1246
    %v1311 = vpack.c.b16 %v1251, %v1247
    %v1312 = vpack.c.b16 %v1256, %v1252
    %v1313 = vpack.c.b16 %v1257, %v1253
    %v1314 = vpack.c.b16 %v1258, %v1254
    %v1315 = vpack.c.b16 %v1259, %v1255
    %v1316 = vpack.c.b16 %v1264, %v1260
    %v1317 = vpack.c.b16 %v1265, %v1261
    %v1318 = vpack.c.b16 %v1266, %v1262
    %v1319 = vpack.c.b16 %v1267, %v1263
    %v1320 = vpack.c.b16 %v1272, %v1268
    %v1321 = vpack.c.b16 %v1273, %v1269
    %v1322 = vpack.c.b16 %v1274, %v1270
    %v1323 = vpack.c.b16 %v1275, %v1271
    %v1324 = vpack.c.b16 %v1280, %v1276
    %v1325 = vpack.c.b16 %v1281, %v1277
    %v1326 = vpack.c.b16 %v1282, %v1278
    %v1327 = vpack.c.b16 %v1283, %v1279
    %v1328 = vpack.c.b16 %v1288, %v1284
    %v1329 = vpack.c.b16 %v1289, %v1285
    %v1330 = vpack.c.b16 %v1290, %v1286
    %v1331 = vpack.c.b16 %v1291, %v1287
    %v1332 = vpack.c.b16 %v1296, %v1292
    %v1333 = vpack.c.b16 %v1297, %v1293
    %v1334 = vpack.c.b16 %v1298, %v1294
    %v1335 = vpack.c.b16 %v1299, %v1295
    %v1336 = vpack.c.b16 %v1304, %v1300
    %v1337 = vpack.c.b16 %v1305, %v1301
    %v1338 = vpack.c.b16 %v1306, %v1302
    %v1339 = vpack.c.b16 %v1307, %v1303
    %1372 = vmatpush.bf16.msra.mxu0 %v1336
    %1373 = vmatpush.bf16.msra.mxu0 %v1332
    %1374 = vmatpush.bf16.msra.mxu0 %v1328
    %1375 = vmatpush.bf16.msra.mxu0 %v1324
    %1376 = vmatpush.bf16.msra.mxu0 %v1320
    %1377 = vmatpush.bf16.msra.mxu0 %v1316
    %1378 = vmatpush.bf16.msra.mxu0 %v1312
    %1379 = vmatpush.bf16.msra.mxu0 %v1308
    %1380 = vmatmul.bf16.gmra.mxu0 %v613
    %v1381 = vpop.f32.mrf.mxu0
    %v1382 = vadd.f32 0.0, %v1381
    %v1383 = vpop.f32.mrf.mxu0
    %1384 = vdwg.mxu0
    %1385 = vmatpush.bf16.msra.mxu0 %v1337
    %1386 = vmatpush.bf16.msra.mxu0 %v1333
    %1387 = vmatpush.bf16.msra.mxu0 %v1329
    %1388 = vmatpush.bf16.msra.mxu0 %v1325
    %1389 = vmatpush.bf16.msra.mxu0 %v1321
    %1390 = vmatpush.bf16.msra.mxu0 %v1317
    %1391 = vmatpush.bf16.msra.mxu0 %v1313
    %1392 = vmatpush.bf16.msra.mxu0 %v1309
    %1393 = vmatmul.bf16.gmra.mxu0 %v613
    %v1394 = vpop.f32.mrf.mxu0
    %v1395 = vadd.f32 0.0, %v1394
    %v1396 = vpop.f32.mrf.mxu0
    %1397 = vdwg.mxu0
    %1398 = vmatpush.bf16.msra.mxu0 %v1338
    %1399 = vmatpush.bf16.msra.mxu0 %v1334
    %1400 = vmatpush.bf16.msra.mxu0 %v1330
    %1401 = vmatpush.bf16.msra.mxu0 %v1326
    %1402 = vmatpush.bf16.msra.mxu0 %v1322
    %1403 = vmatpush.bf16.msra.mxu0 %v1318
    %1404 = vmatpush.bf16.msra.mxu0 %v1314
    %1405 = vmatpush.bf16.msra.mxu0 %v1310
    %1406 = vmatmul.bf16.gmra.mxu0 %v613
    %v1407 = vpop.f32.mrf.mxu0
    %v1408 = vadd.f32 0.0, %v1407
    %v1409 = vpop.f32.mrf.mxu0
    %1410 = vdwg.mxu0
    %1411 = vmatpush.bf16.msra.mxu0 %v1339
    %1412 = vmatpush.bf16.msra.mxu0 %v1335
    %1413 = vmatpush.bf16.msra.mxu0 %v1331
    %1414 = vmatpush.bf16.msra.mxu0 %v1327
    %1415 = vmatpush.bf16.msra.mxu0 %v1323
    %1416 = vmatpush.bf16.msra.mxu0 %v1319
    %1417 = vmatpush.bf16.msra.mxu0 %v1315
    %1418 = vmatpush.bf16.msra.mxu0 %v1311
    %1419 = vmatmul.bf16.gmra.mxu0 %v613
    %v1420 = vpop.f32.mrf.mxu0
    %v1421 = vadd.f32 0.0, %v1420
    %v1422 = vpop.f32.mrf.mxu0
    %1423 = vdwg.mxu0
    %v1424 = vadd.f32 %v1176, %v1382
    %v1425 = vadd.f32 %v1177, %v1395
    %v1426 = vadd.f32 %v1178, %v1408
    %v1427 = vadd.f32 %v1179, %v1421
    %v1428 = vxor.u32 %v1424, 2147483648
    %v1429 = vxor.u32 %v1425, 2147483648
    %v1430 = vmul.f32 %v1428, 1.442695
    %v1431 = vpow.pop %v1430
    %v1432 = vmul.f32 %v1429, 1.442695
    %v1433 = vpow.pop %v1432
    %v1434 = vadd.f32 %v1431, 1.0
    %v1435 = vadd.f32 %v1433, 1.0
    %v1436 = vrcp.pop %v1434
    %v1437 = vmul.f32 %v1434, %v1436
    %v1438 = vsub.f32 1.0, %v1437
    %v1439 = vmul.f32 %v1436, %v1438
    %v1440 = vadd.f32 %v1436, %v1439
    %vm1441 = vweird.f32 %v1434
    %vm1442 = vweird.f32 %v1436
    %vm1443 = vmor %vm1441, %vm1442
    %v1444 = vsel %vm1443, %v1436, %v1440
    %v1445 = vand.u32 2147483647, %v1434
    %vm1446 = vcmp.eq.f32.partialorder %v1445, 8.507059e+37
    %v1447 = vand.u32 %v1434, 2147483648
    %v1448 = vor.u32 1.1754944e-38, %v1447
    %v1449 = vsel %vm1446, %v1448, %v1444
    %v1450 = vmul.f32 1.0, %v1449
    %v1451 = vrcp.pop %v1435
    %v1452 = vmul.f32 %v1435, %v1451
    %v1453 = vsub.f32 1.0, %v1452
    %v1454 = vmul.f32 %v1451, %v1453
    %v1455 = vadd.f32 %v1451, %v1454
    %vm1456 = vweird.f32 %v1435
    %vm1457 = vweird.f32 %v1451
    %vm1458 = vmor %vm1456, %vm1457
    %v1459 = vsel %vm1458, %v1451, %v1455
    %v1460 = vand.u32 2147483647, %v1435
    %vm1461 = vcmp.eq.f32.partialorder %v1460, 8.507059e+37
    %v1462 = vand.u32 %v1435, 2147483648
    %v1463 = vor.u32 1.1754944e-38, %v1462
    %v1464 = vsel %vm1461, %v1463, %v1459
    %v1465 = vmul.f32 1.0, %v1464
    %v1466 = vtanh.pop %v1426
    %v1467 = vxor.u32 %v1427, 2147483648
    %v1468 = vmul.f32 %v1467, 1.442695
    %v1469 = vpow.pop %v1468
    %v1470 = vadd.f32 %v1469, 1.0
    %v1471 = vrcp.pop %v1470
    %v1472 = vmul.f32 %v1470, %v1471
    %v1473 = vsub.f32 1.0, %v1472
    %v1474 = vmul.f32 %v1471, %v1473
    %v1475 = vadd.f32 %v1471, %v1474
    %vm1476 = vweird.f32 %v1470
    %vm1477 = vweird.f32 %v1471
    %vm1478 = vmor %vm1476, %vm1477
    %v1479 = vsel %vm1478, %v1471, %v1475
    %v1480 = vand.u32 2147483647, %v1470
    %vm1481 = vcmp.eq.f32.partialorder %v1480, 8.507059e+37
    %v1482 = vand.u32 %v1470, 2147483648
    %v1483 = vor.u32 1.1754944e-38, %v1482
    %v1484 = vsel %vm1481, %v1483, %v1479
    %v1485 = vmul.f32 1.0, %v1484
    %v1486 = vmul.f32 %v1465, %v610
    %v1487 = vmul.f32 %v1450, %v1466
    %v1488 = vadd.f32 %v1486, %v1487
    %v1489 = vtanh.pop %v1488
    %v1490 = vmul.f32 %v1485, %v1489
    %v1491 = vpack.c.bf16 %v1490, %v1490
    %1492 = vst [vmem:[#allocation3] sm:$0xf] %v1491
    %v1493 = vld [vmem:[#allocation3] sm:$0xff]
    %v1494 = vld [vmem:[#allocation7] sm:$0xff]
    %v1495 = vld [vmem:[#allocation7 + $0x8] sm:$0xff]
    %v1496 = vld [vmem:[#allocation7 + $0x10] sm:$0xff]
    %v1497 = vld [vmem:[#allocation7 + $0x18] sm:$0xff]
    %v1498 = vld [vmem:[#allocation7 + $0x20] sm:$0xff]
    %v1499 = vld [vmem:[#allocation7 + $0x28] sm:$0xff]
    %v1500 = vld [vmem:[#allocation7 + $0x30] sm:$0xff]
    %v1501 = vld [vmem:[#allocation7 + $0x38] sm:$0xff]
    %v1502 = vld [vmem:[#allocation7 + $0x40] sm:$0xff]
    %v1503 = vld [vmem:[#allocation7 + $0x48] sm:$0xff]
    %v1504 = vld [vmem:[#allocation7 + $0x50] sm:$0xff]
    %v1505 = vld [vmem:[#allocation7 + $0x58] sm:$0xff]
    %v1506 = vld [vmem:[#allocation7 + $0x60] sm:$0xff]
    %v1507 = vld [vmem:[#allocation7 + $0x68] sm:$0xff]
    %v1508 = vld [vmem:[#allocation7 + $0x70] sm:$0xff]
    %v1509 = vld [vmem:[#allocation7 + $0x78] sm:$0xff]
    %v1510 = vld [vmem:[#allocation7 + $0x80] sm:$0xff]
    %v1511 = vld [vmem:[#allocation7 + $0x88] sm:$0xff]
    %v1512 = vld [vmem:[#allocation7 + $0x90] sm:$0xff]
    %v1513 = vld [vmem:[#allocation7 + $0x98] sm:$0xff]
    %v1514 = vld [vmem:[#allocation7 + $0xa0] sm:$0xff]
    %v1515 = vld [vmem:[#allocation7 + $0xa8] sm:$0xff]
    %v1516 = vld [vmem:[#allocation7 + $0xb0] sm:$0xff]
    %v1517 = vld [vmem:[#allocation7 + $0xb8] sm:$0xff]
    %v1518 = vld [vmem:[#allocation7 + $0xc0] sm:$0xff]
    %v1519 = vld [vmem:[#allocation7 + $0xc8] sm:$0xff]
    %v1520 = vld [vmem:[#allocation7 + $0xd0] sm:$0xff]
    %v1521 = vld [vmem:[#allocation7 + $0xd8] sm:$0xff]
    %v1522 = vld [vmem:[#allocation7 + $0xe0] sm:$0xff]
    %v1523 = vld [vmem:[#allocation7 + $0xe8] sm:$0xff]
    %v1524 = vld [vmem:[#allocation7 + $0xf0] sm:$0xff]
    %v1525 = vld [vmem:[#allocation7 + $0xf8] sm:$0xff]
    %v1526 = vld [vmem:[#allocation7 + $0x100] sm:$0xff]
    %v1527 = vld [vmem:[#allocation7 + $0x108] sm:$0xff]
    %v1528 = vld [vmem:[#allocation7 + $0x110] sm:$0xff]
    %v1529 = vld [vmem:[#allocation7 + $0x118] sm:$0xff]
    %v1530 = vld [vmem:[#allocation7 + $0x120] sm:$0xff]
    %v1531 = vld [vmem:[#allocation7 + $0x128] sm:$0xff]
    %v1532 = vld [vmem:[#allocation7 + $0x130] sm:$0xff]
    %v1533 = vld [vmem:[#allocation7 + $0x138] sm:$0xff]
    %v1534 = vld [vmem:[#allocation7 + $0x140] sm:$0xff]
    %v1535 = vld [vmem:[#allocation7 + $0x148] sm:$0xff]
    %v1536 = vld [vmem:[#allocation7 + $0x150] sm:$0xff]
    %v1537 = vld [vmem:[#allocation7 + $0x158] sm:$0xff]
    %v1538 = vld [vmem:[#allocation7 + $0x160] sm:$0xff]
    %v1539 = vld [vmem:[#allocation7 + $0x168] sm:$0xff]
    %v1540 = vld [vmem:[#allocation7 + $0x170] sm:$0xff]
    %v1541 = vld [vmem:[#allocation7 + $0x178] sm:$0xff]
    %v1542 = vld [vmem:[#allocation7 + $0x180] sm:$0xff]
    %v1543 = vld [vmem:[#allocation7 + $0x188] sm:$0xff]
    %v1544 = vld [vmem:[#allocation7 + $0x190] sm:$0xff]
    %v1545 = vld [vmem:[#allocation7 + $0x198] sm:$0xff]
    %v1546 = vld [vmem:[#allocation7 + $0x1a0] sm:$0xff]
    %v1547 = vld [vmem:[#allocation7 + $0x1a8] sm:$0xff]
    %v1548 = vld [vmem:[#allocation7 + $0x1b0] sm:$0xff]
    %v1549 = vld [vmem:[#allocation7 + $0x1b8] sm:$0xff]
    %v1550 = vld [vmem:[#allocation7 + $0x1c0] sm:$0xff]
    %v1551 = vld [vmem:[#allocation7 + $0x1c8] sm:$0xff]
    %v1552 = vld [vmem:[#allocation7 + $0x1d0] sm:$0xff]
    %v1553 = vld [vmem:[#allocation7 + $0x1d8] sm:$0xff]
    %v1554 = vld [vmem:[#allocation7 + $0x1e0] sm:$0xff]
    %v1555 = vld [vmem:[#allocation7 + $0x1e8] sm:$0xff]
    %v1556 = vld [vmem:[#allocation7 + $0x1f0] sm:$0xff]
    %v1557 = vld [vmem:[#allocation7 + $0x1f8] sm:$0xff]
    %v1559 = vunpack.c.l.b16 %v1493
    %v1560 = vunpack.c.h.b16 %v1493
    %v1561 = vpack.c.b16 %v1559, %v1559
    %v1562 = vpack.c.b16 %v1560, %v1560
    %v1629 = vunpack.c.l.b16 %v1494
    %v1630 = vunpack.c.h.b16 %v1494
    %v1631 = vunpack.c.l.b16 %v1495
    %v1632 = vunpack.c.h.b16 %v1495
    %v1633 = vunpack.c.l.b16 %v1496
    %v1634 = vunpack.c.h.b16 %v1496
    %v1635 = vunpack.c.l.b16 %v1497
    %v1636 = vunpack.c.h.b16 %v1497
    %v1637 = vunpack.c.l.b16 %v1498
    %v1638 = vunpack.c.h.b16 %v1498
    %v1639 = vunpack.c.l.b16 %v1499
    %v1640 = vunpack.c.h.b16 %v1499
    %v1641 = vunpack.c.l.b16 %v1500
    %v1642 = vunpack.c.h.b16 %v1500
    %v1643 = vunpack.c.l.b16 %v1501
    %v1644 = vunpack.c.h.b16 %v1501
    %v1645 = vunpack.c.l.b16 %v1502
    %v1646 = vunpack.c.h.b16 %v1502
    %v1647 = vunpack.c.l.b16 %v1503
    %v1648 = vunpack.c.h.b16 %v1503
    %v1649 = vunpack.c.l.b16 %v1504
    %v1650 = vunpack.c.h.b16 %v1504
    %v1651 = vunpack.c.l.b16 %v1505
    %v1652 = vunpack.c.h.b16 %v1505
    %v1653 = vunpack.c.l.b16 %v1506
    %v1654 = vunpack.c.h.b16 %v1506
    %v1655 = vunpack.c.l.b16 %v1507
    %v1656 = vunpack.c.h.b16 %v1507
    %v1657 = vunpack.c.l.b16 %v1508
    %v1658 = vunpack.c.h.b16 %v1508
    %v1659 = vunpack.c.l.b16 %v1509
    %v1660 = vunpack.c.h.b16 %v1509
    %v1661 = vunpack.c.l.b16 %v1510
    %v1662 = vunpack.c.h.b16 %v1510
    %v1663 = vunpack.c.l.b16 %v1511
    %v1664 = vunpack.c.h.b16 %v1511
    %v1665 = vunpack.c.l.b16 %v1512
    %v1666 = vunpack.c.h.b16 %v1512
    %v1667 = vunpack.c.l.b16 %v1513
    %v1668 = vunpack.c.h.b16 %v1513
    %v1669 = vunpack.c.l.b16 %v1514
    %v1670 = vunpack.c.h.b16 %v1514
    %v1671 = vunpack.c.l.b16 %v1515
    %v1672 = vunpack.c.h.b16 %v1515
    %v1673 = vunpack.c.l.b16 %v1516
    %v1674 = vunpack.c.h.b16 %v1516
    %v1675 = vunpack.c.l.b16 %v1517
    %v1676 = vunpack.c.h.b16 %v1517
    %v1677 = vunpack.c.l.b16 %v1518
    %v1678 = vunpack.c.h.b16 %v1518
    %v1679 = vunpack.c.l.b16 %v1519
    %v1680 = vunpack.c.h.b16 %v1519
    %v1681 = vunpack.c.l.b16 %v1520
    %v1682 = vunpack.c.h.b16 %v1520
    %v1683 = vunpack.c.l.b16 %v1521
    %v1684 = vunpack.c.h.b16 %v1521
    %v1685 = vunpack.c.l.b16 %v1522
    %v1686 = vunpack.c.h.b16 %v1522
    %v1687 = vunpack.c.l.b16 %v1523
    %v1688 = vunpack.c.h.b16 %v1523
    %v1689 = vunpack.c.l.b16 %v1524
    %v1690 = vunpack.c.h.b16 %v1524
    %v1691 = vunpack.c.l.b16 %v1525
    %v1692 = vunpack.c.h.b16 %v1525
    %v1693 = vunpack.c.l.b16 %v1526
    %v1694 = vunpack.c.h.b16 %v1526
    %v1695 = vunpack.c.l.b16 %v1527
    %v1696 = vunpack.c.h.b16 %v1527
    %v1697 = vunpack.c.l.b16 %v1528
    %v1698 = vunpack.c.h.b16 %v1528
    %v1699 = vunpack.c.l.b16 %v1529
    %v1700 = vunpack.c.h.b16 %v1529
    %v1701 = vunpack.c.l.b16 %v1530
    %v1702 = vunpack.c.h.b16 %v1530
    %v1703 = vunpack.c.l.b16 %v1531
    %v1704 = vunpack.c.h.b16 %v1531
    %v1705 = vunpack.c.l.b16 %v1532
    %v1706 = vunpack.c.h.b16 %v1532
    %v1707 = vunpack.c.l.b16 %v1533
    %v1708 = vunpack.c.h.b16 %v1533
    %v1709 = vunpack.c.l.b16 %v1534
    %v1710 = vunpack.c.h.b16 %v1534
    %v1711 = vunpack.c.l.b16 %v1535
    %v1712 = vunpack.c.h.b16 %v1535
    %v1713 = vunpack.c.l.b16 %v1536
    %v1714 = vunpack.c.h.b16 %v1536
    %v1715 = vunpack.c.l.b16 %v1537
    %v1716 = vunpack.c.h.b16 %v1537
    %v1717 = vunpack.c.l.b16 %v1538
    %v1718 = vunpack.c.h.b16 %v1538
    %v1719 = vunpack.c.l.b16 %v1539
    %v1720 = vunpack.c.h.b16 %v1539
    %v1721 = vunpack.c.l.b16 %v1540
    %v1722 = vunpack.c.h.b16 %v1540
    %v1723 = vunpack.c.l.b16 %v1541
    %v1724 = vunpack.c.h.b16 %v1541
    %v1725 = vunpack.c.l.b16 %v1542
    %v1726 = vunpack.c.h.b16 %v1542
    %v1727 = vunpack.c.l.b16 %v1543
    %v1728 = vunpack.c.h.b16 %v1543
    %v1729 = vunpack.c.l.b16 %v1544
    %v1730 = vunpack.c.h.b16 %v1544
    %v1731 = vunpack.c.l.b16 %v1545
    %v1732 = vunpack.c.h.b16 %v1545
    %v1733 = vunpack.c.l.b16 %v1546
    %v1734 = vunpack.c.h.b16 %v1546
    %v1735 = vunpack.c.l.b16 %v1547
    %v1736 = vunpack.c.h.b16 %v1547
    %v1737 = vunpack.c.l.b16 %v1548
    %v1738 = vunpack.c.h.b16 %v1548
    %v1739 = vunpack.c.l.b16 %v1549
    %v1740 = vunpack.c.h.b16 %v1549
    %v1741 = vunpack.c.l.b16 %v1550
    %v1742 = vunpack.c.h.b16 %v1550
    %v1743 = vunpack.c.l.b16 %v1551
    %v1744 = vunpack.c.h.b16 %v1551
    %v1745 = vunpack.c.l.b16 %v1552
    %v1746 = vunpack.c.h.b16 %v1552
    %v1747 = vunpack.c.l.b16 %v1553
    %v1748 = vunpack.c.h.b16 %v1553
    %v1749 = vunpack.c.l.b16 %v1554
    %v1750 = vunpack.c.h.b16 %v1554
    %v1751 = vunpack.c.l.b16 %v1555
    %v1752 = vunpack.c.h.b16 %v1555
    %v1753 = vunpack.c.l.b16 %v1556
    %v1754 = vunpack.c.h.b16 %v1556
    %v1755 = vunpack.c.l.b16 %v1557
    %v1756 = vunpack.c.h.b16 %v1557
    %v1757 = vpack.c.b16 %v1633, %v1629
    %v1758 = vpack.c.b16 %v1634, %v1630
    %v1759 = vpack.c.b16 %v1635, %v1631
    %v1760 = vpack.c.b16 %v1636, %v1632
    %v1761 = vpack.c.b16 %v1641, %v1637
    %v1762 = vpack.c.b16 %v1642, %v1638
    %v1763 = vpack.c.b16 %v1643, %v1639
    %v1764 = vpack.c.b16 %v1644, %v1640
    %v1765 = vpack.c.b16 %v1649, %v1645
    %v1766 = vpack.c.b16 %v1650, %v1646
    %v1767 = vpack.c.b16 %v1651, %v1647
    %v1768 = vpack.c.b16 %v1652, %v1648
    %v1769 = vpack.c.b16 %v1657, %v1653
    %v1770 = vpack.c.b16 %v1658, %v1654
    %v1771 = vpack.c.b16 %v1659, %v1655
    %v1772 = vpack.c.b16 %v1660, %v1656
    %v1773 = vpack.c.b16 %v1665, %v1661
    %v1774 = vpack.c.b16 %v1666, %v1662
    %v1775 = vpack.c.b16 %v1667, %v1663
    %v1776 = vpack.c.b16 %v1668, %v1664
    %v1777 = vpack.c.b16 %v1673, %v1669
    %v1778 = vpack.c.b16 %v1674, %v1670
    %v1779 = vpack.c.b16 %v1675, %v1671
    %v1780 = vpack.c.b16 %v1676, %v1672
    %v1781 = vpack.c.b16 %v1681, %v1677
    %v1782 = vpack.c.b16 %v1682, %v1678
    %v1783 = vpack.c.b16 %v1683, %v1679
    %v1784 = vpack.c.b16 %v1684, %v1680
    %v1785 = vpack.c.b16 %v1689, %v1685
    %v1786 = vpack.c.b16 %v1690, %v1686
    %v1787 = vpack.c.b16 %v1691, %v1687
    %v1788 = vpack.c.b16 %v1692, %v1688
    %v1789 = vpack.c.b16 %v1697, %v1693
    %v1790 = vpack.c.b16 %v1698, %v1694
    %v1791 = vpack.c.b16 %v1699, %v1695
    %v1792 = vpack.c.b16 %v1700, %v1696
    %v1793 = vpack.c.b16 %v1705, %v1701
    %v1794 = vpack.c.b16 %v1706, %v1702
    %v1795 = vpack.c.b16 %v1707, %v1703
    %v1796 = vpack.c.b16 %v1708, %v1704
    %v1797 = vpack.c.b16 %v1713, %v1709
    %v1798 = vpack.c.b16 %v1714, %v1710
    %v1799 = vpack.c.b16 %v1715, %v1711
    %v1800 = vpack.c.b16 %v1716, %v1712
    %v1801 = vpack.c.b16 %v1721, %v1717
    %v1802 = vpack.c.b16 %v1722, %v1718
    %v1803 = vpack.c.b16 %v1723, %v1719
    %v1804 = vpack.c.b16 %v1724, %v1720
    %v1805 = vpack.c.b16 %v1729, %v1725
    %v1806 = vpack.c.b16 %v1730, %v1726
    %v1807 = vpack.c.b16 %v1731, %v1727
    %v1808 = vpack.c.b16 %v1732, %v1728
    %v1809 = vpack.c.b16 %v1737, %v1733
    %v1810 = vpack.c.b16 %v1738, %v1734
    %v1811 = vpack.c.b16 %v1739, %v1735
    %v1812 = vpack.c.b16 %v1740, %v1736
    %v1813 = vpack.c.b16 %v1745, %v1741
    %v1814 = vpack.c.b16 %v1746, %v1742
    %v1815 = vpack.c.b16 %v1747, %v1743
    %v1816 = vpack.c.b16 %v1748, %v1744
    %v1817 = vpack.c.b16 %v1753, %v1749
    %v1818 = vpack.c.b16 %v1754, %v1750
    %v1819 = vpack.c.b16 %v1755, %v1751
    %v1820 = vpack.c.b16 %v1756, %v1752
    %1885 = vmatpush.bf16.msra.mxu0 %v1785
    %1886 = vmatpush.bf16.msra.mxu0 %v1781
    %1887 = vmatpush.bf16.msra.mxu0 %v1777
    %1888 = vmatpush.bf16.msra.mxu0 %v1773
    %1889 = vmatpush.bf16.msra.mxu0 %v1769
    %1890 = vmatpush.bf16.msra.mxu0 %v1765
    %1891 = vmatpush.bf16.msra.mxu0 %v1761
    %1892 = vmatpush.bf16.msra.mxu0 %v1757
    %1893 = vmatmul.bf16.gmra.mxu0 %v1561
    %v1894 = vpop.f32.mrf.mxu0
    %v1895 = vadd.f32 %v290, %v1894
    %v1896 = vpop.f32.mrf.mxu0
    %1897 = vdwg.mxu0
    %1898 = vmatpush.bf16.msra.mxu0 %v1817
    %1899 = vmatpush.bf16.msra.mxu0 %v1813
    %1900 = vmatpush.bf16.msra.mxu0 %v1809
    %1901 = vmatpush.bf16.msra.mxu0 %v1805
    %1902 = vmatpush.bf16.msra.mxu0 %v1801
    %1903 = vmatpush.bf16.msra.mxu0 %v1797
    %1904 = vmatpush.bf16.msra.mxu0 %v1793
    %1905 = vmatpush.bf16.msra.mxu0 %v1789
    %1906 = vmatmul.bf16.gmra.mxu0 %v1562
    %v1907 = vpop.f32.mrf.mxu0
    %v1908 = vadd.f32 %v1895, %v1907
    %v1909 = vpop.f32.mrf.mxu0
    %1910 = vdwg.mxu0
    %1911 = vmatpush.bf16.msra.mxu0 %v1786
    %1912 = vmatpush.bf16.msra.mxu0 %v1782
    %1913 = vmatpush.bf16.msra.mxu0 %v1778
    %1914 = vmatpush.bf16.msra.mxu0 %v1774
    %1915 = vmatpush.bf16.msra.mxu0 %v1770
    %1916 = vmatpush.bf16.msra.mxu0 %v1766
    %1917 = vmatpush.bf16.msra.mxu0 %v1762
    %1918 = vmatpush.bf16.msra.mxu0 %v1758
    %1919 = vmatmul.bf16.gmra.mxu0 %v1561
    %v1920 = vpop.f32.mrf.mxu0
    %v1921 = vadd.f32 %v291, %v1920
    %v1922 = vpop.f32.mrf.mxu0
    %1923 = vdwg.mxu0
    %1924 = vmatpush.bf16.msra.mxu0 %v1818
    %1925 = vmatpush.bf16.msra.mxu0 %v1814
    %1926 = vmatpush.bf16.msra.mxu0 %v1810
    %1927 = vmatpush.bf16.msra.mxu0 %v1806
    %1928 = vmatpush.bf16.msra.mxu0 %v1802
    %1929 = vmatpush.bf16.msra.mxu0 %v1798
    %1930 = vmatpush.bf16.msra.mxu0 %v1794
    %1931 = vmatpush.bf16.msra.mxu0 %v1790
    %1932 = vmatmul.bf16.gmra.mxu0 %v1562
    %v1933 = vpop.f32.mrf.mxu0
    %v1934 = vadd.f32 %v1921, %v1933
    %v1935 = vpop.f32.mrf.mxu0
    %1936 = vdwg.mxu0
    %1937 = vmatpush.bf16.msra.mxu0 %v1787
    %1938 = vmatpush.bf16.msra.mxu0 %v1783
    %1939 = vmatpush.bf16.msra.mxu0 %v1779
    %1940 = vmatpush.bf16.msra.mxu0 %v1775
    %1941 = vmatpush.bf16.msra.mxu0 %v1771
    %1942 = vmatpush.bf16.msra.mxu0 %v1767
    %1943 = vmatpush.bf16.msra.mxu0 %v1763
    %1944 = vmatpush.bf16.msra.mxu0 %v1759
    %1945 = vmatmul.bf16.gmra.mxu0 %v1561
    %v1946 = vpop.f32.mrf.mxu0
    %v1947 = vadd.f32 %v292, %v1946
    %v1948 = vpop.f32.mrf.mxu0
    %1949 = vdwg.mxu0
    %1950 = vmatpush.bf16.msra.mxu0 %v1819
    %1951 = vmatpush.bf16.msra.mxu0 %v1815
    %1952 = vmatpush.bf16.msra.mxu0 %v1811
    %1953 = vmatpush.bf16.msra.mxu0 %v1807
    %1954 = vmatpush.bf16.msra.mxu0 %v1803
    %1955 = vmatpush.bf16.msra.mxu0 %v1799
    %1956 = vmatpush.bf16.msra.mxu0 %v1795
    %1957 = vmatpush.bf16.msra.mxu0 %v1791
    %1958 = vmatmul.bf16.gmra.mxu0 %v1562
    %v1959 = vpop.f32.mrf.mxu0
    %v1960 = vadd.f32 %v1947, %v1959
    %v1961 = vpop.f32.mrf.mxu0
    %1962 = vdwg.mxu0
    %1963 = vmatpush.bf16.msra.mxu0 %v1788
    %1964 = vmatpush.bf16.msra.mxu0 %v1784
    %1965 = vmatpush.bf16.msra.mxu0 %v1780
    %1966 = vmatpush.bf16.msra.mxu0 %v1776
    %1967 = vmatpush.bf16.msra.mxu0 %v1772
    %1968 = vmatpush.bf16.msra.mxu0 %v1768
    %1969 = vmatpush.bf16.msra.mxu0 %v1764
    %1970 = vmatpush.bf16.msra.mxu0 %v1760
    %1971 = vmatmul.bf16.gmra.mxu0 %v1561
    %v1972 = vpop.f32.mrf.mxu0
    %v1973 = vadd.f32 %v293, %v1972
    %v1974 = vpop.f32.mrf.mxu0
    %1975 = vdwg.mxu0
    %1976 = vmatpush.bf16.msra.mxu0 %v1820
    %1977 = vmatpush.bf16.msra.mxu0 %v1816
    %1978 = vmatpush.bf16.msra.mxu0 %v1812
    %1979 = vmatpush.bf16.msra.mxu0 %v1808
    %1980 = vmatpush.bf16.msra.mxu0 %v1804
    %1981 = vmatpush.bf16.msra.mxu0 %v1800
    %1982 = vmatpush.bf16.msra.mxu0 %v1796
    %1983 = vmatpush.bf16.msra.mxu0 %v1792
    %1984 = vmatmul.bf16.gmra.mxu0 %v1562
    %v1985 = vpop.f32.mrf.mxu0
    %v1986 = vadd.f32 %v1973, %v1985
    %v1987 = vpop.f32.mrf.mxu0
    %1988 = vdwg.mxu0
    %v1989 = vxor.u32 %v1908, 2147483648
    %v1990 = vxor.u32 %v1934, 2147483648
    %v1991 = vmul.f32 %v1989, 1.442695
    %v1992 = vpow.pop %v1991
    %v1993 = vmul.f32 %v1990, 1.442695
    %v1994 = vpow.pop %v1993
    %v1995 = vadd.f32 %v1992, 1.0
    %v1996 = vadd.f32 %v1994, 1.0
    %v1997 = vrcp.pop %v1995
    %v1998 = vmul.f32 %v1995, %v1997
    %v1999 = vsub.f32 1.0, %v1998
    %v2000 = vmul.f32 %v1997, %v1999
    %v2001 = vadd.f32 %v1997, %v2000
    %vm2002 = vweird.f32 %v1995
    %vm2003 = vweird.f32 %v1997
    %vm2004 = vmor %vm2002, %vm2003
    %v2005 = vsel %vm2004, %v1997, %v2001
    %v2006 = vand.u32 2147483647, %v1995
    %vm2007 = vcmp.eq.f32.partialorder %v2006, 8.507059e+37
    %v2008 = vand.u32 %v1995, 2147483648
    %v2009 = vor.u32 1.1754944e-38, %v2008
    %v2010 = vsel %vm2007, %v2009, %v2005
    %v2011 = vmul.f32 1.0, %v2010
    %v2012 = vrcp.pop %v1996
    %v2013 = vmul.f32 %v1996, %v2012
    %v2014 = vsub.f32 1.0, %v2013
    %v2015 = vmul.f32 %v2012, %v2014
    %v2016 = vadd.f32 %v2012, %v2015
    %vm2017 = vweird.f32 %v1996
    %vm2018 = vweird.f32 %v2012
    %vm2019 = vmor %vm2017, %vm2018
    %v2020 = vsel %vm2019, %v2012, %v2016
    %v2021 = vand.u32 2147483647, %v1996
    %vm2022 = vcmp.eq.f32.partialorder %v2021, 8.507059e+37
    %v2023 = vand.u32 %v1996, 2147483648
    %v2024 = vor.u32 1.1754944e-38, %v2023
    %v2025 = vsel %vm2022, %v2024, %v2020
    %v2026 = vmul.f32 1.0, %v2025
    %v2027 = vtanh.pop %v1960
    %v2028 = vxor.u32 %v1986, 2147483648
    %v2029 = vmul.f32 %v2028, 1.442695
    %v2030 = vpow.pop %v2029
    %v2031 = vadd.f32 %v2030, 1.0
    %v2032 = vrcp.pop %v2031
    %v2033 = vmul.f32 %v2031, %v2032
    %v2034 = vsub.f32 1.0, %v2033
    %v2035 = vmul.f32 %v2032, %v2034
    %v2036 = vadd.f32 %v2032, %v2035
    %vm2037 = vweird.f32 %v2031
    %vm2038 = vweird.f32 %v2032
    %vm2039 = vmor %vm2037, %vm2038
    %v2040 = vsel %vm2039, %v2032, %v2036
    %v2041 = vand.u32 2147483647, %v2031
    %vm2042 = vcmp.eq.f32.partialorder %v2041, 8.507059e+37
    %v2043 = vand.u32 %v2031, 2147483648
    %v2044 = vor.u32 1.1754944e-38, %v2043
    %v2045 = vsel %vm2042, %v2044, %v2040
    %v2046 = vmul.f32 1.0, %v2045
    %v2047 = vmul.f32 %v2026, %v1171
    %v2048 = vmul.f32 %v2011, %v2027
    %v2049 = vadd.f32 %v2047, %v2048
    %v2050 = vtanh.pop %v2049
    %v2051 = vmul.f32 %v2046, %v2050
    %v2052 = vpack.c.bf16 %v2051, %v2051
    %2053 = vst [vmem:[#allocation3 + $0x4] sm:$0xf] %v2052
    %v2054 = vld [vmem:[#allocation2 + $0x40] sm:$0xff]
    %v2055 = vld [vmem:[#allocation2 + $0x48] sm:$0xff]
    %v2056 = vld [vmem:[#allocation2 + $0x50] sm:$0xff]
    %v2057 = vld [vmem:[#allocation2 + $0x58] sm:$0xff]
    %v2058 = vld [vmem:[#allocation5] sm:$0xff]
    %v2059 = vld [vmem:[#allocation5 + $0x8] sm:$0xff]
    %v2060 = vld [vmem:[#allocation5 + $0x10] sm:$0xff]
    %v2061 = vld [vmem:[#allocation5 + $0x18] sm:$0xff]
    %v2062 = vld [vmem:[#allocation5 + $0x20] sm:$0xff]
    %v2063 = vld [vmem:[#allocation5 + $0x28] sm:$0xff]
    %v2064 = vld [vmem:[#allocation5 + $0x30] sm:$0xff]
    %v2065 = vld [vmem:[#allocation5 + $0x38] sm:$0xff]
    %v2066 = vld [vmem:[#allocation5 + $0x40] sm:$0xff]
    %v2067 = vld [vmem:[#allocation5 + $0x48] sm:$0xff]
    %v2068 = vld [vmem:[#allocation5 + $0x50] sm:$0xff]
    %v2069 = vld [vmem:[#allocation5 + $0x58] sm:$0xff]
    %v2070 = vld [vmem:[#allocation5 + $0x60] sm:$0xff]
    %v2071 = vld [vmem:[#allocation5 + $0x68] sm:$0xff]
    %v2072 = vld [vmem:[#allocation5 + $0x70] sm:$0xff]
    %v2073 = vld [vmem:[#allocation5 + $0x78] sm:$0xff]
    %v2074 = vld [vmem:[#allocation5 + $0x80] sm:$0xff]
    %v2075 = vld [vmem:[#allocation5 + $0x88] sm:$0xff]
    %v2076 = vld [vmem:[#allocation5 + $0x90] sm:$0xff]
    %v2077 = vld [vmem:[#allocation5 + $0x98] sm:$0xff]
    %v2078 = vld [vmem:[#allocation5 + $0xa0] sm:$0xff]
    %v2079 = vld [vmem:[#allocation5 + $0xa8] sm:$0xff]
    %v2080 = vld [vmem:[#allocation5 + $0xb0] sm:$0xff]
    %v2081 = vld [vmem:[#allocation5 + $0xb8] sm:$0xff]
    %v2082 = vld [vmem:[#allocation5 + $0xc0] sm:$0xff]
    %v2083 = vld [vmem:[#allocation5 + $0xc8] sm:$0xff]
    %v2084 = vld [vmem:[#allocation5 + $0xd0] sm:$0xff]
    %v2085 = vld [vmem:[#allocation5 + $0xd8] sm:$0xff]
    %v2086 = vld [vmem:[#allocation5 + $0xe0] sm:$0xff]
    %v2087 = vld [vmem:[#allocation5 + $0xe8] sm:$0xff]
    %v2088 = vld [vmem:[#allocation5 + $0xf0] sm:$0xff]
    %v2089 = vld [vmem:[#allocation5 + $0xf8] sm:$0xff]
    %v2122 = vunpack.c.l.b16 %v2058
    %v2123 = vunpack.c.h.b16 %v2058
    %v2124 = vunpack.c.l.b16 %v2059
    %v2125 = vunpack.c.h.b16 %v2059
    %v2126 = vunpack.c.l.b16 %v2060
    %v2127 = vunpack.c.h.b16 %v2060
    %v2128 = vunpack.c.l.b16 %v2061
    %v2129 = vunpack.c.h.b16 %v2061
    %v2130 = vunpack.c.l.b16 %v2062
    %v2131 = vunpack.c.h.b16 %v2062
    %v2132 = vunpack.c.l.b16 %v2063
    %v2133 = vunpack.c.h.b16 %v2063
    %v2134 = vunpack.c.l.b16 %v2064
    %v2135 = vunpack.c.h.b16 %v2064
    %v2136 = vunpack.c.l.b16 %v2065
    %v2137 = vunpack.c.h.b16 %v2065
    %v2138 = vunpack.c.l.b16 %v2066
    %v2139 = vunpack.c.h.b16 %v2066
    %v2140 = vunpack.c.l.b16 %v2067
    %v2141 = vunpack.c.h.b16 %v2067
    %v2142 = vunpack.c.l.b16 %v2068
    %v2143 = vunpack.c.h.b16 %v2068
    %v2144 = vunpack.c.l.b16 %v2069
    %v2145 = vunpack.c.h.b16 %v2069
    %v2146 = vunpack.c.l.b16 %v2070
    %v2147 = vunpack.c.h.b16 %v2070
    %v2148 = vunpack.c.l.b16 %v2071
    %v2149 = vunpack.c.h.b16 %v2071
    %v2150 = vunpack.c.l.b16 %v2072
    %v2151 = vunpack.c.h.b16 %v2072
    %v2152 = vunpack.c.l.b16 %v2073
    %v2153 = vunpack.c.h.b16 %v2073
    %v2154 = vunpack.c.l.b16 %v2074
    %v2155 = vunpack.c.h.b16 %v2074
    %v2156 = vunpack.c.l.b16 %v2075
    %v2157 = vunpack.c.h.b16 %v2075
    %v2158 = vunpack.c.l.b16 %v2076
    %v2159 = vunpack.c.h.b16 %v2076
    %v2160 = vunpack.c.l.b16 %v2077
    %v2161 = vunpack.c.h.b16 %v2077
    %v2162 = vunpack.c.l.b16 %v2078
    %v2163 = vunpack.c.h.b16 %v2078
    %v2164 = vunpack.c.l.b16 %v2079
    %v2165 = vunpack.c.h.b16 %v2079
    %v2166 = vunpack.c.l.b16 %v2080
    %v2167 = vunpack.c.h.b16 %v2080
    %v2168 = vunpack.c.l.b16 %v2081
    %v2169 = vunpack.c.h.b16 %v2081
    %v2170 = vunpack.c.l.b16 %v2082
    %v2171 = vunpack.c.h.b16 %v2082
    %v2172 = vunpack.c.l.b16 %v2083
    %v2173 = vunpack.c.h.b16 %v2083
    %v2174 = vunpack.c.l.b16 %v2084
    %v2175 = vunpack.c.h.b16 %v2084
    %v2176 = vunpack.c.l.b16 %v2085
    %v2177 = vunpack.c.h.b16 %v2085
    %v2178 = vunpack.c.l.b16 %v2086
    %v2179 = vunpack.c.h.b16 %v2086
    %v2180 = vunpack.c.l.b16 %v2087
    %v2181 = vunpack.c.h.b16 %v2087
    %v2182 = vunpack.c.l.b16 %v2088
    %v2183 = vunpack.c.h.b16 %v2088
    %v2184 = vunpack.c.l.b16 %v2089
    %v2185 = vunpack.c.h.b16 %v2089
    %v2186 = vpack.c.b16 %v2126, %v2122
    %v2187 = vpack.c.b16 %v2127, %v2123
    %v2188 = vpack.c.b16 %v2128, %v2124
    %v2189 = vpack.c.b16 %v2129, %v2125
    %v2190 = vpack.c.b16 %v2134, %v2130
    %v2191 = vpack.c.b16 %v2135, %v2131
    %v2192 = vpack.c.b16 %v2136, %v2132
    %v2193 = vpack.c.b16 %v2137, %v2133
    %v2194 = vpack.c.b16 %v2142, %v2138
    %v2195 = vpack.c.b16 %v2143, %v2139
    %v2196 = vpack.c.b16 %v2144, %v2140
    %v2197 = vpack.c.b16 %v2145, %v2141
    %v2198 = vpack.c.b16 %v2150, %v2146
    %v2199 = vpack.c.b16 %v2151, %v2147
    %v2200 = vpack.c.b16 %v2152, %v2148
    %v2201 = vpack.c.b16 %v2153, %v2149
    %v2202 = vpack.c.b16 %v2158, %v2154
    %v2203 = vpack.c.b16 %v2159, %v2155
    %v2204 = vpack.c.b16 %v2160, %v2156
    %v2205 = vpack.c.b16 %v2161, %v2157
    %v2206 = vpack.c.b16 %v2166, %v2162
    %v2207 = vpack.c.b16 %v2167, %v2163
    %v2208 = vpack.c.b16 %v2168, %v2164
    %v2209 = vpack.c.b16 %v2169, %v2165
    %v2210 = vpack.c.b16 %v2174, %v2170
    %v2211 = vpack.c.b16 %v2175, %v2171
    %v2212 = vpack.c.b16 %v2176, %v2172
    %v2213 = vpack.c.b16 %v2177, %v2173
    %v2214 = vpack.c.b16 %v2182, %v2178
    %v2215 = vpack.c.b16 %v2183, %v2179
    %v2216 = vpack.c.b16 %v2184, %v2180
    %v2217 = vpack.c.b16 %v2185, %v2181
    %2250 = vmatpush.bf16.msra.mxu0 %v2214
    %2251 = vmatpush.bf16.msra.mxu0 %v2210
    %2252 = vmatpush.bf16.msra.mxu0 %v2206
    %2253 = vmatpush.bf16.msra.mxu0 %v2202
    %2254 = vmatpush.bf16.msra.mxu0 %v2198
    %2255 = vmatpush.bf16.msra.mxu0 %v2194
    %2256 = vmatpush.bf16.msra.mxu0 %v2190
    %2257 = vmatpush.bf16.msra.mxu0 %v2186
    %2258 = vmatmul.bf16.gmra.mxu0 %v1491
    %v2259 = vpop.f32.mrf.mxu0
    %v2260 = vadd.f32 0.0, %v2259
    %v2261 = vpop.f32.mrf.mxu0
    %2262 = vdwg.mxu0
    %2263 = vmatpush.bf16.msra.mxu0 %v2215
    %2264 = vmatpush.bf16.msra.mxu0 %v2211
    %2265 = vmatpush.bf16.msra.mxu0 %v2207
    %2266 = vmatpush.bf16.msra.mxu0 %v2203
    %2267 = vmatpush.bf16.msra.mxu0 %v2199
    %2268 = vmatpush.bf16.msra.mxu0 %v2195
    %2269 = vmatpush.bf16.msra.mxu0 %v2191
    %2270 = vmatpush.bf16.msra.mxu0 %v2187
    %2271 = vmatmul.bf16.gmra.mxu0 %v1491
    %v2272 = vpop.f32.mrf.mxu0
    %v2273 = vadd.f32 0.0, %v2272
    %v2274 = vpop.f32.mrf.mxu0
    %2275 = vdwg.mxu0
    %2276 = vmatpush.bf16.msra.mxu0 %v2216
    %2277 = vmatpush.bf16.msra.mxu0 %v2212
    %2278 = vmatpush.bf16.msra.mxu0 %v2208
    %2279 = vmatpush.bf16.msra.mxu0 %v2204
    %2280 = vmatpush.bf16.msra.mxu0 %v2200
    %2281 = vmatpush.bf16.msra.mxu0 %v2196
    %2282 = vmatpush.bf16.msra.mxu0 %v2192
    %2283 = vmatpush.bf16.msra.mxu0 %v2188
    %2284 = vmatmul.bf16.gmra.mxu0 %v1491
    %v2285 = vpop.f32.mrf.mxu0
    %v2286 = vadd.f32 0.0, %v2285
    %v2287 = vpop.f32.mrf.mxu0
    %2288 = vdwg.mxu0
    %2289 = vmatpush.bf16.msra.mxu0 %v2217
    %2290 = vmatpush.bf16.msra.mxu0 %v2213
    %2291 = vmatpush.bf16.msra.mxu0 %v2209
    %2292 = vmatpush.bf16.msra.mxu0 %v2205
    %2293 = vmatpush.bf16.msra.mxu0 %v2201
    %2294 = vmatpush.bf16.msra.mxu0 %v2197
    %2295 = vmatpush.bf16.msra.mxu0 %v2193
    %2296 = vmatpush.bf16.msra.mxu0 %v2189
    %2297 = vmatmul.bf16.gmra.mxu0 %v1491
    %v2298 = vpop.f32.mrf.mxu0
    %v2299 = vadd.f32 0.0, %v2298
    %v2300 = vpop.f32.mrf.mxu0
    %2301 = vdwg.mxu0
    %v2302 = vadd.f32 %v2054, %v2260
    %v2303 = vadd.f32 %v2055, %v2273
    %v2304 = vadd.f32 %v2056, %v2286
    %v2305 = vadd.f32 %v2057, %v2299
    %v2306 = vxor.u32 %v2302, 2147483648
    %v2307 = vxor.u32 %v2303, 2147483648
    %v2308 = vmul.f32 %v2306, 1.442695
    %v2309 = vpow.pop %v2308
    %v2310 = vmul.f32 %v2307, 1.442695
    %v2311 = vpow.pop %v2310
    %v2312 = vadd.f32 %v2309, 1.0
    %v2313 = vadd.f32 %v2311, 1.0
    %v2314 = vrcp.pop %v2312
    %v2315 = vmul.f32 %v2312, %v2314
    %v2316 = vsub.f32 1.0, %v2315
    %v2317 = vmul.f32 %v2314, %v2316
    %v2318 = vadd.f32 %v2314, %v2317
    %vm2319 = vweird.f32 %v2312
    %vm2320 = vweird.f32 %v2314
    %vm2321 = vmor %vm2319, %vm2320
    %v2322 = vsel %vm2321, %v2314, %v2318
    %v2323 = vand.u32 2147483647, %v2312
    %vm2324 = vcmp.eq.f32.partialorder %v2323, 8.507059e+37
    %v2325 = vand.u32 %v2312, 2147483648
    %v2326 = vor.u32 1.1754944e-38, %v2325
    %v2327 = vsel %vm2324, %v2326, %v2322
    %v2328 = vmul.f32 1.0, %v2327
    %v2329 = vrcp.pop %v2313
    %v2330 = vmul.f32 %v2313, %v2329
    %v2331 = vsub.f32 1.0, %v2330
    %v2332 = vmul.f32 %v2329, %v2331
    %v2333 = vadd.f32 %v2329, %v2332
    %vm2334 = vweird.f32 %v2313
    %vm2335 = vweird.f32 %v2329
    %vm2336 = vmor %vm2334, %vm2335
    %v2337 = vsel %vm2336, %v2329, %v2333
    %v2338 = vand.u32 2147483647, %v2313
    %vm2339 = vcmp.eq.f32.partialorder %v2338, 8.507059e+37
    %v2340 = vand.u32 %v2313, 2147483648
    %v2341 = vor.u32 1.1754944e-38, %v2340
    %v2342 = vsel %vm2339, %v2341, %v2337
    %v2343 = vmul.f32 1.0, %v2342
    %v2344 = vtanh.pop %v2304
    %v2345 = vxor.u32 %v2305, 2147483648
    %v2346 = vmul.f32 %v2345, 1.442695
    %v2347 = vpow.pop %v2346
    %v2348 = vadd.f32 %v2347, 1.0
    %v2349 = vrcp.pop %v2348
    %v2350 = vmul.f32 %v2348, %v2349
    %v2351 = vsub.f32 1.0, %v2350
    %v2352 = vmul.f32 %v2349, %v2351
    %v2353 = vadd.f32 %v2349, %v2352
    %vm2354 = vweird.f32 %v2348
    %vm2355 = vweird.f32 %v2349
    %vm2356 = vmor %vm2354, %vm2355
    %v2357 = vsel %vm2356, %v2349, %v2353
    %v2358 = vand.u32 2147483647, %v2348
    %vm2359 = vcmp.eq.f32.partialorder %v2358, 8.507059e+37
    %v2360 = vand.u32 %v2348, 2147483648
    %v2361 = vor.u32 1.1754944e-38, %v2360
    %v2362 = vsel %vm2359, %v2361, %v2357
    %v2363 = vmul.f32 1.0, %v2362
    %v2364 = vmul.f32 %v2343, %v1488
    %v2365 = vmul.f32 %v2328, %v2344
    %v2366 = vadd.f32 %v2364, %v2365
    %v2367 = vtanh.pop %v2366
    %v2368 = vmul.f32 %v2363, %v2367
    %v2369 = vpack.c.bf16 %v2368, %v2368
    %2370 = vst [vmem:[#allocation3] sm:$0xf] %v2369
    %v2371 = vld [vmem:[#allocation3] sm:$0xff]
    %v2372 = vld [vmem:[#allocation7] sm:$0xff]
    %v2373 = vld [vmem:[#allocation7 + $0x8] sm:$0xff]
    %v2374 = vld [vmem:[#allocation7 + $0x10] sm:$0xff]
    %v2375 = vld [vmem:[#allocation7 + $0x18] sm:$0xff]
    %v2376 = vld [vmem:[#allocation7 + $0x20] sm:$0xff]
    %v2377 = vld [vmem:[#allocation7 + $0x28] sm:$0xff]
    %v2378 = vld [vmem:[#allocation7 + $0x30] sm:$0xff]
    %v2379 = vld [vmem:[#allocation7 + $0x38] sm:$0xff]
    %v2380 = vld [vmem:[#allocation7 + $0x40] sm:$0xff]
    %v2381 = vld [vmem:[#allocation7 + $0x48] sm:$0xff]
    %v2382 = vld [vmem:[#allocation7 + $0x50] sm:$0xff]
    %v2383 = vld [vmem:[#allocation7 + $0x58] sm:$0xff]
    %v2384 = vld [vmem:[#allocation7 + $0x60] sm:$0xff]
    %v2385 = vld [vmem:[#allocation7 + $0x68] sm:$0xff]
    %v2386 = vld [vmem:[#allocation7 + $0x70] sm:$0xff]
    %v2387 = vld [vmem:[#allocation7 + $0x78] sm:$0xff]
    %v2388 = vld [vmem:[#allocation7 + $0x80] sm:$0xff]
    %v2389 = vld [vmem:[#allocation7 + $0x88] sm:$0xff]
    %v2390 = vld [vmem:[#allocation7 + $0x90] sm:$0xff]
    %v2391 = vld [vmem:[#allocation7 + $0x98] sm:$0xff]
    %v2392 = vld [vmem:[#allocation7 + $0xa0] sm:$0xff]
    %v2393 = vld [vmem:[#allocation7 + $0xa8] sm:$0xff]
    %v2394 = vld [vmem:[#allocation7 + $0xb0] sm:$0xff]
    %v2395 = vld [vmem:[#allocation7 + $0xb8] sm:$0xff]
    %v2396 = vld [vmem:[#allocation7 + $0xc0] sm:$0xff]
    %v2397 = vld [vmem:[#allocation7 + $0xc8] sm:$0xff]
    %v2398 = vld [vmem:[#allocation7 + $0xd0] sm:$0xff]
    %v2399 = vld [vmem:[#allocation7 + $0xd8] sm:$0xff]
    %v2400 = vld [vmem:[#allocation7 + $0xe0] sm:$0xff]
    %v2401 = vld [vmem:[#allocation7 + $0xe8] sm:$0xff]
    %v2402 = vld [vmem:[#allocation7 + $0xf0] sm:$0xff]
    %v2403 = vld [vmem:[#allocation7 + $0xf8] sm:$0xff]
    %v2404 = vld [vmem:[#allocation7 + $0x100] sm:$0xff]
    %v2405 = vld [vmem:[#allocation7 + $0x108] sm:$0xff]
    %v2406 = vld [vmem:[#allocation7 + $0x110] sm:$0xff]
    %v2407 = vld [vmem:[#allocation7 + $0x118] sm:$0xff]
    %v2408 = vld [vmem:[#allocation7 + $0x120] sm:$0xff]
    %v2409 = vld [vmem:[#allocation7 + $0x128] sm:$0xff]
    %v2410 = vld [vmem:[#allocation7 + $0x130] sm:$0xff]
    %v2411 = vld [vmem:[#allocation7 + $0x138] sm:$0xff]
    %v2412 = vld [vmem:[#allocation7 + $0x140] sm:$0xff]
    %v2413 = vld [vmem:[#allocation7 + $0x148] sm:$0xff]
    %v2414 = vld [vmem:[#allocation7 + $0x150] sm:$0xff]
    %v2415 = vld [vmem:[#allocation7 + $0x158] sm:$0xff]
    %v2416 = vld [vmem:[#allocation7 + $0x160] sm:$0xff]
    %v2417 = vld [vmem:[#allocation7 + $0x168] sm:$0xff]
    %v2418 = vld [vmem:[#allocation7 + $0x170] sm:$0xff]
    %v2419 = vld [vmem:[#allocation7 + $0x178] sm:$0xff]
    %v2420 = vld [vmem:[#allocation7 + $0x180] sm:$0xff]
    %v2421 = vld [vmem:[#allocation7 + $0x188] sm:$0xff]
    %v2422 = vld [vmem:[#allocation7 + $0x190] sm:$0xff]
    %v2423 = vld [vmem:[#allocation7 + $0x198] sm:$0xff]
    %v2424 = vld [vmem:[#allocation7 + $0x1a0] sm:$0xff]
    %v2425 = vld [vmem:[#allocation7 + $0x1a8] sm:$0xff]
    %v2426 = vld [vmem:[#allocation7 + $0x1b0] sm:$0xff]
    %v2427 = vld [vmem:[#allocation7 + $0x1b8] sm:$0xff]
    %v2428 = vld [vmem:[#allocation7 + $0x1c0] sm:$0xff]
    %v2429 = vld [vmem:[#allocation7 + $0x1c8] sm:$0xff]
    %v2430 = vld [vmem:[#allocation7 + $0x1d0] sm:$0xff]
    %v2431 = vld [vmem:[#allocation7 + $0x1d8] sm:$0xff]
    %v2432 = vld [vmem:[#allocation7 + $0x1e0] sm:$0xff]
    %v2433 = vld [vmem:[#allocation7 + $0x1e8] sm:$0xff]
    %v2434 = vld [vmem:[#allocation7 + $0x1f0] sm:$0xff]
    %v2435 = vld [vmem:[#allocation7 + $0x1f8] sm:$0xff]
    %v2437 = vunpack.c.l.b16 %v2371
    %v2438 = vunpack.c.h.b16 %v2371
    %v2439 = vpack.c.b16 %v2437, %v2437
    %v2440 = vpack.c.b16 %v2438, %v2438
    %v2507 = vunpack.c.l.b16 %v2372
    %v2508 = vunpack.c.h.b16 %v2372
    %v2509 = vunpack.c.l.b16 %v2373
    %v2510 = vunpack.c.h.b16 %v2373
    %v2511 = vunpack.c.l.b16 %v2374
    %v2512 = vunpack.c.h.b16 %v2374
    %v2513 = vunpack.c.l.b16 %v2375
    %v2514 = vunpack.c.h.b16 %v2375
    %v2515 = vunpack.c.l.b16 %v2376
    %v2516 = vunpack.c.h.b16 %v2376
    %v2517 = vunpack.c.l.b16 %v2377
    %v2518 = vunpack.c.h.b16 %v2377
    %v2519 = vunpack.c.l.b16 %v2378
    %v2520 = vunpack.c.h.b16 %v2378
    %v2521 = vunpack.c.l.b16 %v2379
    %v2522 = vunpack.c.h.b16 %v2379
    %v2523 = vunpack.c.l.b16 %v2380
    %v2524 = vunpack.c.h.b16 %v2380
    %v2525 = vunpack.c.l.b16 %v2381
    %v2526 = vunpack.c.h.b16 %v2381
    %v2527 = vunpack.c.l.b16 %v2382
    %v2528 = vunpack.c.h.b16 %v2382
    %v2529 = vunpack.c.l.b16 %v2383
    %v2530 = vunpack.c.h.b16 %v2383
    %v2531 = vunpack.c.l.b16 %v2384
    %v2532 = vunpack.c.h.b16 %v2384
    %v2533 = vunpack.c.l.b16 %v2385
    %v2534 = vunpack.c.h.b16 %v2385
    %v2535 = vunpack.c.l.b16 %v2386
    %v2536 = vunpack.c.h.b16 %v2386
    %v2537 = vunpack.c.l.b16 %v2387
    %v2538 = vunpack.c.h.b16 %v2387
    %v2539 = vunpack.c.l.b16 %v2388
    %v2540 = vunpack.c.h.b16 %v2388
    %v2541 = vunpack.c.l.b16 %v2389
    %v2542 = vunpack.c.h.b16 %v2389
    %v2543 = vunpack.c.l.b16 %v2390
    %v2544 = vunpack.c.h.b16 %v2390
    %v2545 = vunpack.c.l.b16 %v2391
    %v2546 = vunpack.c.h.b16 %v2391
    %v2547 = vunpack.c.l.b16 %v2392
    %v2548 = vunpack.c.h.b16 %v2392
    %v2549 = vunpack.c.l.b16 %v2393
    %v2550 = vunpack.c.h.b16 %v2393
    %v2551 = vunpack.c.l.b16 %v2394
    %v2552 = vunpack.c.h.b16 %v2394
    %v2553 = vunpack.c.l.b16 %v2395
    %v2554 = vunpack.c.h.b16 %v2395
    %v2555 = vunpack.c.l.b16 %v2396
    %v2556 = vunpack.c.h.b16 %v2396
    %v2557 = vunpack.c.l.b16 %v2397
    %v2558 = vunpack.c.h.b16 %v2397
    %v2559 = vunpack.c.l.b16 %v2398
    %v2560 = vunpack.c.h.b16 %v2398
    %v2561 = vunpack.c.l.b16 %v2399
    %v2562 = vunpack.c.h.b16 %v2399
    %v2563 = vunpack.c.l.b16 %v2400
    %v2564 = vunpack.c.h.b16 %v2400
    %v2565 = vunpack.c.l.b16 %v2401
    %v2566 = vunpack.c.h.b16 %v2401
    %v2567 = vunpack.c.l.b16 %v2402
    %v2568 = vunpack.c.h.b16 %v2402
    %v2569 = vunpack.c.l.b16 %v2403
    %v2570 = vunpack.c.h.b16 %v2403
    %v2571 = vunpack.c.l.b16 %v2404
    %v2572 = vunpack.c.h.b16 %v2404
    %v2573 = vunpack.c.l.b16 %v2405
    %v2574 = vunpack.c.h.b16 %v2405
    %v2575 = vunpack.c.l.b16 %v2406
    %v2576 = vunpack.c.h.b16 %v2406
    %v2577 = vunpack.c.l.b16 %v2407
    %v2578 = vunpack.c.h.b16 %v2407
    %v2579 = vunpack.c.l.b16 %v2408
    %v2580 = vunpack.c.h.b16 %v2408
    %v2581 = vunpack.c.l.b16 %v2409
    %v2582 = vunpack.c.h.b16 %v2409
    %v2583 = vunpack.c.l.b16 %v2410
    %v2584 = vunpack.c.h.b16 %v2410
    %v2585 = vunpack.c.l.b16 %v2411
    %v2586 = vunpack.c.h.b16 %v2411
    %v2587 = vunpack.c.l.b16 %v2412
    %v2588 = vunpack.c.h.b16 %v2412
    %v2589 = vunpack.c.l.b16 %v2413
    %v2590 = vunpack.c.h.b16 %v2413
    %v2591 = vunpack.c.l.b16 %v2414
    %v2592 = vunpack.c.h.b16 %v2414
    %v2593 = vunpack.c.l.b16 %v2415
    %v2594 = vunpack.c.h.b16 %v2415
    %v2595 = vunpack.c.l.b16 %v2416
    %v2596 = vunpack.c.h.b16 %v2416
    %v2597 = vunpack.c.l.b16 %v2417
    %v2598 = vunpack.c.h.b16 %v2417
    %v2599 = vunpack.c.l.b16 %v2418
    %v2600 = vunpack.c.h.b16 %v2418
    %v2601 = vunpack.c.l.b16 %v2419
    %v2602 = vunpack.c.h.b16 %v2419
    %v2603 = vunpack.c.l.b16 %v2420
    %v2604 = vunpack.c.h.b16 %v2420
    %v2605 = vunpack.c.l.b16 %v2421
    %v2606 = vunpack.c.h.b16 %v2421
    %v2607 = vunpack.c.l.b16 %v2422
    %v2608 = vunpack.c.h.b16 %v2422
    %v2609 = vunpack.c.l.b16 %v2423
    %v2610 = vunpack.c.h.b16 %v2423
    %v2611 = vunpack.c.l.b16 %v2424
    %v2612 = vunpack.c.h.b16 %v2424
    %v2613 = vunpack.c.l.b16 %v2425
    %v2614 = vunpack.c.h.b16 %v2425
    %v2615 = vunpack.c.l.b16 %v2426
    %v2616 = vunpack.c.h.b16 %v2426
    %v2617 = vunpack.c.l.b16 %v2427
    %v2618 = vunpack.c.h.b16 %v2427
    %v2619 = vunpack.c.l.b16 %v2428
    %v2620 = vunpack.c.h.b16 %v2428
    %v2621 = vunpack.c.l.b16 %v2429
    %v2622 = vunpack.c.h.b16 %v2429
    %v2623 = vunpack.c.l.b16 %v2430
    %v2624 = vunpack.c.h.b16 %v2430
    %v2625 = vunpack.c.l.b16 %v2431
    %v2626 = vunpack.c.h.b16 %v2431
    %v2627 = vunpack.c.l.b16 %v2432
    %v2628 = vunpack.c.h.b16 %v2432
    %v2629 = vunpack.c.l.b16 %v2433
    %v2630 = vunpack.c.h.b16 %v2433
    %v2631 = vunpack.c.l.b16 %v2434
    %v2632 = vunpack.c.h.b16 %v2434
    %v2633 = vunpack.c.l.b16 %v2435
    %v2634 = vunpack.c.h.b16 %v2435
    %v2635 = vpack.c.b16 %v2511, %v2507
    %v2636 = vpack.c.b16 %v2512, %v2508
    %v2637 = vpack.c.b16 %v2513, %v2509
    %v2638 = vpack.c.b16 %v2514, %v2510
    %v2639 = vpack.c.b16 %v2519, %v2515
    %v2640 = vpack.c.b16 %v2520, %v2516
    %v2641 = vpack.c.b16 %v2521, %v2517
    %v2642 = vpack.c.b16 %v2522, %v2518
    %v2643 = vpack.c.b16 %v2527, %v2523
    %v2644 = vpack.c.b16 %v2528, %v2524
    %v2645 = vpack.c.b16 %v2529, %v2525
    %v2646 = vpack.c.b16 %v2530, %v2526
    %v2647 = vpack.c.b16 %v2535, %v2531
    %v2648 = vpack.c.b16 %v2536, %v2532
    %v2649 = vpack.c.b16 %v2537, %v2533
    %v2650 = vpack.c.b16 %v2538, %v2534
    %v2651 = vpack.c.b16 %v2543, %v2539
    %v2652 = vpack.c.b16 %v2544, %v2540
    %v2653 = vpack.c.b16 %v2545, %v2541
    %v2654 = vpack.c.b16 %v2546, %v2542
    %v2655 = vpack.c.b16 %v2551, %v2547
    %v2656 = vpack.c.b16 %v2552, %v2548
    %v2657 = vpack.c.b16 %v2553, %v2549
    %v2658 = vpack.c.b16 %v2554, %v2550
    %v2659 = vpack.c.b16 %v2559, %v2555
    %v2660 = vpack.c.b16 %v2560, %v2556
    %v2661 = vpack.c.b16 %v2561, %v2557
    %v2662 = vpack.c.b16 %v2562, %v2558
    %v2663 = vpack.c.b16 %v2567, %v2563
    %v2664 = vpack.c.b16 %v2568, %v2564
    %v2665 = vpack.c.b16 %v2569, %v2565
    %v2666 = vpack.c.b16 %v2570, %v2566
    %v2667 = vpack.c.b16 %v2575, %v2571
    %v2668 = vpack.c.b16 %v2576, %v2572
    %v2669 = vpack.c.b16 %v2577, %v2573
    %v2670 = vpack.c.b16 %v2578, %v2574
    %v2671 = vpack.c.b16 %v2583, %v2579
    %v2672 = vpack.c.b16 %v2584, %v2580
    %v2673 = vpack.c.b16 %v2585, %v2581
    %v2674 = vpack.c.b16 %v2586, %v2582
    %v2675 = vpack.c.b16 %v2591, %v2587
    %v2676 = vpack.c.b16 %v2592, %v2588
    %v2677 = vpack.c.b16 %v2593, %v2589
    %v2678 = vpack.c.b16 %v2594, %v2590
    %v2679 = vpack.c.b16 %v2599, %v2595
    %v2680 = vpack.c.b16 %v2600, %v2596
    %v2681 = vpack.c.b16 %v2601, %v2597
    %v2682 = vpack.c.b16 %v2602, %v2598
    %v2683 = vpack.c.b16 %v2607, %v2603
    %v2684 = vpack.c.b16 %v2608, %v2604
    %v2685 = vpack.c.b16 %v2609, %v2605
    %v2686 = vpack.c.b16 %v2610, %v2606
    %v2687 = vpack.c.b16 %v2615, %v2611
    %v2688 = vpack.c.b16 %v2616, %v2612
    %v2689 = vpack.c.b16 %v2617, %v2613
    %v2690 = vpack.c.b16 %v2618, %v2614
    %v2691 = vpack.c.b16 %v2623, %v2619
    %v2692 = vpack.c.b16 %v2624, %v2620
    %v2693 = vpack.c.b16 %v2625, %v2621
    %v2694 = vpack.c.b16 %v2626, %v2622
    %v2695 = vpack.c.b16 %v2631, %v2627
    %v2696 = vpack.c.b16 %v2632, %v2628
    %v2697 = vpack.c.b16 %v2633, %v2629
    %v2698 = vpack.c.b16 %v2634, %v2630
    %2763 = vmatpush.bf16.msra.mxu0 %v2663
    %2764 = vmatpush.bf16.msra.mxu0 %v2659
    %2765 = vmatpush.bf16.msra.mxu0 %v2655
    %2766 = vmatpush.bf16.msra.mxu0 %v2651
    %2767 = vmatpush.bf16.msra.mxu0 %v2647
    %2768 = vmatpush.bf16.msra.mxu0 %v2643
    %2769 = vmatpush.bf16.msra.mxu0 %v2639
    %2770 = vmatpush.bf16.msra.mxu0 %v2635
    %2771 = vmatmul.bf16.gmra.mxu0 %v2439
    %v2772 = vpop.f32.mrf.mxu0
    %v2773 = vadd.f32 %v290, %v2772
    %v2774 = vpop.f32.mrf.mxu0
    %2775 = vdwg.mxu0
    %2776 = vmatpush.bf16.msra.mxu0 %v2695
    %2777 = vmatpush.bf16.msra.mxu0 %v2691
    %2778 = vmatpush.bf16.msra.mxu0 %v2687
    %2779 = vmatpush.bf16.msra.mxu0 %v2683
    %2780 = vmatpush.bf16.msra.mxu0 %v2679
    %2781 = vmatpush.bf16.msra.mxu0 %v2675
    %2782 = vmatpush.bf16.msra.mxu0 %v2671
    %2783 = vmatpush.bf16.msra.mxu0 %v2667
    %2784 = vmatmul.bf16.gmra.mxu0 %v2440
    %v2785 = vpop.f32.mrf.mxu0
    %v2786 = vadd.f32 %v2773, %v2785
    %v2787 = vpop.f32.mrf.mxu0
    %2788 = vdwg.mxu0
    %2789 = vmatpush.bf16.msra.mxu0 %v2664
    %2790 = vmatpush.bf16.msra.mxu0 %v2660
    %2791 = vmatpush.bf16.msra.mxu0 %v2656
    %2792 = vmatpush.bf16.msra.mxu0 %v2652
    %2793 = vmatpush.bf16.msra.mxu0 %v2648
    %2794 = vmatpush.bf16.msra.mxu0 %v2644
    %2795 = vmatpush.bf16.msra.mxu0 %v2640
    %2796 = vmatpush.bf16.msra.mxu0 %v2636
    %2797 = vmatmul.bf16.gmra.mxu0 %v2439
    %v2798 = vpop.f32.mrf.mxu0
    %v2799 = vadd.f32 %v291, %v2798
    %v2800 = vpop.f32.mrf.mxu0
    %2801 = vdwg.mxu0
    %2802 = vmatpush.bf16.msra.mxu0 %v2696
    %2803 = vmatpush.bf16.msra.mxu0 %v2692
    %2804 = vmatpush.bf16.msra.mxu0 %v2688
    %2805 = vmatpush.bf16.msra.mxu0 %v2684
    %2806 = vmatpush.bf16.msra.mxu0 %v2680
    %2807 = vmatpush.bf16.msra.mxu0 %v2676
    %2808 = vmatpush.bf16.msra.mxu0 %v2672
    %2809 = vmatpush.bf16.msra.mxu0 %v2668
    %2810 = vmatmul.bf16.gmra.mxu0 %v2440
    %v2811 = vpop.f32.mrf.mxu0
    %v2812 = vadd.f32 %v2799, %v2811
    %v2813 = vpop.f32.mrf.mxu0
    %2814 = vdwg.mxu0
    %2815 = vmatpush.bf16.msra.mxu0 %v2665
    %2816 = vmatpush.bf16.msra.mxu0 %v2661
    %2817 = vmatpush.bf16.msra.mxu0 %v2657
    %2818 = vmatpush.bf16.msra.mxu0 %v2653
    %2819 = vmatpush.bf16.msra.mxu0 %v2649
    %2820 = vmatpush.bf16.msra.mxu0 %v2645
    %2821 = vmatpush.bf16.msra.mxu0 %v2641
    %2822 = vmatpush.bf16.msra.mxu0 %v2637
    %2823 = vmatmul.bf16.gmra.mxu0 %v2439
    %v2824 = vpop.f32.mrf.mxu0
    %v2825 = vadd.f32 %v292, %v2824
    %v2826 = vpop.f32.mrf.mxu0
    %2827 = vdwg.mxu0
    %2828 = vmatpush.bf16.msra.mxu0 %v2697
    %2829 = vmatpush.bf16.msra.mxu0 %v2693
    %2830 = vmatpush.bf16.msra.mxu0 %v2689
    %2831 = vmatpush.bf16.msra.mxu0 %v2685
    %2832 = vmatpush.bf16.msra.mxu0 %v2681
    %2833 = vmatpush.bf16.msra.mxu0 %v2677
    %2834 = vmatpush.bf16.msra.mxu0 %v2673
    %2835 = vmatpush.bf16.msra.mxu0 %v2669
    %2836 = vmatmul.bf16.gmra.mxu0 %v2440
    %v2837 = vpop.f32.mrf.mxu0
    %v2838 = vadd.f32 %v2825, %v2837
    %v2839 = vpop.f32.mrf.mxu0
    %2840 = vdwg.mxu0
    %2841 = vmatpush.bf16.msra.mxu0 %v2666
    %2842 = vmatpush.bf16.msra.mxu0 %v2662
    %2843 = vmatpush.bf16.msra.mxu0 %v2658
    %2844 = vmatpush.bf16.msra.mxu0 %v2654
    %2845 = vmatpush.bf16.msra.mxu0 %v2650
    %2846 = vmatpush.bf16.msra.mxu0 %v2646
    %2847 = vmatpush.bf16.msra.mxu0 %v2642
    %2848 = vmatpush.bf16.msra.mxu0 %v2638
    %2849 = vmatmul.bf16.gmra.mxu0 %v2439
    %v2850 = vpop.f32.mrf.mxu0
    %v2851 = vadd.f32 %v293, %v2850
    %v2852 = vpop.f32.mrf.mxu0
    %2853 = vdwg.mxu0
    %2854 = vmatpush.bf16.msra.mxu0 %v2698
    %2855 = vmatpush.bf16.msra.mxu0 %v2694
    %2856 = vmatpush.bf16.msra.mxu0 %v2690
    %2857 = vmatpush.bf16.msra.mxu0 %v2686
    %2858 = vmatpush.bf16.msra.mxu0 %v2682
    %2859 = vmatpush.bf16.msra.mxu0 %v2678
    %2860 = vmatpush.bf16.msra.mxu0 %v2674
    %2861 = vmatpush.bf16.msra.mxu0 %v2670
    %2862 = vmatmul.bf16.gmra.mxu0 %v2440
    %v2863 = vpop.f32.mrf.mxu0
    %v2864 = vadd.f32 %v2851, %v2863
    %v2865 = vpop.f32.mrf.mxu0
    %2866 = vdwg.mxu0
    %v2867 = vxor.u32 %v2786, 2147483648
    %v2868 = vxor.u32 %v2812, 2147483648
    %v2869 = vmul.f32 %v2867, 1.442695
    %v2870 = vpow.pop %v2869
    %v2871 = vmul.f32 %v2868, 1.442695
    %v2872 = vpow.pop %v2871
    %v2873 = vadd.f32 %v2870, 1.0
    %v2874 = vadd.f32 %v2872, 1.0
    %v2875 = vrcp.pop %v2873
    %v2876 = vmul.f32 %v2873, %v2875
    %v2877 = vsub.f32 1.0, %v2876
    %v2878 = vmul.f32 %v2875, %v2877
    %v2879 = vadd.f32 %v2875, %v2878
    %vm2880 = vweird.f32 %v2873
    %vm2881 = vweird.f32 %v2875
    %vm2882 = vmor %vm2880, %vm2881
    %v2883 = vsel %vm2882, %v2875, %v2879
    %v2884 = vand.u32 2147483647, %v2873
    %vm2885 = vcmp.eq.f32.partialorder %v2884, 8.507059e+37
    %v2886 = vand.u32 %v2873, 2147483648
    %v2887 = vor.u32 1.1754944e-38, %v2886
    %v2888 = vsel %vm2885, %v2887, %v2883
    %v2889 = vmul.f32 1.0, %v2888
    %v2890 = vrcp.pop %v2874
    %v2891 = vmul.f32 %v2874, %v2890
    %v2892 = vsub.f32 1.0, %v2891
    %v2893 = vmul.f32 %v2890, %v2892
    %v2894 = vadd.f32 %v2890, %v2893
    %vm2895 = vweird.f32 %v2874
    %vm2896 = vweird.f32 %v2890
    %vm2897 = vmor %vm2895, %vm2896
    %v2898 = vsel %vm2897, %v2890, %v2894
    %v2899 = vand.u32 2147483647, %v2874
    %vm2900 = vcmp.eq.f32.partialorder %v2899, 8.507059e+37
    %v2901 = vand.u32 %v2874, 2147483648
    %v2902 = vor.u32 1.1754944e-38, %v2901
    %v2903 = vsel %vm2900, %v2902, %v2898
    %v2904 = vmul.f32 1.0, %v2903
    %v2905 = vtanh.pop %v2838
    %v2906 = vxor.u32 %v2864, 2147483648
    %v2907 = vmul.f32 %v2906, 1.442695
    %v2908 = vpow.pop %v2907
    %v2909 = vadd.f32 %v2908, 1.0
    %v2910 = vrcp.pop %v2909
    %v2911 = vmul.f32 %v2909, %v2910
    %v2912 = vsub.f32 1.0, %v2911
    %v2913 = vmul.f32 %v2910, %v2912
    %v2914 = vadd.f32 %v2910, %v2913
    %vm2915 = vweird.f32 %v2909
    %vm2916 = vweird.f32 %v2910
    %vm2917 = vmor %vm2915, %vm2916
    %v2918 = vsel %vm2917, %v2910, %v2914
    %v2919 = vand.u32 2147483647, %v2909
    %vm2920 = vcmp.eq.f32.partialorder %v2919, 8.507059e+37
    %v2921 = vand.u32 %v2909, 2147483648
    %v2922 = vor.u32 1.1754944e-38, %v2921
    %v2923 = vsel %vm2920, %v2922, %v2918
    %v2924 = vmul.f32 1.0, %v2923
    %v2925 = vmul.f32 %v2904, %v2049
    %v2926 = vmul.f32 %v2889, %v2905
    %v2927 = vadd.f32 %v2925, %v2926
    %v2928 = vtanh.pop %v2927
    %v2929 = vmul.f32 %v2924, %v2928
    %v2930 = vpack.c.bf16 %v2929, %v2929
    %2931 = vst [vmem:[#allocation3 + $0x4] sm:$0xf] %v2930
    %v2932 = vld [vmem:[#allocation2 + $0x60] sm:$0xff]
    %v2933 = vld [vmem:[#allocation2 + $0x68] sm:$0xff]
    %v2934 = vld [vmem:[#allocation2 + $0x70] sm:$0xff]
    %v2935 = vld [vmem:[#allocation2 + $0x78] sm:$0xff]
    %v2936 = vld [vmem:[#allocation5] sm:$0xff]
    %v2937 = vld [vmem:[#allocation5 + $0x8] sm:$0xff]
    %v2938 = vld [vmem:[#allocation5 + $0x10] sm:$0xff]
    %v2939 = vld [vmem:[#allocation5 + $0x18] sm:$0xff]
    %v2940 = vld [vmem:[#allocation5 + $0x20] sm:$0xff]
    %v2941 = vld [vmem:[#allocation5 + $0x28] sm:$0xff]
    %v2942 = vld [vmem:[#allocation5 + $0x30] sm:$0xff]
    %v2943 = vld [vmem:[#allocation5 + $0x38] sm:$0xff]
    %v2944 = vld [vmem:[#allocation5 + $0x40] sm:$0xff]
    %v2945 = vld [vmem:[#allocation5 + $0x48] sm:$0xff]
    %v2946 = vld [vmem:[#allocation5 + $0x50] sm:$0xff]
    %v2947 = vld [vmem:[#allocation5 + $0x58] sm:$0xff]
    %v2948 = vld [vmem:[#allocation5 + $0x60] sm:$0xff]
    %v2949 = vld [vmem:[#allocation5 + $0x68] sm:$0xff]
    %v2950 = vld [vmem:[#allocation5 + $0x70] sm:$0xff]
    %v2951 = vld [vmem:[#allocation5 + $0x78] sm:$0xff]
    %v2952 = vld [vmem:[#allocation5 + $0x80] sm:$0xff]
    %v2953 = vld [vmem:[#allocation5 + $0x88] sm:$0xff]
    %v2954 = vld [vmem:[#allocation5 + $0x90] sm:$0xff]
    %v2955 = vld [vmem:[#allocation5 + $0x98] sm:$0xff]
    %v2956 = vld [vmem:[#allocation5 + $0xa0] sm:$0xff]
    %v2957 = vld [vmem:[#allocation5 + $0xa8] sm:$0xff]
    %v2958 = vld [vmem:[#allocation5 + $0xb0] sm:$0xff]
    %v2959 = vld [vmem:[#allocation5 + $0xb8] sm:$0xff]
    %v2960 = vld [vmem:[#allocation5 + $0xc0] sm:$0xff]
    %v2961 = vld [vmem:[#allocation5 + $0xc8] sm:$0xff]
    %v2962 = vld [vmem:[#allocation5 + $0xd0] sm:$0xff]
    %v2963 = vld [vmem:[#allocation5 + $0xd8] sm:$0xff]
    %v2964 = vld [vmem:[#allocation5 + $0xe0] sm:$0xff]
    %v2965 = vld [vmem:[#allocation5 + $0xe8] sm:$0xff]
    %v2966 = vld [vmem:[#allocation5 + $0xf0] sm:$0xff]
    %v2967 = vld [vmem:[#allocation5 + $0xf8] sm:$0xff]
    %v3000 = vunpack.c.l.b16 %v2936
    %v3001 = vunpack.c.h.b16 %v2936
    %v3002 = vunpack.c.l.b16 %v2937
    %v3003 = vunpack.c.h.b16 %v2937
    %v3004 = vunpack.c.l.b16 %v2938
    %v3005 = vunpack.c.h.b16 %v2938
    %v3006 = vunpack.c.l.b16 %v2939
    %v3007 = vunpack.c.h.b16 %v2939
    %v3008 = vunpack.c.l.b16 %v2940
    %v3009 = vunpack.c.h.b16 %v2940
    %v3010 = vunpack.c.l.b16 %v2941
    %v3011 = vunpack.c.h.b16 %v2941
    %v3012 = vunpack.c.l.b16 %v2942
    %v3013 = vunpack.c.h.b16 %v2942
    %v3014 = vunpack.c.l.b16 %v2943
    %v3015 = vunpack.c.h.b16 %v2943
    %v3016 = vunpack.c.l.b16 %v2944
    %v3017 = vunpack.c.h.b16 %v2944
    %v3018 = vunpack.c.l.b16 %v2945
    %v3019 = vunpack.c.h.b16 %v2945
    %v3020 = vunpack.c.l.b16 %v2946
    %v3021 = vunpack.c.h.b16 %v2946
    %v3022 = vunpack.c.l.b16 %v2947
    %v3023 = vunpack.c.h.b16 %v2947
    %v3024 = vunpack.c.l.b16 %v2948
    %v3025 = vunpack.c.h.b16 %v2948
    %v3026 = vunpack.c.l.b16 %v2949
    %v3027 = vunpack.c.h.b16 %v2949
    %v3028 = vunpack.c.l.b16 %v2950
    %v3029 = vunpack.c.h.b16 %v2950
    %v3030 = vunpack.c.l.b16 %v2951
    %v3031 = vunpack.c.h.b16 %v2951
    %v3032 = vunpack.c.l.b16 %v2952
    %v3033 = vunpack.c.h.b16 %v2952
    %v3034 = vunpack.c.l.b16 %v2953
    %v3035 = vunpack.c.h.b16 %v2953
    %v3036 = vunpack.c.l.b16 %v2954
    %v3037 = vunpack.c.h.b16 %v2954
    %v3038 = vunpack.c.l.b16 %v2955
    %v3039 = vunpack.c.h.b16 %v2955
    %v3040 = vunpack.c.l.b16 %v2956
    %v3041 = vunpack.c.h.b16 %v2956
    %v3042 = vunpack.c.l.b16 %v2957
    %v3043 = vunpack.c.h.b16 %v2957
    %v3044 = vunpack.c.l.b16 %v2958
    %v3045 = vunpack.c.h.b16 %v2958
    %v3046 = vunpack.c.l.b16 %v2959
    %v3047 = vunpack.c.h.b16 %v2959
    %v3048 = vunpack.c.l.b16 %v2960
    %v3049 = vunpack.c.h.b16 %v2960
    %v3050 = vunpack.c.l.b16 %v2961
    %v3051 = vunpack.c.h.b16 %v2961
    %v3052 = vunpack.c.l.b16 %v2962
    %v3053 = vunpack.c.h.b16 %v2962
    %v3054 = vunpack.c.l.b16 %v2963
    %v3055 = vunpack.c.h.b16 %v2963
    %v3056 = vunpack.c.l.b16 %v2964
    %v3057 = vunpack.c.h.b16 %v2964
    %v3058 = vunpack.c.l.b16 %v2965
    %v3059 = vunpack.c.h.b16 %v2965
    %v3060 = vunpack.c.l.b16 %v2966
    %v3061 = vunpack.c.h.b16 %v2966
    %v3062 = vunpack.c.l.b16 %v2967
    %v3063 = vunpack.c.h.b16 %v2967
    %v3064 = vpack.c.b16 %v3004, %v3000
    %v3065 = vpack.c.b16 %v3005, %v3001
    %v3066 = vpack.c.b16 %v3006, %v3002
    %v3067 = vpack.c.b16 %v3007, %v3003
    %v3068 = vpack.c.b16 %v3012, %v3008
    %v3069 = vpack.c.b16 %v3013, %v3009
    %v3070 = vpack.c.b16 %v3014, %v3010
    %v3071 = vpack.c.b16 %v3015, %v3011
    %v3072 = vpack.c.b16 %v3020, %v3016
    %v3073 = vpack.c.b16 %v3021, %v3017
    %v3074 = vpack.c.b16 %v3022, %v3018
    %v3075 = vpack.c.b16 %v3023, %v3019
    %v3076 = vpack.c.b16 %v3028, %v3024
    %v3077 = vpack.c.b16 %v3029, %v3025
    %v3078 = vpack.c.b16 %v3030, %v3026
    %v3079 = vpack.c.b16 %v3031, %v3027
    %v3080 = vpack.c.b16 %v3036, %v3032
    %v3081 = vpack.c.b16 %v3037, %v3033
    %v3082 = vpack.c.b16 %v3038, %v3034
    %v3083 = vpack.c.b16 %v3039, %v3035
    %v3084 = vpack.c.b16 %v3044, %v3040
    %v3085 = vpack.c.b16 %v3045, %v3041
    %v3086 = vpack.c.b16 %v3046, %v3042
    %v3087 = vpack.c.b16 %v3047, %v3043
    %v3088 = vpack.c.b16 %v3052, %v3048
    %v3089 = vpack.c.b16 %v3053, %v3049
    %v3090 = vpack.c.b16 %v3054, %v3050
    %v3091 = vpack.c.b16 %v3055, %v3051
    %v3092 = vpack.c.b16 %v3060, %v3056
    %v3093 = vpack.c.b16 %v3061, %v3057
    %v3094 = vpack.c.b16 %v3062, %v3058
    %v3095 = vpack.c.b16 %v3063, %v3059
    %3128 = vmatpush.bf16.msra.mxu0 %v3092
    %3129 = vmatpush.bf16.msra.mxu0 %v3088
    %3130 = vmatpush.bf16.msra.mxu0 %v3084
    %3131 = vmatpush.bf16.msra.mxu0 %v3080
    %3132 = vmatpush.bf16.msra.mxu0 %v3076
    %3133 = vmatpush.bf16.msra.mxu0 %v3072
    %3134 = vmatpush.bf16.msra.mxu0 %v3068
    %3135 = vmatpush.bf16.msra.mxu0 %v3064
    %3136 = vmatmul.bf16.gmra.mxu0 %v2369
    %v3137 = vpop.f32.mrf.mxu0
    %v3138 = vadd.f32 0.0, %v3137
    %v3139 = vpop.f32.mrf.mxu0
    %3140 = vdwg.mxu0
    %3141 = vmatpush.bf16.msra.mxu0 %v3093
    %3142 = vmatpush.bf16.msra.mxu0 %v3089
    %3143 = vmatpush.bf16.msra.mxu0 %v3085
    %3144 = vmatpush.bf16.msra.mxu0 %v3081
    %3145 = vmatpush.bf16.msra.mxu0 %v3077
    %3146 = vmatpush.bf16.msra.mxu0 %v3073
    %3147 = vmatpush.bf16.msra.mxu0 %v3069
    %3148 = vmatpush.bf16.msra.mxu0 %v3065
    %3149 = vmatmul.bf16.gmra.mxu0 %v2369
    %v3150 = vpop.f32.mrf.mxu0
    %v3151 = vadd.f32 0.0, %v3150
    %v3152 = vpop.f32.mrf.mxu0
    %3153 = vdwg.mxu0
    %3154 = vmatpush.bf16.msra.mxu0 %v3094
    %3155 = vmatpush.bf16.msra.mxu0 %v3090
    %3156 = vmatpush.bf16.msra.mxu0 %v3086
    %3157 = vmatpush.bf16.msra.mxu0 %v3082
    %3158 = vmatpush.bf16.msra.mxu0 %v3078
    %3159 = vmatpush.bf16.msra.mxu0 %v3074
    %3160 = vmatpush.bf16.msra.mxu0 %v3070
    %3161 = vmatpush.bf16.msra.mxu0 %v3066
    %3162 = vmatmul.bf16.gmra.mxu0 %v2369
    %v3163 = vpop.f32.mrf.mxu0
    %v3164 = vadd.f32 0.0, %v3163
    %v3165 = vpop.f32.mrf.mxu0
    %3166 = vdwg.mxu0
    %3167 = vmatpush.bf16.msra.mxu0 %v3095
    %3168 = vmatpush.bf16.msra.mxu0 %v3091
    %3169 = vmatpush.bf16.msra.mxu0 %v3087
    %3170 = vmatpush.bf16.msra.mxu0 %v3083
    %3171 = vmatpush.bf16.msra.mxu0 %v3079
    %3172 = vmatpush.bf16.msra.mxu0 %v3075
    %3173 = vmatpush.bf16.msra.mxu0 %v3071
    %3174 = vmatpush.bf16.msra.mxu0 %v3067
    %3175 = vmatmul.bf16.gmra.mxu0 %v2369
    %v3176 = vpop.f32.mrf.mxu0
    %v3177 = vadd.f32 0.0, %v3176
    %v3178 = vpop.f32.mrf.mxu0
    %3179 = vdwg.mxu0
    %v3180 = vadd.f32 %v2932, %v3138
    %v3181 = vadd.f32 %v2933, %v3151
    %v3182 = vadd.f32 %v2934, %v3164
    %v3183 = vadd.f32 %v2935, %v3177
    %v3184 = vxor.u32 %v3180, 2147483648
    %v3185 = vxor.u32 %v3181, 2147483648
    %v3186 = vmul.f32 %v3184, 1.442695
    %v3187 = vpow.pop %v3186
    %v3188 = vmul.f32 %v3185, 1.442695
    %v3189 = vpow.pop %v3188
    %v3190 = vadd.f32 %v3187, 1.0
    %v3191 = vadd.f32 %v3189, 1.0
    %v3192 = vrcp.pop %v3190
    %v3193 = vmul.f32 %v3190, %v3192
    %v3194 = vsub.f32 1.0, %v3193
    %v3195 = vmul.f32 %v3192, %v3194
    %v3196 = vadd.f32 %v3192, %v3195
    %vm3197 = vweird.f32 %v3190
    %vm3198 = vweird.f32 %v3192
    %vm3199 = vmor %vm3197, %vm3198
    %v3200 = vsel %vm3199, %v3192, %v3196
    %v3201 = vand.u32 2147483647, %v3190
    %vm3202 = vcmp.eq.f32.partialorder %v3201, 8.507059e+37
    %v3203 = vand.u32 %v3190, 2147483648
    %v3204 = vor.u32 1.1754944e-38, %v3203
    %v3205 = vsel %vm3202, %v3204, %v3200
    %v3206 = vmul.f32 1.0, %v3205
    %v3207 = vrcp.pop %v3191
    %v3208 = vmul.f32 %v3191, %v3207
    %v3209 = vsub.f32 1.0, %v3208
    %v3210 = vmul.f32 %v3207, %v3209
    %v3211 = vadd.f32 %v3207, %v3210
    %vm3212 = vweird.f32 %v3191
    %vm3213 = vweird.f32 %v3207
    %vm3214 = vmor %vm3212, %vm3213
    %v3215 = vsel %vm3214, %v3207, %v3211
    %v3216 = vand.u32 2147483647, %v3191
    %vm3217 = vcmp.eq.f32.partialorder %v3216, 8.507059e+37
    %v3218 = vand.u32 %v3191, 2147483648
    %v3219 = vor.u32 1.1754944e-38, %v3218
    %v3220 = vsel %vm3217, %v3219, %v3215
    %v3221 = vmul.f32 1.0, %v3220
    %v3222 = vtanh.pop %v3182
    %v3223 = vxor.u32 %v3183, 2147483648
    %v3224 = vmul.f32 %v3223, 1.442695
    %v3225 = vpow.pop %v3224
    %v3226 = vadd.f32 %v3225, 1.0
    %v3227 = vrcp.pop %v3226
    %v3228 = vmul.f32 %v3226, %v3227
    %v3229 = vsub.f32 1.0, %v3228
    %v3230 = vmul.f32 %v3227, %v3229
    %v3231 = vadd.f32 %v3227, %v3230
    %vm3232 = vweird.f32 %v3226
    %vm3233 = vweird.f32 %v3227
    %vm3234 = vmor %vm3232, %vm3233
    %v3235 = vsel %vm3234, %v3227, %v3231
    %v3236 = vand.u32 2147483647, %v3226
    %vm3237 = vcmp.eq.f32.partialorder %v3236, 8.507059e+37
    %v3238 = vand.u32 %v3226, 2147483648
    %v3239 = vor.u32 1.1754944e-38, %v3238
    %v3240 = vsel %vm3237, %v3239, %v3235
    %v3241 = vmul.f32 1.0, %v3240
    %v3242 = vmul.f32 %v3221, %v2366
    %v3243 = vmul.f32 %v3206, %v3222
    %v3244 = vadd.f32 %v3242, %v3243
    %v3245 = vtanh.pop %v3244
    %v3246 = vmul.f32 %v3241, %v3245
    %v3247 = vpack.c.bf16 %v3246, %v3246
    %3248 = vst [vmem:[#allocation3] sm:$0xf] %v3247
    %v3249 = vld [vmem:[#allocation3] sm:$0xff]
    %v3250 = vld [vmem:[#allocation7] sm:$0xff]
    %v3251 = vld [vmem:[#allocation7 + $0x8] sm:$0xff]
    %v3252 = vld [vmem:[#allocation7 + $0x10] sm:$0xff]
    %v3253 = vld [vmem:[#allocation7 + $0x18] sm:$0xff]
    %v3254 = vld [vmem:[#allocation7 + $0x20] sm:$0xff]
    %v3255 = vld [vmem:[#allocation7 + $0x28] sm:$0xff]
    %v3256 = vld [vmem:[#allocation7 + $0x30] sm:$0xff]
    %v3257 = vld [vmem:[#allocation7 + $0x38] sm:$0xff]
    %v3258 = vld [vmem:[#allocation7 + $0x40] sm:$0xff]
    %v3259 = vld [vmem:[#allocation7 + $0x48] sm:$0xff]
    %v3260 = vld [vmem:[#allocation7 + $0x50] sm:$0xff]
    %v3261 = vld [vmem:[#allocation7 + $0x58] sm:$0xff]
    %v3262 = vld [vmem:[#allocation7 + $0x60] sm:$0xff]
    %v3263 = vld [vmem:[#allocation7 + $0x68] sm:$0xff]
    %v3264 = vld [vmem:[#allocation7 + $0x70] sm:$0xff]
    %v3265 = vld [vmem:[#allocation7 + $0x78] sm:$0xff]
    %v3266 = vld [vmem:[#allocation7 + $0x80] sm:$0xff]
    %v3267 = vld [vmem:[#allocation7 + $0x88] sm:$0xff]
    %v3268 = vld [vmem:[#allocation7 + $0x90] sm:$0xff]
    %v3269 = vld [vmem:[#allocation7 + $0x98] sm:$0xff]
    %v3270 = vld [vmem:[#allocation7 + $0xa0] sm:$0xff]
    %v3271 = vld [vmem:[#allocation7 + $0xa8] sm:$0xff]
    %v3272 = vld [vmem:[#allocation7 + $0xb0] sm:$0xff]
    %v3273 = vld [vmem:[#allocation7 + $0xb8] sm:$0xff]
    %v3274 = vld [vmem:[#allocation7 + $0xc0] sm:$0xff]
    %v3275 = vld [vmem:[#allocation7 + $0xc8] sm:$0xff]
    %v3276 = vld [vmem:[#allocation7 + $0xd0] sm:$0xff]
    %v3277 = vld [vmem:[#allocation7 + $0xd8] sm:$0xff]
    %v3278 = vld [vmem:[#allocation7 + $0xe0] sm:$0xff]
    %v3279 = vld [vmem:[#allocation7 + $0xe8] sm:$0xff]
    %v3280 = vld [vmem:[#allocation7 + $0xf0] sm:$0xff]
    %v3281 = vld [vmem:[#allocation7 + $0xf8] sm:$0xff]
    %v3282 = vld [vmem:[#allocation7 + $0x100] sm:$0xff]
    %v3283 = vld [vmem:[#allocation7 + $0x108] sm:$0xff]
    %v3284 = vld [vmem:[#allocation7 + $0x110] sm:$0xff]
    %v3285 = vld [vmem:[#allocation7 + $0x118] sm:$0xff]
    %v3286 = vld [vmem:[#allocation7 + $0x120] sm:$0xff]
    %v3287 = vld [vmem:[#allocation7 + $0x128] sm:$0xff]
    %v3288 = vld [vmem:[#allocation7 + $0x130] sm:$0xff]
    %v3289 = vld [vmem:[#allocation7 + $0x138] sm:$0xff]
    %v3290 = vld [vmem:[#allocation7 + $0x140] sm:$0xff]
    %v3291 = vld [vmem:[#allocation7 + $0x148] sm:$0xff]
    %v3292 = vld [vmem:[#allocation7 + $0x150] sm:$0xff]
    %v3293 = vld [vmem:[#allocation7 + $0x158] sm:$0xff]
    %v3294 = vld [vmem:[#allocation7 + $0x160] sm:$0xff]
    %v3295 = vld [vmem:[#allocation7 + $0x168] sm:$0xff]
    %v3296 = vld [vmem:[#allocation7 + $0x170] sm:$0xff]
    %v3297 = vld [vmem:[#allocation7 + $0x178] sm:$0xff]
    %v3298 = vld [vmem:[#allocation7 + $0x180] sm:$0xff]
    %v3299 = vld [vmem:[#allocation7 + $0x188] sm:$0xff]
    %v3300 = vld [vmem:[#allocation7 + $0x190] sm:$0xff]
    %v3301 = vld [vmem:[#allocation7 + $0x198] sm:$0xff]
    %v3302 = vld [vmem:[#allocation7 + $0x1a0] sm:$0xff]
    %v3303 = vld [vmem:[#allocation7 + $0x1a8] sm:$0xff]
    %v3304 = vld [vmem:[#allocation7 + $0x1b0] sm:$0xff]
    %v3305 = vld [vmem:[#allocation7 + $0x1b8] sm:$0xff]
    %v3306 = vld [vmem:[#allocation7 + $0x1c0] sm:$0xff]
    %v3307 = vld [vmem:[#allocation7 + $0x1c8] sm:$0xff]
    %v3308 = vld [vmem:[#allocation7 + $0x1d0] sm:$0xff]
    %v3309 = vld [vmem:[#allocation7 + $0x1d8] sm:$0xff]
    %v3310 = vld [vmem:[#allocation7 + $0x1e0] sm:$0xff]
    %v3311 = vld [vmem:[#allocation7 + $0x1e8] sm:$0xff]
    %v3312 = vld [vmem:[#allocation7 + $0x1f0] sm:$0xff]
    %v3313 = vld [vmem:[#allocation7 + $0x1f8] sm:$0xff]
    %v3315 = vunpack.c.l.b16 %v3249
    %v3316 = vunpack.c.h.b16 %v3249
    %v3317 = vpack.c.b16 %v3315, %v3315
    %v3318 = vpack.c.b16 %v3316, %v3316
    %v3385 = vunpack.c.l.b16 %v3250
    %v3386 = vunpack.c.h.b16 %v3250
    %v3387 = vunpack.c.l.b16 %v3251
    %v3388 = vunpack.c.h.b16 %v3251
    %v3389 = vunpack.c.l.b16 %v3252
    %v3390 = vunpack.c.h.b16 %v3252
    %v3391 = vunpack.c.l.b16 %v3253
    %v3392 = vunpack.c.h.b16 %v3253
    %v3393 = vunpack.c.l.b16 %v3254
    %v3394 = vunpack.c.h.b16 %v3254
    %v3395 = vunpack.c.l.b16 %v3255
    %v3396 = vunpack.c.h.b16 %v3255
    %v3397 = vunpack.c.l.b16 %v3256
    %v3398 = vunpack.c.h.b16 %v3256
    %v3399 = vunpack.c.l.b16 %v3257
    %v3400 = vunpack.c.h.b16 %v3257
    %v3401 = vunpack.c.l.b16 %v3258
    %v3402 = vunpack.c.h.b16 %v3258
    %v3403 = vunpack.c.l.b16 %v3259
    %v3404 = vunpack.c.h.b16 %v3259
    %v3405 = vunpack.c.l.b16 %v3260
    %v3406 = vunpack.c.h.b16 %v3260
    %v3407 = vunpack.c.l.b16 %v3261
    %v3408 = vunpack.c.h.b16 %v3261
    %v3409 = vunpack.c.l.b16 %v3262
    %v3410 = vunpack.c.h.b16 %v3262
    %v3411 = vunpack.c.l.b16 %v3263
    %v3412 = vunpack.c.h.b16 %v3263
    %v3413 = vunpack.c.l.b16 %v3264
    %v3414 = vunpack.c.h.b16 %v3264
    %v3415 = vunpack.c.l.b16 %v3265
    %v3416 = vunpack.c.h.b16 %v3265
    %v3417 = vunpack.c.l.b16 %v3266
    %v3418 = vunpack.c.h.b16 %v3266
    %v3419 = vunpack.c.l.b16 %v3267
    %v3420 = vunpack.c.h.b16 %v3267
    %v3421 = vunpack.c.l.b16 %v3268
    %v3422 = vunpack.c.h.b16 %v3268
    %v3423 = vunpack.c.l.b16 %v3269
    %v3424 = vunpack.c.h.b16 %v3269
    %v3425 = vunpack.c.l.b16 %v3270
    %v3426 = vunpack.c.h.b16 %v3270
    %v3427 = vunpack.c.l.b16 %v3271
    %v3428 = vunpack.c.h.b16 %v3271
    %v3429 = vunpack.c.l.b16 %v3272
    %v3430 = vunpack.c.h.b16 %v3272
    %v3431 = vunpack.c.l.b16 %v3273
    %v3432 = vunpack.c.h.b16 %v3273
    %v3433 = vunpack.c.l.b16 %v3274
    %v3434 = vunpack.c.h.b16 %v3274
    %v3435 = vunpack.c.l.b16 %v3275
    %v3436 = vunpack.c.h.b16 %v3275
    %v3437 = vunpack.c.l.b16 %v3276
    %v3438 = vunpack.c.h.b16 %v3276
    %v3439 = vunpack.c.l.b16 %v3277
    %v3440 = vunpack.c.h.b16 %v3277
    %v3441 = vunpack.c.l.b16 %v3278
    %v3442 = vunpack.c.h.b16 %v3278
    %v3443 = vunpack.c.l.b16 %v3279
    %v3444 = vunpack.c.h.b16 %v3279
    %v3445 = vunpack.c.l.b16 %v3280
    %v3446 = vunpack.c.h.b16 %v3280
    %v3447 = vunpack.c.l.b16 %v3281
    %v3448 = vunpack.c.h.b16 %v3281
    %v3449 = vunpack.c.l.b16 %v3282
    %v3450 = vunpack.c.h.b16 %v3282
    %v3451 = vunpack.c.l.b16 %v3283
    %v3452 = vunpack.c.h.b16 %v3283
    %v3453 = vunpack.c.l.b16 %v3284
    %v3454 = vunpack.c.h.b16 %v3284
    %v3455 = vunpack.c.l.b16 %v3285
    %v3456 = vunpack.c.h.b16 %v3285
    %v3457 = vunpack.c.l.b16 %v3286
    %v3458 = vunpack.c.h.b16 %v3286
    %v3459 = vunpack.c.l.b16 %v3287
    %v3460 = vunpack.c.h.b16 %v3287
    %v3461 = vunpack.c.l.b16 %v3288
    %v3462 = vunpack.c.h.b16 %v3288
    %v3463 = vunpack.c.l.b16 %v3289
    %v3464 = vunpack.c.h.b16 %v3289
    %v3465 = vunpack.c.l.b16 %v3290
    %v3466 = vunpack.c.h.b16 %v3290
    %v3467 = vunpack.c.l.b16 %v3291
    %v3468 = vunpack.c.h.b16 %v3291
    %v3469 = vunpack.c.l.b16 %v3292
    %v3470 = vunpack.c.h.b16 %v3292
    %v3471 = vunpack.c.l.b16 %v3293
    %v3472 = vunpack.c.h.b16 %v3293
    %v3473 = vunpack.c.l.b16 %v3294
    %v3474 = vunpack.c.h.b16 %v3294
    %v3475 = vunpack.c.l.b16 %v3295
    %v3476 = vunpack.c.h.b16 %v3295
    %v3477 = vunpack.c.l.b16 %v3296
    %v3478 = vunpack.c.h.b16 %v3296
    %v3479 = vunpack.c.l.b16 %v3297
    %v3480 = vunpack.c.h.b16 %v3297
    %v3481 = vunpack.c.l.b16 %v3298
    %v3482 = vunpack.c.h.b16 %v3298
    %v3483 = vunpack.c.l.b16 %v3299
    %v3484 = vunpack.c.h.b16 %v3299
    %v3485 = vunpack.c.l.b16 %v3300
    %v3486 = vunpack.c.h.b16 %v3300
    %v3487 = vunpack.c.l.b16 %v3301
    %v3488 = vunpack.c.h.b16 %v3301
    %v3489 = vunpack.c.l.b16 %v3302
    %v3490 = vunpack.c.h.b16 %v3302
    %v3491 = vunpack.c.l.b16 %v3303
    %v3492 = vunpack.c.h.b16 %v3303
    %v3493 = vunpack.c.l.b16 %v3304
    %v3494 = vunpack.c.h.b16 %v3304
    %v3495 = vunpack.c.l.b16 %v3305
    %v3496 = vunpack.c.h.b16 %v3305
    %v3497 = vunpack.c.l.b16 %v3306
    %v3498 = vunpack.c.h.b16 %v3306
    %v3499 = vunpack.c.l.b16 %v3307
    %v3500 = vunpack.c.h.b16 %v3307
    %v3501 = vunpack.c.l.b16 %v3308
    %v3502 = vunpack.c.h.b16 %v3308
    %v3503 = vunpack.c.l.b16 %v3309
    %v3504 = vunpack.c.h.b16 %v3309
    %v3505 = vunpack.c.l.b16 %v3310
    %v3506 = vunpack.c.h.b16 %v3310
    %v3507 = vunpack.c.l.b16 %v3311
    %v3508 = vunpack.c.h.b16 %v3311
    %v3509 = vunpack.c.l.b16 %v3312
    %v3510 = vunpack.c.h.b16 %v3312
    %v3511 = vunpack.c.l.b16 %v3313
    %v3512 = vunpack.c.h.b16 %v3313
    %v3513 = vpack.c.b16 %v3389, %v3385
    %v3514 = vpack.c.b16 %v3390, %v3386
    %v3515 = vpack.c.b16 %v3391, %v3387
    %v3516 = vpack.c.b16 %v3392, %v3388
    %v3517 = vpack.c.b16 %v3397, %v3393
    %v3518 = vpack.c.b16 %v3398, %v3394
    %v3519 = vpack.c.b16 %v3399, %v3395
    %v3520 = vpack.c.b16 %v3400, %v3396
    %v3521 = vpack.c.b16 %v3405, %v3401
    %v3522 = vpack.c.b16 %v3406, %v3402
    %v3523 = vpack.c.b16 %v3407, %v3403
    %v3524 = vpack.c.b16 %v3408, %v3404
    %v3525 = vpack.c.b16 %v3413, %v3409
    %v3526 = vpack.c.b16 %v3414, %v3410
    %v3527 = vpack.c.b16 %v3415, %v3411
    %v3528 = vpack.c.b16 %v3416, %v3412
    %v3529 = vpack.c.b16 %v3421, %v3417
    %v3530 = vpack.c.b16 %v3422, %v3418
    %v3531 = vpack.c.b16 %v3423, %v3419
    %v3532 = vpack.c.b16 %v3424, %v3420
    %v3533 = vpack.c.b16 %v3429, %v3425
    %v3534 = vpack.c.b16 %v3430, %v3426
    %v3535 = vpack.c.b16 %v3431, %v3427
    %v3536 = vpack.c.b16 %v3432, %v3428
    %v3537 = vpack.c.b16 %v3437, %v3433
    %v3538 = vpack.c.b16 %v3438, %v3434
    %v3539 = vpack.c.b16 %v3439, %v3435
    %v3540 = vpack.c.b16 %v3440, %v3436
    %v3541 = vpack.c.b16 %v3445, %v3441
    %v3542 = vpack.c.b16 %v3446, %v3442
    %v3543 = vpack.c.b16 %v3447, %v3443
    %v3544 = vpack.c.b16 %v3448, %v3444
    %v3545 = vpack.c.b16 %v3453, %v3449
    %v3546 = vpack.c.b16 %v3454, %v3450
    %v3547 = vpack.c.b16 %v3455, %v3451
    %v3548 = vpack.c.b16 %v3456, %v3452
    %v3549 = vpack.c.b16 %v3461, %v3457
    %v3550 = vpack.c.b16 %v3462, %v3458
    %v3551 = vpack.c.b16 %v3463, %v3459
    %v3552 = vpack.c.b16 %v3464, %v3460
    %v3553 = vpack.c.b16 %v3469, %v3465
    %v3554 = vpack.c.b16 %v3470, %v3466
    %v3555 = vpack.c.b16 %v3471, %v3467
    %v3556 = vpack.c.b16 %v3472, %v3468
    %v3557 = vpack.c.b16 %v3477, %v3473
    %v3558 = vpack.c.b16 %v3478, %v3474
    %v3559 = vpack.c.b16 %v3479, %v3475
    %v3560 = vpack.c.b16 %v3480, %v3476
    %v3561 = vpack.c.b16 %v3485, %v3481
    %v3562 = vpack.c.b16 %v3486, %v3482
    %v3563 = vpack.c.b16 %v3487, %v3483
    %v3564 = vpack.c.b16 %v3488, %v3484
    %v3565 = vpack.c.b16 %v3493, %v3489
    %v3566 = vpack.c.b16 %v3494, %v3490
    %v3567 = vpack.c.b16 %v3495, %v3491
    %v3568 = vpack.c.b16 %v3496, %v3492
    %v3569 = vpack.c.b16 %v3501, %v3497
    %v3570 = vpack.c.b16 %v3502, %v3498
    %v3571 = vpack.c.b16 %v3503, %v3499
    %v3572 = vpack.c.b16 %v3504, %v3500
    %v3573 = vpack.c.b16 %v3509, %v3505
    %v3574 = vpack.c.b16 %v3510, %v3506
    %v3575 = vpack.c.b16 %v3511, %v3507
    %v3576 = vpack.c.b16 %v3512, %v3508
    %3641 = vmatpush.bf16.msra.mxu0 %v3541
    %3642 = vmatpush.bf16.msra.mxu0 %v3537
    %3643 = vmatpush.bf16.msra.mxu0 %v3533
    %3644 = vmatpush.bf16.msra.mxu0 %v3529
    %3645 = vmatpush.bf16.msra.mxu0 %v3525
    %3646 = vmatpush.bf16.msra.mxu0 %v3521
    %3647 = vmatpush.bf16.msra.mxu0 %v3517
    %3648 = vmatpush.bf16.msra.mxu0 %v3513
    %3649 = vmatmul.bf16.gmra.mxu0 %v3317
    %v3650 = vpop.f32.mrf.mxu0
    %v3651 = vadd.f32 %v290, %v3650
    %v3652 = vpop.f32.mrf.mxu0
    %3653 = vdwg.mxu0
    %3654 = vmatpush.bf16.msra.mxu0 %v3573
    %3655 = vmatpush.bf16.msra.mxu0 %v3569
    %3656 = vmatpush.bf16.msra.mxu0 %v3565
    %3657 = vmatpush.bf16.msra.mxu0 %v3561
    %3658 = vmatpush.bf16.msra.mxu0 %v3557
    %3659 = vmatpush.bf16.msra.mxu0 %v3553
    %3660 = vmatpush.bf16.msra.mxu0 %v3549
    %3661 = vmatpush.bf16.msra.mxu0 %v3545
    %3662 = vmatmul.bf16.gmra.mxu0 %v3318
    %v3663 = vpop.f32.mrf.mxu0
    %v3664 = vadd.f32 %v3651, %v3663
    %v3665 = vpop.f32.mrf.mxu0
    %3666 = vdwg.mxu0
    %3667 = vmatpush.bf16.msra.mxu0 %v3542
    %3668 = vmatpush.bf16.msra.mxu0 %v3538
    %3669 = vmatpush.bf16.msra.mxu0 %v3534
    %3670 = vmatpush.bf16.msra.mxu0 %v3530
    %3671 = vmatpush.bf16.msra.mxu0 %v3526
    %3672 = vmatpush.bf16.msra.mxu0 %v3522
    %3673 = vmatpush.bf16.msra.mxu0 %v3518
    %3674 = vmatpush.bf16.msra.mxu0 %v3514
    %3675 = vmatmul.bf16.gmra.mxu0 %v3317
    %v3676 = vpop.f32.mrf.mxu0
    %v3677 = vadd.f32 %v291, %v3676
    %v3678 = vpop.f32.mrf.mxu0
    %3679 = vdwg.mxu0
    %3680 = vmatpush.bf16.msra.mxu0 %v3574
    %3681 = vmatpush.bf16.msra.mxu0 %v3570
    %3682 = vmatpush.bf16.msra.mxu0 %v3566
    %3683 = vmatpush.bf16.msra.mxu0 %v3562
    %3684 = vmatpush.bf16.msra.mxu0 %v3558
    %3685 = vmatpush.bf16.msra.mxu0 %v3554
    %3686 = vmatpush.bf16.msra.mxu0 %v3550
    %3687 = vmatpush.bf16.msra.mxu0 %v3546
    %3688 = vmatmul.bf16.gmra.mxu0 %v3318
    %v3689 = vpop.f32.mrf.mxu0
    %v3690 = vadd.f32 %v3677, %v3689
    %v3691 = vpop.f32.mrf.mxu0
    %3692 = vdwg.mxu0
    %3693 = vmatpush.bf16.msra.mxu0 %v3543
    %3694 = vmatpush.bf16.msra.mxu0 %v3539
    %3695 = vmatpush.bf16.msra.mxu0 %v3535
    %3696 = vmatpush.bf16.msra.mxu0 %v3531
    %3697 = vmatpush.bf16.msra.mxu0 %v3527
    %3698 = vmatpush.bf16.msra.mxu0 %v3523
    %3699 = vmatpush.bf16.msra.mxu0 %v3519
    %3700 = vmatpush.bf16.msra.mxu0 %v3515
    %3701 = vmatmul.bf16.gmra.mxu0 %v3317
    %v3702 = vpop.f32.mrf.mxu0
    %v3703 = vadd.f32 %v292, %v3702
    %v3704 = vpop.f32.mrf.mxu0
    %3705 = vdwg.mxu0
    %3706 = vmatpush.bf16.msra.mxu0 %v3575
    %3707 = vmatpush.bf16.msra.mxu0 %v3571
    %3708 = vmatpush.bf16.msra.mxu0 %v3567
    %3709 = vmatpush.bf16.msra.mxu0 %v3563
    %3710 = vmatpush.bf16.msra.mxu0 %v3559
    %3711 = vmatpush.bf16.msra.mxu0 %v3555
    %3712 = vmatpush.bf16.msra.mxu0 %v3551
    %3713 = vmatpush.bf16.msra.mxu0 %v3547
    %3714 = vmatmul.bf16.gmra.mxu0 %v3318
    %v3715 = vpop.f32.mrf.mxu0
    %v3716 = vadd.f32 %v3703, %v3715
    %v3717 = vpop.f32.mrf.mxu0
    %3718 = vdwg.mxu0
    %3719 = vmatpush.bf16.msra.mxu0 %v3544
    %3720 = vmatpush.bf16.msra.mxu0 %v3540
    %3721 = vmatpush.bf16.msra.mxu0 %v3536
    %3722 = vmatpush.bf16.msra.mxu0 %v3532
    %3723 = vmatpush.bf16.msra.mxu0 %v3528
    %3724 = vmatpush.bf16.msra.mxu0 %v3524
    %3725 = vmatpush.bf16.msra.mxu0 %v3520
    %3726 = vmatpush.bf16.msra.mxu0 %v3516
    %3727 = vmatmul.bf16.gmra.mxu0 %v3317
    %v3728 = vpop.f32.mrf.mxu0
    %v3729 = vadd.f32 %v293, %v3728
    %v3730 = vpop.f32.mrf.mxu0
    %3731 = vdwg.mxu0
    %3732 = vmatpush.bf16.msra.mxu0 %v3576
    %3733 = vmatpush.bf16.msra.mxu0 %v3572
    %3734 = vmatpush.bf16.msra.mxu0 %v3568
    %3735 = vmatpush.bf16.msra.mxu0 %v3564
    %3736 = vmatpush.bf16.msra.mxu0 %v3560
    %3737 = vmatpush.bf16.msra.mxu0 %v3556
    %3738 = vmatpush.bf16.msra.mxu0 %v3552
    %3739 = vmatpush.bf16.msra.mxu0 %v3548
    %3740 = vmatmul.bf16.gmra.mxu0 %v3318
    %v3741 = vpop.f32.mrf.mxu0
    %v3742 = vadd.f32 %v3729, %v3741
    %v3743 = vpop.f32.mrf.mxu0
    %3744 = vdwg.mxu0
    %v3745 = vxor.u32 %v3664, 2147483648
    %v3746 = vxor.u32 %v3690, 2147483648
    %v3747 = vmul.f32 %v3745, 1.442695
    %v3748 = vpow.pop %v3747
    %v3749 = vmul.f32 %v3746, 1.442695
    %v3750 = vpow.pop %v3749
    %v3751 = vadd.f32 %v3748, 1.0
    %v3752 = vadd.f32 %v3750, 1.0
    %v3753 = vrcp.pop %v3751
    %v3754 = vmul.f32 %v3751, %v3753
    %v3755 = vsub.f32 1.0, %v3754
    %v3756 = vmul.f32 %v3753, %v3755
    %v3757 = vadd.f32 %v3753, %v3756
    %vm3758 = vweird.f32 %v3751
    %vm3759 = vweird.f32 %v3753
    %vm3760 = vmor %vm3758, %vm3759
    %v3761 = vsel %vm3760, %v3753, %v3757
    %v3762 = vand.u32 2147483647, %v3751
    %vm3763 = vcmp.eq.f32.partialorder %v3762, 8.507059e+37
    %v3764 = vand.u32 %v3751, 2147483648
    %v3765 = vor.u32 1.1754944e-38, %v3764
    %v3766 = vsel %vm3763, %v3765, %v3761
    %v3767 = vmul.f32 1.0, %v3766
    %v3768 = vrcp.pop %v3752
    %v3769 = vmul.f32 %v3752, %v3768
    %v3770 = vsub.f32 1.0, %v3769
    %v3771 = vmul.f32 %v3768, %v3770
    %v3772 = vadd.f32 %v3768, %v3771
    %vm3773 = vweird.f32 %v3752
    %vm3774 = vweird.f32 %v3768
    %vm3775 = vmor %vm3773, %vm3774
    %v3776 = vsel %vm3775, %v3768, %v3772
    %v3777 = vand.u32 2147483647, %v3752
    %vm3778 = vcmp.eq.f32.partialorder %v3777, 8.507059e+37
    %v3779 = vand.u32 %v3752, 2147483648
    %v3780 = vor.u32 1.1754944e-38, %v3779
    %v3781 = vsel %vm3778, %v3780, %v3776
    %v3782 = vmul.f32 1.0, %v3781
    %v3783 = vtanh.pop %v3716
    %v3784 = vxor.u32 %v3742, 2147483648
    %v3785 = vmul.f32 %v3784, 1.442695
    %v3786 = vpow.pop %v3785
    %v3787 = vadd.f32 %v3786, 1.0
    %v3788 = vrcp.pop %v3787
    %v3789 = vmul.f32 %v3787, %v3788
    %v3790 = vsub.f32 1.0, %v3789
    %v3791 = vmul.f32 %v3788, %v3790
    %v3792 = vadd.f32 %v3788, %v3791
    %vm3793 = vweird.f32 %v3787
    %vm3794 = vweird.f32 %v3788
    %vm3795 = vmor %vm3793, %vm3794
    %v3796 = vsel %vm3795, %v3788, %v3792
    %v3797 = vand.u32 2147483647, %v3787
    %vm3798 = vcmp.eq.f32.partialorder %v3797, 8.507059e+37
    %v3799 = vand.u32 %v3787, 2147483648
    %v3800 = vor.u32 1.1754944e-38, %v3799
    %v3801 = vsel %vm3798, %v3800, %v3796
    %v3802 = vmul.f32 1.0, %v3801
    %v3803 = vmul.f32 %v3782, %v2927
    %v3804 = vmul.f32 %v3767, %v3783
    %v3805 = vadd.f32 %v3803, %v3804
    %v3806 = vtanh.pop %v3805
    %v3807 = vmul.f32 %v3802, %v3806
    %v3808 = vpack.c.bf16 %v3807, %v3807
    %3809 = vst [vmem:[#allocation3 + $0x4] sm:$0xf] %v3808
    %v3810 = vld [vmem:[#allocation2 + $0x80] sm:$0xff]
    %v3811 = vld [vmem:[#allocation2 + $0x88] sm:$0xff]
    %v3812 = vld [vmem:[#allocation2 + $0x90] sm:$0xff]
    %v3813 = vld [vmem:[#allocation2 + $0x98] sm:$0xff]
    %v3814 = vld [vmem:[#allocation5] sm:$0xff]
    %v3815 = vld [vmem:[#allocation5 + $0x8] sm:$0xff]
    %v3816 = vld [vmem:[#allocation5 + $0x10] sm:$0xff]
    %v3817 = vld [vmem:[#allocation5 + $0x18] sm:$0xff]
    %v3818 = vld [vmem:[#allocation5 + $0x20] sm:$0xff]
    %v3819 = vld [vmem:[#allocation5 + $0x28] sm:$0xff]
    %v3820 = vld [vmem:[#allocation5 + $0x30] sm:$0xff]
    %v3821 = vld [vmem:[#allocation5 + $0x38] sm:$0xff]
    %v3822 = vld [vmem:[#allocation5 + $0x40] sm:$0xff]
    %v3823 = vld [vmem:[#allocation5 + $0x48] sm:$0xff]
    %v3824 = vld [vmem:[#allocation5 + $0x50] sm:$0xff]
    %v3825 = vld [vmem:[#allocation5 + $0x58] sm:$0xff]
    %v3826 = vld [vmem:[#allocation5 + $0x60] sm:$0xff]
    %v3827 = vld [vmem:[#allocation5 + $0x68] sm:$0xff]
    %v3828 = vld [vmem:[#allocation5 + $0x70] sm:$0xff]
    %v3829 = vld [vmem:[#allocation5 + $0x78] sm:$0xff]
    %v3830 = vld [vmem:[#allocation5 + $0x80] sm:$0xff]
    %v3831 = vld [vmem:[#allocation5 + $0x88] sm:$0xff]
    %v3832 = vld [vmem:[#allocation5 + $0x90] sm:$0xff]
    %v3833 = vld [vmem:[#allocation5 + $0x98] sm:$0xff]
    %v3834 = vld [vmem:[#allocation5 + $0xa0] sm:$0xff]
    %v3835 = vld [vmem:[#allocation5 + $0xa8] sm:$0xff]
    %v3836 = vld [vmem:[#allocation5 + $0xb0] sm:$0xff]
    %v3837 = vld [vmem:[#allocation5 + $0xb8] sm:$0xff]
    %v3838 = vld [vmem:[#allocation5 + $0xc0] sm:$0xff]
    %v3839 = vld [vmem:[#allocation5 + $0xc8] sm:$0xff]
    %v3840 = vld [vmem:[#allocation5 + $0xd0] sm:$0xff]
    %v3841 = vld [vmem:[#allocation5 + $0xd8] sm:$0xff]
    %v3842 = vld [vmem:[#allocation5 + $0xe0] sm:$0xff]
    %v3843 = vld [vmem:[#allocation5 + $0xe8] sm:$0xff]
    %v3844 = vld [vmem:[#allocation5 + $0xf0] sm:$0xff]
    %v3845 = vld [vmem:[#allocation5 + $0xf8] sm:$0xff]
    %v3878 = vunpack.c.l.b16 %v3814
    %v3879 = vunpack.c.h.b16 %v3814
    %v3880 = vunpack.c.l.b16 %v3815
    %v3881 = vunpack.c.h.b16 %v3815
    %v3882 = vunpack.c.l.b16 %v3816
    %v3883 = vunpack.c.h.b16 %v3816
    %v3884 = vunpack.c.l.b16 %v3817
    %v3885 = vunpack.c.h.b16 %v3817
    %v3886 = vunpack.c.l.b16 %v3818
    %v3887 = vunpack.c.h.b16 %v3818
    %v3888 = vunpack.c.l.b16 %v3819
    %v3889 = vunpack.c.h.b16 %v3819
    %v3890 = vunpack.c.l.b16 %v3820
    %v3891 = vunpack.c.h.b16 %v3820
    %v3892 = vunpack.c.l.b16 %v3821
    %v3893 = vunpack.c.h.b16 %v3821
    %v3894 = vunpack.c.l.b16 %v3822
    %v3895 = vunpack.c.h.b16 %v3822
    %v3896 = vunpack.c.l.b16 %v3823
    %v3897 = vunpack.c.h.b16 %v3823
    %v3898 = vunpack.c.l.b16 %v3824
    %v3899 = vunpack.c.h.b16 %v3824
    %v3900 = vunpack.c.l.b16 %v3825
    %v3901 = vunpack.c.h.b16 %v3825
    %v3902 = vunpack.c.l.b16 %v3826
    %v3903 = vunpack.c.h.b16 %v3826
    %v3904 = vunpack.c.l.b16 %v3827
    %v3905 = vunpack.c.h.b16 %v3827
    %v3906 = vunpack.c.l.b16 %v3828
    %v3907 = vunpack.c.h.b16 %v3828
    %v3908 = vunpack.c.l.b16 %v3829
    %v3909 = vunpack.c.h.b16 %v3829
    %v3910 = vunpack.c.l.b16 %v3830
    %v3911 = vunpack.c.h.b16 %v3830
    %v3912 = vunpack.c.l.b16 %v3831
    %v3913 = vunpack.c.h.b16 %v3831
    %v3914 = vunpack.c.l.b16 %v3832
    %v3915 = vunpack.c.h.b16 %v3832
    %v3916 = vunpack.c.l.b16 %v3833
    %v3917 = vunpack.c.h.b16 %v3833
    %v3918 = vunpack.c.l.b16 %v3834
    %v3919 = vunpack.c.h.b16 %v3834
    %v3920 = vunpack.c.l.b16 %v3835
    %v3921 = vunpack.c.h.b16 %v3835
    %v3922 = vunpack.c.l.b16 %v3836
    %v3923 = vunpack.c.h.b16 %v3836
    %v3924 = vunpack.c.l.b16 %v3837
    %v3925 = vunpack.c.h.b16 %v3837
    %v3926 = vunpack.c.l.b16 %v3838
    %v3927 = vunpack.c.h.b16 %v3838
    %v3928 = vunpack.c.l.b16 %v3839
    %v3929 = vunpack.c.h.b16 %v3839
    %v3930 = vunpack.c.l.b16 %v3840
    %v3931 = vunpack.c.h.b16 %v3840
    %v3932 = vunpack.c.l.b16 %v3841
    %v3933 = vunpack.c.h.b16 %v3841
    %v3934 = vunpack.c.l.b16 %v3842
    %v3935 = vunpack.c.h.b16 %v3842
    %v3936 = vunpack.c.l.b16 %v3843
    %v3937 = vunpack.c.h.b16 %v3843
    %v3938 = vunpack.c.l.b16 %v3844
    %v3939 = vunpack.c.h.b16 %v3844
    %v3940 = vunpack.c.l.b16 %v3845
    %v3941 = vunpack.c.h.b16 %v3845
    %v3942 = vpack.c.b16 %v3882, %v3878
    %v3943 = vpack.c.b16 %v3883, %v3879
    %v3944 = vpack.c.b16 %v3884, %v3880
    %v3945 = vpack.c.b16 %v3885, %v3881
    %v3946 = vpack.c.b16 %v3890, %v3886
    %v3947 = vpack.c.b16 %v3891, %v3887
    %v3948 = vpack.c.b16 %v3892, %v3888
    %v3949 = vpack.c.b16 %v3893, %v3889
    %v3950 = vpack.c.b16 %v3898, %v3894
    %v3951 = vpack.c.b16 %v3899, %v3895
    %v3952 = vpack.c.b16 %v3900, %v3896
    %v3953 = vpack.c.b16 %v3901, %v3897
    %v3954 = vpack.c.b16 %v3906, %v3902
    %v3955 = vpack.c.b16 %v3907, %v3903
    %v3956 = vpack.c.b16 %v3908, %v3904
    %v3957 = vpack.c.b16 %v3909, %v3905
    %v3958 = vpack.c.b16 %v3914, %v3910
    %v3959 = vpack.c.b16 %v3915, %v3911
    %v3960 = vpack.c.b16 %v3916, %v3912
    %v3961 = vpack.c.b16 %v3917, %v3913
    %v3962 = vpack.c.b16 %v3922, %v3918
    %v3963 = vpack.c.b16 %v3923, %v3919
    %v3964 = vpack.c.b16 %v3924, %v3920
    %v3965 = vpack.c.b16 %v3925, %v3921
    %v3966 = vpack.c.b16 %v3930, %v3926
    %v3967 = vpack.c.b16 %v3931, %v3927
    %v3968 = vpack.c.b16 %v3932, %v3928
    %v3969 = vpack.c.b16 %v3933, %v3929
    %v3970 = vpack.c.b16 %v3938, %v3934
    %v3971 = vpack.c.b16 %v3939, %v3935
    %v3972 = vpack.c.b16 %v3940, %v3936
    %v3973 = vpack.c.b16 %v3941, %v3937
    %4006 = vmatpush.bf16.msra.mxu0 %v3970
    %4007 = vmatpush.bf16.msra.mxu0 %v3966
    %4008 = vmatpush.bf16.msra.mxu0 %v3962
    %4009 = vmatpush.bf16.msra.mxu0 %v3958
    %4010 = vmatpush.bf16.msra.mxu0 %v3954
    %4011 = vmatpush.bf16.msra.mxu0 %v3950
    %4012 = vmatpush.bf16.msra.mxu0 %v3946
    %4013 = vmatpush.bf16.msra.mxu0 %v3942
    %4014 = vmatmul.bf16.gmra.mxu0 %v3247
    %v4015 = vpop.f32.mrf.mxu0
    %v4016 = vadd.f32 0.0, %v4015
    %v4017 = vpop.f32.mrf.mxu0
    %4018 = vdwg.mxu0
    %4019 = vmatpush.bf16.msra.mxu0 %v3971
    %4020 = vmatpush.bf16.msra.mxu0 %v3967
    %4021 = vmatpush.bf16.msra.mxu0 %v3963
    %4022 = vmatpush.bf16.msra.mxu0 %v3959
    %4023 = vmatpush.bf16.msra.mxu0 %v3955
    %4024 = vmatpush.bf16.msra.mxu0 %v3951
    %4025 = vmatpush.bf16.msra.mxu0 %v3947
    %4026 = vmatpush.bf16.msra.mxu0 %v3943
    %4027 = vmatmul.bf16.gmra.mxu0 %v3247
    %v4028 = vpop.f32.mrf.mxu0
    %v4029 = vadd.f32 0.0, %v4028
    %v4030 = vpop.f32.mrf.mxu0
    %4031 = vdwg.mxu0
    %4032 = vmatpush.bf16.msra.mxu0 %v3972
    %4033 = vmatpush.bf16.msra.mxu0 %v3968
    %4034 = vmatpush.bf16.msra.mxu0 %v3964
    %4035 = vmatpush.bf16.msra.mxu0 %v3960
    %4036 = vmatpush.bf16.msra.mxu0 %v3956
    %4037 = vmatpush.bf16.msra.mxu0 %v3952
    %4038 = vmatpush.bf16.msra.mxu0 %v3948
    %4039 = vmatpush.bf16.msra.mxu0 %v3944
    %4040 = vmatmul.bf16.gmra.mxu0 %v3247
    %v4041 = vpop.f32.mrf.mxu0
    %v4042 = vadd.f32 0.0, %v4041
    %v4043 = vpop.f32.mrf.mxu0
    %4044 = vdwg.mxu0
    %4045 = vmatpush.bf16.msra.mxu0 %v3973
    %4046 = vmatpush.bf16.msra.mxu0 %v3969
    %4047 = vmatpush.bf16.msra.mxu0 %v3965
    %4048 = vmatpush.bf16.msra.mxu0 %v3961
    %4049 = vmatpush.bf16.msra.mxu0 %v3957
    %4050 = vmatpush.bf16.msra.mxu0 %v3953
    %4051 = vmatpush.bf16.msra.mxu0 %v3949
    %4052 = vmatpush.bf16.msra.mxu0 %v3945
    %4053 = vmatmul.bf16.gmra.mxu0 %v3247
    %v4054 = vpop.f32.mrf.mxu0
    %v4055 = vadd.f32 0.0, %v4054
    %v4056 = vpop.f32.mrf.mxu0
    %4057 = vdwg.mxu0
    %v4058 = vadd.f32 %v3810, %v4016
    %v4059 = vadd.f32 %v3811, %v4029
    %v4060 = vadd.f32 %v3812, %v4042
    %v4061 = vadd.f32 %v3813, %v4055
    %v4062 = vxor.u32 %v4058, 2147483648
    %v4063 = vxor.u32 %v4059, 2147483648
    %v4064 = vmul.f32 %v4062, 1.442695
    %v4065 = vpow.pop %v4064
    %v4066 = vmul.f32 %v4063, 1.442695
    %v4067 = vpow.pop %v4066
    %v4068 = vadd.f32 %v4065, 1.0
    %v4069 = vadd.f32 %v4067, 1.0
    %v4070 = vrcp.pop %v4068
    %v4071 = vmul.f32 %v4068, %v4070
    %v4072 = vsub.f32 1.0, %v4071
    %v4073 = vmul.f32 %v4070, %v4072
    %v4074 = vadd.f32 %v4070, %v4073
    %vm4075 = vweird.f32 %v4068
    %vm4076 = vweird.f32 %v4070
    %vm4077 = vmor %vm4075, %vm4076
    %v4078 = vsel %vm4077, %v4070, %v4074
    %v4079 = vand.u32 2147483647, %v4068
    %vm4080 = vcmp.eq.f32.partialorder %v4079, 8.507059e+37
    %v4081 = vand.u32 %v4068, 2147483648
    %v4082 = vor.u32 1.1754944e-38, %v4081
    %v4083 = vsel %vm4080, %v4082, %v4078
    %v4084 = vmul.f32 1.0, %v4083
    %v4085 = vrcp.pop %v4069
    %v4086 = vmul.f32 %v4069, %v4085
    %v4087 = vsub.f32 1.0, %v4086
    %v4088 = vmul.f32 %v4085, %v4087
    %v4089 = vadd.f32 %v4085, %v4088
    %vm4090 = vweird.f32 %v4069
    %vm4091 = vweird.f32 %v4085
    %vm4092 = vmor %vm4090, %vm4091
    %v4093 = vsel %vm4092, %v4085, %v4089
    %v4094 = vand.u32 2147483647, %v4069
    %vm4095 = vcmp.eq.f32.partialorder %v4094, 8.507059e+37
    %v4096 = vand.u32 %v4069, 2147483648
    %v4097 = vor.u32 1.1754944e-38, %v4096
    %v4098 = vsel %vm4095, %v4097, %v4093
    %v4099 = vmul.f32 1.0, %v4098
    %v4100 = vtanh.pop %v4060
    %v4101 = vxor.u32 %v4061, 2147483648
    %v4102 = vmul.f32 %v4101, 1.442695
    %v4103 = vpow.pop %v4102
    %v4104 = vadd.f32 %v4103, 1.0
    %v4105 = vrcp.pop %v4104
    %v4106 = vmul.f32 %v4104, %v4105
    %v4107 = vsub.f32 1.0, %v4106
    %v4108 = vmul.f32 %v4105, %v4107
    %v4109 = vadd.f32 %v4105, %v4108
    %vm4110 = vweird.f32 %v4104
    %vm4111 = vweird.f32 %v4105
    %vm4112 = vmor %vm4110, %vm4111
    %v4113 = vsel %vm4112, %v4105, %v4109
    %v4114 = vand.u32 2147483647, %v4104
    %vm4115 = vcmp.eq.f32.partialorder %v4114, 8.507059e+37
    %v4116 = vand.u32 %v4104, 2147483648
    %v4117 = vor.u32 1.1754944e-38, %v4116
    %v4118 = vsel %vm4115, %v4117, %v4113
    %v4119 = vmul.f32 1.0, %v4118
    %v4120 = vmul.f32 %v4099, %v3244
    %v4121 = vmul.f32 %v4084, %v4100
    %v4122 = vadd.f32 %v4120, %v4121
    %v4123 = vtanh.pop %v4122
    %v4124 = vmul.f32 %v4119, %v4123
    %v4125 = vpack.c.bf16 %v4124, %v4124
    %4126 = vst [vmem:[#allocation3] sm:$0xf] %v4125
    %v4127 = vld [vmem:[#allocation3] sm:$0xff]
    %v4128 = vld [vmem:[#allocation7] sm:$0xff]
    %v4129 = vld [vmem:[#allocation7 + $0x8] sm:$0xff]
    %v4130 = vld [vmem:[#allocation7 + $0x10] sm:$0xff]
    %v4131 = vld [vmem:[#allocation7 + $0x18] sm:$0xff]
    %v4132 = vld [vmem:[#allocation7 + $0x20] sm:$0xff]
    %v4133 = vld [vmem:[#allocation7 + $0x28] sm:$0xff]
    %v4134 = vld [vmem:[#allocation7 + $0x30] sm:$0xff]
    %v4135 = vld [vmem:[#allocation7 + $0x38] sm:$0xff]
    %v4136 = vld [vmem:[#allocation7 + $0x40] sm:$0xff]
    %v4137 = vld [vmem:[#allocation7 + $0x48] sm:$0xff]
    %v4138 = vld [vmem:[#allocation7 + $0x50] sm:$0xff]
    %v4139 = vld [vmem:[#allocation7 + $0x58] sm:$0xff]
    %v4140 = vld [vmem:[#allocation7 + $0x60] sm:$0xff]
    %v4141 = vld [vmem:[#allocation7 + $0x68] sm:$0xff]
    %v4142 = vld [vmem:[#allocation7 + $0x70] sm:$0xff]
    %v4143 = vld [vmem:[#allocation7 + $0x78] sm:$0xff]
    %v4144 = vld [vmem:[#allocation7 + $0x80] sm:$0xff]
    %v4145 = vld [vmem:[#allocation7 + $0x88] sm:$0xff]
    %v4146 = vld [vmem:[#allocation7 + $0x90] sm:$0xff]
    %v4147 = vld [vmem:[#allocation7 + $0x98] sm:$0xff]
    %v4148 = vld [vmem:[#allocation7 + $0xa0] sm:$0xff]
    %v4149 = vld [vmem:[#allocation7 + $0xa8] sm:$0xff]
    %v4150 = vld [vmem:[#allocation7 + $0xb0] sm:$0xff]
    %v4151 = vld [vmem:[#allocation7 + $0xb8] sm:$0xff]
    %v4152 = vld [vmem:[#allocation7 + $0xc0] sm:$0xff]
    %v4153 = vld [vmem:[#allocation7 + $0xc8] sm:$0xff]
    %v4154 = vld [vmem:[#allocation7 + $0xd0] sm:$0xff]
    %v4155 = vld [vmem:[#allocation7 + $0xd8] sm:$0xff]
    %v4156 = vld [vmem:[#allocation7 + $0xe0] sm:$0xff]
    %v4157 = vld [vmem:[#allocation7 + $0xe8] sm:$0xff]
    %v4158 = vld [vmem:[#allocation7 + $0xf0] sm:$0xff]
    %v4159 = vld [vmem:[#allocation7 + $0xf8] sm:$0xff]
    %v4160 = vld [vmem:[#allocation7 + $0x100] sm:$0xff]
    %v4161 = vld [vmem:[#allocation7 + $0x108] sm:$0xff]
    %v4162 = vld [vmem:[#allocation7 + $0x110] sm:$0xff]
    %v4163 = vld [vmem:[#allocation7 + $0x118] sm:$0xff]
    %v4164 = vld [vmem:[#allocation7 + $0x120] sm:$0xff]
    %v4165 = vld [vmem:[#allocation7 + $0x128] sm:$0xff]
    %v4166 = vld [vmem:[#allocation7 + $0x130] sm:$0xff]
    %v4167 = vld [vmem:[#allocation7 + $0x138] sm:$0xff]
    %v4168 = vld [vmem:[#allocation7 + $0x140] sm:$0xff]
    %v4169 = vld [vmem:[#allocation7 + $0x148] sm:$0xff]
    %v4170 = vld [vmem:[#allocation7 + $0x150] sm:$0xff]
    %v4171 = vld [vmem:[#allocation7 + $0x158] sm:$0xff]
    %v4172 = vld [vmem:[#allocation7 + $0x160] sm:$0xff]
    %v4173 = vld [vmem:[#allocation7 + $0x168] sm:$0xff]
    %v4174 = vld [vmem:[#allocation7 + $0x170] sm:$0xff]
    %v4175 = vld [vmem:[#allocation7 + $0x178] sm:$0xff]
    %v4176 = vld [vmem:[#allocation7 + $0x180] sm:$0xff]
    %v4177 = vld [vmem:[#allocation7 + $0x188] sm:$0xff]
    %v4178 = vld [vmem:[#allocation7 + $0x190] sm:$0xff]
    %v4179 = vld [vmem:[#allocation7 + $0x198] sm:$0xff]
    %v4180 = vld [vmem:[#allocation7 + $0x1a0] sm:$0xff]
    %v4181 = vld [vmem:[#allocation7 + $0x1a8] sm:$0xff]
    %v4182 = vld [vmem:[#allocation7 + $0x1b0] sm:$0xff]
    %v4183 = vld [vmem:[#allocation7 + $0x1b8] sm:$0xff]
    %v4184 = vld [vmem:[#allocation7 + $0x1c0] sm:$0xff]
    %v4185 = vld [vmem:[#allocation7 + $0x1c8] sm:$0xff]
    %v4186 = vld [vmem:[#allocation7 + $0x1d0] sm:$0xff]
    %v4187 = vld [vmem:[#allocation7 + $0x1d8] sm:$0xff]
    %v4188 = vld [vmem:[#allocation7 + $0x1e0] sm:$0xff]
    %v4189 = vld [vmem:[#allocation7 + $0x1e8] sm:$0xff]
    %v4190 = vld [vmem:[#allocation7 + $0x1f0] sm:$0xff]
    %v4191 = vld [vmem:[#allocation7 + $0x1f8] sm:$0xff]
    %v4193 = vunpack.c.l.b16 %v4127
    %v4194 = vunpack.c.h.b16 %v4127
    %v4195 = vpack.c.b16 %v4193, %v4193
    %v4196 = vpack.c.b16 %v4194, %v4194
    %v4263 = vunpack.c.l.b16 %v4128
    %v4264 = vunpack.c.h.b16 %v4128
    %v4265 = vunpack.c.l.b16 %v4129
    %v4266 = vunpack.c.h.b16 %v4129
    %v4267 = vunpack.c.l.b16 %v4130
    %v4268 = vunpack.c.h.b16 %v4130
    %v4269 = vunpack.c.l.b16 %v4131
    %v4270 = vunpack.c.h.b16 %v4131
    %v4271 = vunpack.c.l.b16 %v4132
    %v4272 = vunpack.c.h.b16 %v4132
    %v4273 = vunpack.c.l.b16 %v4133
    %v4274 = vunpack.c.h.b16 %v4133
    %v4275 = vunpack.c.l.b16 %v4134
    %v4276 = vunpack.c.h.b16 %v4134
    %v4277 = vunpack.c.l.b16 %v4135
    %v4278 = vunpack.c.h.b16 %v4135
    %v4279 = vunpack.c.l.b16 %v4136
    %v4280 = vunpack.c.h.b16 %v4136
    %v4281 = vunpack.c.l.b16 %v4137
    %v4282 = vunpack.c.h.b16 %v4137
    %v4283 = vunpack.c.l.b16 %v4138
    %v4284 = vunpack.c.h.b16 %v4138
    %v4285 = vunpack.c.l.b16 %v4139
    %v4286 = vunpack.c.h.b16 %v4139
    %v4287 = vunpack.c.l.b16 %v4140
    %v4288 = vunpack.c.h.b16 %v4140
    %v4289 = vunpack.c.l.b16 %v4141
    %v4290 = vunpack.c.h.b16 %v4141
    %v4291 = vunpack.c.l.b16 %v4142
    %v4292 = vunpack.c.h.b16 %v4142
    %v4293 = vunpack.c.l.b16 %v4143
    %v4294 = vunpack.c.h.b16 %v4143
    %v4295 = vunpack.c.l.b16 %v4144
    %v4296 = vunpack.c.h.b16 %v4144
    %v4297 = vunpack.c.l.b16 %v4145
    %v4298 = vunpack.c.h.b16 %v4145
    %v4299 = vunpack.c.l.b16 %v4146
    %v4300 = vunpack.c.h.b16 %v4146
    %v4301 = vunpack.c.l.b16 %v4147
    %v4302 = vunpack.c.h.b16 %v4147
    %v4303 = vunpack.c.l.b16 %v4148
    %v4304 = vunpack.c.h.b16 %v4148
    %v4305 = vunpack.c.l.b16 %v4149
    %v4306 = vunpack.c.h.b16 %v4149
    %v4307 = vunpack.c.l.b16 %v4150
    %v4308 = vunpack.c.h.b16 %v4150
    %v4309 = vunpack.c.l.b16 %v4151
    %v4310 = vunpack.c.h.b16 %v4151
    %v4311 = vunpack.c.l.b16 %v4152
    %v4312 = vunpack.c.h.b16 %v4152
    %v4313 = vunpack.c.l.b16 %v4153
    %v4314 = vunpack.c.h.b16 %v4153
    %v4315 = vunpack.c.l.b16 %v4154
    %v4316 = vunpack.c.h.b16 %v4154
    %v4317 = vunpack.c.l.b16 %v4155
    %v4318 = vunpack.c.h.b16 %v4155
    %v4319 = vunpack.c.l.b16 %v4156
    %v4320 = vunpack.c.h.b16 %v4156
    %v4321 = vunpack.c.l.b16 %v4157
    %v4322 = vunpack.c.h.b16 %v4157
    %v4323 = vunpack.c.l.b16 %v4158
    %v4324 = vunpack.c.h.b16 %v4158
    %v4325 = vunpack.c.l.b16 %v4159
    %v4326 = vunpack.c.h.b16 %v4159
    %v4327 = vunpack.c.l.b16 %v4160
    %v4328 = vunpack.c.h.b16 %v4160
    %v4329 = vunpack.c.l.b16 %v4161
    %v4330 = vunpack.c.h.b16 %v4161
    %v4331 = vunpack.c.l.b16 %v4162
    %v4332 = vunpack.c.h.b16 %v4162
    %v4333 = vunpack.c.l.b16 %v4163
    %v4334 = vunpack.c.h.b16 %v4163
    %v4335 = vunpack.c.l.b16 %v4164
    %v4336 = vunpack.c.h.b16 %v4164
    %v4337 = vunpack.c.l.b16 %v4165
    %v4338 = vunpack.c.h.b16 %v4165
    %v4339 = vunpack.c.l.b16 %v4166
    %v4340 = vunpack.c.h.b16 %v4166
    %v4341 = vunpack.c.l.b16 %v4167
    %v4342 = vunpack.c.h.b16 %v4167
    %v4343 = vunpack.c.l.b16 %v4168
    %v4344 = vunpack.c.h.b16 %v4168
    %v4345 = vunpack.c.l.b16 %v4169
    %v4346 = vunpack.c.h.b16 %v4169
    %v4347 = vunpack.c.l.b16 %v4170
    %v4348 = vunpack.c.h.b16 %v4170
    %v4349 = vunpack.c.l.b16 %v4171
    %v4350 = vunpack.c.h.b16 %v4171
    %v4351 = vunpack.c.l.b16 %v4172
    %v4352 = vunpack.c.h.b16 %v4172
    %v4353 = vunpack.c.l.b16 %v4173
    %v4354 = vunpack.c.h.b16 %v4173
    %v4355 = vunpack.c.l.b16 %v4174
    %v4356 = vunpack.c.h.b16 %v4174
    %v4357 = vunpack.c.l.b16 %v4175
    %v4358 = vunpack.c.h.b16 %v4175
    %v4359 = vunpack.c.l.b16 %v4176
    %v4360 = vunpack.c.h.b16 %v4176
    %v4361 = vunpack.c.l.b16 %v4177
    %v4362 = vunpack.c.h.b16 %v4177
    %v4363 = vunpack.c.l.b16 %v4178
    %v4364 = vunpack.c.h.b16 %v4178
    %v4365 = vunpack.c.l.b16 %v4179
    %v4366 = vunpack.c.h.b16 %v4179
    %v4367 = vunpack.c.l.b16 %v4180
    %v4368 = vunpack.c.h.b16 %v4180
    %v4369 = vunpack.c.l.b16 %v4181
    %v4370 = vunpack.c.h.b16 %v4181
    %v4371 = vunpack.c.l.b16 %v4182
    %v4372 = vunpack.c.h.b16 %v4182
    %v4373 = vunpack.c.l.b16 %v4183
    %v4374 = vunpack.c.h.b16 %v4183
    %v4375 = vunpack.c.l.b16 %v4184
    %v4376 = vunpack.c.h.b16 %v4184
    %v4377 = vunpack.c.l.b16 %v4185
    %v4378 = vunpack.c.h.b16 %v4185
    %v4379 = vunpack.c.l.b16 %v4186
    %v4380 = vunpack.c.h.b16 %v4186
    %v4381 = vunpack.c.l.b16 %v4187
    %v4382 = vunpack.c.h.b16 %v4187
    %v4383 = vunpack.c.l.b16 %v4188
    %v4384 = vunpack.c.h.b16 %v4188
    %v4385 = vunpack.c.l.b16 %v4189
    %v4386 = vunpack.c.h.b16 %v4189
    %v4387 = vunpack.c.l.b16 %v4190
    %v4388 = vunpack.c.h.b16 %v4190
    %v4389 = vunpack.c.l.b16 %v4191
    %v4390 = vunpack.c.h.b16 %v4191
    %v4391 = vpack.c.b16 %v4267, %v4263
    %v4392 = vpack.c.b16 %v4268, %v4264
    %v4393 = vpack.c.b16 %v4269, %v4265
    %v4394 = vpack.c.b16 %v4270, %v4266
    %v4395 = vpack.c.b16 %v4275, %v4271
    %v4396 = vpack.c.b16 %v4276, %v4272
    %v4397 = vpack.c.b16 %v4277, %v4273
    %v4398 = vpack.c.b16 %v4278, %v4274
    %v4399 = vpack.c.b16 %v4283, %v4279
    %v4400 = vpack.c.b16 %v4284, %v4280
    %v4401 = vpack.c.b16 %v4285, %v4281
    %v4402 = vpack.c.b16 %v4286, %v4282
    %v4403 = vpack.c.b16 %v4291, %v4287
    %v4404 = vpack.c.b16 %v4292, %v4288
    %v4405 = vpack.c.b16 %v4293, %v4289
    %v4406 = vpack.c.b16 %v4294, %v4290
    %v4407 = vpack.c.b16 %v4299, %v4295
    %v4408 = vpack.c.b16 %v4300, %v4296
    %v4409 = vpack.c.b16 %v4301, %v4297
    %v4410 = vpack.c.b16 %v4302, %v4298
    %v4411 = vpack.c.b16 %v4307, %v4303
    %v4412 = vpack.c.b16 %v4308, %v4304
    %v4413 = vpack.c.b16 %v4309, %v4305
    %v4414 = vpack.c.b16 %v4310, %v4306
    %v4415 = vpack.c.b16 %v4315, %v4311
    %v4416 = vpack.c.b16 %v4316, %v4312
    %v4417 = vpack.c.b16 %v4317, %v4313
    %v4418 = vpack.c.b16 %v4318, %v4314
    %v4419 = vpack.c.b16 %v4323, %v4319
    %v4420 = vpack.c.b16 %v4324, %v4320
    %v4421 = vpack.c.b16 %v4325, %v4321
    %v4422 = vpack.c.b16 %v4326, %v4322
    %v4423 = vpack.c.b16 %v4331, %v4327
    %v4424 = vpack.c.b16 %v4332, %v4328
    %v4425 = vpack.c.b16 %v4333, %v4329
    %v4426 = vpack.c.b16 %v4334, %v4330
    %v4427 = vpack.c.b16 %v4339, %v4335
    %v4428 = vpack.c.b16 %v4340, %v4336
    %v4429 = vpack.c.b16 %v4341, %v4337
    %v4430 = vpack.c.b16 %v4342, %v4338
    %v4431 = vpack.c.b16 %v4347, %v4343
    %v4432 = vpack.c.b16 %v4348, %v4344
    %v4433 = vpack.c.b16 %v4349, %v4345
    %v4434 = vpack.c.b16 %v4350, %v4346
    %v4435 = vpack.c.b16 %v4355, %v4351
    %v4436 = vpack.c.b16 %v4356, %v4352
    %v4437 = vpack.c.b16 %v4357, %v4353
    %v4438 = vpack.c.b16 %v4358, %v4354
    %v4439 = vpack.c.b16 %v4363, %v4359
    %v4440 = vpack.c.b16 %v4364, %v4360
    %v4441 = vpack.c.b16 %v4365, %v4361
    %v4442 = vpack.c.b16 %v4366, %v4362
    %v4443 = vpack.c.b16 %v4371, %v4367
    %v4444 = vpack.c.b16 %v4372, %v4368
    %v4445 = vpack.c.b16 %v4373, %v4369
    %v4446 = vpack.c.b16 %v4374, %v4370
    %v4447 = vpack.c.b16 %v4379, %v4375
    %v4448 = vpack.c.b16 %v4380, %v4376
    %v4449 = vpack.c.b16 %v4381, %v4377
    %v4450 = vpack.c.b16 %v4382, %v4378
    %v4451 = vpack.c.b16 %v4387, %v4383
    %v4452 = vpack.c.b16 %v4388, %v4384
    %v4453 = vpack.c.b16 %v4389, %v4385
    %v4454 = vpack.c.b16 %v4390, %v4386
    %4519 = vmatpush.bf16.msra.mxu0 %v4419
    %4520 = vmatpush.bf16.msra.mxu0 %v4415
    %4521 = vmatpush.bf16.msra.mxu0 %v4411
    %4522 = vmatpush.bf16.msra.mxu0 %v4407
    %4523 = vmatpush.bf16.msra.mxu0 %v4403
    %4524 = vmatpush.bf16.msra.mxu0 %v4399
    %4525 = vmatpush.bf16.msra.mxu0 %v4395
    %4526 = vmatpush.bf16.msra.mxu0 %v4391
    %4527 = vmatmul.bf16.gmra.mxu0 %v4195
    %v4528 = vpop.f32.mrf.mxu0
    %v4529 = vadd.f32 %v290, %v4528
    %v4530 = vpop.f32.mrf.mxu0
    %4531 = vdwg.mxu0
    %4532 = vmatpush.bf16.msra.mxu0 %v4451
    %4533 = vmatpush.bf16.msra.mxu0 %v4447
    %4534 = vmatpush.bf16.msra.mxu0 %v4443
    %4535 = vmatpush.bf16.msra.mxu0 %v4439
    %4536 = vmatpush.bf16.msra.mxu0 %v4435
    %4537 = vmatpush.bf16.msra.mxu0 %v4431
    %4538 = vmatpush.bf16.msra.mxu0 %v4427
    %4539 = vmatpush.bf16.msra.mxu0 %v4423
    %4540 = vmatmul.bf16.gmra.mxu0 %v4196
    %v4541 = vpop.f32.mrf.mxu0
    %v4542 = vadd.f32 %v4529, %v4541
    %v4543 = vpop.f32.mrf.mxu0
    %4544 = vdwg.mxu0
    %4545 = vmatpush.bf16.msra.mxu0 %v4420
    %4546 = vmatpush.bf16.msra.mxu0 %v4416
    %4547 = vmatpush.bf16.msra.mxu0 %v4412
    %4548 = vmatpush.bf16.msra.mxu0 %v4408
    %4549 = vmatpush.bf16.msra.mxu0 %v4404
    %4550 = vmatpush.bf16.msra.mxu0 %v4400
    %4551 = vmatpush.bf16.msra.mxu0 %v4396
    %4552 = vmatpush.bf16.msra.mxu0 %v4392
    %4553 = vmatmul.bf16.gmra.mxu0 %v4195
    %v4554 = vpop.f32.mrf.mxu0
    %v4555 = vadd.f32 %v291, %v4554
    %v4556 = vpop.f32.mrf.mxu0
    %4557 = vdwg.mxu0
    %4558 = vmatpush.bf16.msra.mxu0 %v4452
    %4559 = vmatpush.bf16.msra.mxu0 %v4448
    %4560 = vmatpush.bf16.msra.mxu0 %v4444
    %4561 = vmatpush.bf16.msra.mxu0 %v4440
    %4562 = vmatpush.bf16.msra.mxu0 %v4436
    %4563 = vmatpush.bf16.msra.mxu0 %v4432
    %4564 = vmatpush.bf16.msra.mxu0 %v4428
    %4565 = vmatpush.bf16.msra.mxu0 %v4424
    %4566 = vmatmul.bf16.gmra.mxu0 %v4196
    %v4567 = vpop.f32.mrf.mxu0
    %v4568 = vadd.f32 %v4555, %v4567
    %v4569 = vpop.f32.mrf.mxu0
    %4570 = vdwg.mxu0
    %4571 = vmatpush.bf16.msra.mxu0 %v4421
    %4572 = vmatpush.bf16.msra.mxu0 %v4417
    %4573 = vmatpush.bf16.msra.mxu0 %v4413
    %4574 = vmatpush.bf16.msra.mxu0 %v4409
    %4575 = vmatpush.bf16.msra.mxu0 %v4405
    %4576 = vmatpush.bf16.msra.mxu0 %v4401
    %4577 = vmatpush.bf16.msra.mxu0 %v4397
    %4578 = vmatpush.bf16.msra.mxu0 %v4393
    %4579 = vmatmul.bf16.gmra.mxu0 %v4195
    %v4580 = vpop.f32.mrf.mxu0
    %v4581 = vadd.f32 %v292, %v4580
    %v4582 = vpop.f32.mrf.mxu0
    %4583 = vdwg.mxu0
    %4584 = vmatpush.bf16.msra.mxu0 %v4453
    %4585 = vmatpush.bf16.msra.mxu0 %v4449
    %4586 = vmatpush.bf16.msra.mxu0 %v4445
    %4587 = vmatpush.bf16.msra.mxu0 %v4441
    %4588 = vmatpush.bf16.msra.mxu0 %v4437
    %4589 = vmatpush.bf16.msra.mxu0 %v4433
    %4590 = vmatpush.bf16.msra.mxu0 %v4429
    %4591 = vmatpush.bf16.msra.mxu0 %v4425
    %4592 = vmatmul.bf16.gmra.mxu0 %v4196
    %v4593 = vpop.f32.mrf.mxu0
    %v4594 = vadd.f32 %v4581, %v4593
    %v4595 = vpop.f32.mrf.mxu0
    %4596 = vdwg.mxu0
    %4597 = vmatpush.bf16.msra.mxu0 %v4422
    %4598 = vmatpush.bf16.msra.mxu0 %v4418
    %4599 = vmatpush.bf16.msra.mxu0 %v4414
    %4600 = vmatpush.bf16.msra.mxu0 %v4410
    %4601 = vmatpush.bf16.msra.mxu0 %v4406
    %4602 = vmatpush.bf16.msra.mxu0 %v4402
    %4603 = vmatpush.bf16.msra.mxu0 %v4398
    %4604 = vmatpush.bf16.msra.mxu0 %v4394
    %4605 = vmatmul.bf16.gmra.mxu0 %v4195
    %v4606 = vpop.f32.mrf.mxu0
    %v4607 = vadd.f32 %v293, %v4606
    %v4608 = vpop.f32.mrf.mxu0
    %4609 = vdwg.mxu0
    %4610 = vmatpush.bf16.msra.mxu0 %v4454
    %4611 = vmatpush.bf16.msra.mxu0 %v4450
    %4612 = vmatpush.bf16.msra.mxu0 %v4446
    %4613 = vmatpush.bf16.msra.mxu0 %v4442
    %4614 = vmatpush.bf16.msra.mxu0 %v4438
    %4615 = vmatpush.bf16.msra.mxu0 %v4434
    %4616 = vmatpush.bf16.msra.mxu0 %v4430
    %4617 = vmatpush.bf16.msra.mxu0 %v4426
    %4618 = vmatmul.bf16.gmra.mxu0 %v4196
    %v4619 = vpop.f32.mrf.mxu0
    %v4620 = vadd.f32 %v4607, %v4619
    %v4621 = vpop.f32.mrf.mxu0
    %4622 = vdwg.mxu0
    %v4623 = vxor.u32 %v4542, 2147483648
    %v4624 = vxor.u32 %v4568, 2147483648
    %v4625 = vmul.f32 %v4623, 1.442695
    %v4626 = vpow.pop %v4625
    %v4627 = vmul.f32 %v4624, 1.442695
    %v4628 = vpow.pop %v4627
    %v4629 = vadd.f32 %v4626, 1.0
    %v4630 = vadd.f32 %v4628, 1.0
    %v4631 = vrcp.pop %v4629
    %v4632 = vmul.f32 %v4629, %v4631
    %v4633 = vsub.f32 1.0, %v4632
    %v4634 = vmul.f32 %v4631, %v4633
    %v4635 = vadd.f32 %v4631, %v4634
    %vm4636 = vweird.f32 %v4629
    %vm4637 = vweird.f32 %v4631
    %vm4638 = vmor %vm4636, %vm4637
    %v4639 = vsel %vm4638, %v4631, %v4635
    %v4640 = vand.u32 2147483647, %v4629
    %vm4641 = vcmp.eq.f32.partialorder %v4640, 8.507059e+37
    %v4642 = vand.u32 %v4629, 2147483648
    %v4643 = vor.u32 1.1754944e-38, %v4642
    %v4644 = vsel %vm4641, %v4643, %v4639
    %v4645 = vmul.f32 1.0, %v4644
    %v4646 = vrcp.pop %v4630
    %v4647 = vmul.f32 %v4630, %v4646
    %v4648 = vsub.f32 1.0, %v4647
    %v4649 = vmul.f32 %v4646, %v4648
    %v4650 = vadd.f32 %v4646, %v4649
    %vm4651 = vweird.f32 %v4630
    %vm4652 = vweird.f32 %v4646
    %vm4653 = vmor %vm4651, %vm4652
    %v4654 = vsel %vm4653, %v4646, %v4650
    %v4655 = vand.u32 2147483647, %v4630
    %vm4656 = vcmp.eq.f32.partialorder %v4655, 8.507059e+37
    %v4657 = vand.u32 %v4630, 2147483648
    %v4658 = vor.u32 1.1754944e-38, %v4657
    %v4659 = vsel %vm4656, %v4658, %v4654
    %v4660 = vmul.f32 1.0, %v4659
    %v4661 = vtanh.pop %v4594
    %v4662 = vxor.u32 %v4620, 2147483648
    %v4663 = vmul.f32 %v4662, 1.442695
    %v4664 = vpow.pop %v4663
    %v4665 = vadd.f32 %v4664, 1.0
    %v4666 = vrcp.pop %v4665
    %v4667 = vmul.f32 %v4665, %v4666
    %v4668 = vsub.f32 1.0, %v4667
    %v4669 = vmul.f32 %v4666, %v4668
    %v4670 = vadd.f32 %v4666, %v4669
    %vm4671 = vweird.f32 %v4665
    %vm4672 = vweird.f32 %v4666
    %vm4673 = vmor %vm4671, %vm4672
    %v4674 = vsel %vm4673, %v4666, %v4670
    %v4675 = vand.u32 2147483647, %v4665
    %vm4676 = vcmp.eq.f32.partialorder %v4675, 8.507059e+37
    %v4677 = vand.u32 %v4665, 2147483648
    %v4678 = vor.u32 1.1754944e-38, %v4677
    %v4679 = vsel %vm4676, %v4678, %v4674
    %v4680 = vmul.f32 1.0, %v4679
    %v4681 = vmul.f32 %v4660, %v3805
    %v4682 = vmul.f32 %v4645, %v4661
    %v4683 = vadd.f32 %v4681, %v4682
    %v4684 = vtanh.pop %v4683
    %v4685 = vmul.f32 %v4680, %v4684
    %v4686 = vpack.c.bf16 %v4685, %v4685
    %4687 = vst [vmem:[#allocation3 + $0x4] sm:$0xf] %v4686
    %v4688 = vld [vmem:[#allocation2 + $0xa0] sm:$0xff]
    %v4689 = vld [vmem:[#allocation2 + $0xa8] sm:$0xff]
    %v4690 = vld [vmem:[#allocation2 + $0xb0] sm:$0xff]
    %v4691 = vld [vmem:[#allocation2 + $0xb8] sm:$0xff]
    %v4692 = vld [vmem:[#allocation5] sm:$0xff]
    %v4693 = vld [vmem:[#allocation5 + $0x8] sm:$0xff]
    %v4694 = vld [vmem:[#allocation5 + $0x10] sm:$0xff]
    %v4695 = vld [vmem:[#allocation5 + $0x18] sm:$0xff]
    %v4696 = vld [vmem:[#allocation5 + $0x20] sm:$0xff]
    %v4697 = vld [vmem:[#allocation5 + $0x28] sm:$0xff]
    %v4698 = vld [vmem:[#allocation5 + $0x30] sm:$0xff]
    %v4699 = vld [vmem:[#allocation5 + $0x38] sm:$0xff]
    %v4700 = vld [vmem:[#allocation5 + $0x40] sm:$0xff]
    %v4701 = vld [vmem:[#allocation5 + $0x48] sm:$0xff]
    %v4702 = vld [vmem:[#allocation5 + $0x50] sm:$0xff]
    %v4703 = vld [vmem:[#allocation5 + $0x58] sm:$0xff]
    %v4704 = vld [vmem:[#allocation5 + $0x60] sm:$0xff]
    %v4705 = vld [vmem:[#allocation5 + $0x68] sm:$0xff]
    %v4706 = vld [vmem:[#allocation5 + $0x70] sm:$0xff]
    %v4707 = vld [vmem:[#allocation5 + $0x78] sm:$0xff]
    %v4708 = vld [vmem:[#allocation5 + $0x80] sm:$0xff]
    %v4709 = vld [vmem:[#allocation5 + $0x88] sm:$0xff]
    %v4710 = vld [vmem:[#allocation5 + $0x90] sm:$0xff]
    %v4711 = vld [vmem:[#allocation5 + $0x98] sm:$0xff]
    %v4712 = vld [vmem:[#allocation5 + $0xa0] sm:$0xff]
    %v4713 = vld [vmem:[#allocation5 + $0xa8] sm:$0xff]
    %v4714 = vld [vmem:[#allocation5 + $0xb0] sm:$0xff]
    %v4715 = vld [vmem:[#allocation5 + $0xb8] sm:$0xff]
    %v4716 = vld [vmem:[#allocation5 + $0xc0] sm:$0xff]
    %v4717 = vld [vmem:[#allocation5 + $0xc8] sm:$0xff]
    %v4718 = vld [vmem:[#allocation5 + $0xd0] sm:$0xff]
    %v4719 = vld [vmem:[#allocation5 + $0xd8] sm:$0xff]
    %v4720 = vld [vmem:[#allocation5 + $0xe0] sm:$0xff]
    %v4721 = vld [vmem:[#allocation5 + $0xe8] sm:$0xff]
    %v4722 = vld [vmem:[#allocation5 + $0xf0] sm:$0xff]
    %v4723 = vld [vmem:[#allocation5 + $0xf8] sm:$0xff]
    %v4756 = vunpack.c.l.b16 %v4692
    %v4757 = vunpack.c.h.b16 %v4692
    %v4758 = vunpack.c.l.b16 %v4693
    %v4759 = vunpack.c.h.b16 %v4693
    %v4760 = vunpack.c.l.b16 %v4694
    %v4761 = vunpack.c.h.b16 %v4694
    %v4762 = vunpack.c.l.b16 %v4695
    %v4763 = vunpack.c.h.b16 %v4695
    %v4764 = vunpack.c.l.b16 %v4696
    %v4765 = vunpack.c.h.b16 %v4696
    %v4766 = vunpack.c.l.b16 %v4697
    %v4767 = vunpack.c.h.b16 %v4697
    %v4768 = vunpack.c.l.b16 %v4698
    %v4769 = vunpack.c.h.b16 %v4698
    %v4770 = vunpack.c.l.b16 %v4699
    %v4771 = vunpack.c.h.b16 %v4699
    %v4772 = vunpack.c.l.b16 %v4700
    %v4773 = vunpack.c.h.b16 %v4700
    %v4774 = vunpack.c.l.b16 %v4701
    %v4775 = vunpack.c.h.b16 %v4701
    %v4776 = vunpack.c.l.b16 %v4702
    %v4777 = vunpack.c.h.b16 %v4702
    %v4778 = vunpack.c.l.b16 %v4703
    %v4779 = vunpack.c.h.b16 %v4703
    %v4780 = vunpack.c.l.b16 %v4704
    %v4781 = vunpack.c.h.b16 %v4704
    %v4782 = vunpack.c.l.b16 %v4705
    %v4783 = vunpack.c.h.b16 %v4705
    %v4784 = vunpack.c.l.b16 %v4706
    %v4785 = vunpack.c.h.b16 %v4706
    %v4786 = vunpack.c.l.b16 %v4707
    %v4787 = vunpack.c.h.b16 %v4707
    %v4788 = vunpack.c.l.b16 %v4708
    %v4789 = vunpack.c.h.b16 %v4708
    %v4790 = vunpack.c.l.b16 %v4709
    %v4791 = vunpack.c.h.b16 %v4709
    %v4792 = vunpack.c.l.b16 %v4710
    %v4793 = vunpack.c.h.b16 %v4710
    %v4794 = vunpack.c.l.b16 %v4711
    %v4795 = vunpack.c.h.b16 %v4711
    %v4796 = vunpack.c.l.b16 %v4712
    %v4797 = vunpack.c.h.b16 %v4712
    %v4798 = vunpack.c.l.b16 %v4713
    %v4799 = vunpack.c.h.b16 %v4713
    %v4800 = vunpack.c.l.b16 %v4714
    %v4801 = vunpack.c.h.b16 %v4714
    %v4802 = vunpack.c.l.b16 %v4715
    %v4803 = vunpack.c.h.b16 %v4715
    %v4804 = vunpack.c.l.b16 %v4716
    %v4805 = vunpack.c.h.b16 %v4716
    %v4806 = vunpack.c.l.b16 %v4717
    %v4807 = vunpack.c.h.b16 %v4717
    %v4808 = vunpack.c.l.b16 %v4718
    %v4809 = vunpack.c.h.b16 %v4718
    %v4810 = vunpack.c.l.b16 %v4719
    %v4811 = vunpack.c.h.b16 %v4719
    %v4812 = vunpack.c.l.b16 %v4720
    %v4813 = vunpack.c.h.b16 %v4720
    %v4814 = vunpack.c.l.b16 %v4721
    %v4815 = vunpack.c.h.b16 %v4721
    %v4816 = vunpack.c.l.b16 %v4722
    %v4817 = vunpack.c.h.b16 %v4722
    %v4818 = vunpack.c.l.b16 %v4723
    %v4819 = vunpack.c.h.b16 %v4723
    %v4820 = vpack.c.b16 %v4760, %v4756
    %v4821 = vpack.c.b16 %v4761, %v4757
    %v4822 = vpack.c.b16 %v4762, %v4758
    %v4823 = vpack.c.b16 %v4763, %v4759
    %v4824 = vpack.c.b16 %v4768, %v4764
    %v4825 = vpack.c.b16 %v4769, %v4765
    %v4826 = vpack.c.b16 %v4770, %v4766
    %v4827 = vpack.c.b16 %v4771, %v4767
    %v4828 = vpack.c.b16 %v4776, %v4772
    %v4829 = vpack.c.b16 %v4777, %v4773
    %v4830 = vpack.c.b16 %v4778, %v4774
    %v4831 = vpack.c.b16 %v4779, %v4775
    %v4832 = vpack.c.b16 %v4784, %v4780
    %v4833 = vpack.c.b16 %v4785, %v4781
    %v4834 = vpack.c.b16 %v4786, %v4782
    %v4835 = vpack.c.b16 %v4787, %v4783
    %v4836 = vpack.c.b16 %v4792, %v4788
    %v4837 = vpack.c.b16 %v4793, %v4789
    %v4838 = vpack.c.b16 %v4794, %v4790
    %v4839 = vpack.c.b16 %v4795, %v4791
    %v4840 = vpack.c.b16 %v4800, %v4796
    %v4841 = vpack.c.b16 %v4801, %v4797
    %v4842 = vpack.c.b16 %v4802, %v4798
    %v4843 = vpack.c.b16 %v4803, %v4799
    %v4844 = vpack.c.b16 %v4808, %v4804
    %v4845 = vpack.c.b16 %v4809, %v4805
    %v4846 = vpack.c.b16 %v4810, %v4806
    %v4847 = vpack.c.b16 %v4811, %v4807
    %v4848 = vpack.c.b16 %v4816, %v4812
    %v4849 = vpack.c.b16 %v4817, %v4813
    %v4850 = vpack.c.b16 %v4818, %v4814
    %v4851 = vpack.c.b16 %v4819, %v4815
    %4884 = vmatpush.bf16.msra.mxu0 %v4848
    %4885 = vmatpush.bf16.msra.mxu0 %v4844
    %4886 = vmatpush.bf16.msra.mxu0 %v4840
    %4887 = vmatpush.bf16.msra.mxu0 %v4836
    %4888 = vmatpush.bf16.msra.mxu0 %v4832
    %4889 = vmatpush.bf16.msra.mxu0 %v4828
    %4890 = vmatpush.bf16.msra.mxu0 %v4824
    %4891 = vmatpush.bf16.msra.mxu0 %v4820
    %4892 = vmatmul.bf16.gmra.mxu0 %v4125
    %v4893 = vpop.f32.mrf.mxu0
    %v4894 = vadd.f32 0.0, %v4893
    %v4895 = vpop.f32.mrf.mxu0
    %4896 = vdwg.mxu0
    %4897 = vmatpush.bf16.msra.mxu0 %v4849
    %4898 = vmatpush.bf16.msra.mxu0 %v4845
    %4899 = vmatpush.bf16.msra.mxu0 %v4841
    %4900 = vmatpush.bf16.msra.mxu0 %v4837
    %4901 = vmatpush.bf16.msra.mxu0 %v4833
    %4902 = vmatpush.bf16.msra.mxu0 %v4829
    %4903 = vmatpush.bf16.msra.mxu0 %v4825
    %4904 = vmatpush.bf16.msra.mxu0 %v4821
    %4905 = vmatmul.bf16.gmra.mxu0 %v4125
    %v4906 = vpop.f32.mrf.mxu0
    %v4907 = vadd.f32 0.0, %v4906
    %v4908 = vpop.f32.mrf.mxu0
    %4909 = vdwg.mxu0
    %4910 = vmatpush.bf16.msra.mxu0 %v4850
    %4911 = vmatpush.bf16.msra.mxu0 %v4846
    %4912 = vmatpush.bf16.msra.mxu0 %v4842
    %4913 = vmatpush.bf16.msra.mxu0 %v4838
    %4914 = vmatpush.bf16.msra.mxu0 %v4834
    %4915 = vmatpush.bf16.msra.mxu0 %v4830
    %4916 = vmatpush.bf16.msra.mxu0 %v4826
    %4917 = vmatpush.bf16.msra.mxu0 %v4822
    %4918 = vmatmul.bf16.gmra.mxu0 %v4125
    %v4919 = vpop.f32.mrf.mxu0
    %v4920 = vadd.f32 0.0, %v4919
    %v4921 = vpop.f32.mrf.mxu0
    %4922 = vdwg.mxu0
    %4923 = vmatpush.bf16.msra.mxu0 %v4851
    %4924 = vmatpush.bf16.msra.mxu0 %v4847
    %4925 = vmatpush.bf16.msra.mxu0 %v4843
    %4926 = vmatpush.bf16.msra.mxu0 %v4839
    %4927 = vmatpush.bf16.msra.mxu0 %v4835
    %4928 = vmatpush.bf16.msra.mxu0 %v4831
    %4929 = vmatpush.bf16.msra.mxu0 %v4827
    %4930 = vmatpush.bf16.msra.mxu0 %v4823
    %4931 = vmatmul.bf16.gmra.mxu0 %v4125
    %v4932 = vpop.f32.mrf.mxu0
    %v4933 = vadd.f32 0.0, %v4932
    %v4934 = vpop.f32.mrf.mxu0
    %4935 = vdwg.mxu0
    %v4936 = vadd.f32 %v4688, %v4894
    %v4937 = vadd.f32 %v4689, %v4907
    %v4938 = vadd.f32 %v4690, %v4920
    %v4939 = vadd.f32 %v4691, %v4933
    %v4940 = vxor.u32 %v4936, 2147483648
    %v4941 = vxor.u32 %v4937, 2147483648
    %v4942 = vmul.f32 %v4940, 1.442695
    %v4943 = vpow.pop %v4942
    %v4944 = vmul.f32 %v4941, 1.442695
    %v4945 = vpow.pop %v4944
    %v4946 = vadd.f32 %v4943, 1.0
    %v4947 = vadd.f32 %v4945, 1.0
    %v4948 = vrcp.pop %v4946
    %v4949 = vmul.f32 %v4946, %v4948
    %v4950 = vsub.f32 1.0, %v4949
    %v4951 = vmul.f32 %v4948, %v4950
    %v4952 = vadd.f32 %v4948, %v4951
    %vm4953 = vweird.f32 %v4946
    %vm4954 = vweird.f32 %v4948
    %vm4955 = vmor %vm4953, %vm4954
    %v4956 = vsel %vm4955, %v4948, %v4952
    %v4957 = vand.u32 2147483647, %v4946
    %vm4958 = vcmp.eq.f32.partialorder %v4957, 8.507059e+37
    %v4959 = vand.u32 %v4946, 2147483648
    %v4960 = vor.u32 1.1754944e-38, %v4959
    %v4961 = vsel %vm4958, %v4960, %v4956
    %v4962 = vmul.f32 1.0, %v4961
    %v4963 = vrcp.pop %v4947
    %v4964 = vmul.f32 %v4947, %v4963
    %v4965 = vsub.f32 1.0, %v4964
    %v4966 = vmul.f32 %v4963, %v4965
    %v4967 = vadd.f32 %v4963, %v4966
    %vm4968 = vweird.f32 %v4947
    %vm4969 = vweird.f32 %v4963
    %vm4970 = vmor %vm4968, %vm4969
    %v4971 = vsel %vm4970, %v4963, %v4967
    %v4972 = vand.u32 2147483647, %v4947
    %vm4973 = vcmp.eq.f32.partialorder %v4972, 8.507059e+37
    %v4974 = vand.u32 %v4947, 2147483648
    %v4975 = vor.u32 1.1754944e-38, %v4974
    %v4976 = vsel %vm4973, %v4975, %v4971
    %v4977 = vmul.f32 1.0, %v4976
    %v4978 = vtanh.pop %v4938
    %v4979 = vxor.u32 %v4939, 2147483648
    %v4980 = vmul.f32 %v4979, 1.442695
    %v4981 = vpow.pop %v4980
    %v4982 = vadd.f32 %v4981, 1.0
    %v4983 = vrcp.pop %v4982
    %v4984 = vmul.f32 %v4982, %v4983
    %v4985 = vsub.f32 1.0, %v4984
    %v4986 = vmul.f32 %v4983, %v4985
    %v4987 = vadd.f32 %v4983, %v4986
    %vm4988 = vweird.f32 %v4982
    %vm4989 = vweird.f32 %v4983
    %vm4990 = vmor %vm4988, %vm4989
    %v4991 = vsel %vm4990, %v4983, %v4987
    %v4992 = vand.u32 2147483647, %v4982
    %vm4993 = vcmp.eq.f32.partialorder %v4992, 8.507059e+37
    %v4994 = vand.u32 %v4982, 2147483648
    %v4995 = vor.u32 1.1754944e-38, %v4994
    %v4996 = vsel %vm4993, %v4995, %v4991
    %v4997 = vmul.f32 1.0, %v4996
    %v4998 = vmul.f32 %v4977, %v4122
    %v4999 = vmul.f32 %v4962, %v4978
    %v5000 = vadd.f32 %v4998, %v4999
    %v5001 = vtanh.pop %v5000
    %v5002 = vmul.f32 %v4997, %v5001
    %v5003 = vpack.c.bf16 %v5002, %v5002
    %5004 = vst [vmem:[#allocation3] sm:$0xf] %v5003
    %v5005 = vld [vmem:[#allocation3] sm:$0xff]
    %v5006 = vld [vmem:[#allocation7] sm:$0xff]
    %v5007 = vld [vmem:[#allocation7 + $0x8] sm:$0xff]
    %v5008 = vld [vmem:[#allocation7 + $0x10] sm:$0xff]
    %v5009 = vld [vmem:[#allocation7 + $0x18] sm:$0xff]
    %v5010 = vld [vmem:[#allocation7 + $0x20] sm:$0xff]
    %v5011 = vld [vmem:[#allocation7 + $0x28] sm:$0xff]
    %v5012 = vld [vmem:[#allocation7 + $0x30] sm:$0xff]
    %v5013 = vld [vmem:[#allocation7 + $0x38] sm:$0xff]
    %v5014 = vld [vmem:[#allocation7 + $0x40] sm:$0xff]
    %v5015 = vld [vmem:[#allocation7 + $0x48] sm:$0xff]
    %v5016 = vld [vmem:[#allocation7 + $0x50] sm:$0xff]
    %v5017 = vld [vmem:[#allocation7 + $0x58] sm:$0xff]
    %v5018 = vld [vmem:[#allocation7 + $0x60] sm:$0xff]
    %v5019 = vld [vmem:[#allocation7 + $0x68] sm:$0xff]
    %v5020 = vld [vmem:[#allocation7 + $0x70] sm:$0xff]
    %v5021 = vld [vmem:[#allocation7 + $0x78] sm:$0xff]
    %v5022 = vld [vmem:[#allocation7 + $0x80] sm:$0xff]
    %v5023 = vld [vmem:[#allocation7 + $0x88] sm:$0xff]
    %v5024 = vld [vmem:[#allocation7 + $0x90] sm:$0xff]
    %v5025 = vld [vmem:[#allocation7 + $0x98] sm:$0xff]
    %v5026 = vld [vmem:[#allocation7 + $0xa0] sm:$0xff]
    %v5027 = vld [vmem:[#allocation7 + $0xa8] sm:$0xff]
    %v5028 = vld [vmem:[#allocation7 + $0xb0] sm:$0xff]
    %v5029 = vld [vmem:[#allocation7 + $0xb8] sm:$0xff]
    %v5030 = vld [vmem:[#allocation7 + $0xc0] sm:$0xff]
    %v5031 = vld [vmem:[#allocation7 + $0xc8] sm:$0xff]
    %v5032 = vld [vmem:[#allocation7 + $0xd0] sm:$0xff]
    %v5033 = vld [vmem:[#allocation7 + $0xd8] sm:$0xff]
    %v5034 = vld [vmem:[#allocation7 + $0xe0] sm:$0xff]
    %v5035 = vld [vmem:[#allocation7 + $0xe8] sm:$0xff]
    %v5036 = vld [vmem:[#allocation7 + $0xf0] sm:$0xff]
    %v5037 = vld [vmem:[#allocation7 + $0xf8] sm:$0xff]
    %v5038 = vld [vmem:[#allocation7 + $0x100] sm:$0xff]
    %v5039 = vld [vmem:[#allocation7 + $0x108] sm:$0xff]
    %v5040 = vld [vmem:[#allocation7 + $0x110] sm:$0xff]
    %v5041 = vld [vmem:[#allocation7 + $0x118] sm:$0xff]
    %v5042 = vld [vmem:[#allocation7 + $0x120] sm:$0xff]
    %v5043 = vld [vmem:[#allocation7 + $0x128] sm:$0xff]
    %v5044 = vld [vmem:[#allocation7 + $0x130] sm:$0xff]
    %v5045 = vld [vmem:[#allocation7 + $0x138] sm:$0xff]
    %v5046 = vld [vmem:[#allocation7 + $0x140] sm:$0xff]
    %v5047 = vld [vmem:[#allocation7 + $0x148] sm:$0xff]
    %v5048 = vld [vmem:[#allocation7 + $0x150] sm:$0xff]
    %v5049 = vld [vmem:[#allocation7 + $0x158] sm:$0xff]
    %v5050 = vld [vmem:[#allocation7 + $0x160] sm:$0xff]
    %v5051 = vld [vmem:[#allocation7 + $0x168] sm:$0xff]
    %v5052 = vld [vmem:[#allocation7 + $0x170] sm:$0xff]
    %v5053 = vld [vmem:[#allocation7 + $0x178] sm:$0xff]
    %v5054 = vld [vmem:[#allocation7 + $0x180] sm:$0xff]
    %v5055 = vld [vmem:[#allocation7 + $0x188] sm:$0xff]
    %v5056 = vld [vmem:[#allocation7 + $0x190] sm:$0xff]
    %v5057 = vld [vmem:[#allocation7 + $0x198] sm:$0xff]
    %v5058 = vld [vmem:[#allocation7 + $0x1a0] sm:$0xff]
    %v5059 = vld [vmem:[#allocation7 + $0x1a8] sm:$0xff]
    %v5060 = vld [vmem:[#allocation7 + $0x1b0] sm:$0xff]
    %v5061 = vld [vmem:[#allocation7 + $0x1b8] sm:$0xff]
    %v5062 = vld [vmem:[#allocation7 + $0x1c0] sm:$0xff]
    %v5063 = vld [vmem:[#allocation7 + $0x1c8] sm:$0xff]
    %v5064 = vld [vmem:[#allocation7 + $0x1d0] sm:$0xff]
    %v5065 = vld [vmem:[#allocation7 + $0x1d8] sm:$0xff]
    %v5066 = vld [vmem:[#allocation7 + $0x1e0] sm:$0xff]
    %v5067 = vld [vmem:[#allocation7 + $0x1e8] sm:$0xff]
    %v5068 = vld [vmem:[#allocation7 + $0x1f0] sm:$0xff]
    %v5069 = vld [vmem:[#allocation7 + $0x1f8] sm:$0xff]
    %v5071 = vunpack.c.l.b16 %v5005
    %v5072 = vunpack.c.h.b16 %v5005
    %v5073 = vpack.c.b16 %v5071, %v5071
    %v5074 = vpack.c.b16 %v5072, %v5072
    %v5141 = vunpack.c.l.b16 %v5006
    %v5142 = vunpack.c.h.b16 %v5006
    %v5143 = vunpack.c.l.b16 %v5007
    %v5144 = vunpack.c.h.b16 %v5007
    %v5145 = vunpack.c.l.b16 %v5008
    %v5146 = vunpack.c.h.b16 %v5008
    %v5147 = vunpack.c.l.b16 %v5009
    %v5148 = vunpack.c.h.b16 %v5009
    %v5149 = vunpack.c.l.b16 %v5010
    %v5150 = vunpack.c.h.b16 %v5010
    %v5151 = vunpack.c.l.b16 %v5011
    %v5152 = vunpack.c.h.b16 %v5011
    %v5153 = vunpack.c.l.b16 %v5012
    %v5154 = vunpack.c.h.b16 %v5012
    %v5155 = vunpack.c.l.b16 %v5013
    %v5156 = vunpack.c.h.b16 %v5013
    %v5157 = vunpack.c.l.b16 %v5014
    %v5158 = vunpack.c.h.b16 %v5014
    %v5159 = vunpack.c.l.b16 %v5015
    %v5160 = vunpack.c.h.b16 %v5015
    %v5161 = vunpack.c.l.b16 %v5016
    %v5162 = vunpack.c.h.b16 %v5016
    %v5163 = vunpack.c.l.b16 %v5017
    %v5164 = vunpack.c.h.b16 %v5017
    %v5165 = vunpack.c.l.b16 %v5018
    %v5166 = vunpack.c.h.b16 %v5018
    %v5167 = vunpack.c.l.b16 %v5019
    %v5168 = vunpack.c.h.b16 %v5019
    %v5169 = vunpack.c.l.b16 %v5020
    %v5170 = vunpack.c.h.b16 %v5020
    %v5171 = vunpack.c.l.b16 %v5021
    %v5172 = vunpack.c.h.b16 %v5021
    %v5173 = vunpack.c.l.b16 %v5022
    %v5174 = vunpack.c.h.b16 %v5022
    %v5175 = vunpack.c.l.b16 %v5023
    %v5176 = vunpack.c.h.b16 %v5023
    %v5177 = vunpack.c.l.b16 %v5024
    %v5178 = vunpack.c.h.b16 %v5024
    %v5179 = vunpack.c.l.b16 %v5025
    %v5180 = vunpack.c.h.b16 %v5025
    %v5181 = vunpack.c.l.b16 %v5026
    %v5182 = vunpack.c.h.b16 %v5026
    %v5183 = vunpack.c.l.b16 %v5027
    %v5184 = vunpack.c.h.b16 %v5027
    %v5185 = vunpack.c.l.b16 %v5028
    %v5186 = vunpack.c.h.b16 %v5028
    %v5187 = vunpack.c.l.b16 %v5029
    %v5188 = vunpack.c.h.b16 %v5029
    %v5189 = vunpack.c.l.b16 %v5030
    %v5190 = vunpack.c.h.b16 %v5030
    %v5191 = vunpack.c.l.b16 %v5031
    %v5192 = vunpack.c.h.b16 %v5031
    %v5193 = vunpack.c.l.b16 %v5032
    %v5194 = vunpack.c.h.b16 %v5032
    %v5195 = vunpack.c.l.b16 %v5033
    %v5196 = vunpack.c.h.b16 %v5033
    %v5197 = vunpack.c.l.b16 %v5034
    %v5198 = vunpack.c.h.b16 %v5034
    %v5199 = vunpack.c.l.b16 %v5035
    %v5200 = vunpack.c.h.b16 %v5035
    %v5201 = vunpack.c.l.b16 %v5036
    %v5202 = vunpack.c.h.b16 %v5036
    %v5203 = vunpack.c.l.b16 %v5037
    %v5204 = vunpack.c.h.b16 %v5037
    %v5205 = vunpack.c.l.b16 %v5038
    %v5206 = vunpack.c.h.b16 %v5038
    %v5207 = vunpack.c.l.b16 %v5039
    %v5208 = vunpack.c.h.b16 %v5039
    %v5209 = vunpack.c.l.b16 %v5040
    %v5210 = vunpack.c.h.b16 %v5040
    %v5211 = vunpack.c.l.b16 %v5041
    %v5212 = vunpack.c.h.b16 %v5041
    %v5213 = vunpack.c.l.b16 %v5042
    %v5214 = vunpack.c.h.b16 %v5042
    %v5215 = vunpack.c.l.b16 %v5043
    %v5216 = vunpack.c.h.b16 %v5043
    %v5217 = vunpack.c.l.b16 %v5044
    %v5218 = vunpack.c.h.b16 %v5044
    %v5219 = vunpack.c.l.b16 %v5045
    %v5220 = vunpack.c.h.b16 %v5045
    %v5221 = vunpack.c.l.b16 %v5046
    %v5222 = vunpack.c.h.b16 %v5046
    %v5223 = vunpack.c.l.b16 %v5047
    %v5224 = vunpack.c.h.b16 %v5047
    %v5225 = vunpack.c.l.b16 %v5048
    %v5226 = vunpack.c.h.b16 %v5048
    %v5227 = vunpack.c.l.b16 %v5049
    %v5228 = vunpack.c.h.b16 %v5049
    %v5229 = vunpack.c.l.b16 %v5050
    %v5230 = vunpack.c.h.b16 %v5050
    %v5231 = vunpack.c.l.b16 %v5051
    %v5232 = vunpack.c.h.b16 %v5051
    %v5233 = vunpack.c.l.b16 %v5052
    %v5234 = vunpack.c.h.b16 %v5052
    %v5235 = vunpack.c.l.b16 %v5053
    %v5236 = vunpack.c.h.b16 %v5053
    %v5237 = vunpack.c.l.b16 %v5054
    %v5238 = vunpack.c.h.b16 %v5054
    %v5239 = vunpack.c.l.b16 %v5055
    %v5240 = vunpack.c.h.b16 %v5055
    %v5241 = vunpack.c.l.b16 %v5056
    %v5242 = vunpack.c.h.b16 %v5056
    %v5243 = vunpack.c.l.b16 %v5057
    %v5244 = vunpack.c.h.b16 %v5057
    %v5245 = vunpack.c.l.b16 %v5058
    %v5246 = vunpack.c.h.b16 %v5058
    %v5247 = vunpack.c.l.b16 %v5059
    %v5248 = vunpack.c.h.b16 %v5059
    %v5249 = vunpack.c.l.b16 %v5060
    %v5250 = vunpack.c.h.b16 %v5060
    %v5251 = vunpack.c.l.b16 %v5061
    %v5252 = vunpack.c.h.b16 %v5061
    %v5253 = vunpack.c.l.b16 %v5062
    %v5254 = vunpack.c.h.b16 %v5062
    %v5255 = vunpack.c.l.b16 %v5063
    %v5256 = vunpack.c.h.b16 %v5063
    %v5257 = vunpack.c.l.b16 %v5064
    %v5258 = vunpack.c.h.b16 %v5064
    %v5259 = vunpack.c.l.b16 %v5065
    %v5260 = vunpack.c.h.b16 %v5065
    %v5261 = vunpack.c.l.b16 %v5066
    %v5262 = vunpack.c.h.b16 %v5066
    %v5263 = vunpack.c.l.b16 %v5067
    %v5264 = vunpack.c.h.b16 %v5067
    %v5265 = vunpack.c.l.b16 %v5068
    %v5266 = vunpack.c.h.b16 %v5068
    %v5267 = vunpack.c.l.b16 %v5069
    %v5268 = vunpack.c.h.b16 %v5069
    %v5269 = vpack.c.b16 %v5145, %v5141
    %v5270 = vpack.c.b16 %v5146, %v5142
    %v5271 = vpack.c.b16 %v5147, %v5143
    %v5272 = vpack.c.b16 %v5148, %v5144
    %v5273 = vpack.c.b16 %v5153, %v5149
    %v5274 = vpack.c.b16 %v5154, %v5150
    %v5275 = vpack.c.b16 %v5155, %v5151
    %v5276 = vpack.c.b16 %v5156, %v5152
    %v5277 = vpack.c.b16 %v5161, %v5157
    %v5278 = vpack.c.b16 %v5162, %v5158
    %v5279 = vpack.c.b16 %v5163, %v5159
    %v5280 = vpack.c.b16 %v5164, %v5160
    %v5281 = vpack.c.b16 %v5169, %v5165
    %v5282 = vpack.c.b16 %v5170, %v5166
    %v5283 = vpack.c.b16 %v5171, %v5167
    %v5284 = vpack.c.b16 %v5172, %v5168
    %v5285 = vpack.c.b16 %v5177, %v5173
    %v5286 = vpack.c.b16 %v5178, %v5174
    %v5287 = vpack.c.b16 %v5179, %v5175
    %v5288 = vpack.c.b16 %v5180, %v5176
    %v5289 = vpack.c.b16 %v5185, %v5181
    %v5290 = vpack.c.b16 %v5186, %v5182
    %v5291 = vpack.c.b16 %v5187, %v5183
    %v5292 = vpack.c.b16 %v5188, %v5184
    %v5293 = vpack.c.b16 %v5193, %v5189
    %v5294 = vpack.c.b16 %v5194, %v5190
    %v5295 = vpack.c.b16 %v5195, %v5191
    %v5296 = vpack.c.b16 %v5196, %v5192
    %v5297 = vpack.c.b16 %v5201, %v5197
    %v5298 = vpack.c.b16 %v5202, %v5198
    %v5299 = vpack.c.b16 %v5203, %v5199
    %v5300 = vpack.c.b16 %v5204, %v5200
    %v5301 = vpack.c.b16 %v5209, %v5205
    %v5302 = vpack.c.b16 %v5210, %v5206
    %v5303 = vpack.c.b16 %v5211, %v5207
    %v5304 = vpack.c.b16 %v5212, %v5208
    %v5305 = vpack.c.b16 %v5217, %v5213
    %v5306 = vpack.c.b16 %v5218, %v5214
    %v5307 = vpack.c.b16 %v5219, %v5215
    %v5308 = vpack.c.b16 %v5220, %v5216
    %v5309 = vpack.c.b16 %v5225, %v5221
    %v5310 = vpack.c.b16 %v5226, %v5222
    %v5311 = vpack.c.b16 %v5227, %v5223
    %v5312 = vpack.c.b16 %v5228, %v5224
    %v5313 = vpack.c.b16 %v5233, %v5229
    %v5314 = vpack.c.b16 %v5234, %v5230
    %v5315 = vpack.c.b16 %v5235, %v5231
    %v5316 = vpack.c.b16 %v5236, %v5232
    %v5317 = vpack.c.b16 %v5241, %v5237
    %v5318 = vpack.c.b16 %v5242, %v5238
    %v5319 = vpack.c.b16 %v5243, %v5239
    %v5320 = vpack.c.b16 %v5244, %v5240
    %v5321 = vpack.c.b16 %v5249, %v5245
    %v5322 = vpack.c.b16 %v5250, %v5246
    %v5323 = vpack.c.b16 %v5251, %v5247
    %v5324 = vpack.c.b16 %v5252, %v5248
    %v5325 = vpack.c.b16 %v5257, %v5253
    %v5326 = vpack.c.b16 %v5258, %v5254
    %v5327 = vpack.c.b16 %v5259, %v5255
    %v5328 = vpack.c.b16 %v5260, %v5256
    %v5329 = vpack.c.b16 %v5265, %v5261
    %v5330 = vpack.c.b16 %v5266, %v5262
    %v5331 = vpack.c.b16 %v5267, %v5263
    %v5332 = vpack.c.b16 %v5268, %v5264
    %5397 = vmatpush.bf16.msra.mxu0 %v5297
    %5398 = vmatpush.bf16.msra.mxu0 %v5293
    %5399 = vmatpush.bf16.msra.mxu0 %v5289
    %5400 = vmatpush.bf16.msra.mxu0 %v5285
    %5401 = vmatpush.bf16.msra.mxu0 %v5281
    %5402 = vmatpush.bf16.msra.mxu0 %v5277
    %5403 = vmatpush.bf16.msra.mxu0 %v5273
    %5404 = vmatpush.bf16.msra.mxu0 %v5269
    %5405 = vmatmul.bf16.gmra.mxu0 %v5073
    %v5406 = vpop.f32.mrf.mxu0
    %v5407 = vadd.f32 %v290, %v5406
    %v5408 = vpop.f32.mrf.mxu0
    %5409 = vdwg.mxu0
    %5410 = vmatpush.bf16.msra.mxu0 %v5329
    %5411 = vmatpush.bf16.msra.mxu0 %v5325
    %5412 = vmatpush.bf16.msra.mxu0 %v5321
    %5413 = vmatpush.bf16.msra.mxu0 %v5317
    %5414 = vmatpush.bf16.msra.mxu0 %v5313
    %5415 = vmatpush.bf16.msra.mxu0 %v5309
    %5416 = vmatpush.bf16.msra.mxu0 %v5305
    %5417 = vmatpush.bf16.msra.mxu0 %v5301
    %5418 = vmatmul.bf16.gmra.mxu0 %v5074
    %v5419 = vpop.f32.mrf.mxu0
    %v5420 = vadd.f32 %v5407, %v5419
    %v5421 = vpop.f32.mrf.mxu0
    %5422 = vdwg.mxu0
    %5423 = vmatpush.bf16.msra.mxu0 %v5298
    %5424 = vmatpush.bf16.msra.mxu0 %v5294
    %5425 = vmatpush.bf16.msra.mxu0 %v5290
    %5426 = vmatpush.bf16.msra.mxu0 %v5286
    %5427 = vmatpush.bf16.msra.mxu0 %v5282
    %5428 = vmatpush.bf16.msra.mxu0 %v5278
    %5429 = vmatpush.bf16.msra.mxu0 %v5274
    %5430 = vmatpush.bf16.msra.mxu0 %v5270
    %5431 = vmatmul.bf16.gmra.mxu0 %v5073
    %v5432 = vpop.f32.mrf.mxu0
    %v5433 = vadd.f32 %v291, %v5432
    %v5434 = vpop.f32.mrf.mxu0
    %5435 = vdwg.mxu0
    %5436 = vmatpush.bf16.msra.mxu0 %v5330
    %5437 = vmatpush.bf16.msra.mxu0 %v5326
    %5438 = vmatpush.bf16.msra.mxu0 %v5322
    %5439 = vmatpush.bf16.msra.mxu0 %v5318
    %5440 = vmatpush.bf16.msra.mxu0 %v5314
    %5441 = vmatpush.bf16.msra.mxu0 %v5310
    %5442 = vmatpush.bf16.msra.mxu0 %v5306
    %5443 = vmatpush.bf16.msra.mxu0 %v5302
    %5444 = vmatmul.bf16.gmra.mxu0 %v5074
    %v5445 = vpop.f32.mrf.mxu0
    %v5446 = vadd.f32 %v5433, %v5445
    %v5447 = vpop.f32.mrf.mxu0
    %5448 = vdwg.mxu0
    %5449 = vmatpush.bf16.msra.mxu0 %v5299
    %5450 = vmatpush.bf16.msra.mxu0 %v5295
    %5451 = vmatpush.bf16.msra.mxu0 %v5291
    %5452 = vmatpush.bf16.msra.mxu0 %v5287
    %5453 = vmatpush.bf16.msra.mxu0 %v5283
    %5454 = vmatpush.bf16.msra.mxu0 %v5279
    %5455 = vmatpush.bf16.msra.mxu0 %v5275
    %5456 = vmatpush.bf16.msra.mxu0 %v5271
    %5457 = vmatmul.bf16.gmra.mxu0 %v5073
    %v5458 = vpop.f32.mrf.mxu0
    %v5459 = vadd.f32 %v292, %v5458
    %v5460 = vpop.f32.mrf.mxu0
    %5461 = vdwg.mxu0
    %5462 = vmatpush.bf16.msra.mxu0 %v5331
    %5463 = vmatpush.bf16.msra.mxu0 %v5327
    %5464 = vmatpush.bf16.msra.mxu0 %v5323
    %5465 = vmatpush.bf16.msra.mxu0 %v5319
    %5466 = vmatpush.bf16.msra.mxu0 %v5315
    %5467 = vmatpush.bf16.msra.mxu0 %v5311
    %5468 = vmatpush.bf16.msra.mxu0 %v5307
    %5469 = vmatpush.bf16.msra.mxu0 %v5303
    %5470 = vmatmul.bf16.gmra.mxu0 %v5074
    %v5471 = vpop.f32.mrf.mxu0
    %v5472 = vadd.f32 %v5459, %v5471
    %v5473 = vpop.f32.mrf.mxu0
    %5474 = vdwg.mxu0
    %5475 = vmatpush.bf16.msra.mxu0 %v5300
    %5476 = vmatpush.bf16.msra.mxu0 %v5296
    %5477 = vmatpush.bf16.msra.mxu0 %v5292
    %5478 = vmatpush.bf16.msra.mxu0 %v5288
    %5479 = vmatpush.bf16.msra.mxu0 %v5284
    %5480 = vmatpush.bf16.msra.mxu0 %v5280
    %5481 = vmatpush.bf16.msra.mxu0 %v5276
    %5482 = vmatpush.bf16.msra.mxu0 %v5272
    %5483 = vmatmul.bf16.gmra.mxu0 %v5073
    %v5484 = vpop.f32.mrf.mxu0
    %v5485 = vadd.f32 %v293, %v5484
    %v5486 = vpop.f32.mrf.mxu0
    %5487 = vdwg.mxu0
    %5488 = vmatpush.bf16.msra.mxu0 %v5332
    %5489 = vmatpush.bf16.msra.mxu0 %v5328
    %5490 = vmatpush.bf16.msra.mxu0 %v5324
    %5491 = vmatpush.bf16.msra.mxu0 %v5320
    %5492 = vmatpush.bf16.msra.mxu0 %v5316
    %5493 = vmatpush.bf16.msra.mxu0 %v5312
    %5494 = vmatpush.bf16.msra.mxu0 %v5308
    %5495 = vmatpush.bf16.msra.mxu0 %v5304
    %5496 = vmatmul.bf16.gmra.mxu0 %v5074
    %v5497 = vpop.f32.mrf.mxu0
    %v5498 = vadd.f32 %v5485, %v5497
    %v5499 = vpop.f32.mrf.mxu0
    %5500 = vdwg.mxu0
    %v5501 = vxor.u32 %v5420, 2147483648
    %v5502 = vxor.u32 %v5446, 2147483648
    %v5503 = vmul.f32 %v5501, 1.442695
    %v5504 = vpow.pop %v5503
    %v5505 = vmul.f32 %v5502, 1.442695
    %v5506 = vpow.pop %v5505
    %v5507 = vadd.f32 %v5504, 1.0
    %v5508 = vadd.f32 %v5506, 1.0
    %v5509 = vrcp.pop %v5507
    %v5510 = vmul.f32 %v5507, %v5509
    %v5511 = vsub.f32 1.0, %v5510
    %v5512 = vmul.f32 %v5509, %v5511
    %v5513 = vadd.f32 %v5509, %v5512
    %vm5514 = vweird.f32 %v5507
    %vm5515 = vweird.f32 %v5509
    %vm5516 = vmor %vm5514, %vm5515
    %v5517 = vsel %vm5516, %v5509, %v5513
    %v5518 = vand.u32 2147483647, %v5507
    %vm5519 = vcmp.eq.f32.partialorder %v5518, 8.507059e+37
    %v5520 = vand.u32 %v5507, 2147483648
    %v5521 = vor.u32 1.1754944e-38, %v5520
    %v5522 = vsel %vm5519, %v5521, %v5517
    %v5523 = vmul.f32 1.0, %v5522
    %v5524 = vrcp.pop %v5508
    %v5525 = vmul.f32 %v5508, %v5524
    %v5526 = vsub.f32 1.0, %v5525
    %v5527 = vmul.f32 %v5524, %v5526
    %v5528 = vadd.f32 %v5524, %v5527
    %vm5529 = vweird.f32 %v5508
    %vm5530 = vweird.f32 %v5524
    %vm5531 = vmor %vm5529, %vm5530
    %v5532 = vsel %vm5531, %v5524, %v5528
    %v5533 = vand.u32 2147483647, %v5508
    %vm5534 = vcmp.eq.f32.partialorder %v5533, 8.507059e+37
    %v5535 = vand.u32 %v5508, 2147483648
    %v5536 = vor.u32 1.1754944e-38, %v5535
    %v5537 = vsel %vm5534, %v5536, %v5532
    %v5538 = vmul.f32 1.0, %v5537
    %v5539 = vtanh.pop %v5472
    %v5540 = vxor.u32 %v5498, 2147483648
    %v5541 = vmul.f32 %v5540, 1.442695
    %v5542 = vpow.pop %v5541
    %v5543 = vadd.f32 %v5542, 1.0
    %v5544 = vrcp.pop %v5543
    %v5545 = vmul.f32 %v5543, %v5544
    %v5546 = vsub.f32 1.0, %v5545
    %v5547 = vmul.f32 %v5544, %v5546
    %v5548 = vadd.f32 %v5544, %v5547
    %vm5549 = vweird.f32 %v5543
    %vm5550 = vweird.f32 %v5544
    %vm5551 = vmor %vm5549, %vm5550
    %v5552 = vsel %vm5551, %v5544, %v5548
    %v5553 = vand.u32 2147483647, %v5543
    %vm5554 = vcmp.eq.f32.partialorder %v5553, 8.507059e+37
    %v5555 = vand.u32 %v5543, 2147483648
    %v5556 = vor.u32 1.1754944e-38, %v5555
    %v5557 = vsel %vm5554, %v5556, %v5552
    %v5558 = vmul.f32 1.0, %v5557
    %v5559 = vmul.f32 %v5538, %v4683
    %v5560 = vmul.f32 %v5523, %v5539
    %v5561 = vadd.f32 %v5559, %v5560
    %v5562 = vtanh.pop %v5561
    %v5563 = vmul.f32 %v5558, %v5562
    %v5564 = vpack.c.bf16 %v5563, %v5563
    %5565 = vst [vmem:[#allocation3 + $0x4] sm:$0xf] %v5564
    %v5566 = vld [vmem:[#allocation2 + $0xc0] sm:$0xff]
    %v5567 = vld [vmem:[#allocation2 + $0xc8] sm:$0xff]
    %v5568 = vld [vmem:[#allocation2 + $0xd0] sm:$0xff]
    %v5569 = vld [vmem:[#allocation2 + $0xd8] sm:$0xff]
    %v5570 = vld [vmem:[#allocation5] sm:$0xff]
    %v5571 = vld [vmem:[#allocation5 + $0x8] sm:$0xff]
    %v5572 = vld [vmem:[#allocation5 + $0x10] sm:$0xff]
    %v5573 = vld [vmem:[#allocation5 + $0x18] sm:$0xff]
    %v5574 = vld [vmem:[#allocation5 + $0x20] sm:$0xff]
    %v5575 = vld [vmem:[#allocation5 + $0x28] sm:$0xff]
    %v5576 = vld [vmem:[#allocation5 + $0x30] sm:$0xff]
    %v5577 = vld [vmem:[#allocation5 + $0x38] sm:$0xff]
    %v5578 = vld [vmem:[#allocation5 + $0x40] sm:$0xff]
    %v5579 = vld [vmem:[#allocation5 + $0x48] sm:$0xff]
    %v5580 = vld [vmem:[#allocation5 + $0x50] sm:$0xff]
    %v5581 = vld [vmem:[#allocation5 + $0x58] sm:$0xff]
    %v5582 = vld [vmem:[#allocation5 + $0x60] sm:$0xff]
    %v5583 = vld [vmem:[#allocation5 + $0x68] sm:$0xff]
    %v5584 = vld [vmem:[#allocation5 + $0x70] sm:$0xff]
    %v5585 = vld [vmem:[#allocation5 + $0x78] sm:$0xff]
    %v5586 = vld [vmem:[#allocation5 + $0x80] sm:$0xff]
    %v5587 = vld [vmem:[#allocation5 + $0x88] sm:$0xff]
    %v5588 = vld [vmem:[#allocation5 + $0x90] sm:$0xff]
    %v5589 = vld [vmem:[#allocation5 + $0x98] sm:$0xff]
    %v5590 = vld [vmem:[#allocation5 + $0xa0] sm:$0xff]
    %v5591 = vld [vmem:[#allocation5 + $0xa8] sm:$0xff]
    %v5592 = vld [vmem:[#allocation5 + $0xb0] sm:$0xff]
    %v5593 = vld [vmem:[#allocation5 + $0xb8] sm:$0xff]
    %v5594 = vld [vmem:[#allocation5 + $0xc0] sm:$0xff]
    %v5595 = vld [vmem:[#allocation5 + $0xc8] sm:$0xff]
    %v5596 = vld [vmem:[#allocation5 + $0xd0] sm:$0xff]
    %v5597 = vld [vmem:[#allocation5 + $0xd8] sm:$0xff]
    %v5598 = vld [vmem:[#allocation5 + $0xe0] sm:$0xff]
    %v5599 = vld [vmem:[#allocation5 + $0xe8] sm:$0xff]
    %v5600 = vld [vmem:[#allocation5 + $0xf0] sm:$0xff]
    %v5601 = vld [vmem:[#allocation5 + $0xf8] sm:$0xff]
    %v5634 = vunpack.c.l.b16 %v5570
    %v5635 = vunpack.c.h.b16 %v5570
    %v5636 = vunpack.c.l.b16 %v5571
    %v5637 = vunpack.c.h.b16 %v5571
    %v5638 = vunpack.c.l.b16 %v5572
    %v5639 = vunpack.c.h.b16 %v5572
    %v5640 = vunpack.c.l.b16 %v5573
    %v5641 = vunpack.c.h.b16 %v5573
    %v5642 = vunpack.c.l.b16 %v5574
    %v5643 = vunpack.c.h.b16 %v5574
    %v5644 = vunpack.c.l.b16 %v5575
    %v5645 = vunpack.c.h.b16 %v5575
    %v5646 = vunpack.c.l.b16 %v5576
    %v5647 = vunpack.c.h.b16 %v5576
    %v5648 = vunpack.c.l.b16 %v5577
    %v5649 = vunpack.c.h.b16 %v5577
    %v5650 = vunpack.c.l.b16 %v5578
    %v5651 = vunpack.c.h.b16 %v5578
    %v5652 = vunpack.c.l.b16 %v5579
    %v5653 = vunpack.c.h.b16 %v5579
    %v5654 = vunpack.c.l.b16 %v5580
    %v5655 = vunpack.c.h.b16 %v5580
    %v5656 = vunpack.c.l.b16 %v5581
    %v5657 = vunpack.c.h.b16 %v5581
    %v5658 = vunpack.c.l.b16 %v5582
    %v5659 = vunpack.c.h.b16 %v5582
    %v5660 = vunpack.c.l.b16 %v5583
    %v5661 = vunpack.c.h.b16 %v5583
    %v5662 = vunpack.c.l.b16 %v5584
    %v5663 = vunpack.c.h.b16 %v5584
    %v5664 = vunpack.c.l.b16 %v5585
    %v5665 = vunpack.c.h.b16 %v5585
    %v5666 = vunpack.c.l.b16 %v5586
    %v5667 = vunpack.c.h.b16 %v5586
    %v5668 = vunpack.c.l.b16 %v5587
    %v5669 = vunpack.c.h.b16 %v5587
    %v5670 = vunpack.c.l.b16 %v5588
    %v5671 = vunpack.c.h.b16 %v5588
    %v5672 = vunpack.c.l.b16 %v5589
    %v5673 = vunpack.c.h.b16 %v5589
    %v5674 = vunpack.c.l.b16 %v5590
    %v5675 = vunpack.c.h.b16 %v5590
    %v5676 = vunpack.c.l.b16 %v5591
    %v5677 = vunpack.c.h.b16 %v5591
    %v5678 = vunpack.c.l.b16 %v5592
    %v5679 = vunpack.c.h.b16 %v5592
    %v5680 = vunpack.c.l.b16 %v5593
    %v5681 = vunpack.c.h.b16 %v5593
    %v5682 = vunpack.c.l.b16 %v5594
    %v5683 = vunpack.c.h.b16 %v5594
    %v5684 = vunpack.c.l.b16 %v5595
    %v5685 = vunpack.c.h.b16 %v5595
    %v5686 = vunpack.c.l.b16 %v5596
    %v5687 = vunpack.c.h.b16 %v5596
    %v5688 = vunpack.c.l.b16 %v5597
    %v5689 = vunpack.c.h.b16 %v5597
    %v5690 = vunpack.c.l.b16 %v5598
    %v5691 = vunpack.c.h.b16 %v5598
    %v5692 = vunpack.c.l.b16 %v5599
    %v5693 = vunpack.c.h.b16 %v5599
    %v5694 = vunpack.c.l.b16 %v5600
    %v5695 = vunpack.c.h.b16 %v5600
    %v5696 = vunpack.c.l.b16 %v5601
    %v5697 = vunpack.c.h.b16 %v5601
    %v5698 = vpack.c.b16 %v5638, %v5634
    %v5699 = vpack.c.b16 %v5639, %v5635
    %v5700 = vpack.c.b16 %v5640, %v5636
    %v5701 = vpack.c.b16 %v5641, %v5637
    %v5702 = vpack.c.b16 %v5646, %v5642
    %v5703 = vpack.c.b16 %v5647, %v5643
    %v5704 = vpack.c.b16 %v5648, %v5644
    %v5705 = vpack.c.b16 %v5649, %v5645
    %v5706 = vpack.c.b16 %v5654, %v5650
    %v5707 = vpack.c.b16 %v5655, %v5651
    %v5708 = vpack.c.b16 %v5656, %v5652
    %v5709 = vpack.c.b16 %v5657, %v5653
    %v5710 = vpack.c.b16 %v5662, %v5658
    %v5711 = vpack.c.b16 %v5663, %v5659
    %v5712 = vpack.c.b16 %v5664, %v5660
    %v5713 = vpack.c.b16 %v5665, %v5661
    %v5714 = vpack.c.b16 %v5670, %v5666
    %v5715 = vpack.c.b16 %v5671, %v5667
    %v5716 = vpack.c.b16 %v5672, %v5668
    %v5717 = vpack.c.b16 %v5673, %v5669
    %v5718 = vpack.c.b16 %v5678, %v5674
    %v5719 = vpack.c.b16 %v5679, %v5675
    %v5720 = vpack.c.b16 %v5680, %v5676
    %v5721 = vpack.c.b16 %v5681, %v5677
    %v5722 = vpack.c.b16 %v5686, %v5682
    %v5723 = vpack.c.b16 %v5687, %v5683
    %v5724 = vpack.c.b16 %v5688, %v5684
    %v5725 = vpack.c.b16 %v5689, %v5685
    %v5726 = vpack.c.b16 %v5694, %v5690
    %v5727 = vpack.c.b16 %v5695, %v5691
    %v5728 = vpack.c.b16 %v5696, %v5692
    %v5729 = vpack.c.b16 %v5697, %v5693
    %5762 = vmatpush.bf16.msra.mxu0 %v5726
    %5763 = vmatpush.bf16.msra.mxu0 %v5722
    %5764 = vmatpush.bf16.msra.mxu0 %v5718
    %5765 = vmatpush.bf16.msra.mxu0 %v5714
    %5766 = vmatpush.bf16.msra.mxu0 %v5710
    %5767 = vmatpush.bf16.msra.mxu0 %v5706
    %5768 = vmatpush.bf16.msra.mxu0 %v5702
    %5769 = vmatpush.bf16.msra.mxu0 %v5698
    %5770 = vmatmul.bf16.gmra.mxu0 %v5003
    %v5771 = vpop.f32.mrf.mxu0
    %v5772 = vadd.f32 0.0, %v5771
    %v5773 = vpop.f32.mrf.mxu0
    %5774 = vdwg.mxu0
    %5775 = vmatpush.bf16.msra.mxu0 %v5727
    %5776 = vmatpush.bf16.msra.mxu0 %v5723
    %5777 = vmatpush.bf16.msra.mxu0 %v5719
    %5778 = vmatpush.bf16.msra.mxu0 %v5715
    %5779 = vmatpush.bf16.msra.mxu0 %v5711
    %5780 = vmatpush.bf16.msra.mxu0 %v5707
    %5781 = vmatpush.bf16.msra.mxu0 %v5703
    %5782 = vmatpush.bf16.msra.mxu0 %v5699
    %5783 = vmatmul.bf16.gmra.mxu0 %v5003
    %v5784 = vpop.f32.mrf.mxu0
    %v5785 = vadd.f32 0.0, %v5784
    %v5786 = vpop.f32.mrf.mxu0
    %5787 = vdwg.mxu0
    %5788 = vmatpush.bf16.msra.mxu0 %v5728
    %5789 = vmatpush.bf16.msra.mxu0 %v5724
    %5790 = vmatpush.bf16.msra.mxu0 %v5720
    %5791 = vmatpush.bf16.msra.mxu0 %v5716
    %5792 = vmatpush.bf16.msra.mxu0 %v5712
    %5793 = vmatpush.bf16.msra.mxu0 %v5708
    %5794 = vmatpush.bf16.msra.mxu0 %v5704
    %5795 = vmatpush.bf16.msra.mxu0 %v5700
    %5796 = vmatmul.bf16.gmra.mxu0 %v5003
    %v5797 = vpop.f32.mrf.mxu0
    %v5798 = vadd.f32 0.0, %v5797
    %v5799 = vpop.f32.mrf.mxu0
    %5800 = vdwg.mxu0
    %5801 = vmatpush.bf16.msra.mxu0 %v5729
    %5802 = vmatpush.bf16.msra.mxu0 %v5725
    %5803 = vmatpush.bf16.msra.mxu0 %v5721
    %5804 = vmatpush.bf16.msra.mxu0 %v5717
    %5805 = vmatpush.bf16.msra.mxu0 %v5713
    %5806 = vmatpush.bf16.msra.mxu0 %v5709
    %5807 = vmatpush.bf16.msra.mxu0 %v5705
    %5808 = vmatpush.bf16.msra.mxu0 %v5701
    %5809 = vmatmul.bf16.gmra.mxu0 %v5003
    %v5810 = vpop.f32.mrf.mxu0
    %v5811 = vadd.f32 0.0, %v5810
    %v5812 = vpop.f32.mrf.mxu0
    %5813 = vdwg.mxu0
    %v5814 = vadd.f32 %v5566, %v5772
    %v5815 = vadd.f32 %v5567, %v5785
    %v5816 = vadd.f32 %v5568, %v5798
    %v5817 = vadd.f32 %v5569, %v5811
    %v5818 = vxor.u32 %v5814, 2147483648
    %v5819 = vxor.u32 %v5815, 2147483648
    %v5820 = vmul.f32 %v5818, 1.442695
    %v5821 = vpow.pop %v5820
    %v5822 = vmul.f32 %v5819, 1.442695
    %v5823 = vpow.pop %v5822
    %v5824 = vadd.f32 %v5821, 1.0
    %v5825 = vadd.f32 %v5823, 1.0
    %v5826 = vrcp.pop %v5824
    %v5827 = vmul.f32 %v5824, %v5826
    %v5828 = vsub.f32 1.0, %v5827
    %v5829 = vmul.f32 %v5826, %v5828
    %v5830 = vadd.f32 %v5826, %v5829
    %vm5831 = vweird.f32 %v5824
    %vm5832 = vweird.f32 %v5826
    %vm5833 = vmor %vm5831, %vm5832
    %v5834 = vsel %vm5833, %v5826, %v5830
    %v5835 = vand.u32 2147483647, %v5824
    %vm5836 = vcmp.eq.f32.partialorder %v5835, 8.507059e+37
    %v5837 = vand.u32 %v5824, 2147483648
    %v5838 = vor.u32 1.1754944e-38, %v5837
    %v5839 = vsel %vm5836, %v5838, %v5834
    %v5840 = vmul.f32 1.0, %v5839
    %v5841 = vrcp.pop %v5825
    %v5842 = vmul.f32 %v5825, %v5841
    %v5843 = vsub.f32 1.0, %v5842
    %v5844 = vmul.f32 %v5841, %v5843
    %v5845 = vadd.f32 %v5841, %v5844
    %vm5846 = vweird.f32 %v5825
    %vm5847 = vweird.f32 %v5841
    %vm5848 = vmor %vm5846, %vm5847
    %v5849 = vsel %vm5848, %v5841, %v5845
    %v5850 = vand.u32 2147483647, %v5825
    %vm5851 = vcmp.eq.f32.partialorder %v5850, 8.507059e+37
    %v5852 = vand.u32 %v5825, 2147483648
    %v5853 = vor.u32 1.1754944e-38, %v5852
    %v5854 = vsel %vm5851, %v5853, %v5849
    %v5855 = vmul.f32 1.0, %v5854
    %v5856 = vtanh.pop %v5816
    %v5857 = vxor.u32 %v5817, 2147483648
    %v5858 = vmul.f32 %v5857, 1.442695
    %v5859 = vpow.pop %v5858
    %v5860 = vadd.f32 %v5859, 1.0
    %v5861 = vrcp.pop %v5860
    %v5862 = vmul.f32 %v5860, %v5861
    %v5863 = vsub.f32 1.0, %v5862
    %v5864 = vmul.f32 %v5861, %v5863
    %v5865 = vadd.f32 %v5861, %v5864
    %vm5866 = vweird.f32 %v5860
    %vm5867 = vweird.f32 %v5861
    %vm5868 = vmor %vm5866, %vm5867
    %v5869 = vsel %vm5868, %v5861, %v5865
    %v5870 = vand.u32 2147483647, %v5860
    %vm5871 = vcmp.eq.f32.partialorder %v5870, 8.507059e+37
    %v5872 = vand.u32 %v5860, 2147483648
    %v5873 = vor.u32 1.1754944e-38, %v5872
    %v5874 = vsel %vm5871, %v5873, %v5869
    %v5875 = vmul.f32 1.0, %v5874
    %v5876 = vmul.f32 %v5855, %v5000
    %v5877 = vmul.f32 %v5840, %v5856
    %v5878 = vadd.f32 %v5876, %v5877
    %v5879 = vtanh.pop %v5878
    %v5880 = vmul.f32 %v5875, %v5879
    %v5881 = vpack.c.bf16 %v5880, %v5880
    %5882 = vst [vmem:[#allocation3] sm:$0xf] %v5881
    %v5883 = vld [vmem:[#allocation3] sm:$0xff]
    %v5884 = vld [vmem:[#allocation7] sm:$0xff]
    %v5885 = vld [vmem:[#allocation7 + $0x8] sm:$0xff]
    %v5886 = vld [vmem:[#allocation7 + $0x10] sm:$0xff]
    %v5887 = vld [vmem:[#allocation7 + $0x18] sm:$0xff]
    %v5888 = vld [vmem:[#allocation7 + $0x20] sm:$0xff]
    %v5889 = vld [vmem:[#allocation7 + $0x28] sm:$0xff]
    %v5890 = vld [vmem:[#allocation7 + $0x30] sm:$0xff]
    %v5891 = vld [vmem:[#allocation7 + $0x38] sm:$0xff]
    %v5892 = vld [vmem:[#allocation7 + $0x40] sm:$0xff]
    %v5893 = vld [vmem:[#allocation7 + $0x48] sm:$0xff]
    %v5894 = vld [vmem:[#allocation7 + $0x50] sm:$0xff]
    %v5895 = vld [vmem:[#allocation7 + $0x58] sm:$0xff]
    %v5896 = vld [vmem:[#allocation7 + $0x60] sm:$0xff]
    %v5897 = vld [vmem:[#allocation7 + $0x68] sm:$0xff]
    %v5898 = vld [vmem:[#allocation7 + $0x70] sm:$0xff]
    %v5899 = vld [vmem:[#allocation7 + $0x78] sm:$0xff]
    %v5900 = vld [vmem:[#allocation7 + $0x80] sm:$0xff]
    %v5901 = vld [vmem:[#allocation7 + $0x88] sm:$0xff]
    %v5902 = vld [vmem:[#allocation7 + $0x90] sm:$0xff]
    %v5903 = vld [vmem:[#allocation7 + $0x98] sm:$0xff]
    %v5904 = vld [vmem:[#allocation7 + $0xa0] sm:$0xff]
    %v5905 = vld [vmem:[#allocation7 + $0xa8] sm:$0xff]
    %v5906 = vld [vmem:[#allocation7 + $0xb0] sm:$0xff]
    %v5907 = vld [vmem:[#allocation7 + $0xb8] sm:$0xff]
    %v5908 = vld [vmem:[#allocation7 + $0xc0] sm:$0xff]
    %v5909 = vld [vmem:[#allocation7 + $0xc8] sm:$0xff]
    %v5910 = vld [vmem:[#allocation7 + $0xd0] sm:$0xff]
    %v5911 = vld [vmem:[#allocation7 + $0xd8] sm:$0xff]
    %v5912 = vld [vmem:[#allocation7 + $0xe0] sm:$0xff]
    %v5913 = vld [vmem:[#allocation7 + $0xe8] sm:$0xff]
    %v5914 = vld [vmem:[#allocation7 + $0xf0] sm:$0xff]
    %v5915 = vld [vmem:[#allocation7 + $0xf8] sm:$0xff]
    %v5916 = vld [vmem:[#allocation7 + $0x100] sm:$0xff]
    %v5917 = vld [vmem:[#allocation7 + $0x108] sm:$0xff]
    %v5918 = vld [vmem:[#allocation7 + $0x110] sm:$0xff]
    %v5919 = vld [vmem:[#allocation7 + $0x118] sm:$0xff]
    %v5920 = vld [vmem:[#allocation7 + $0x120] sm:$0xff]
    %v5921 = vld [vmem:[#allocation7 + $0x128] sm:$0xff]
    %v5922 = vld [vmem:[#allocation7 + $0x130] sm:$0xff]
    %v5923 = vld [vmem:[#allocation7 + $0x138] sm:$0xff]
    %v5924 = vld [vmem:[#allocation7 + $0x140] sm:$0xff]
    %v5925 = vld [vmem:[#allocation7 + $0x148] sm:$0xff]
    %v5926 = vld [vmem:[#allocation7 + $0x150] sm:$0xff]
    %v5927 = vld [vmem:[#allocation7 + $0x158] sm:$0xff]
    %v5928 = vld [vmem:[#allocation7 + $0x160] sm:$0xff]
    %v5929 = vld [vmem:[#allocation7 + $0x168] sm:$0xff]
    %v5930 = vld [vmem:[#allocation7 + $0x170] sm:$0xff]
    %v5931 = vld [vmem:[#allocation7 + $0x178] sm:$0xff]
    %v5932 = vld [vmem:[#allocation7 + $0x180] sm:$0xff]
    %v5933 = vld [vmem:[#allocation7 + $0x188] sm:$0xff]
    %v5934 = vld [vmem:[#allocation7 + $0x190] sm:$0xff]
    %v5935 = vld [vmem:[#allocation7 + $0x198] sm:$0xff]
    %v5936 = vld [vmem:[#allocation7 + $0x1a0] sm:$0xff]
    %v5937 = vld [vmem:[#allocation7 + $0x1a8] sm:$0xff]
    %v5938 = vld [vmem:[#allocation7 + $0x1b0] sm:$0xff]
    %v5939 = vld [vmem:[#allocation7 + $0x1b8] sm:$0xff]
    %v5940 = vld [vmem:[#allocation7 + $0x1c0] sm:$0xff]
    %v5941 = vld [vmem:[#allocation7 + $0x1c8] sm:$0xff]
    %v5942 = vld [vmem:[#allocation7 + $0x1d0] sm:$0xff]
    %v5943 = vld [vmem:[#allocation7 + $0x1d8] sm:$0xff]
    %v5944 = vld [vmem:[#allocation7 + $0x1e0] sm:$0xff]
    %v5945 = vld [vmem:[#allocation7 + $0x1e8] sm:$0xff]
    %v5946 = vld [vmem:[#allocation7 + $0x1f0] sm:$0xff]
    %v5947 = vld [vmem:[#allocation7 + $0x1f8] sm:$0xff]
    %v5949 = vunpack.c.l.b16 %v5883
    %v5950 = vunpack.c.h.b16 %v5883
    %v5951 = vpack.c.b16 %v5949, %v5949
    %v5952 = vpack.c.b16 %v5950, %v5950
    %v6019 = vunpack.c.l.b16 %v5884
    %v6020 = vunpack.c.h.b16 %v5884
    %v6021 = vunpack.c.l.b16 %v5885
    %v6022 = vunpack.c.h.b16 %v5885
    %v6023 = vunpack.c.l.b16 %v5886
    %v6024 = vunpack.c.h.b16 %v5886
    %v6025 = vunpack.c.l.b16 %v5887
    %v6026 = vunpack.c.h.b16 %v5887
    %v6027 = vunpack.c.l.b16 %v5888
    %v6028 = vunpack.c.h.b16 %v5888
    %v6029 = vunpack.c.l.b16 %v5889
    %v6030 = vunpack.c.h.b16 %v5889
    %v6031 = vunpack.c.l.b16 %v5890
    %v6032 = vunpack.c.h.b16 %v5890
    %v6033 = vunpack.c.l.b16 %v5891
    %v6034 = vunpack.c.h.b16 %v5891
    %v6035 = vunpack.c.l.b16 %v5892
    %v6036 = vunpack.c.h.b16 %v5892
    %v6037 = vunpack.c.l.b16 %v5893
    %v6038 = vunpack.c.h.b16 %v5893
    %v6039 = vunpack.c.l.b16 %v5894
    %v6040 = vunpack.c.h.b16 %v5894
    %v6041 = vunpack.c.l.b16 %v5895
    %v6042 = vunpack.c.h.b16 %v5895
    %v6043 = vunpack.c.l.b16 %v5896
    %v6044 = vunpack.c.h.b16 %v5896
    %v6045 = vunpack.c.l.b16 %v5897
    %v6046 = vunpack.c.h.b16 %v5897
    %v6047 = vunpack.c.l.b16 %v5898
    %v6048 = vunpack.c.h.b16 %v5898
    %v6049 = vunpack.c.l.b16 %v5899
    %v6050 = vunpack.c.h.b16 %v5899
    %v6051 = vunpack.c.l.b16 %v5900
    %v6052 = vunpack.c.h.b16 %v5900
    %v6053 = vunpack.c.l.b16 %v5901
    %v6054 = vunpack.c.h.b16 %v5901
    %v6055 = vunpack.c.l.b16 %v5902
    %v6056 = vunpack.c.h.b16 %v5902
    %v6057 = vunpack.c.l.b16 %v5903
    %v6058 = vunpack.c.h.b16 %v5903
    %v6059 = vunpack.c.l.b16 %v5904
    %v6060 = vunpack.c.h.b16 %v5904
    %v6061 = vunpack.c.l.b16 %v5905
    %v6062 = vunpack.c.h.b16 %v5905
    %v6063 = vunpack.c.l.b16 %v5906
    %v6064 = vunpack.c.h.b16 %v5906
    %v6065 = vunpack.c.l.b16 %v5907
    %v6066 = vunpack.c.h.b16 %v5907
    %v6067 = vunpack.c.l.b16 %v5908
    %v6068 = vunpack.c.h.b16 %v5908
    %v6069 = vunpack.c.l.b16 %v5909
    %v6070 = vunpack.c.h.b16 %v5909
    %v6071 = vunpack.c.l.b16 %v5910
    %v6072 = vunpack.c.h.b16 %v5910
    %v6073 = vunpack.c.l.b16 %v5911
    %v6074 = vunpack.c.h.b16 %v5911
    %v6075 = vunpack.c.l.b16 %v5912
    %v6076 = vunpack.c.h.b16 %v5912
    %v6077 = vunpack.c.l.b16 %v5913
    %v6078 = vunpack.c.h.b16 %v5913
    %v6079 = vunpack.c.l.b16 %v5914
    %v6080 = vunpack.c.h.b16 %v5914
    %v6081 = vunpack.c.l.b16 %v5915
    %v6082 = vunpack.c.h.b16 %v5915
    %v6083 = vunpack.c.l.b16 %v5916
    %v6084 = vunpack.c.h.b16 %v5916
    %v6085 = vunpack.c.l.b16 %v5917
    %v6086 = vunpack.c.h.b16 %v5917
    %v6087 = vunpack.c.l.b16 %v5918
    %v6088 = vunpack.c.h.b16 %v5918
    %v6089 = vunpack.c.l.b16 %v5919
    %v6090 = vunpack.c.h.b16 %v5919
    %v6091 = vunpack.c.l.b16 %v5920
    %v6092 = vunpack.c.h.b16 %v5920
    %v6093 = vunpack.c.l.b16 %v5921
    %v6094 = vunpack.c.h.b16 %v5921
    %v6095 = vunpack.c.l.b16 %v5922
    %v6096 = vunpack.c.h.b16 %v5922
    %v6097 = vunpack.c.l.b16 %v5923
    %v6098 = vunpack.c.h.b16 %v5923
    %v6099 = vunpack.c.l.b16 %v5924
    %v6100 = vunpack.c.h.b16 %v5924
    %v6101 = vunpack.c.l.b16 %v5925
    %v6102 = vunpack.c.h.b16 %v5925
    %v6103 = vunpack.c.l.b16 %v5926
    %v6104 = vunpack.c.h.b16 %v5926
    %v6105 = vunpack.c.l.b16 %v5927
    %v6106 = vunpack.c.h.b16 %v5927
    %v6107 = vunpack.c.l.b16 %v5928
    %v6108 = vunpack.c.h.b16 %v5928
    %v6109 = vunpack.c.l.b16 %v5929
    %v6110 = vunpack.c.h.b16 %v5929
    %v6111 = vunpack.c.l.b16 %v5930
    %v6112 = vunpack.c.h.b16 %v5930
    %v6113 = vunpack.c.l.b16 %v5931
    %v6114 = vunpack.c.h.b16 %v5931
    %v6115 = vunpack.c.l.b16 %v5932
    %v6116 = vunpack.c.h.b16 %v5932
    %v6117 = vunpack.c.l.b16 %v5933
    %v6118 = vunpack.c.h.b16 %v5933
    %v6119 = vunpack.c.l.b16 %v5934
    %v6120 = vunpack.c.h.b16 %v5934
    %v6121 = vunpack.c.l.b16 %v5935
    %v6122 = vunpack.c.h.b16 %v5935
    %v6123 = vunpack.c.l.b16 %v5936
    %v6124 = vunpack.c.h.b16 %v5936
    %v6125 = vunpack.c.l.b16 %v5937
    %v6126 = vunpack.c.h.b16 %v5937
    %v6127 = vunpack.c.l.b16 %v5938
    %v6128 = vunpack.c.h.b16 %v5938
    %v6129 = vunpack.c.l.b16 %v5939
    %v6130 = vunpack.c.h.b16 %v5939
    %v6131 = vunpack.c.l.b16 %v5940
    %v6132 = vunpack.c.h.b16 %v5940
    %v6133 = vunpack.c.l.b16 %v5941
    %v6134 = vunpack.c.h.b16 %v5941
    %v6135 = vunpack.c.l.b16 %v5942
    %v6136 = vunpack.c.h.b16 %v5942
    %v6137 = vunpack.c.l.b16 %v5943
    %v6138 = vunpack.c.h.b16 %v5943
    %v6139 = vunpack.c.l.b16 %v5944
    %v6140 = vunpack.c.h.b16 %v5944
    %v6141 = vunpack.c.l.b16 %v5945
    %v6142 = vunpack.c.h.b16 %v5945
    %v6143 = vunpack.c.l.b16 %v5946
    %v6144 = vunpack.c.h.b16 %v5946
    %v6145 = vunpack.c.l.b16 %v5947
    %v6146 = vunpack.c.h.b16 %v5947
    %v6147 = vpack.c.b16 %v6023, %v6019
    %v6148 = vpack.c.b16 %v6024, %v6020
    %v6149 = vpack.c.b16 %v6025, %v6021
    %v6150 = vpack.c.b16 %v6026, %v6022
    %v6151 = vpack.c.b16 %v6031, %v6027
    %v6152 = vpack.c.b16 %v6032, %v6028
    %v6153 = vpack.c.b16 %v6033, %v6029
    %v6154 = vpack.c.b16 %v6034, %v6030
    %v6155 = vpack.c.b16 %v6039, %v6035
    %v6156 = vpack.c.b16 %v6040, %v6036
    %v6157 = vpack.c.b16 %v6041, %v6037
    %v6158 = vpack.c.b16 %v6042, %v6038
    %v6159 = vpack.c.b16 %v6047, %v6043
    %v6160 = vpack.c.b16 %v6048, %v6044
    %v6161 = vpack.c.b16 %v6049, %v6045
    %v6162 = vpack.c.b16 %v6050, %v6046
    %v6163 = vpack.c.b16 %v6055, %v6051
    %v6164 = vpack.c.b16 %v6056, %v6052
    %v6165 = vpack.c.b16 %v6057, %v6053
    %v6166 = vpack.c.b16 %v6058, %v6054
    %v6167 = vpack.c.b16 %v6063, %v6059
    %v6168 = vpack.c.b16 %v6064, %v6060
    %v6169 = vpack.c.b16 %v6065, %v6061
    %v6170 = vpack.c.b16 %v6066, %v6062
    %v6171 = vpack.c.b16 %v6071, %v6067
    %v6172 = vpack.c.b16 %v6072, %v6068
    %v6173 = vpack.c.b16 %v6073, %v6069
    %v6174 = vpack.c.b16 %v6074, %v6070
    %v6175 = vpack.c.b16 %v6079, %v6075
    %v6176 = vpack.c.b16 %v6080, %v6076
    %v6177 = vpack.c.b16 %v6081, %v6077
    %v6178 = vpack.c.b16 %v6082, %v6078
    %v6179 = vpack.c.b16 %v6087, %v6083
    %v6180 = vpack.c.b16 %v6088, %v6084
    %v6181 = vpack.c.b16 %v6089, %v6085
    %v6182 = vpack.c.b16 %v6090, %v6086
    %v6183 = vpack.c.b16 %v6095, %v6091
    %v6184 = vpack.c.b16 %v6096, %v6092
    %v6185 = vpack.c.b16 %v6097, %v6093
    %v6186 = vpack.c.b16 %v6098, %v6094
    %v6187 = vpack.c.b16 %v6103, %v6099
    %v6188 = vpack.c.b16 %v6104, %v6100
    %v6189 = vpack.c.b16 %v6105, %v6101
    %v6190 = vpack.c.b16 %v6106, %v6102
    %v6191 = vpack.c.b16 %v6111, %v6107
    %v6192 = vpack.c.b16 %v6112, %v6108
    %v6193 = vpack.c.b16 %v6113, %v6109
    %v6194 = vpack.c.b16 %v6114, %v6110
    %v6195 = vpack.c.b16 %v6119, %v6115
    %v6196 = vpack.c.b16 %v6120, %v6116
    %v6197 = vpack.c.b16 %v6121, %v6117
    %v6198 = vpack.c.b16 %v6122, %v6118
    %v6199 = vpack.c.b16 %v6127, %v6123
    %v6200 = vpack.c.b16 %v6128, %v6124
    %v6201 = vpack.c.b16 %v6129, %v6125
    %v6202 = vpack.c.b16 %v6130, %v6126
    %v6203 = vpack.c.b16 %v6135, %v6131
    %v6204 = vpack.c.b16 %v6136, %v6132
    %v6205 = vpack.c.b16 %v6137, %v6133
    %v6206 = vpack.c.b16 %v6138, %v6134
    %v6207 = vpack.c.b16 %v6143, %v6139
    %v6208 = vpack.c.b16 %v6144, %v6140
    %v6209 = vpack.c.b16 %v6145, %v6141
    %v6210 = vpack.c.b16 %v6146, %v6142
    %6275 = vmatpush.bf16.msra.mxu0 %v6175
    %6276 = vmatpush.bf16.msra.mxu0 %v6171
    %6277 = vmatpush.bf16.msra.mxu0 %v6167
    %6278 = vmatpush.bf16.msra.mxu0 %v6163
    %6279 = vmatpush.bf16.msra.mxu0 %v6159
    %6280 = vmatpush.bf16.msra.mxu0 %v6155
    %6281 = vmatpush.bf16.msra.mxu0 %v6151
    %6282 = vmatpush.bf16.msra.mxu0 %v6147
    %6283 = vmatmul.bf16.gmra.mxu0 %v5951
    %v6284 = vpop.f32.mrf.mxu0
    %v6285 = vadd.f32 %v290, %v6284
    %v6286 = vpop.f32.mrf.mxu0
    %6287 = vdwg.mxu0
    %6288 = vmatpush.bf16.msra.mxu0 %v6207
    %6289 = vmatpush.bf16.msra.mxu0 %v6203
    %6290 = vmatpush.bf16.msra.mxu0 %v6199
    %6291 = vmatpush.bf16.msra.mxu0 %v6195
    %6292 = vmatpush.bf16.msra.mxu0 %v6191
    %6293 = vmatpush.bf16.msra.mxu0 %v6187
    %6294 = vmatpush.bf16.msra.mxu0 %v6183
    %6295 = vmatpush.bf16.msra.mxu0 %v6179
    %6296 = vmatmul.bf16.gmra.mxu0 %v5952
    %v6297 = vpop.f32.mrf.mxu0
    %v6298 = vadd.f32 %v6285, %v6297
    %v6299 = vpop.f32.mrf.mxu0
    %6300 = vdwg.mxu0
    %6301 = vmatpush.bf16.msra.mxu0 %v6176
    %6302 = vmatpush.bf16.msra.mxu0 %v6172
    %6303 = vmatpush.bf16.msra.mxu0 %v6168
    %6304 = vmatpush.bf16.msra.mxu0 %v6164
    %6305 = vmatpush.bf16.msra.mxu0 %v6160
    %6306 = vmatpush.bf16.msra.mxu0 %v6156
    %6307 = vmatpush.bf16.msra.mxu0 %v6152
    %6308 = vmatpush.bf16.msra.mxu0 %v6148
    %6309 = vmatmul.bf16.gmra.mxu0 %v5951
    %v6310 = vpop.f32.mrf.mxu0
    %v6311 = vadd.f32 %v291, %v6310
    %v6312 = vpop.f32.mrf.mxu0
    %6313 = vdwg.mxu0
    %6314 = vmatpush.bf16.msra.mxu0 %v6208
    %6315 = vmatpush.bf16.msra.mxu0 %v6204
    %6316 = vmatpush.bf16.msra.mxu0 %v6200
    %6317 = vmatpush.bf16.msra.mxu0 %v6196
    %6318 = vmatpush.bf16.msra.mxu0 %v6192
    %6319 = vmatpush.bf16.msra.mxu0 %v6188
    %6320 = vmatpush.bf16.msra.mxu0 %v6184
    %6321 = vmatpush.bf16.msra.mxu0 %v6180
    %6322 = vmatmul.bf16.gmra.mxu0 %v5952
    %v6323 = vpop.f32.mrf.mxu0
    %v6324 = vadd.f32 %v6311, %v6323
    %v6325 = vpop.f32.mrf.mxu0
    %6326 = vdwg.mxu0
    %6327 = vmatpush.bf16.msra.mxu0 %v6177
    %6328 = vmatpush.bf16.msra.mxu0 %v6173
    %6329 = vmatpush.bf16.msra.mxu0 %v6169
    %6330 = vmatpush.bf16.msra.mxu0 %v6165
    %6331 = vmatpush.bf16.msra.mxu0 %v6161
    %6332 = vmatpush.bf16.msra.mxu0 %v6157
    %6333 = vmatpush.bf16.msra.mxu0 %v6153
    %6334 = vmatpush.bf16.msra.mxu0 %v6149
    %6335 = vmatmul.bf16.gmra.mxu0 %v5951
    %v6336 = vpop.f32.mrf.mxu0
    %v6337 = vadd.f32 %v292, %v6336
    %v6338 = vpop.f32.mrf.mxu0
    %6339 = vdwg.mxu0
    %6340 = vmatpush.bf16.msra.mxu0 %v6209
    %6341 = vmatpush.bf16.msra.mxu0 %v6205
    %6342 = vmatpush.bf16.msra.mxu0 %v6201
    %6343 = vmatpush.bf16.msra.mxu0 %v6197
    %6344 = vmatpush.bf16.msra.mxu0 %v6193
    %6345 = vmatpush.bf16.msra.mxu0 %v6189
    %6346 = vmatpush.bf16.msra.mxu0 %v6185
    %6347 = vmatpush.bf16.msra.mxu0 %v6181
    %6348 = vmatmul.bf16.gmra.mxu0 %v5952
    %v6349 = vpop.f32.mrf.mxu0
    %v6350 = vadd.f32 %v6337, %v6349
    %v6351 = vpop.f32.mrf.mxu0
    %6352 = vdwg.mxu0
    %6353 = vmatpush.bf16.msra.mxu0 %v6178
    %6354 = vmatpush.bf16.msra.mxu0 %v6174
    %6355 = vmatpush.bf16.msra.mxu0 %v6170
    %6356 = vmatpush.bf16.msra.mxu0 %v6166
    %6357 = vmatpush.bf16.msra.mxu0 %v6162
    %6358 = vmatpush.bf16.msra.mxu0 %v6158
    %6359 = vmatpush.bf16.msra.mxu0 %v6154
    %6360 = vmatpush.bf16.msra.mxu0 %v6150
    %6361 = vmatmul.bf16.gmra.mxu0 %v5951
    %v6362 = vpop.f32.mrf.mxu0
    %v6363 = vadd.f32 %v293, %v6362
    %v6364 = vpop.f32.mrf.mxu0
    %6365 = vdwg.mxu0
    %6366 = vmatpush.bf16.msra.mxu0 %v6210
    %6367 = vmatpush.bf16.msra.mxu0 %v6206
    %6368 = vmatpush.bf16.msra.mxu0 %v6202
    %6369 = vmatpush.bf16.msra.mxu0 %v6198
    %6370 = vmatpush.bf16.msra.mxu0 %v6194
    %6371 = vmatpush.bf16.msra.mxu0 %v6190
    %6372 = vmatpush.bf16.msra.mxu0 %v6186
    %6373 = vmatpush.bf16.msra.mxu0 %v6182
    %6374 = vmatmul.bf16.gmra.mxu0 %v5952
    %v6375 = vpop.f32.mrf.mxu0
    %v6376 = vadd.f32 %v6363, %v6375
    %v6377 = vpop.f32.mrf.mxu0
    %6378 = vdwg.mxu0
    %v6379 = vxor.u32 %v6298, 2147483648
    %v6380 = vxor.u32 %v6324, 2147483648
    %v6381 = vmul.f32 %v6379, 1.442695
    %v6382 = vpow.pop %v6381
    %v6383 = vmul.f32 %v6380, 1.442695
    %v6384 = vpow.pop %v6383
    %v6385 = vadd.f32 %v6382, 1.0
    %v6386 = vadd.f32 %v6384, 1.0
    %v6387 = vrcp.pop %v6385
    %v6388 = vmul.f32 %v6385, %v6387
    %v6389 = vsub.f32 1.0, %v6388
    %v6390 = vmul.f32 %v6387, %v6389
    %v6391 = vadd.f32 %v6387, %v6390
    %vm6392 = vweird.f32 %v6385
    %vm6393 = vweird.f32 %v6387
    %vm6394 = vmor %vm6392, %vm6393
    %v6395 = vsel %vm6394, %v6387, %v6391
    %v6396 = vand.u32 2147483647, %v6385
    %vm6397 = vcmp.eq.f32.partialorder %v6396, 8.507059e+37
    %v6398 = vand.u32 %v6385, 2147483648
    %v6399 = vor.u32 1.1754944e-38, %v6398
    %v6400 = vsel %vm6397, %v6399, %v6395
    %v6401 = vmul.f32 1.0, %v6400
    %v6402 = vrcp.pop %v6386
    %v6403 = vmul.f32 %v6386, %v6402
    %v6404 = vsub.f32 1.0, %v6403
    %v6405 = vmul.f32 %v6402, %v6404
    %v6406 = vadd.f32 %v6402, %v6405
    %vm6407 = vweird.f32 %v6386
    %vm6408 = vweird.f32 %v6402
    %vm6409 = vmor %vm6407, %vm6408
    %v6410 = vsel %vm6409, %v6402, %v6406
    %v6411 = vand.u32 2147483647, %v6386
    %vm6412 = vcmp.eq.f32.partialorder %v6411, 8.507059e+37
    %v6413 = vand.u32 %v6386, 2147483648
    %v6414 = vor.u32 1.1754944e-38, %v6413
    %v6415 = vsel %vm6412, %v6414, %v6410
    %v6416 = vmul.f32 1.0, %v6415
    %v6417 = vtanh.pop %v6350
    %v6418 = vxor.u32 %v6376, 2147483648
    %v6419 = vmul.f32 %v6418, 1.442695
    %v6420 = vpow.pop %v6419
    %v6421 = vadd.f32 %v6420, 1.0
    %v6422 = vrcp.pop %v6421
    %v6423 = vmul.f32 %v6421, %v6422
    %v6424 = vsub.f32 1.0, %v6423
    %v6425 = vmul.f32 %v6422, %v6424
    %v6426 = vadd.f32 %v6422, %v6425
    %vm6427 = vweird.f32 %v6421
    %vm6428 = vweird.f32 %v6422
    %vm6429 = vmor %vm6427, %vm6428
    %v6430 = vsel %vm6429, %v6422, %v6426
    %v6431 = vand.u32 2147483647, %v6421
    %vm6432 = vcmp.eq.f32.partialorder %v6431, 8.507059e+37
    %v6433 = vand.u32 %v6421, 2147483648
    %v6434 = vor.u32 1.1754944e-38, %v6433
    %v6435 = vsel %vm6432, %v6434, %v6430
    %v6436 = vmul.f32 1.0, %v6435
    %v6437 = vmul.f32 %v6416, %v5561
    %v6438 = vmul.f32 %v6401, %v6417
    %v6439 = vadd.f32 %v6437, %v6438
    %v6440 = vtanh.pop %v6439
    %v6441 = vmul.f32 %v6436, %v6440
    %v6442 = vpack.c.bf16 %v6441, %v6441
    %6443 = vst [vmem:[#allocation3 + $0x4] sm:$0xf] %v6442
    %v6444 = vld [vmem:[#allocation2 + $0xe0] sm:$0xff]
    %v6445 = vld [vmem:[#allocation2 + $0xe8] sm:$0xff]
    %v6446 = vld [vmem:[#allocation2 + $0xf0] sm:$0xff]
    %v6447 = vld [vmem:[#allocation2 + $0xf8] sm:$0xff]
    %v6448 = vld [vmem:[#allocation5] sm:$0xff]
    %v6449 = vld [vmem:[#allocation5 + $0x8] sm:$0xff]
    %v6450 = vld [vmem:[#allocation5 + $0x10] sm:$0xff]
    %v6451 = vld [vmem:[#allocation5 + $0x18] sm:$0xff]
    %v6452 = vld [vmem:[#allocation5 + $0x20] sm:$0xff]
    %v6453 = vld [vmem:[#allocation5 + $0x28] sm:$0xff]
    %v6454 = vld [vmem:[#allocation5 + $0x30] sm:$0xff]
    %v6455 = vld [vmem:[#allocation5 + $0x38] sm:$0xff]
    %v6456 = vld [vmem:[#allocation5 + $0x40] sm:$0xff]
    %v6457 = vld [vmem:[#allocation5 + $0x48] sm:$0xff]
    %v6458 = vld [vmem:[#allocation5 + $0x50] sm:$0xff]
    %v6459 = vld [vmem:[#allocation5 + $0x58] sm:$0xff]
    %v6460 = vld [vmem:[#allocation5 + $0x60] sm:$0xff]
    %v6461 = vld [vmem:[#allocation5 + $0x68] sm:$0xff]
    %v6462 = vld [vmem:[#allocation5 + $0x70] sm:$0xff]
    %v6463 = vld [vmem:[#allocation5 + $0x78] sm:$0xff]
    %v6464 = vld [vmem:[#allocation5 + $0x80] sm:$0xff]
    %v6465 = vld [vmem:[#allocation5 + $0x88] sm:$0xff]
    %v6466 = vld [vmem:[#allocation5 + $0x90] sm:$0xff]
    %v6467 = vld [vmem:[#allocation5 + $0x98] sm:$0xff]
    %v6468 = vld [vmem:[#allocation5 + $0xa0] sm:$0xff]
    %v6469 = vld [vmem:[#allocation5 + $0xa8] sm:$0xff]
    %v6470 = vld [vmem:[#allocation5 + $0xb0] sm:$0xff]
    %v6471 = vld [vmem:[#allocation5 + $0xb8] sm:$0xff]
    %v6472 = vld [vmem:[#allocation5 + $0xc0] sm:$0xff]
    %v6473 = vld [vmem:[#allocation5 + $0xc8] sm:$0xff]
    %v6474 = vld [vmem:[#allocation5 + $0xd0] sm:$0xff]
    %v6475 = vld [vmem:[#allocation5 + $0xd8] sm:$0xff]
    %v6476 = vld [vmem:[#allocation5 + $0xe0] sm:$0xff]
    %v6477 = vld [vmem:[#allocation5 + $0xe8] sm:$0xff]
    %v6478 = vld [vmem:[#allocation5 + $0xf0] sm:$0xff]
    %v6479 = vld [vmem:[#allocation5 + $0xf8] sm:$0xff]
    %v6512 = vunpack.c.l.b16 %v6448
    %v6513 = vunpack.c.h.b16 %v6448
    %v6514 = vunpack.c.l.b16 %v6449
    %v6515 = vunpack.c.h.b16 %v6449
    %v6516 = vunpack.c.l.b16 %v6450
    %v6517 = vunpack.c.h.b16 %v6450
    %v6518 = vunpack.c.l.b16 %v6451
    %v6519 = vunpack.c.h.b16 %v6451
    %v6520 = vunpack.c.l.b16 %v6452
    %v6521 = vunpack.c.h.b16 %v6452
    %v6522 = vunpack.c.l.b16 %v6453
    %v6523 = vunpack.c.h.b16 %v6453
    %v6524 = vunpack.c.l.b16 %v6454
    %v6525 = vunpack.c.h.b16 %v6454
    %v6526 = vunpack.c.l.b16 %v6455
    %v6527 = vunpack.c.h.b16 %v6455
    %v6528 = vunpack.c.l.b16 %v6456
    %v6529 = vunpack.c.h.b16 %v6456
    %v6530 = vunpack.c.l.b16 %v6457
    %v6531 = vunpack.c.h.b16 %v6457
    %v6532 = vunpack.c.l.b16 %v6458
    %v6533 = vunpack.c.h.b16 %v6458
    %v6534 = vunpack.c.l.b16 %v6459
    %v6535 = vunpack.c.h.b16 %v6459
    %v6536 = vunpack.c.l.b16 %v6460
    %v6537 = vunpack.c.h.b16 %v6460
    %v6538 = vunpack.c.l.b16 %v6461
    %v6539 = vunpack.c.h.b16 %v6461
    %v6540 = vunpack.c.l.b16 %v6462
    %v6541 = vunpack.c.h.b16 %v6462
    %v6542 = vunpack.c.l.b16 %v6463
    %v6543 = vunpack.c.h.b16 %v6463
    %v6544 = vunpack.c.l.b16 %v6464
    %v6545 = vunpack.c.h.b16 %v6464
    %v6546 = vunpack.c.l.b16 %v6465
    %v6547 = vunpack.c.h.b16 %v6465
    %v6548 = vunpack.c.l.b16 %v6466
    %v6549 = vunpack.c.h.b16 %v6466
    %v6550 = vunpack.c.l.b16 %v6467
    %v6551 = vunpack.c.h.b16 %v6467
    %v6552 = vunpack.c.l.b16 %v6468
    %v6553 = vunpack.c.h.b16 %v6468
    %v6554 = vunpack.c.l.b16 %v6469
    %v6555 = vunpack.c.h.b16 %v6469
    %v6556 = vunpack.c.l.b16 %v6470
    %v6557 = vunpack.c.h.b16 %v6470
    %v6558 = vunpack.c.l.b16 %v6471
    %v6559 = vunpack.c.h.b16 %v6471
    %v6560 = vunpack.c.l.b16 %v6472
    %v6561 = vunpack.c.h.b16 %v6472
    %v6562 = vunpack.c.l.b16 %v6473
    %v6563 = vunpack.c.h.b16 %v6473
    %v6564 = vunpack.c.l.b16 %v6474
    %v6565 = vunpack.c.h.b16 %v6474
    %v6566 = vunpack.c.l.b16 %v6475
    %v6567 = vunpack.c.h.b16 %v6475
    %v6568 = vunpack.c.l.b16 %v6476
    %v6569 = vunpack.c.h.b16 %v6476
    %v6570 = vunpack.c.l.b16 %v6477
    %v6571 = vunpack.c.h.b16 %v6477
    %v6572 = vunpack.c.l.b16 %v6478
    %v6573 = vunpack.c.h.b16 %v6478
    %v6574 = vunpack.c.l.b16 %v6479
    %v6575 = vunpack.c.h.b16 %v6479
    %v6576 = vpack.c.b16 %v6516, %v6512
    %v6577 = vpack.c.b16 %v6517, %v6513
    %v6578 = vpack.c.b16 %v6518, %v6514
    %v6579 = vpack.c.b16 %v6519, %v6515
    %v6580 = vpack.c.b16 %v6524, %v6520
    %v6581 = vpack.c.b16 %v6525, %v6521
    %v6582 = vpack.c.b16 %v6526, %v6522
    %v6583 = vpack.c.b16 %v6527, %v6523
    %v6584 = vpack.c.b16 %v6532, %v6528
    %v6585 = vpack.c.b16 %v6533, %v6529
    %v6586 = vpack.c.b16 %v6534, %v6530
    %v6587 = vpack.c.b16 %v6535, %v6531
    %v6588 = vpack.c.b16 %v6540, %v6536
    %v6589 = vpack.c.b16 %v6541, %v6537
    %v6590 = vpack.c.b16 %v6542, %v6538
    %v6591 = vpack.c.b16 %v6543, %v6539
    %v6592 = vpack.c.b16 %v6548, %v6544
    %v6593 = vpack.c.b16 %v6549, %v6545
    %v6594 = vpack.c.b16 %v6550, %v6546
    %v6595 = vpack.c.b16 %v6551, %v6547
    %v6596 = vpack.c.b16 %v6556, %v6552
    %v6597 = vpack.c.b16 %v6557, %v6553
    %v6598 = vpack.c.b16 %v6558, %v6554
    %v6599 = vpack.c.b16 %v6559, %v6555
    %v6600 = vpack.c.b16 %v6564, %v6560
    %v6601 = vpack.c.b16 %v6565, %v6561
    %v6602 = vpack.c.b16 %v6566, %v6562
    %v6603 = vpack.c.b16 %v6567, %v6563
    %v6604 = vpack.c.b16 %v6572, %v6568
    %v6605 = vpack.c.b16 %v6573, %v6569
    %v6606 = vpack.c.b16 %v6574, %v6570
    %v6607 = vpack.c.b16 %v6575, %v6571
    %6640 = vmatpush.bf16.msra.mxu0 %v6604
    %6641 = vmatpush.bf16.msra.mxu0 %v6600
    %6642 = vmatpush.bf16.msra.mxu0 %v6596
    %6643 = vmatpush.bf16.msra.mxu0 %v6592
    %6644 = vmatpush.bf16.msra.mxu0 %v6588
    %6645 = vmatpush.bf16.msra.mxu0 %v6584
    %6646 = vmatpush.bf16.msra.mxu0 %v6580
    %6647 = vmatpush.bf16.msra.mxu0 %v6576
    %6648 = vmatmul.bf16.gmra.mxu0 %v5881
    %v6649 = vpop.f32.mrf.mxu0
    %v6650 = vadd.f32 0.0, %v6649
    %v6651 = vpop.f32.mrf.mxu0
    %6652 = vdwg.mxu0
    %6653 = vmatpush.bf16.msra.mxu0 %v6605
    %6654 = vmatpush.bf16.msra.mxu0 %v6601
    %6655 = vmatpush.bf16.msra.mxu0 %v6597
    %6656 = vmatpush.bf16.msra.mxu0 %v6593
    %6657 = vmatpush.bf16.msra.mxu0 %v6589
    %6658 = vmatpush.bf16.msra.mxu0 %v6585
    %6659 = vmatpush.bf16.msra.mxu0 %v6581
    %6660 = vmatpush.bf16.msra.mxu0 %v6577
    %6661 = vmatmul.bf16.gmra.mxu0 %v5881
    %v6662 = vpop.f32.mrf.mxu0
    %v6663 = vadd.f32 0.0, %v6662
    %v6664 = vpop.f32.mrf.mxu0
    %6665 = vdwg.mxu0
    %6666 = vmatpush.bf16.msra.mxu0 %v6606
    %6667 = vmatpush.bf16.msra.mxu0 %v6602
    %6668 = vmatpush.bf16.msra.mxu0 %v6598
    %6669 = vmatpush.bf16.msra.mxu0 %v6594
    %6670 = vmatpush.bf16.msra.mxu0 %v6590
    %6671 = vmatpush.bf16.msra.mxu0 %v6586
    %6672 = vmatpush.bf16.msra.mxu0 %v6582
    %6673 = vmatpush.bf16.msra.mxu0 %v6578
    %6674 = vmatmul.bf16.gmra.mxu0 %v5881
    %v6675 = vpop.f32.mrf.mxu0
    %v6676 = vadd.f32 0.0, %v6675
    %v6677 = vpop.f32.mrf.mxu0
    %6678 = vdwg.mxu0
    %6679 = vmatpush.bf16.msra.mxu0 %v6607
    %6680 = vmatpush.bf16.msra.mxu0 %v6603
    %6681 = vmatpush.bf16.msra.mxu0 %v6599
    %6682 = vmatpush.bf16.msra.mxu0 %v6595
    %6683 = vmatpush.bf16.msra.mxu0 %v6591
    %6684 = vmatpush.bf16.msra.mxu0 %v6587
    %6685 = vmatpush.bf16.msra.mxu0 %v6583
    %6686 = vmatpush.bf16.msra.mxu0 %v6579
    %6687 = vmatmul.bf16.gmra.mxu0 %v5881
    %v6688 = vpop.f32.mrf.mxu0
    %v6689 = vadd.f32 0.0, %v6688
    %v6690 = vpop.f32.mrf.mxu0
    %6691 = vdwg.mxu0
    %v6692 = vadd.f32 %v6444, %v6650
    %v6693 = vadd.f32 %v6445, %v6663
    %v6694 = vadd.f32 %v6446, %v6676
    %v6695 = vadd.f32 %v6447, %v6689
    %v6696 = vxor.u32 %v6692, 2147483648
    %v6697 = vxor.u32 %v6693, 2147483648
    %v6698 = vmul.f32 %v6696, 1.442695
    %v6699 = vpow.pop %v6698
    %v6700 = vmul.f32 %v6697, 1.442695
    %v6701 = vpow.pop %v6700
    %v6702 = vadd.f32 %v6699, 1.0
    %v6703 = vadd.f32 %v6701, 1.0
    %v6704 = vrcp.pop %v6702
    %v6705 = vmul.f32 %v6702, %v6704
    %v6706 = vsub.f32 1.0, %v6705
    %v6707 = vmul.f32 %v6704, %v6706
    %v6708 = vadd.f32 %v6704, %v6707
    %vm6709 = vweird.f32 %v6702
    %vm6710 = vweird.f32 %v6704
    %vm6711 = vmor %vm6709, %vm6710
    %v6712 = vsel %vm6711, %v6704, %v6708
    %v6713 = vand.u32 2147483647, %v6702
    %vm6714 = vcmp.eq.f32.partialorder %v6713, 8.507059e+37
    %v6715 = vand.u32 %v6702, 2147483648
    %v6716 = vor.u32 1.1754944e-38, %v6715
    %v6717 = vsel %vm6714, %v6716, %v6712
    %v6718 = vmul.f32 1.0, %v6717
    %v6719 = vrcp.pop %v6703
    %v6720 = vmul.f32 %v6703, %v6719
    %v6721 = vsub.f32 1.0, %v6720
    %v6722 = vmul.f32 %v6719, %v6721
    %v6723 = vadd.f32 %v6719, %v6722
    %vm6724 = vweird.f32 %v6703
    %vm6725 = vweird.f32 %v6719
    %vm6726 = vmor %vm6724, %vm6725
    %v6727 = vsel %vm6726, %v6719, %v6723
    %v6728 = vand.u32 2147483647, %v6703
    %vm6729 = vcmp.eq.f32.partialorder %v6728, 8.507059e+37
    %v6730 = vand.u32 %v6703, 2147483648
    %v6731 = vor.u32 1.1754944e-38, %v6730
    %v6732 = vsel %vm6729, %v6731, %v6727
    %v6733 = vmul.f32 1.0, %v6732
    %v6734 = vtanh.pop %v6694
    %v6735 = vxor.u32 %v6695, 2147483648
    %v6736 = vmul.f32 %v6735, 1.442695
    %v6737 = vpow.pop %v6736
    %v6738 = vadd.f32 %v6737, 1.0
    %v6739 = vrcp.pop %v6738
    %v6740 = vmul.f32 %v6738, %v6739
    %v6741 = vsub.f32 1.0, %v6740
    %v6742 = vmul.f32 %v6739, %v6741
    %v6743 = vadd.f32 %v6739, %v6742
    %vm6744 = vweird.f32 %v6738
    %vm6745 = vweird.f32 %v6739
    %vm6746 = vmor %vm6744, %vm6745
    %v6747 = vsel %vm6746, %v6739, %v6743
    %v6748 = vand.u32 2147483647, %v6738
    %vm6749 = vcmp.eq.f32.partialorder %v6748, 8.507059e+37
    %v6750 = vand.u32 %v6738, 2147483648
    %v6751 = vor.u32 1.1754944e-38, %v6750
    %v6752 = vsel %vm6749, %v6751, %v6747
    %v6753 = vmul.f32 1.0, %v6752
    %v6754 = vmul.f32 %v6733, %v5878
    %v6755 = vmul.f32 %v6718, %v6734
    %v6756 = vadd.f32 %v6754, %v6755
    %v6757 = vtanh.pop %v6756
    %v6758 = vmul.f32 %v6753, %v6757
    %v6759 = vpack.c.bf16 %v6758, %v6758
    %6760 = vst [vmem:[#allocation3] sm:$0xf] %v6759
    %v6761 = vld [vmem:[#allocation3] sm:$0xff]
    %v6762 = vld [vmem:[#allocation7] sm:$0xff]
    %v6763 = vld [vmem:[#allocation7 + $0x8] sm:$0xff]
    %v6764 = vld [vmem:[#allocation7 + $0x10] sm:$0xff]
    %v6765 = vld [vmem:[#allocation7 + $0x18] sm:$0xff]
    %v6766 = vld [vmem:[#allocation7 + $0x20] sm:$0xff]
    %v6767 = vld [vmem:[#allocation7 + $0x28] sm:$0xff]
    %v6768 = vld [vmem:[#allocation7 + $0x30] sm:$0xff]
    %v6769 = vld [vmem:[#allocation7 + $0x38] sm:$0xff]
    %v6770 = vld [vmem:[#allocation7 + $0x40] sm:$0xff]
    %v6771 = vld [vmem:[#allocation7 + $0x48] sm:$0xff]
    %v6772 = vld [vmem:[#allocation7 + $0x50] sm:$0xff]
    %v6773 = vld [vmem:[#allocation7 + $0x58] sm:$0xff]
    %v6774 = vld [vmem:[#allocation7 + $0x60] sm:$0xff]
    %v6775 = vld [vmem:[#allocation7 + $0x68] sm:$0xff]
    %v6776 = vld [vmem:[#allocation7 + $0x70] sm:$0xff]
    %v6777 = vld [vmem:[#allocation7 + $0x78] sm:$0xff]
    %v6778 = vld [vmem:[#allocation7 + $0x80] sm:$0xff]
    %v6779 = vld [vmem:[#allocation7 + $0x88] sm:$0xff]
    %v6780 = vld [vmem:[#allocation7 + $0x90] sm:$0xff]
    %v6781 = vld [vmem:[#allocation7 + $0x98] sm:$0xff]
    %v6782 = vld [vmem:[#allocation7 + $0xa0] sm:$0xff]
    %v6783 = vld [vmem:[#allocation7 + $0xa8] sm:$0xff]
    %v6784 = vld [vmem:[#allocation7 + $0xb0] sm:$0xff]
    %v6785 = vld [vmem:[#allocation7 + $0xb8] sm:$0xff]
    %v6786 = vld [vmem:[#allocation7 + $0xc0] sm:$0xff]
    %v6787 = vld [vmem:[#allocation7 + $0xc8] sm:$0xff]
    %v6788 = vld [vmem:[#allocation7 + $0xd0] sm:$0xff]
    %v6789 = vld [vmem:[#allocation7 + $0xd8] sm:$0xff]
    %v6790 = vld [vmem:[#allocation7 + $0xe0] sm:$0xff]
    %v6791 = vld [vmem:[#allocation7 + $0xe8] sm:$0xff]
    %v6792 = vld [vmem:[#allocation7 + $0xf0] sm:$0xff]
    %v6793 = vld [vmem:[#allocation7 + $0xf8] sm:$0xff]
    %v6794 = vld [vmem:[#allocation7 + $0x100] sm:$0xff]
    %v6795 = vld [vmem:[#allocation7 + $0x108] sm:$0xff]
    %v6796 = vld [vmem:[#allocation7 + $0x110] sm:$0xff]
    %v6797 = vld [vmem:[#allocation7 + $0x118] sm:$0xff]
    %v6798 = vld [vmem:[#allocation7 + $0x120] sm:$0xff]
    %v6799 = vld [vmem:[#allocation7 + $0x128] sm:$0xff]
    %v6800 = vld [vmem:[#allocation7 + $0x130] sm:$0xff]
    %v6801 = vld [vmem:[#allocation7 + $0x138] sm:$0xff]
    %v6802 = vld [vmem:[#allocation7 + $0x140] sm:$0xff]
    %v6803 = vld [vmem:[#allocation7 + $0x148] sm:$0xff]
    %v6804 = vld [vmem:[#allocation7 + $0x150] sm:$0xff]
    %v6805 = vld [vmem:[#allocation7 + $0x158] sm:$0xff]
    %v6806 = vld [vmem:[#allocation7 + $0x160] sm:$0xff]
    %v6807 = vld [vmem:[#allocation7 + $0x168] sm:$0xff]
    %v6808 = vld [vmem:[#allocation7 + $0x170] sm:$0xff]
    %v6809 = vld [vmem:[#allocation7 + $0x178] sm:$0xff]
    %v6810 = vld [vmem:[#allocation7 + $0x180] sm:$0xff]
    %v6811 = vld [vmem:[#allocation7 + $0x188] sm:$0xff]
    %v6812 = vld [vmem:[#allocation7 + $0x190] sm:$0xff]
    %v6813 = vld [vmem:[#allocation7 + $0x198] sm:$0xff]
    %v6814 = vld [vmem:[#allocation7 + $0x1a0] sm:$0xff]
    %v6815 = vld [vmem:[#allocation7 + $0x1a8] sm:$0xff]
    %v6816 = vld [vmem:[#allocation7 + $0x1b0] sm:$0xff]
    %v6817 = vld [vmem:[#allocation7 + $0x1b8] sm:$0xff]
    %v6818 = vld [vmem:[#allocation7 + $0x1c0] sm:$0xff]
    %v6819 = vld [vmem:[#allocation7 + $0x1c8] sm:$0xff]
    %v6820 = vld [vmem:[#allocation7 + $0x1d0] sm:$0xff]
    %v6821 = vld [vmem:[#allocation7 + $0x1d8] sm:$0xff]
    %v6822 = vld [vmem:[#allocation7 + $0x1e0] sm:$0xff]
    %v6823 = vld [vmem:[#allocation7 + $0x1e8] sm:$0xff]
    %v6824 = vld [vmem:[#allocation7 + $0x1f0] sm:$0xff]
    %v6825 = vld [vmem:[#allocation7 + $0x1f8] sm:$0xff]
    %v6827 = vunpack.c.l.b16 %v6761
    %v6828 = vunpack.c.h.b16 %v6761
    %v6829 = vpack.c.b16 %v6827, %v6827
    %v6830 = vpack.c.b16 %v6828, %v6828
    %v6897 = vunpack.c.l.b16 %v6762
    %v6898 = vunpack.c.h.b16 %v6762
    %v6899 = vunpack.c.l.b16 %v6763
    %v6900 = vunpack.c.h.b16 %v6763
    %v6901 = vunpack.c.l.b16 %v6764
    %v6902 = vunpack.c.h.b16 %v6764
    %v6903 = vunpack.c.l.b16 %v6765
    %v6904 = vunpack.c.h.b16 %v6765
    %v6905 = vunpack.c.l.b16 %v6766
    %v6906 = vunpack.c.h.b16 %v6766
    %v6907 = vunpack.c.l.b16 %v6767
    %v6908 = vunpack.c.h.b16 %v6767
    %v6909 = vunpack.c.l.b16 %v6768
    %v6910 = vunpack.c.h.b16 %v6768
    %v6911 = vunpack.c.l.b16 %v6769
    %v6912 = vunpack.c.h.b16 %v6769
    %v6913 = vunpack.c.l.b16 %v6770
    %v6914 = vunpack.c.h.b16 %v6770
    %v6915 = vunpack.c.l.b16 %v6771
    %v6916 = vunpack.c.h.b16 %v6771
    %v6917 = vunpack.c.l.b16 %v6772
    %v6918 = vunpack.c.h.b16 %v6772
    %v6919 = vunpack.c.l.b16 %v6773
    %v6920 = vunpack.c.h.b16 %v6773
    %v6921 = vunpack.c.l.b16 %v6774
    %v6922 = vunpack.c.h.b16 %v6774
    %v6923 = vunpack.c.l.b16 %v6775
    %v6924 = vunpack.c.h.b16 %v6775
    %v6925 = vunpack.c.l.b16 %v6776
    %v6926 = vunpack.c.h.b16 %v6776
    %v6927 = vunpack.c.l.b16 %v6777
    %v6928 = vunpack.c.h.b16 %v6777
    %v6929 = vunpack.c.l.b16 %v6778
    %v6930 = vunpack.c.h.b16 %v6778
    %v6931 = vunpack.c.l.b16 %v6779
    %v6932 = vunpack.c.h.b16 %v6779
    %v6933 = vunpack.c.l.b16 %v6780
    %v6934 = vunpack.c.h.b16 %v6780
    %v6935 = vunpack.c.l.b16 %v6781
    %v6936 = vunpack.c.h.b16 %v6781
    %v6937 = vunpack.c.l.b16 %v6782
    %v6938 = vunpack.c.h.b16 %v6782
    %v6939 = vunpack.c.l.b16 %v6783
    %v6940 = vunpack.c.h.b16 %v6783
    %v6941 = vunpack.c.l.b16 %v6784
    %v6942 = vunpack.c.h.b16 %v6784
    %v6943 = vunpack.c.l.b16 %v6785
    %v6944 = vunpack.c.h.b16 %v6785
    %v6945 = vunpack.c.l.b16 %v6786
    %v6946 = vunpack.c.h.b16 %v6786
    %v6947 = vunpack.c.l.b16 %v6787
    %v6948 = vunpack.c.h.b16 %v6787
    %v6949 = vunpack.c.l.b16 %v6788
    %v6950 = vunpack.c.h.b16 %v6788
    %v6951 = vunpack.c.l.b16 %v6789
    %v6952 = vunpack.c.h.b16 %v6789
    %v6953 = vunpack.c.l.b16 %v6790
    %v6954 = vunpack.c.h.b16 %v6790
    %v6955 = vunpack.c.l.b16 %v6791
    %v6956 = vunpack.c.h.b16 %v6791
    %v6957 = vunpack.c.l.b16 %v6792
    %v6958 = vunpack.c.h.b16 %v6792
    %v6959 = vunpack.c.l.b16 %v6793
    %v6960 = vunpack.c.h.b16 %v6793
    %v6961 = vunpack.c.l.b16 %v6794
    %v6962 = vunpack.c.h.b16 %v6794
    %v6963 = vunpack.c.l.b16 %v6795
    %v6964 = vunpack.c.h.b16 %v6795
    %v6965 = vunpack.c.l.b16 %v6796
    %v6966 = vunpack.c.h.b16 %v6796
    %v6967 = vunpack.c.l.b16 %v6797
    %v6968 = vunpack.c.h.b16 %v6797
    %v6969 = vunpack.c.l.b16 %v6798
    %v6970 = vunpack.c.h.b16 %v6798
    %v6971 = vunpack.c.l.b16 %v6799
    %v6972 = vunpack.c.h.b16 %v6799
    %v6973 = vunpack.c.l.b16 %v6800
    %v6974 = vunpack.c.h.b16 %v6800
    %v6975 = vunpack.c.l.b16 %v6801
    %v6976 = vunpack.c.h.b16 %v6801
    %v6977 = vunpack.c.l.b16 %v6802
    %v6978 = vunpack.c.h.b16 %v6802
    %v6979 = vunpack.c.l.b16 %v6803
    %v6980 = vunpack.c.h.b16 %v6803
    %v6981 = vunpack.c.l.b16 %v6804
    %v6982 = vunpack.c.h.b16 %v6804
    %v6983 = vunpack.c.l.b16 %v6805
    %v6984 = vunpack.c.h.b16 %v6805
    %v6985 = vunpack.c.l.b16 %v6806
    %v6986 = vunpack.c.h.b16 %v6806
    %v6987 = vunpack.c.l.b16 %v6807
    %v6988 = vunpack.c.h.b16 %v6807
    %v6989 = vunpack.c.l.b16 %v6808
    %v6990 = vunpack.c.h.b16 %v6808
    %v6991 = vunpack.c.l.b16 %v6809
    %v6992 = vunpack.c.h.b16 %v6809
    %v6993 = vunpack.c.l.b16 %v6810
    %v6994 = vunpack.c.h.b16 %v6810
    %v6995 = vunpack.c.l.b16 %v6811
    %v6996 = vunpack.c.h.b16 %v6811
    %v6997 = vunpack.c.l.b16 %v6812
    %v6998 = vunpack.c.h.b16 %v6812
    %v6999 = vunpack.c.l.b16 %v6813
    %v7000 = vunpack.c.h.b16 %v6813
    %v7001 = vunpack.c.l.b16 %v6814
    %v7002 = vunpack.c.h.b16 %v6814
    %v7003 = vunpack.c.l.b16 %v6815
    %v7004 = vunpack.c.h.b16 %v6815
    %v7005 = vunpack.c.l.b16 %v6816
    %v7006 = vunpack.c.h.b16 %v6816
    %v7007 = vunpack.c.l.b16 %v6817
    %v7008 = vunpack.c.h.b16 %v6817
    %v7009 = vunpack.c.l.b16 %v6818
    %v7010 = vunpack.c.h.b16 %v6818
    %v7011 = vunpack.c.l.b16 %v6819
    %v7012 = vunpack.c.h.b16 %v6819
    %v7013 = vunpack.c.l.b16 %v6820
    %v7014 = vunpack.c.h.b16 %v6820
    %v7015 = vunpack.c.l.b16 %v6821
    %v7016 = vunpack.c.h.b16 %v6821
    %v7017 = vunpack.c.l.b16 %v6822
    %v7018 = vunpack.c.h.b16 %v6822
    %v7019 = vunpack.c.l.b16 %v6823
    %v7020 = vunpack.c.h.b16 %v6823
    %v7021 = vunpack.c.l.b16 %v6824
    %v7022 = vunpack.c.h.b16 %v6824
    %v7023 = vunpack.c.l.b16 %v6825
    %v7024 = vunpack.c.h.b16 %v6825
    %v7025 = vpack.c.b16 %v6901, %v6897
    %v7026 = vpack.c.b16 %v6902, %v6898
    %v7027 = vpack.c.b16 %v6903, %v6899
    %v7028 = vpack.c.b16 %v6904, %v6900
    %v7029 = vpack.c.b16 %v6909, %v6905
    %v7030 = vpack.c.b16 %v6910, %v6906
    %v7031 = vpack.c.b16 %v6911, %v6907
    %v7032 = vpack.c.b16 %v6912, %v6908
    %v7033 = vpack.c.b16 %v6917, %v6913
    %v7034 = vpack.c.b16 %v6918, %v6914
    %v7035 = vpack.c.b16 %v6919, %v6915
    %v7036 = vpack.c.b16 %v6920, %v6916
    %v7037 = vpack.c.b16 %v6925, %v6921
    %v7038 = vpack.c.b16 %v6926, %v6922
    %v7039 = vpack.c.b16 %v6927, %v6923
    %v7040 = vpack.c.b16 %v6928, %v6924
    %v7041 = vpack.c.b16 %v6933, %v6929
    %v7042 = vpack.c.b16 %v6934, %v6930
    %v7043 = vpack.c.b16 %v6935, %v6931
    %v7044 = vpack.c.b16 %v6936, %v6932
    %v7045 = vpack.c.b16 %v6941, %v6937
    %v7046 = vpack.c.b16 %v6942, %v6938
    %v7047 = vpack.c.b16 %v6943, %v6939
    %v7048 = vpack.c.b16 %v6944, %v6940
    %v7049 = vpack.c.b16 %v6949, %v6945
    %v7050 = vpack.c.b16 %v6950, %v6946
    %v7051 = vpack.c.b16 %v6951, %v6947
    %v7052 = vpack.c.b16 %v6952, %v6948
    %v7053 = vpack.c.b16 %v6957, %v6953
    %v7054 = vpack.c.b16 %v6958, %v6954
    %v7055 = vpack.c.b16 %v6959, %v6955
    %v7056 = vpack.c.b16 %v6960, %v6956
    %v7057 = vpack.c.b16 %v6965, %v6961
    %v7058 = vpack.c.b16 %v6966, %v6962
    %v7059 = vpack.c.b16 %v6967, %v6963
    %v7060 = vpack.c.b16 %v6968, %v6964
    %v7061 = vpack.c.b16 %v6973, %v6969
    %v7062 = vpack.c.b16 %v6974, %v6970
    %v7063 = vpack.c.b16 %v6975, %v6971
    %v7064 = vpack.c.b16 %v6976, %v6972
    %v7065 = vpack.c.b16 %v6981, %v6977
    %v7066 = vpack.c.b16 %v6982, %v6978
    %v7067 = vpack.c.b16 %v6983, %v6979
    %v7068 = vpack.c.b16 %v6984, %v6980
    %v7069 = vpack.c.b16 %v6989, %v6985
    %v7070 = vpack.c.b16 %v6990, %v6986
    %v7071 = vpack.c.b16 %v6991, %v6987
    %v7072 = vpack.c.b16 %v6992, %v6988
    %v7073 = vpack.c.b16 %v6997, %v6993
    %v7074 = vpack.c.b16 %v6998, %v6994
    %v7075 = vpack.c.b16 %v6999, %v6995
    %v7076 = vpack.c.b16 %v7000, %v6996
    %v7077 = vpack.c.b16 %v7005, %v7001
    %v7078 = vpack.c.b16 %v7006, %v7002
    %v7079 = vpack.c.b16 %v7007, %v7003
    %v7080 = vpack.c.b16 %v7008, %v7004
    %v7081 = vpack.c.b16 %v7013, %v7009
    %v7082 = vpack.c.b16 %v7014, %v7010
    %v7083 = vpack.c.b16 %v7015, %v7011
    %v7084 = vpack.c.b16 %v7016, %v7012
    %v7085 = vpack.c.b16 %v7021, %v7017
    %v7086 = vpack.c.b16 %v7022, %v7018
    %v7087 = vpack.c.b16 %v7023, %v7019
    %v7088 = vpack.c.b16 %v7024, %v7020
    %7153 = vmatpush.bf16.msra.mxu0 %v7053
    %7154 = vmatpush.bf16.msra.mxu0 %v7049
    %7155 = vmatpush.bf16.msra.mxu0 %v7045
    %7156 = vmatpush.bf16.msra.mxu0 %v7041
    %7157 = vmatpush.bf16.msra.mxu0 %v7037
    %7158 = vmatpush.bf16.msra.mxu0 %v7033
    %7159 = vmatpush.bf16.msra.mxu0 %v7029
    %7160 = vmatpush.bf16.msra.mxu0 %v7025
    %7161 = vmatmul.bf16.gmra.mxu0 %v6829
    %v7162 = vpop.f32.mrf.mxu0
    %v7163 = vadd.f32 %v290, %v7162
    %v7164 = vpop.f32.mrf.mxu0
    %7165 = vdwg.mxu0
    %7166 = vmatpush.bf16.msra.mxu0 %v7085
    %7167 = vmatpush.bf16.msra.mxu0 %v7081
    %7168 = vmatpush.bf16.msra.mxu0 %v7077
    %7169 = vmatpush.bf16.msra.mxu0 %v7073
    %7170 = vmatpush.bf16.msra.mxu0 %v7069
    %7171 = vmatpush.bf16.msra.mxu0 %v7065
    %7172 = vmatpush.bf16.msra.mxu0 %v7061
    %7173 = vmatpush.bf16.msra.mxu0 %v7057
    %7174 = vmatmul.bf16.gmra.mxu0 %v6830
    %v7175 = vpop.f32.mrf.mxu0
    %v7176 = vadd.f32 %v7163, %v7175
    %v7177 = vpop.f32.mrf.mxu0
    %7178 = vdwg.mxu0
    %7179 = vmatpush.bf16.msra.mxu0 %v7054
    %7180 = vmatpush.bf16.msra.mxu0 %v7050
    %7181 = vmatpush.bf16.msra.mxu0 %v7046
    %7182 = vmatpush.bf16.msra.mxu0 %v7042
    %7183 = vmatpush.bf16.msra.mxu0 %v7038
    %7184 = vmatpush.bf16.msra.mxu0 %v7034
    %7185 = vmatpush.bf16.msra.mxu0 %v7030
    %7186 = vmatpush.bf16.msra.mxu0 %v7026
    %7187 = vmatmul.bf16.gmra.mxu0 %v6829
    %v7188 = vpop.f32.mrf.mxu0
    %v7189 = vadd.f32 %v291, %v7188
    %v7190 = vpop.f32.mrf.mxu0
    %7191 = vdwg.mxu0
    %7192 = vmatpush.bf16.msra.mxu0 %v7086
    %7193 = vmatpush.bf16.msra.mxu0 %v7082
    %7194 = vmatpush.bf16.msra.mxu0 %v7078
    %7195 = vmatpush.bf16.msra.mxu0 %v7074
    %7196 = vmatpush.bf16.msra.mxu0 %v7070
    %7197 = vmatpush.bf16.msra.mxu0 %v7066
    %7198 = vmatpush.bf16.msra.mxu0 %v7062
    %7199 = vmatpush.bf16.msra.mxu0 %v7058
    %7200 = vmatmul.bf16.gmra.mxu0 %v6830
    %v7201 = vpop.f32.mrf.mxu0
    %v7202 = vadd.f32 %v7189, %v7201
    %v7203 = vpop.f32.mrf.mxu0
    %7204 = vdwg.mxu0
    %7205 = vmatpush.bf16.msra.mxu0 %v7055
    %7206 = vmatpush.bf16.msra.mxu0 %v7051
    %7207 = vmatpush.bf16.msra.mxu0 %v7047
    %7208 = vmatpush.bf16.msra.mxu0 %v7043
    %7209 = vmatpush.bf16.msra.mxu0 %v7039
    %7210 = vmatpush.bf16.msra.mxu0 %v7035
    %7211 = vmatpush.bf16.msra.mxu0 %v7031
    %7212 = vmatpush.bf16.msra.mxu0 %v7027
    %7213 = vmatmul.bf16.gmra.mxu0 %v6829
    %v7214 = vpop.f32.mrf.mxu0
    %v7215 = vadd.f32 %v292, %v7214
    %v7216 = vpop.f32.mrf.mxu0
    %7217 = vdwg.mxu0
    %7218 = vmatpush.bf16.msra.mxu0 %v7087
    %7219 = vmatpush.bf16.msra.mxu0 %v7083
    %7220 = vmatpush.bf16.msra.mxu0 %v7079
    %7221 = vmatpush.bf16.msra.mxu0 %v7075
    %7222 = vmatpush.bf16.msra.mxu0 %v7071
    %7223 = vmatpush.bf16.msra.mxu0 %v7067
    %7224 = vmatpush.bf16.msra.mxu0 %v7063
    %7225 = vmatpush.bf16.msra.mxu0 %v7059
    %7226 = vmatmul.bf16.gmra.mxu0 %v6830
    %v7227 = vpop.f32.mrf.mxu0
    %v7228 = vadd.f32 %v7215, %v7227
    %v7229 = vpop.f32.mrf.mxu0
    %7230 = vdwg.mxu0
    %7231 = vmatpush.bf16.msra.mxu0 %v7056
    %7232 = vmatpush.bf16.msra.mxu0 %v7052
    %7233 = vmatpush.bf16.msra.mxu0 %v7048
    %7234 = vmatpush.bf16.msra.mxu0 %v7044
    %7235 = vmatpush.bf16.msra.mxu0 %v7040
    %7236 = vmatpush.bf16.msra.mxu0 %v7036
    %7237 = vmatpush.bf16.msra.mxu0 %v7032
    %7238 = vmatpush.bf16.msra.mxu0 %v7028
    %7239 = vmatmul.bf16.gmra.mxu0 %v6829
    %v7240 = vpop.f32.mrf.mxu0
    %v7241 = vadd.f32 %v293, %v7240
    %v7242 = vpop.f32.mrf.mxu0
    %7243 = vdwg.mxu0
    %7244 = vmatpush.bf16.msra.mxu0 %v7088
    %7245 = vmatpush.bf16.msra.mxu0 %v7084
    %7246 = vmatpush.bf16.msra.mxu0 %v7080
    %7247 = vmatpush.bf16.msra.mxu0 %v7076
    %7248 = vmatpush.bf16.msra.mxu0 %v7072
    %7249 = vmatpush.bf16.msra.mxu0 %v7068
    %7250 = vmatpush.bf16.msra.mxu0 %v7064
    %7251 = vmatpush.bf16.msra.mxu0 %v7060
    %7252 = vmatmul.bf16.gmra.mxu0 %v6830
    %v7253 = vpop.f32.mrf.mxu0
    %v7254 = vadd.f32 %v7241, %v7253
    %v7255 = vpop.f32.mrf.mxu0
    %7256 = vdwg.mxu0
    %v7257 = vxor.u32 %v7176, 2147483648
    %v7258 = vxor.u32 %v7202, 2147483648
    %v7259 = vmul.f32 %v7257, 1.442695
    %v7260 = vpow.pop %v7259
    %v7261 = vmul.f32 %v7258, 1.442695
    %v7262 = vpow.pop %v7261
    %v7263 = vadd.f32 %v7260, 1.0
    %v7264 = vadd.f32 %v7262, 1.0
    %v7265 = vrcp.pop %v7263
    %v7266 = vmul.f32 %v7263, %v7265
    %v7267 = vsub.f32 1.0, %v7266
    %v7268 = vmul.f32 %v7265, %v7267
    %v7269 = vadd.f32 %v7265, %v7268
    %vm7270 = vweird.f32 %v7263
    %vm7271 = vweird.f32 %v7265
    %vm7272 = vmor %vm7270, %vm7271
    %v7273 = vsel %vm7272, %v7265, %v7269
    %v7274 = vand.u32 2147483647, %v7263
    %vm7275 = vcmp.eq.f32.partialorder %v7274, 8.507059e+37
    %v7276 = vand.u32 %v7263, 2147483648
    %v7277 = vor.u32 1.1754944e-38, %v7276
    %v7278 = vsel %vm7275, %v7277, %v7273
    %v7279 = vmul.f32 1.0, %v7278
    %v7280 = vrcp.pop %v7264
    %v7281 = vmul.f32 %v7264, %v7280
    %v7282 = vsub.f32 1.0, %v7281
    %v7283 = vmul.f32 %v7280, %v7282
    %v7284 = vadd.f32 %v7280, %v7283
    %vm7285 = vweird.f32 %v7264
    %vm7286 = vweird.f32 %v7280
    %vm7287 = vmor %vm7285, %vm7286
    %v7288 = vsel %vm7287, %v7280, %v7284
    %v7289 = vand.u32 2147483647, %v7264
    %vm7290 = vcmp.eq.f32.partialorder %v7289, 8.507059e+37
    %v7291 = vand.u32 %v7264, 2147483648
    %v7292 = vor.u32 1.1754944e-38, %v7291
    %v7293 = vsel %vm7290, %v7292, %v7288
    %v7294 = vmul.f32 1.0, %v7293
    %v7295 = vtanh.pop %v7228
    %v7296 = vxor.u32 %v7254, 2147483648
    %v7297 = vmul.f32 %v7296, 1.442695
    %v7298 = vpow.pop %v7297
    %v7299 = vadd.f32 %v7298, 1.0
    %v7300 = vrcp.pop %v7299
    %v7301 = vmul.f32 %v7299, %v7300
    %v7302 = vsub.f32 1.0, %v7301
    %v7303 = vmul.f32 %v7300, %v7302
    %v7304 = vadd.f32 %v7300, %v7303
    %vm7305 = vweird.f32 %v7299
    %vm7306 = vweird.f32 %v7300
    %vm7307 = vmor %vm7305, %vm7306
    %v7308 = vsel %vm7307, %v7300, %v7304
    %v7309 = vand.u32 2147483647, %v7299
    %vm7310 = vcmp.eq.f32.partialorder %v7309, 8.507059e+37
    %v7311 = vand.u32 %v7299, 2147483648
    %v7312 = vor.u32 1.1754944e-38, %v7311
    %v7313 = vsel %vm7310, %v7312, %v7308
    %v7314 = vmul.f32 1.0, %v7313
    %v7315 = vmul.f32 %v7294, %v6439
    %v7316 = vmul.f32 %v7279, %v7295
    %v7317 = vadd.f32 %v7315, %v7316
    %v7318 = vtanh.pop %v7317
    %v7319 = vmul.f32 %v7314, %v7318
    %v7320 = vpack.c.bf16 %v7319, %v7319
    %7321 = vst [vmem:[#allocation3 + $0x4] sm:$0xf] %v7320
    %v7322 = vld [vmem:[%s6] sm:$0x1]
    %v7324 = vperm.slane %v7322, 0
    %v7326 = vmul.f32 %v7319, %v7324
    %7327 = vadd.xlane.f32.xlu0 %v7326
    %v7328 = vpop.xlane.xlu0 %7327
    %v7329 = vld [vmem:[#allocation4] sm:$0x1]
    %v7331 = vperm.slane %v7329, 0
    %v7333 = vadd.f32 %v7328, %v7331
    %vm7334 = vcmask 7168
    %7335 = vst.msk [vmem:[%s8] sm:$0xff] %vm7334, %v7333
    // Predicated region
    $region42: #{tpu_custom_call.1} parent=1 // pred_check
      _
    $region43: #{tpu_custom_call.1} parent=1 // pred_check_branch
      %7337 = sbr.rel (0) target = $region45
    $region44: #{tpu_custom_call.1} parent=1 // pred_region
      _
    $region45: #{tpu_custom_call.1} parent=1 // pred_fallthru
      _
    // Predicated region
    $region46: #{tpu_custom_call.1} parent=1 // pred_check
      _
    $region47: #{tpu_custom_call.1} parent=1 // pred_check_branch
      %7339 = sbr.rel (0) target = $region49
    $region48: #{tpu_custom_call.1} parent=1 // pred_region
      _
    $region49: #{tpu_custom_call.1} parent=1 // pred_fallthru
      _
    %7340 = vsyncpa [#allocation6], 1
    %7341 = vsyncpa [#allocation8], 1

</llo_original>
